<compile_context>
chip_gen: v6e
topology: v6e:2x2x1
jax: 0.10.0
libtpu: 0.0.40
codegen_flags: <defaults>
</compile_context>

<pallas_src>
import functools

import jax
import jax.numpy as jnp
from jax.experimental import pallas as pl
from jax.experimental.pallas import tpu as pltpu

AXIS = 4                 # "axis" constructor arg of MyGruNet
HID = 7 * AXIS           # GRU input_size == hidden_size == 7*axis
SEQ = 36                 # fixed sequence length from x.view(-1, 36, 7*axis)
OUT = 5                  # output_linear out_features


def gru_net_kernel(x_ref, wih_ref, whh_ref, bgi_ref, bhn_ref, wout_ref,
                   bout_ref, o_ref, gi_ref):
    """Whole forward pass (36 GRU steps + final Linear) in one invocation.

    x_ref:    (SEQ*B, IN)   time-major flattened input (row t*B + b == x[b, t])
    wih_ref:  (3, IN, H)    gate-major, pre-transposed input weights
    whh_ref:  (3, H, H)     gate-major, pre-transposed hidden weights
    bgi_ref:  (3, 1, H)     [b_ir+b_hr, b_iz+b_hz, b_in]
    bhn_ref:  (1, H)        b_hn (must stay inside r * (W_hn h + b_hn))
    wout_ref: (H, OUT), bout_ref: (1, OUT)
    gi_ref:   VMEM scratch (3, SEQ*B, H) for the hoisted input projection
    """
    B, _ = o_ref.shape
    H = whh_ref.shape[-1]
    T = x_ref.shape[0] // B

    # ---- Hoisted input projection: ONE big matmul per gate (off the serial
    # chain), biases folded in here so the loop does no redundant broadcasts.
    x_all = x_ref[...]                                            # (SEQ*B, IN)
    for g in range(3):
        gi_ref[g] = (jnp.dot(x_all, wih_ref[g],
                             preferred_element_type=jnp.float32)
                     + bgi_ref[g])                                # (SEQ*B, H)

    # ---- Loop-invariant values hoisted once.
    whh_r = whh_ref[0]
    whh_z = whh_ref[1]
    whh_n = whh_ref[2]
    b_hn = jnp.broadcast_to(bhn_ref[...], (B, H))

    # ---- Recurrence: fully unrolled (static trip count), h carried in vregs.
    h = jnp.zeros((B, H), jnp.float32)
    for t in range(T):
        row = t * B                                   # static -> static slices
        g_r = gi_ref[0, pl.ds(row, B), :]
        g_z = gi_ref[1, pl.ds(row, B), :]
        g_n = gi_ref[2, pl.ds(row, B), :]
        gh_r = jnp.dot(h, whh_r, preferred_element_type=jnp.float32)
        gh_z = jnp.dot(h, whh_z, preferred_element_type=jnp.float32)
        gh_n = jnp.dot(h, whh_n, preferred_element_type=jnp.float32) + b_hn
        r = jax.nn.sigmoid(g_r + gh_r)
        z = jax.nn.sigmoid(g_z + gh_z)
        n = jnp.tanh(g_n + r * gh_n)
        h = (1.0 - z) * n + z * h

    # ---- output_linear(h_T)  (GRU output at t=-1 == final hidden state)
    o_ref[...] = (jnp.dot(h, wout_ref[...], preferred_element_type=jnp.float32)
                  + bout_ref[...]).astype(o_ref.dtype)


@jax.jit
def my_gru_net(x, w_ih, w_hh, b_ih, b_hh, w_out, b_out):
    """Forward pass of MyGruNet.

    x:      any shape reshapable to (-1, 36, 7*axis)
    w_ih:   (3H, IN)   w_hh: (3H, H)   b_ih, b_hh: (3H,)
    w_out:  (OUT, H)   b_out: (OUT,)
    returns (B, OUT) float32
    """
    x = jnp.reshape(x, (-1, SEQ, HID)).astype(jnp.float32)   # x.view(-1, 36, 7*axis)
    B = x.shape[0]
    H = HID
    # Time-major flatten: row t*B + b  ==  x[b, t, :]
    x2d = jnp.transpose(x, (1, 0, 2)).reshape(SEQ * B, HID)

    w_ih = w_ih.astype(jnp.float32)
    w_hh = w_hh.astype(jnp.float32)
    b_ih = b_ih.astype(jnp.float32)
    b_hh = b_hh.astype(jnp.float32)

    # Gate-major, pre-transposed weights (PyTorch gate order r, z, n).
    wih_s = jnp.stack([w_ih[0 * H:1 * H].T,
                       w_ih[1 * H:2 * H].T,
                       w_ih[2 * H:3 * H].T])                    # (3, IN, H)
    whh_s = jnp.stack([w_hh[0 * H:1 * H].T,
                       w_hh[1 * H:2 * H].T,
                       w_hh[2 * H:3 * H].T])                    # (3, H, H)
    # Fold biases: b_ir+b_hr and b_iz+b_hz can merge; b_in folds into gi_n,
    # b_hn must remain inside r * (W_hn h + b_hn).
    b_gi = jnp.stack([(b_ih[0 * H:1 * H] + b_hh[0 * H:1 * H]).reshape(1, H),
                      (b_ih[1 * H:2 * H] + b_hh[1 * H:2 * H]).reshape(1, H),
                      b_ih[2 * H:3 * H].reshape(1, H)])         # (3, 1, H)
    b_hn = b_hh[2 * H:3 * H].reshape(1, H)                      # (1, H)
    wout_t = jnp.transpose(w_out).astype(jnp.float32)           # (H, OUT)
    bout = b_out.reshape(1, OUT).astype(jnp.float32)            # (1, OUT)

    full = lambda a: pl.BlockSpec(a.shape, lambda i: (0,) * a.ndim)

    out = pl.pallas_call(
        gru_net_kernel,
        out_shape=jax.ShapeDtypeStruct((B, OUT), jnp.float32),
        grid=(1,),                                   # single invocation
        in_specs=[full(x2d), full(wih_s), full(whh_s), full(b_gi),
                  full(b_hn), full(wout_t), full(bout)],
        out_specs=pl.BlockSpec((B, OUT), lambda i: (0, 0)),
        scratch_shapes=[pltpu.VMEM((3, SEQ * B, H), jnp.float32)],
        compiler_params=pltpu.CompilerParams(
            dimension_semantics=("arbitrary",)),
    )(x2d, wih_s, whh_s, b_gi, b_hn, wout_t, bout)
    return out


def _reference(x, w_ih, w_hh, b_ih, b_hh, w_out, b_out):
    """Pure-JAX reference matching torch.nn.GRU + Linear semantics."""
    x = jnp.reshape(x, (-1, SEQ, HID)).astype(jnp.float32)
    B = x.shape[0]
    h = jnp.zeros((B, HID), jnp.float32)

    def step(h, x_t):
        gi = x_t @ w_ih.T + b_ih
        gh = h @ w_hh.T + b_hh
        r = jax.nn.sigmoid(gi[:, :HID] + gh[:, :HID])
        z = jax.nn.sigmoid(gi[:, HID:2 * HID] + gh[:, HID:2 * HID])
        n = jnp.tanh(gi[:, 2 * HID:] + r * gh[:, 2 * HID:])
        h_new = (1.0 - z) * n + z * h
        return h_new, h_new

    h_last, _ = jax.lax.scan(step, h, jnp.transpose(x, (1, 0, 2)))
    return h_last @ w_out.T + b_out


if __name__ == "__main__":
    key = jax.random.PRNGKey(0)
    k_x, k1, k2, k3, k4, k5, k6 = jax.random.split(key, 7)

    # Deterministic parameter init (uniform(-1/sqrt(H), 1/sqrt(H)), like PyTorch).
    bound = 1.0 / jnp.sqrt(jnp.float32(HID))
    u = lambda k, shape: jax.random.uniform(k, shape, jnp.float32, -bound, bound)
    w_ih = u(k1, (3 * HID, HID))
    w_hh = u(k2, (3 * HID, HID))
    b_ih = u(k3, (3 * HID,))
    b_hh = u(k4, (3 * HID,))
    w_out = u(k5, (OUT, HID))
    b_out = u(k6, (OUT,))

    # Example input: (B, 36, 7, axis) -> view(-1, 36, 7*axis) inside forward.
    B = 2
    x = jax.random.normal(k_x, (B, SEQ, 7, AXIS), jnp.float32)

    y = my_gru_net(x, w_ih, w_hh, b_ih, b_hh, w_out, b_out)
    y = jax.block_until_ready(y)

    y_ref = _reference(x, w_ih, w_hh, b_ih, b_hh, w_out, b_out)
    assert y.shape == (B, OUT)
    assert jnp.allclose(y, y_ref, atol=1e-4, rtol=1e-4), "mismatch vs reference"
    print("KERNEL_OK")
</pallas_src>

<mosaic_0001>
module attributes {stable_mosaic.version = 11 : i64} {
  func.func @gru_net_kernel(%arg0: i32, %arg1: memref<72x28xf32, #tpu.memory_space<vmem>>, %arg2: memref<3x28x28xf32, #tpu.memory_space<vmem>>, %arg3: memref<3x28x28xf32, #tpu.memory_space<vmem>>, %arg4: memref<3x1x28xf32, #tpu.memory_space<vmem>>, %arg5: memref<1x28xf32, #tpu.memory_space<vmem>>, %arg6: memref<28x5xf32, #tpu.memory_space<vmem>>, %arg7: memref<1x5xf32, #tpu.memory_space<vmem>>, %arg8: memref<2x5xf32, #tpu.memory_space<vmem>>, %arg9: memref<3x72x28xf32, #tpu.memory_space<vmem>>) attributes {dimension_semantics = [#tpu.dimension_semantics<arbitrary>], iteration_bounds = array<i64: 1>, scalar_prefetch = 0 : i64, scratch_operands = 1 : i64, tpu.core_type = #tpu.core_type<tc>, window_params = [{pipeline_mode = #tpu.pipeline_mode<synchronous>, transform_indices = @transform_0, window_bounds = array<i64: 72, 28>}, {pipeline_mode = #tpu.pipeline_mode<synchronous>, transform_indices = @transform_1, window_bounds = array<i64: 3, 28, 28>}, {pipeline_mode = #tpu.pipeline_mode<synchronous>, transform_indices = @transform_2, window_bounds = array<i64: 3, 28, 28>}, {pipeline_mode = #tpu.pipeline_mode<synchronous>, transform_indices = @transform_3, window_bounds = array<i64: 3, 1, 28>}, {pipeline_mode = #tpu.pipeline_mode<synchronous>, transform_indices = @transform_4, window_bounds = array<i64: 1, 28>}, {pipeline_mode = #tpu.pipeline_mode<synchronous>, transform_indices = @transform_5, window_bounds = array<i64: 28, 5>}, {pipeline_mode = #tpu.pipeline_mode<synchronous>, transform_indices = @transform_6, window_bounds = array<i64: 1, 5>}, {pipeline_mode = #tpu.pipeline_mode<synchronous>, transform_indices = @transform_7, window_bounds = array<i64: 2, 5>}]} {
    %c0 = arith.constant 0 : index
    %c0_0 = arith.constant 0 : index
    %0 = vector.load %arg1[%c0, %c0_0] : memref<72x28xf32, #tpu.memory_space<vmem>>, vector<72x28xf32>
    %c0_1 = arith.constant 0 : index
    %c0_2 = arith.constant 0 : index
    %c0_3 = arith.constant 0 : index
    %1 = vector.load %arg2[%c0_1, %c0_2, %c0_3] : memref<3x28x28xf32, #tpu.memory_space<vmem>>, vector<1x28x28xf32>
    %2 = vector.shape_cast %1 : vector<1x28x28xf32> to vector<28x28xf32>
    %cst = arith.constant dense<0.000000e+00> : vector<72x28xf32>
    %3 = tpu.matmul %0, %2, %cst {dimension_numbers = #tpu.dot_dimension_numbers<[1], [0], [0], [1], [0, 0, 1, 1], [], []>} : vector<72x28xf32>, vector<28x28xf32>, vector<72x28xf32> -> vector<72x28xf32>
    %c0_4 = arith.constant 0 : index
    %c0_5 = arith.constant 0 : index
    %c0_6 = arith.constant 0 : index
    %4 = vector.load %arg4[%c0_4, %c0_5, %c0_6] : memref<3x1x28xf32, #tpu.memory_space<vmem>>, vector<1x1x28xf32>
    %5 = vector.shape_cast %4 : vector<1x1x28xf32> to vector<1x28xf32>
    %6 = vector.broadcast %5 : vector<1x28xf32> to vector<72x28xf32>
    %7 = arith.addf %3, %6 : vector<72x28xf32>
    %c0_7 = arith.constant 0 : index
    %c0_8 = arith.constant 0 : index
    %c0_9 = arith.constant 0 : index
    %8 = vector.load %arg9[%c0_7, %c0_8, %c0_9] : memref<3x72x28xf32, #tpu.memory_space<vmem>>, vector<1x72x28xf32>
    %9 = vector.shape_cast %8 : vector<1x72x28xf32> to vector<72x28xf32>
    %10 = vector.shape_cast %7 : vector<72x28xf32> to vector<1x72x28xf32>
    tpu.vector_store %arg9[%c0_7, %c0_8, %c0_9], %10 {strides = array<i32>} : memref<3x72x28xf32, #tpu.memory_space<vmem>>, vector<1x72x28xf32>,
    %c1 = arith.constant 1 : index
    %c0_10 = arith.constant 0 : index
    %c0_11 = arith.constant 0 : index
    %11 = vector.load %arg2[%c1, %c0_10, %c0_11] : memref<3x28x28xf32, #tpu.memory_space<vmem>>, vector<1x28x28xf32>
    %12 = vector.shape_cast %11 : vector<1x28x28xf32> to vector<28x28xf32>
    %cst_12 = arith.constant dense<0.000000e+00> : vector<72x28xf32>
    %13 = tpu.matmul %0, %12, %cst_12 {dimension_numbers = #tpu.dot_dimension_numbers<[1], [0], [0], [1], [0, 0, 1, 1], [], []>} : vector<72x28xf32>, vector<28x28xf32>, vector<72x28xf32> -> vector<72x28xf32>
    %c1_13 = arith.constant 1 : index
    %c0_14 = arith.constant 0 : index
    %c0_15 = arith.constant 0 : index
    %14 = vector.load %arg4[%c1_13, %c0_14, %c0_15] : memref<3x1x28xf32, #tpu.memory_space<vmem>>, vector<1x1x28xf32>
    %15 = vector.shape_cast %14 : vector<1x1x28xf32> to vector<1x28xf32>
    %16 = vector.broadcast %15 : vector<1x28xf32> to vector<72x28xf32>
    %17 = arith.addf %13, %16 : vector<72x28xf32>
    %c1_16 = arith.constant 1 : index
    %c0_17 = arith.constant 0 : index
    %c0_18 = arith.constant 0 : index
    %18 = vector.load %arg9[%c1_16, %c0_17, %c0_18] : memref<3x72x28xf32, #tpu.memory_space<vmem>>, vector<1x72x28xf32>
    %19 = vector.shape_cast %18 : vector<1x72x28xf32> to vector<72x28xf32>
    %20 = vector.shape_cast %17 : vector<72x28xf32> to vector<1x72x28xf32>
    tpu.vector_store %arg9[%c1_16, %c0_17, %c0_18], %20 {strides = array<i32>} : memref<3x72x28xf32, #tpu.memory_space<vmem>>, vector<1x72x28xf32>,
    %c2 = arith.constant 2 : index
    %c0_19 = arith.constant 0 : index
    %c0_20 = arith.constant 0 : index
    %21 = vector.load %arg2[%c2, %c0_19, %c0_20] : memref<3x28x28xf32, #tpu.memory_space<vmem>>, vector<1x28x28xf32>
    %22 = vector.shape_cast %21 : vector<1x28x28xf32> to vector<28x28xf32>
    %cst_21 = arith.constant dense<0.000000e+00> : vector<72x28xf32>
    %23 = tpu.matmul %0, %22, %cst_21 {dimension_numbers = #tpu.dot_dimension_numbers<[1], [0], [0], [1], [0, 0, 1, 1], [], []>} : vector<72x28xf32>, vector<28x28xf32>, vector<72x28xf32> -> vector<72x28xf32>
    %c2_22 = arith.constant 2 : index
    %c0_23 = arith.constant 0 : index
    %c0_24 = arith.constant 0 : index
    %24 = vector.load %arg4[%c2_22, %c0_23, %c0_24] : memref<3x1x28xf32, #tpu.memory_space<vmem>>, vector<1x1x28xf32>
    %25 = vector.shape_cast %24 : vector<1x1x28xf32> to vector<1x28xf32>
    %26 = vector.broadcast %25 : vector<1x28xf32> to vector<72x28xf32>
    %27 = arith.addf %23, %26 : vector<72x28xf32>
    %c2_25 = arith.constant 2 : index
    %c0_26 = arith.constant 0 : index
    %c0_27 = arith.constant 0 : index
    %28 = vector.load %arg9[%c2_25, %c0_26, %c0_27] : memref<3x72x28xf32, #tpu.memory_space<vmem>>, vector<1x72x28xf32>
    %29 = vector.shape_cast %28 : vector<1x72x28xf32> to vector<72x28xf32>
    %30 = vector.shape_cast %27 : vector<72x28xf32> to vector<1x72x28xf32>
    tpu.vector_store %arg9[%c2_25, %c0_26, %c0_27], %30 {strides = array<i32>} : memref<3x72x28xf32, #tpu.memory_space<vmem>>, vector<1x72x28xf32>,
    %c0_28 = arith.constant 0 : index
    %c0_29 = arith.constant 0 : index
    %c0_30 = arith.constant 0 : index
    %31 = vector.load %arg3[%c0_28, %c0_29, %c0_30] : memref<3x28x28xf32, #tpu.memory_space<vmem>>, vector<1x28x28xf32>
    %32 = vector.shape_cast %31 : vector<1x28x28xf32> to vector<28x28xf32>
    %c1_31 = arith.constant 1 : index
    %c0_32 = arith.constant 0 : index
    %c0_33 = arith.constant 0 : index
    %33 = vector.load %arg3[%c1_31, %c0_32, %c0_33] : memref<3x28x28xf32, #tpu.memory_space<vmem>>, vector<1x28x28xf32>
    %34 = vector.shape_cast %33 : vector<1x28x28xf32> to vector<28x28xf32>
    %c2_34 = arith.constant 2 : index
    %c0_35 = arith.constant 0 : index
    %c0_36 = arith.constant 0 : index
    %35 = vector.load %arg3[%c2_34, %c0_35, %c0_36] : memref<3x28x28xf32, #tpu.memory_space<vmem>>, vector<1x28x28xf32>
    %36 = vector.shape_cast %35 : vector<1x28x28xf32> to vector<28x28xf32>
    %c0_37 = arith.constant 0 : index
    %c0_38 = arith.constant 0 : index
    %37 = vector.load %arg5[%c0_37, %c0_38] : memref<1x28xf32, #tpu.memory_space<vmem>>, vector<1x28xf32>
    %38 = vector.shape_cast %37 : vector<1x28xf32> to vector<1x28xf32>
    %39 = vector.broadcast %38 : vector<1x28xf32> to vector<2x28xf32>
    %cst_39 = arith.constant 0.000000e+00 : f32
    %40 = vector.broadcast %cst_39 : f32 to vector<2x28xf32>
    %c0_40 = arith.constant 0 : index
    %c0_41 = arith.constant 0 : index
    %c0_42 = arith.constant 0 : index
    %41 = vector.load %arg9[%c0_40, %c0_41, %c0_42] : memref<3x72x28xf32, #tpu.memory_space<vmem>>, vector<1x2x28xf32>
    %42 = vector.shape_cast %41 : vector<1x2x28xf32> to vector<2x28xf32>
    %c1_43 = arith.constant 1 : index
    %c0_44 = arith.constant 0 : index
    %c0_45 = arith.constant 0 : index
    %43 = vector.load %arg9[%c1_43, %c0_44, %c0_45] : memref<3x72x28xf32, #tpu.memory_space<vmem>>, vector<1x2x28xf32>
    %44 = vector.shape_cast %43 : vector<1x2x28xf32> to vector<2x28xf32>
    %c2_46 = arith.constant 2 : index
    %c0_47 = arith.constant 0 : index
    %c0_48 = arith.constant 0 : index
    %45 = vector.load %arg9[%c2_46, %c0_47, %c0_48] : memref<3x72x28xf32, #tpu.memory_space<vmem>>, vector<1x2x28xf32>
    %46 = vector.shape_cast %45 : vector<1x2x28xf32> to vector<2x28xf32>
    %cst_49 = arith.constant dense<0.000000e+00> : vector<2x28xf32>
    %47 = tpu.matmul %40, %32, %cst_49 {dimension_numbers = #tpu.dot_dimension_numbers<[1], [0], [0], [1], [0, 0, 1, 1], [], []>} : vector<2x28xf32>, vector<28x28xf32>, vector<2x28xf32> -> vector<2x28xf32>
    %cst_50 = arith.constant dense<0.000000e+00> : vector<2x28xf32>
    %48 = tpu.matmul %40, %34, %cst_50 {dimension_numbers = #tpu.dot_dimension_numbers<[1], [0], [0], [1], [0, 0, 1, 1], [], []>} : vector<2x28xf32>, vector<28x28xf32>, vector<2x28xf32> -> vector<2x28xf32>
    %cst_51 = arith.constant dense<0.000000e+00> : vector<2x28xf32>
    %49 = tpu.matmul %40, %36, %cst_51 {dimension_numbers = #tpu.dot_dimension_numbers<[1], [0], [0], [1], [0, 0, 1, 1], [], []>} : vector<2x28xf32>, vector<28x28xf32>, vector<2x28xf32> -> vector<2x28xf32>
    %50 = arith.addf %49, %39 : vector<2x28xf32>
    %51 = arith.addf %42, %47 : vector<2x28xf32>
    %52 = arith.negf %51 : vector<2x28xf32>
    %53 = math.exp %52 : vector<2x28xf32>
    %cst_52 = arith.constant 1.000000e+00 : f32
    %54 = vector.broadcast %cst_52 : f32 to vector<2x28xf32>
    %55 = arith.addf %54, %53 : vector<2x28xf32>
    %56 = arith.divf %54, %55 : vector<2x28xf32>
    %57 = arith.addf %44, %48 : vector<2x28xf32>
    %58 = arith.negf %57 : vector<2x28xf32>
    %59 = math.exp %58 : vector<2x28xf32>
    %cst_53 = arith.constant 1.000000e+00 : f32
    %60 = vector.broadcast %cst_53 : f32 to vector<2x28xf32>
    %61 = arith.addf %60, %59 : vector<2x28xf32>
    %62 = arith.divf %60, %61 : vector<2x28xf32>
    %63 = arith.mulf %56, %50 : vector<2x28xf32>
    %64 = arith.addf %46, %63 : vector<2x28xf32>
    %65 = math.tanh %64 : vector<2x28xf32>
    %cst_54 = arith.constant 1.000000e+00 : f32
    %66 = vector.broadcast %cst_54 : f32 to vector<2x28xf32>
    %67 = arith.subf %66, %62 : vector<2x28xf32>
    %68 = arith.mulf %67, %65 : vector<2x28xf32>
    %69 = arith.mulf %62, %40 : vector<2x28xf32>
    %70 = arith.addf %68, %69 : vector<2x28xf32>
    %c0_55 = arith.constant 0 : index
    %c2_56 = arith.constant 2 : index
    %c0_57 = arith.constant 0 : index
    %71 = vector.load %arg9[%c0_55, %c2_56, %c0_57] : memref<3x72x28xf32, #tpu.memory_space<vmem>>, vector<1x2x28xf32>
    %72 = vector.shape_cast %71 : vector<1x2x28xf32> to vector<2x28xf32>
    %c1_58 = arith.constant 1 : index
    %c2_59 = arith.constant 2 : index
    %c0_60 = arith.constant 0 : index
    %73 = vector.load %arg9[%c1_58, %c2_59, %c0_60] : memref<3x72x28xf32, #tpu.memory_space<vmem>>, vector<1x2x28xf32>
    %74 = vector.shape_cast %73 : vector<1x2x28xf32> to vector<2x28xf32>
    %c2_61 = arith.constant 2 : index
    %c2_62 = arith.constant 2 : index
    %c0_63 = arith.constant 0 : index
    %75 = vector.load %arg9[%c2_61, %c2_62, %c0_63] : memref<3x72x28xf32, #tpu.memory_space<vmem>>, vector<1x2x28xf32>
    %76 = vector.shape_cast %75 : vector<1x2x28xf32> to vector<2x28xf32>
    %cst_64 = arith.constant dense<0.000000e+00> : vector<2x28xf32>
    %77 = tpu.matmul %70, %32, %cst_64 {dimension_numbers = #tpu.dot_dimension_numbers<[1], [0], [0], [1], [0, 0, 1, 1], [], []>} : vector<2x28xf32>, vector<28x28xf32>, vector<2x28xf32> -> vector<2x28xf32>
    %cst_65 = arith.constant dense<0.000000e+00> : vector<2x28xf32>
    %78 = tpu.matmul %70, %34, %cst_65 {dimension_numbers = #tpu.dot_dimension_numbers<[1], [0], [0], [1], [0, 0, 1, 1], [], []>} : vector<2x28xf32>, vector<28x28xf32>, vector<2x28xf32> -> vector<2x28xf32>
    %cst_66 = arith.constant dense<0.000000e+00> : vector<2x28xf32>
    %79 = tpu.matmul %70, %36, %cst_66 {dimension_numbers = #tpu.dot_dimension_numbers<[1], [0], [0], [1], [0, 0, 1, 1], [], []>} : vector<2x28xf32>, vector<28x28xf32>, vector<2x28xf32> -> vector<2x28xf32>
    %80 = arith.addf %79, %39 : vector<2x28xf32>
    %81 = arith.addf %72, %77 : vector<2x28xf32>
    %82 = arith.negf %81 : vector<2x28xf32>
    %83 = math.exp %82 : vector<2x28xf32>
    %cst_67 = arith.constant 1.000000e+00 : f32
    %84 = vector.broadcast %cst_67 : f32 to vector<2x28xf32>
    %85 = arith.addf %84, %83 : vector<2x28xf32>
    %86 = arith.divf %84, %85 : vector<2x28xf32>
    %87 = arith.addf %74, %78 : vector<2x28xf32>
    %88 = arith.negf %87 : vector<2x28xf32>
    %89 = math.exp %88 : vector<2x28xf32>
    %cst_68 = arith.constant 1.000000e+00 : f32
    %90 = vector.broadcast %cst_68 : f32 to vector<2x28xf32>
    %91 = arith.addf %90, %89 : vector<2x28xf32>
    %92 = arith.divf %90, %91 : vector<2x28xf32>
    %93 = arith.mulf %86, %80 : vector<2x28xf32>
    %94 = arith.addf %76, %93 : vector<2x28xf32>
    %95 = math.tanh %94 : vector<2x28xf32>
    %cst_69 = arith.constant 1.000000e+00 : f32
    %96 = vector.broadcast %cst_69 : f32 to vector<2x28xf32>
    %97 = arith.subf %96, %92 : vector<2x28xf32>
    %98 = arith.mulf %97, %95 : vector<2x28xf32>
    %99 = arith.mulf %92, %70 : vector<2x28xf32>
    %100 = arith.addf %98, %99 : vector<2x28xf32>
    %c0_70 = arith.constant 0 : index
    %c4 = arith.constant 4 : index
    %c0_71 = arith.constant 0 : index
    %101 = vector.load %arg9[%c0_70, %c4, %c0_71] : memref<3x72x28xf32, #tpu.memory_space<vmem>>, vector<1x2x28xf32>
    %102 = vector.shape_cast %101 : vector<1x2x28xf32> to vector<2x28xf32>
    %c1_72 = arith.constant 1 : index
    %c4_73 = arith.constant 4 : index
    %c0_74 = arith.constant 0 : index
    %103 = vector.load %arg9[%c1_72, %c4_73, %c0_74] : memref<3x72x28xf32, #tpu.memory_space<vmem>>, vector<1x2x28xf32>
    %104 = vector.shape_cast %103 : vector<1x2x28xf32> to vector<2x28xf32>
    %c2_75 = arith.constant 2 : index
    %c4_76 = arith.constant 4 : index
    %c0_77 = arith.constant 0 : index
    %105 = vector.load %arg9[%c2_75, %c4_76, %c0_77] : memref<3x72x28xf32, #tpu.memory_space<vmem>>, vector<1x2x28xf32>
    %106 = vector.shape_cast %105 : vector<1x2x28xf32> to vector<2x28xf32>
    %cst_78 = arith.constant dense<0.000000e+00> : vector<2x28xf32>
    %107 = tpu.matmul %100, %32, %cst_78 {dimension_numbers = #tpu.dot_dimension_numbers<[1], [0], [0], [1], [0, 0, 1, 1], [], []>} : vector<2x28xf32>, vector<28x28xf32>, vector<2x28xf32> -> vector<2x28xf32>
    %cst_79 = arith.constant dense<0.000000e+00> : vector<2x28xf32>
    %108 = tpu.matmul %100, %34, %cst_79 {dimension_numbers = #tpu.dot_dimension_numbers<[1], [0], [0], [1], [0, 0, 1, 1], [], []>} : vector<2x28xf32>, vector<28x28xf32>, vector<2x28xf32> -> vector<2x28xf32>
    %cst_80 = arith.constant dense<0.000000e+00> : vector<2x28xf32>
    %109 = tpu.matmul %100, %36, %cst_80 {dimension_numbers = #tpu.dot_dimension_numbers<[1], [0], [0], [1], [0, 0, 1, 1], [], []>} : vector<2x28xf32>, vector<28x28xf32>, vector<2x28xf32> -> vector<2x28xf32>
    %110 = arith.addf %109, %39 : vector<2x28xf32>
    %111 = arith.addf %102, %107 : vector<2x28xf32>
    %112 = arith.negf %111 : vector<2x28xf32>
    %113 = math.exp %112 : vector<2x28xf32>
    %cst_81 = arith.constant 1.000000e+00 : f32
    %114 = vector.broadcast %cst_81 : f32 to vector<2x28xf32>
    %115 = arith.addf %114, %113 : vector<2x28xf32>
    %116 = arith.divf %114, %115 : vector<2x28xf32>
    %117 = arith.addf %104, %108 : vector<2x28xf32>
    %118 = arith.negf %117 : vector<2x28xf32>
    %119 = math.exp %118 : vector<2x28xf32>
    %cst_82 = arith.constant 1.000000e+00 : f32
    %120 = vector.broadcast %cst_82 : f32 to vector<2x28xf32>
    %121 = arith.addf %120, %119 : vector<2x28xf32>
    %122 = arith.divf %120, %121 : vector<2x28xf32>
    %123 = arith.mulf %116, %110 : vector<2x28xf32>
    %124 = arith.addf %106, %123 : vector<2x28xf32>
    %125 = math.tanh %124 : vector<2x28xf32>
    %cst_83 = arith.constant 1.000000e+00 : f32
    %126 = vector.broadcast %cst_83 : f32 to vector<2x28xf32>
    %127 = arith.subf %126, %122 : vector<2x28xf32>
    %128 = arith.mulf %127, %125 : vector<2x28xf32>
    %129 = arith.mulf %122, %100 : vector<2x28xf32>
    %130 = arith.addf %128, %129 : vector<2x28xf32>
    %c0_84 = arith.constant 0 : index
    %c6 = arith.constant 6 : index
    %c0_85 = arith.constant 0 : index
    %131 = vector.load %arg9[%c0_84, %c6, %c0_85] : memref<3x72x28xf32, #tpu.memory_space<vmem>>, vector<1x2x28xf32>
    %132 = vector.shape_cast %131 : vector<1x2x28xf32> to vector<2x28xf32>
    %c1_86 = arith.constant 1 : index
    %c6_87 = arith.constant 6 : index
    %c0_88 = arith.constant 0 : index
    %133 = vector.load %arg9[%c1_86, %c6_87, %c0_88] : memref<3x72x28xf32, #tpu.memory_space<vmem>>, vector<1x2x28xf32>
    %134 = vector.shape_cast %133 : vector<1x2x28xf32> to vector<2x28xf32>
    %c2_89 = arith.constant 2 : index
    %c6_90 = arith.constant 6 : index
    %c0_91 = arith.constant 0 : index
    %135 = vector.load %arg9[%c2_89, %c6_90, %c0_91] : memref<3x72x28xf32, #tpu.memory_space<vmem>>, vector<1x2x28xf32>
    %136 = vector.shape_cast %135 : vector<1x2x28xf32> to vector<2x28xf32>
    %cst_92 = arith.constant dense<0.000000e+00> : vector<2x28xf32>
    %137 = tpu.matmul %130, %32, %cst_92 {dimension_numbers = #tpu.dot_dimension_numbers<[1], [0], [0], [1], [0, 0, 1, 1], [], []>} : vector<2x28xf32>, vector<28x28xf32>, vector<2x28xf32> -> vector<2x28xf32>
    %cst_93 = arith.constant dense<0.000000e+00> : vector<2x28xf32>
    %138 = tpu.matmul %130, %34, %cst_93 {dimension_numbers = #tpu.dot_dimension_numbers<[1], [0], [0], [1], [0, 0, 1, 1], [], []>} : vector<2x28xf32>, vector<28x28xf32>, vector<2x28xf32> -> vector<2x28xf32>
    %cst_94 = arith.constant dense<0.000000e+00> : vector<2x28xf32>
    %139 = tpu.matmul %130, %36, %cst_94 {dimension_numbers = #tpu.dot_dimension_numbers<[1], [0], [0], [1], [0, 0, 1, 1], [], []>} : vector<2x28xf32>, vector<28x28xf32>, vector<2x28xf32> -> vector<2x28xf32>
    %140 = arith.addf %139, %39 : vector<2x28xf32>
    %141 = arith.addf %132, %137 : vector<2x28xf32>
    %142 = arith.negf %141 : vector<2x28xf32>
    %143 = math.exp %142 : vector<2x28xf32>
    %cst_95 = arith.constant 1.000000e+00 : f32
    %144 = vector.broadcast %cst_95 : f32 to vector<2x28xf32>
    %145 = arith.addf %144, %143 : vector<2x28xf32>
    %146 = arith.divf %144, %145 : vector<2x28xf32>
    %147 = arith.addf %134, %138 : vector<2x28xf32>
    %148 = arith.negf %147 : vector<2x28xf32>
    %149 = math.exp %148 : vector<2x28xf32>
    %cst_96 = arith.constant 1.000000e+00 : f32
    %150 = vector.broadcast %cst_96 : f32 to vector<2x28xf32>
    %151 = arith.addf %150, %149 : vector<2x28xf32>
    %152 = arith.divf %150, %151 : vector<2x28xf32>
    %153 = arith.mulf %146, %140 : vector<2x28xf32>
    %154 = arith.addf %136, %153 : vector<2x28xf32>
    %155 = math.tanh %154 : vector<2x28xf32>
    %cst_97 = arith.constant 1.000000e+00 : f32
    %156 = vector.broadcast %cst_97 : f32 to vector<2x28xf32>
    %157 = arith.subf %156, %152 : vector<2x28xf32>
    %158 = arith.mulf %157, %155 : vector<2x28xf32>
    %159 = arith.mulf %152, %130 : vector<2x28xf32>
    %160 = arith.addf %158, %159 : vector<2x28xf32>
    %c0_98 = arith.constant 0 : index
    %c8 = arith.constant 8 : index
    %c0_99 = arith.constant 0 : index
    %161 = vector.load %arg9[%c0_98, %c8, %c0_99] : memref<3x72x28xf32, #tpu.memory_space<vmem>>, vector<1x2x28xf32>
    %162 = vector.shape_cast %161 : vector<1x2x28xf32> to vector<2x28xf32>
    %c1_100 = arith.constant 1 : index
    %c8_101 = arith.constant 8 : index
    %c0_102 = arith.constant 0 : index
    %163 = vector.load %arg9[%c1_100, %c8_101, %c0_102] : memref<3x72x28xf32, #tpu.memory_space<vmem>>, vector<1x2x28xf32>
    %164 = vector.shape_cast %163 : vector<1x2x28xf32> to vector<2x28xf32>
    %c2_103 = arith.constant 2 : index
    %c8_104 = arith.constant 8 : index
    %c0_105 = arith.constant 0 : index
    %165 = vector.load %arg9[%c2_103, %c8_104, %c0_105] : memref<3x72x28xf32, #tpu.memory_space<vmem>>, vector<1x2x28xf32>
    %166 = vector.shape_cast %165 : vector<1x2x28xf32> to vector<2x28xf32>
    %cst_106 = arith.constant dense<0.000000e+00> : vector<2x28xf32>
    %167 = tpu.matmul %160, %32, %cst_106 {dimension_numbers = #tpu.dot_dimension_numbers<[1], [0], [0], [1], [0, 0, 1, 1], [], []>} : vector<2x28xf32>, vector<28x28xf32>, vector<2x28xf32> -> vector<2x28xf32>
    %cst_107 = arith.constant dense<0.000000e+00> : vector<2x28xf32>
    %168 = tpu.matmul %160, %34, %cst_107 {dimension_numbers = #tpu.dot_dimension_numbers<[1], [0], [0], [1], [0, 0, 1, 1], [], []>} : vector<2x28xf32>, vector<28x28xf32>, vector<2x28xf32> -> vector<2x28xf32>
    %cst_108 = arith.constant dense<0.000000e+00> : vector<2x28xf32>
    %169 = tpu.matmul %160, %36, %cst_108 {dimension_numbers = #tpu.dot_dimension_numbers<[1], [0], [0], [1], [0, 0, 1, 1], [], []>} : vector<2x28xf32>, vector<28x28xf32>, vector<2x28xf32> -> vector<2x28xf32>
    %170 = arith.addf %169, %39 : vector<2x28xf32>
    %171 = arith.addf %162, %167 : vector<2x28xf32>
    %172 = arith.negf %171 : vector<2x28xf32>
    %173 = math.exp %172 : vector<2x28xf32>
    %cst_109 = arith.constant 1.000000e+00 : f32
    %174 = vector.broadcast %cst_109 : f32 to vector<2x28xf32>
    %175 = arith.addf %174, %173 : vector<2x28xf32>
    %176 = arith.divf %174, %175 : vector<2x28xf32>
    %177 = arith.addf %164, %168 : vector<2x28xf32>
    %178 = arith.negf %177 : vector<2x28xf32>
    %179 = math.exp %178 : vector<2x28xf32>
    %cst_110 = arith.constant 1.000000e+00 : f32
    %180 = vector.broadcast %cst_110 : f32 to vector<2x28xf32>
    %181 = arith.addf %180, %179 : vector<2x28xf32>
    %182 = arith.divf %180, %181 : vector<2x28xf32>
    %183 = arith.mulf %176, %170 : vector<2x28xf32>
    %184 = arith.addf %166, %183 : vector<2x28xf32>
    %185 = math.tanh %184 : vector<2x28xf32>
    %cst_111 = arith.constant 1.000000e+00 : f32
    %186 = vector.broadcast %cst_111 : f32 to vector<2x28xf32>
    %187 = arith.subf %186, %182 : vector<2x28xf32>
    %188 = arith.mulf %187, %185 : vector<2x28xf32>
    %189 = arith.mulf %182, %160 : vector<2x28xf32>
    %190 = arith.addf %188, %189 : vector<2x28xf32>
    %c0_112 = arith.constant 0 : index
    %c10 = arith.constant 10 : index
    %c0_113 = arith.constant 0 : index
    %191 = vector.load %arg9[%c0_112, %c10, %c0_113] : memref<3x72x28xf32, #tpu.memory_space<vmem>>, vector<1x2x28xf32>
    %192 = vector.shape_cast %191 : vector<1x2x28xf32> to vector<2x28xf32>
    %c1_114 = arith.constant 1 : index
    %c10_115 = arith.constant 10 : index
    %c0_116 = arith.constant 0 : index
    %193 = vector.load %arg9[%c1_114, %c10_115, %c0_116] : memref<3x72x28xf32, #tpu.memory_space<vmem>>, vector<1x2x28xf32>
    %194 = vector.shape_cast %193 : vector<1x2x28xf32> to vector<2x28xf32>
    %c2_117 = arith.constant 2 : index
    %c10_118 = arith.constant 10 : index
    %c0_119 = arith.constant 0 : index
    %195 = vector.load %arg9[%c2_117, %c10_118, %c0_119] : memref<3x72x28xf32, #tpu.memory_space<vmem>>, vector<1x2x28xf32>
    %196 = vector.shape_cast %195 : vector<1x2x28xf32> to vector<2x28xf32>
    %cst_120 = arith.constant dense<0.000000e+00> : vector<2x28xf32>
    %197 = tpu.matmul %190, %32, %cst_120 {dimension_numbers = #tpu.dot_dimension_numbers<[1], [0], [0], [1], [0, 0, 1, 1], [], []>} : vector<2x28xf32>, vector<28x28xf32>, vector<2x28xf32> -> vector<2x28xf32>
    %cst_121 = arith.constant dense<0.000000e+00> : vector<2x28xf32>
    %198 = tpu.matmul %190, %34, %cst_121 {dimension_numbers = #tpu.dot_dimension_numbers<[1], [0], [0], [1], [0, 0, 1, 1], [], []>} : vector<2x28xf32>, vector<28x28xf32>, vector<2x28xf32> -> vector<2x28xf32>
    %cst_122 = arith.constant dense<0.000000e+00> : vector<2x28xf32>
    %199 = tpu.matmul %190, %36, %cst_122 {dimension_numbers = #tpu.dot_dimension_numbers<[1], [0], [0], [1], [0, 0, 1, 1], [], []>} : vector<2x28xf32>, vector<28x28xf32>, vector<2x28xf32> -> vector<2x28xf32>
    %200 = arith.addf %199, %39 : vector<2x28xf32>
    %201 = arith.addf %192, %197 : vector<2x28xf32>
    %202 = arith.negf %201 : vector<2x28xf32>
    %203 = math.exp %202 : vector<2x28xf32>
    %cst_123 = arith.constant 1.000000e+00 : f32
    %204 = vector.broadcast %cst_123 : f32 to vector<2x28xf32>
    %205 = arith.addf %204, %203 : vector<2x28xf32>
    %206 = arith.divf %204, %205 : vector<2x28xf32>
    %207 = arith.addf %194, %198 : vector<2x28xf32>
    %208 = arith.negf %207 : vector<2x28xf32>
    %209 = math.exp %208 : vector<2x28xf32>
    %cst_124 = arith.constant 1.000000e+00 : f32
    %210 = vector.broadcast %cst_124 : f32 to vector<2x28xf32>
    %211 = arith.addf %210, %209 : vector<2x28xf32>
    %212 = arith.divf %210, %211 : vector<2x28xf32>
    %213 = arith.mulf %206, %200 : vector<2x28xf32>
    %214 = arith.addf %196, %213 : vector<2x28xf32>
    %215 = math.tanh %214 : vector<2x28xf32>
    %cst_125 = arith.constant 1.000000e+00 : f32
    %216 = vector.broadcast %cst_125 : f32 to vector<2x28xf32>
    %217 = arith.subf %216, %212 : vector<2x28xf32>
    %218 = arith.mulf %217, %215 : vector<2x28xf32>
    %219 = arith.mulf %212, %190 : vector<2x28xf32>
    %220 = arith.addf %218, %219 : vector<2x28xf32>
    %c0_126 = arith.constant 0 : index
    %c12 = arith.constant 12 : index
    %c0_127 = arith.constant 0 : index
    %221 = vector.load %arg9[%c0_126, %c12, %c0_127] : memref<3x72x28xf32, #tpu.memory_space<vmem>>, vector<1x2x28xf32>
    %222 = vector.shape_cast %221 : vector<1x2x28xf32> to vector<2x28xf32>
    %c1_128 = arith.constant 1 : index
    %c12_129 = arith.constant 12 : index
    %c0_130 = arith.constant 0 : index
    %223 = vector.load %arg9[%c1_128, %c12_129, %c0_130] : memref<3x72x28xf32, #tpu.memory_space<vmem>>, vector<1x2x28xf32>
    %224 = vector.shape_cast %223 : vector<1x2x28xf32> to vector<2x28xf32>
    %c2_131 = arith.constant 2 : index
    %c12_132 = arith.constant 12 : index
    %c0_133 = arith.constant 0 : index
    %225 = vector.load %arg9[%c2_131, %c12_132, %c0_133] : memref<3x72x28xf32, #tpu.memory_space<vmem>>, vector<1x2x28xf32>
    %226 = vector.shape_cast %225 : vector<1x2x28xf32> to vector<2x28xf32>
    %cst_134 = arith.constant dense<0.000000e+00> : vector<2x28xf32>
    %227 = tpu.matmul %220, %32, %cst_134 {dimension_numbers = #tpu.dot_dimension_numbers<[1], [0], [0], [1], [0, 0, 1, 1], [], []>} : vector<2x28xf32>, vector<28x28xf32>, vector<2x28xf32> -> vector<2x28xf32>
    %cst_135 = arith.constant dense<0.000000e+00> : vector<2x28xf32>
    %228 = tpu.matmul %220, %34, %cst_135 {dimension_numbers = #tpu.dot_dimension_numbers<[1], [0], [0], [1], [0, 0, 1, 1], [], []>} : vector<2x28xf32>, vector<28x28xf32>, vector<2x28xf32> -> vector<2x28xf32>
    %cst_136 = arith.constant dense<0.000000e+00> : vector<2x28xf32>
    %229 = tpu.matmul %220, %36, %cst_136 {dimension_numbers = #tpu.dot_dimension_numbers<[1], [0], [0], [1], [0, 0, 1, 1], [], []>} : vector<2x28xf32>, vector<28x28xf32>, vector<2x28xf32> -> vector<2x28xf32>
    %230 = arith.addf %229, %39 : vector<2x28xf32>
    %231 = arith.addf %222, %227 : vector<2x28xf32>
    %232 = arith.negf %231 : vector<2x28xf32>
    %233 = math.exp %232 : vector<2x28xf32>
    %cst_137 = arith.constant 1.000000e+00 : f32
    %234 = vector.broadcast %cst_137 : f32 to vector<2x28xf32>
    %235 = arith.addf %234, %233 : vector<2x28xf32>
    %236 = arith.divf %234, %235 : vector<2x28xf32>
    %237 = arith.addf %224, %228 : vector<2x28xf32>
    %238 = arith.negf %237 : vector<2x28xf32>
    %239 = math.exp %238 : vector<2x28xf32>
    %cst_138 = arith.constant 1.000000e+00 : f32
    %240 = vector.broadcast %cst_138 : f32 to vector<2x28xf32>
    %241 = arith.addf %240, %239 : vector<2x28xf32>
    %242 = arith.divf %240, %241 : vector<2x28xf32>
    %243 = arith.mulf %236, %230 : vector<2x28xf32>
    %244 = arith.addf %226, %243 : vector<2x28xf32>
    %245 = math.tanh %244 : vector<2x28xf32>
    %cst_139 = arith.constant 1.000000e+00 : f32
    %246 = vector.broadcast %cst_139 : f32 to vector<2x28xf32>
    %247 = arith.subf %246, %242 : vector<2x28xf32>
    %248 = arith.mulf %247, %245 : vector<2x28xf32>
    %249 = arith.mulf %242, %220 : vector<2x28xf32>
    %250 = arith.addf %248, %249 : vector<2x28xf32>
    %c0_140 = arith.constant 0 : index
    %c14 = arith.constant 14 : index
    %c0_141 = arith.constant 0 : index
    %251 = vector.load %arg9[%c0_140, %c14, %c0_141] : memref<3x72x28xf32, #tpu.memory_space<vmem>>, vector<1x2x28xf32>
    %252 = vector.shape_cast %251 : vector<1x2x28xf32> to vector<2x28xf32>
    %c1_142 = arith.constant 1 : index
    %c14_143 = arith.constant 14 : index
    %c0_144 = arith.constant 0 : index
    %253 = vector.load %arg9[%c1_142, %c14_143, %c0_144] : memref<3x72x28xf32, #tpu.memory_space<vmem>>, vector<1x2x28xf32>
    %254 = vector.shape_cast %253 : vector<1x2x28xf32> to vector<2x28xf32>
    %c2_145 = arith.constant 2 : index
    %c14_146 = arith.constant 14 : index
    %c0_147 = arith.constant 0 : index
    %255 = vector.load %arg9[%c2_145, %c14_146, %c0_147] : memref<3x72x28xf32, #tpu.memory_space<vmem>>, vector<1x2x28xf32>
    %256 = vector.shape_cast %255 : vector<1x2x28xf32> to vector<2x28xf32>
    %cst_148 = arith.constant dense<0.000000e+00> : vector<2x28xf32>
    %257 = tpu.matmul %250, %32, %cst_148 {dimension_numbers = #tpu.dot_dimension_numbers<[1], [0], [0], [1], [0, 0, 1, 1], [], []>} : vector<2x28xf32>, vector<28x28xf32>, vector<2x28xf32> -> vector<2x28xf32>
    %cst_149 = arith.constant dense<0.000000e+00> : vector<2x28xf32>
    %258 = tpu.matmul %250, %34, %cst_149 {dimension_numbers = #tpu.dot_dimension_numbers<[1], [0], [0], [1], [0, 0, 1, 1], [], []>} : vector<2x28xf32>, vector<28x28xf32>, vector<2x28xf32> -> vector<2x28xf32>
    %cst_150 = arith.constant dense<0.000000e+00> : vector<2x28xf32>
    %259 = tpu.matmul %250, %36, %cst_150 {dimension_numbers = #tpu.dot_dimension_numbers<[1], [0], [0], [1], [0, 0, 1, 1], [], []>} : vector<2x28xf32>, vector<28x28xf32>, vector<2x28xf32> -> vector<2x28xf32>
    %260 = arith.addf %259, %39 : vector<2x28xf32>
    %261 = arith.addf %252, %257 : vector<2x28xf32>
    %262 = arith.negf %261 : vector<2x28xf32>
    %263 = math.exp %262 : vector<2x28xf32>
    %cst_151 = arith.constant 1.000000e+00 : f32
    %264 = vector.broadcast %cst_151 : f32 to vector<2x28xf32>
    %265 = arith.addf %264, %263 : vector<2x28xf32>
    %266 = arith.divf %264, %265 : vector<2x28xf32>
    %267 = arith.addf %254, %258 : vector<2x28xf32>
    %268 = arith.negf %267 : vector<2x28xf32>
    %269 = math.exp %268 : vector<2x28xf32>
    %cst_152 = arith.constant 1.000000e+00 : f32
    %270 = vector.broadcast %cst_152 : f32 to vector<2x28xf32>
    %271 = arith.addf %270, %269 : vector<2x28xf32>
    %272 = arith.divf %270, %271 : vector<2x28xf32>
    %273 = arith.mulf %266, %260 : vector<2x28xf32>
    %274 = arith.addf %256, %273 : vector<2x28xf32>
    %275 = math.tanh %274 : vector<2x28xf32>
    %cst_153 = arith.constant 1.000000e+00 : f32
    %276 = vector.broadcast %cst_153 : f32 to vector<2x28xf32>
    %277 = arith.subf %276, %272 : vector<2x28xf32>
    %278 = arith.mulf %277, %275 : vector<2x28xf32>
    %279 = arith.mulf %272, %250 : vector<2x28xf32>
    %280 = arith.addf %278, %279 : vector<2x28xf32>
    %c0_154 = arith.constant 0 : index
    %c16 = arith.constant 16 : index
    %c0_155 = arith.constant 0 : index
    %281 = vector.load %arg9[%c0_154, %c16, %c0_155] : memref<3x72x28xf32, #tpu.memory_space<vmem>>, vector<1x2x28xf32>
    %282 = vector.shape_cast %281 : vector<1x2x28xf32> to vector<2x28xf32>
    %c1_156 = arith.constant 1 : index
    %c16_157 = arith.constant 16 : index
    %c0_158 = arith.constant 0 : index
    %283 = vector.load %arg9[%c1_156, %c16_157, %c0_158] : memref<3x72x28xf32, #tpu.memory_space<vmem>>, vector<1x2x28xf32>
    %284 = vector.shape_cast %283 : vector<1x2x28xf32> to vector<2x28xf32>
    %c2_159 = arith.constant 2 : index
    %c16_160 = arith.constant 16 : index
    %c0_161 = arith.constant 0 : index
    %285 = vector.load %arg9[%c2_159, %c16_160, %c0_161] : memref<3x72x28xf32, #tpu.memory_space<vmem>>, vector<1x2x28xf32>
    %286 = vector.shape_cast %285 : vector<1x2x28xf32> to vector<2x28xf32>
    %cst_162 = arith.constant dense<0.000000e+00> : vector<2x28xf32>
    %287 = tpu.matmul %280, %32, %cst_162 {dimension_numbers = #tpu.dot_dimension_numbers<[1], [0], [0], [1], [0, 0, 1, 1], [], []>} : vector<2x28xf32>, vector<28x28xf32>, vector<2x28xf32> -> vector<2x28xf32>
    %cst_163 = arith.constant dense<0.000000e+00> : vector<2x28xf32>
    %288 = tpu.matmul %280, %34, %cst_163 {dimension_numbers = #tpu.dot_dimension_numbers<[1], [0], [0], [1], [0, 0, 1, 1], [], []>} : vector<2x28xf32>, vector<28x28xf32>, vector<2x28xf32> -> vector<2x28xf32>
    %cst_164 = arith.constant dense<0.000000e+00> : vector<2x28xf32>
    %289 = tpu.matmul %280, %36, %cst_164 {dimension_numbers = #tpu.dot_dimension_numbers<[1], [0], [0], [1], [0, 0, 1, 1], [], []>} : vector<2x28xf32>, vector<28x28xf32>, vector<2x28xf32> -> vector<2x28xf32>
    %290 = arith.addf %289, %39 : vector<2x28xf32>
    %291 = arith.addf %282, %287 : vector<2x28xf32>
    %292 = arith.negf %291 : vector<2x28xf32>
    %293 = math.exp %292 : vector<2x28xf32>
    %cst_165 = arith.constant 1.000000e+00 : f32
    %294 = vector.broadcast %cst_165 : f32 to vector<2x28xf32>
    %295 = arith.addf %294, %293 : vector<2x28xf32>
    %296 = arith.divf %294, %295 : vector<2x28xf32>
    %297 = arith.addf %284, %288 : vector<2x28xf32>
    %298 = arith.negf %297 : vector<2x28xf32>
    %299 = math.exp %298 : vector<2x28xf32>
    %cst_166 = arith.constant 1.000000e+00 : f32
    %300 = vector.broadcast %cst_166 : f32 to vector<2x28xf32>
    %301 = arith.addf %300, %299 : vector<2x28xf32>
    %302 = arith.divf %300, %301 : vector<2x28xf32>
    %303 = arith.mulf %296, %290 : vector<2x28xf32>
    %304 = arith.addf %286, %303 : vector<2x28xf32>
    %305 = math.tanh %304 : vector<2x28xf32>
    %cst_167 = arith.constant 1.000000e+00 : f32
    %306 = vector.broadcast %cst_167 : f32 to vector<2x28xf32>
    %307 = arith.subf %306, %302 : vector<2x28xf32>
    %308 = arith.mulf %307, %305 : vector<2x28xf32>
    %309 = arith.mulf %302, %280 : vector<2x28xf32>
    %310 = arith.addf %308, %309 : vector<2x28xf32>
    %c0_168 = arith.constant 0 : index
    %c18 = arith.constant 18 : index
    %c0_169 = arith.constant 0 : index
    %311 = vector.load %arg9[%c0_168, %c18, %c0_169] : memref<3x72x28xf32, #tpu.memory_space<vmem>>, vector<1x2x28xf32>
    %312 = vector.shape_cast %311 : vector<1x2x28xf32> to vector<2x28xf32>
    %c1_170 = arith.constant 1 : index
    %c18_171 = arith.constant 18 : index
    %c0_172 = arith.constant 0 : index
    %313 = vector.load %arg9[%c1_170, %c18_171, %c0_172] : memref<3x72x28xf32, #tpu.memory_space<vmem>>, vector<1x2x28xf32>
    %314 = vector.shape_cast %313 : vector<1x2x28xf32> to vector<2x28xf32>
    %c2_173 = arith.constant 2 : index
    %c18_174 = arith.constant 18 : index
    %c0_175 = arith.constant 0 : index
    %315 = vector.load %arg9[%c2_173, %c18_174, %c0_175] : memref<3x72x28xf32, #tpu.memory_space<vmem>>, vector<1x2x28xf32>
    %316 = vector.shape_cast %315 : vector<1x2x28xf32> to vector<2x28xf32>
    %cst_176 = arith.constant dense<0.000000e+00> : vector<2x28xf32>
    %317 = tpu.matmul %310, %32, %cst_176 {dimension_numbers = #tpu.dot_dimension_numbers<[1], [0], [0], [1], [0, 0, 1, 1], [], []>} : vector<2x28xf32>, vector<28x28xf32>, vector<2x28xf32> -> vector<2x28xf32>
    %cst_177 = arith.constant dense<0.000000e+00> : vector<2x28xf32>
    %318 = tpu.matmul %310, %34, %cst_177 {dimension_numbers = #tpu.dot_dimension_numbers<[1], [0], [0], [1], [0, 0, 1, 1], [], []>} : vector<2x28xf32>, vector<28x28xf32>, vector<2x28xf32> -> vector<2x28xf32>
    %cst_178 = arith.constant dense<0.000000e+00> : vector<2x28xf32>
    %319 = tpu.matmul %310, %36, %cst_178 {dimension_numbers = #tpu.dot_dimension_numbers<[1], [0], [0], [1], [0, 0, 1, 1], [], []>} : vector<2x28xf32>, vector<28x28xf32>, vector<2x28xf32> -> vector<2x28xf32>
    %320 = arith.addf %319, %39 : vector<2x28xf32>
    %321 = arith.addf %312, %317 : vector<2x28xf32>
    %322 = arith.negf %321 : vector<2x28xf32>
    %323 = math.exp %322 : vector<2x28xf32>
    %cst_179 = arith.constant 1.000000e+00 : f32
    %324 = vector.broadcast %cst_179 : f32 to vector<2x28xf32>
    %325 = arith.addf %324, %323 : vector<2x28xf32>
    %326 = arith.divf %324, %325 : vector<2x28xf32>
    %327 = arith.addf %314, %318 : vector<2x28xf32>
    %328 = arith.negf %327 : vector<2x28xf32>
    %329 = math.exp %328 : vector<2x28xf32>
    %cst_180 = arith.constant 1.000000e+00 : f32
    %330 = vector.broadcast %cst_180 : f32 to vector<2x28xf32>
    %331 = arith.addf %330, %329 : vector<2x28xf32>
    %332 = arith.divf %330, %331 : vector<2x28xf32>
    %333 = arith.mulf %326, %320 : vector<2x28xf32>
    %334 = arith.addf %316, %333 : vector<2x28xf32>
    %335 = math.tanh %334 : vector<2x28xf32>
    %cst_181 = arith.constant 1.000000e+00 : f32
    %336 = vector.broadcast %cst_181 : f32 to vector<2x28xf32>
    %337 = arith.subf %336, %332 : vector<2x28xf32>
    %338 = arith.mulf %337, %335 : vector<2x28xf32>
    %339 = arith.mulf %332, %310 : vector<2x28xf32>
    %340 = arith.addf %338, %339 : vector<2x28xf32>
    %c0_182 = arith.constant 0 : index
    %c20 = arith.constant 20 : index
    %c0_183 = arith.constant 0 : index
    %341 = vector.load %arg9[%c0_182, %c20, %c0_183] : memref<3x72x28xf32, #tpu.memory_space<vmem>>, vector<1x2x28xf32>
    %342 = vector.shape_cast %341 : vector<1x2x28xf32> to vector<2x28xf32>
    %c1_184 = arith.constant 1 : index
    %c20_185 = arith.constant 20 : index
    %c0_186 = arith.constant 0 : index
    %343 = vector.load %arg9[%c1_184, %c20_185, %c0_186] : memref<3x72x28xf32, #tpu.memory_space<vmem>>, vector<1x2x28xf32>
    %344 = vector.shape_cast %343 : vector<1x2x28xf32> to vector<2x28xf32>
    %c2_187 = arith.constant 2 : index
    %c20_188 = arith.constant 20 : index
    %c0_189 = arith.constant 0 : index
    %345 = vector.load %arg9[%c2_187, %c20_188, %c0_189] : memref<3x72x28xf32, #tpu.memory_space<vmem>>, vector<1x2x28xf32>
    %346 = vector.shape_cast %345 : vector<1x2x28xf32> to vector<2x28xf32>
    %cst_190 = arith.constant dense<0.000000e+00> : vector<2x28xf32>
    %347 = tpu.matmul %340, %32, %cst_190 {dimension_numbers = #tpu.dot_dimension_numbers<[1], [0], [0], [1], [0, 0, 1, 1], [], []>} : vector<2x28xf32>, vector<28x28xf32>, vector<2x28xf32> -> vector<2x28xf32>
    %cst_191 = arith.constant dense<0.000000e+00> : vector<2x28xf32>
    %348 = tpu.matmul %340, %34, %cst_191 {dimension_numbers = #tpu.dot_dimension_numbers<[1], [0], [0], [1], [0, 0, 1, 1], [], []>} : vector<2x28xf32>, vector<28x28xf32>, vector<2x28xf32> -> vector<2x28xf32>
    %cst_192 = arith.constant dense<0.000000e+00> : vector<2x28xf32>
    %349 = tpu.matmul %340, %36, %cst_192 {dimension_numbers = #tpu.dot_dimension_numbers<[1], [0], [0], [1], [0, 0, 1, 1], [], []>} : vector<2x28xf32>, vector<28x28xf32>, vector<2x28xf32> -> vector<2x28xf32>
    %350 = arith.addf %349, %39 : vector<2x28xf32>
    %351 = arith.addf %342, %347 : vector<2x28xf32>
    %352 = arith.negf %351 : vector<2x28xf32>
    %353 = math.exp %352 : vector<2x28xf32>
    %cst_193 = arith.constant 1.000000e+00 : f32
    %354 = vector.broadcast %cst_193 : f32 to vector<2x28xf32>
    %355 = arith.addf %354, %353 : vector<2x28xf32>
    %356 = arith.divf %354, %355 : vector<2x28xf32>
    %357 = arith.addf %344, %348 : vector<2x28xf32>
    %358 = arith.negf %357 : vector<2x28xf32>
    %359 = math.exp %358 : vector<2x28xf32>
    %cst_194 = arith.constant 1.000000e+00 : f32
    %360 = vector.broadcast %cst_194 : f32 to vector<2x28xf32>
    %361 = arith.addf %360, %359 : vector<2x28xf32>
    %362 = arith.divf %360, %361 : vector<2x28xf32>
    %363 = arith.mulf %356, %350 : vector<2x28xf32>
    %364 = arith.addf %346, %363 : vector<2x28xf32>
    %365 = math.tanh %364 : vector<2x28xf32>
    %cst_195 = arith.constant 1.000000e+00 : f32
    %366 = vector.broadcast %cst_195 : f32 to vector<2x28xf32>
    %367 = arith.subf %366, %362 : vector<2x28xf32>
    %368 = arith.mulf %367, %365 : vector<2x28xf32>
    %369 = arith.mulf %362, %340 : vector<2x28xf32>
    %370 = arith.addf %368, %369 : vector<2x28xf32>
    %c0_196 = arith.constant 0 : index
    %c22 = arith.constant 22 : index
    %c0_197 = arith.constant 0 : index
    %371 = vector.load %arg9[%c0_196, %c22, %c0_197] : memref<3x72x28xf32, #tpu.memory_space<vmem>>, vector<1x2x28xf32>
    %372 = vector.shape_cast %371 : vector<1x2x28xf32> to vector<2x28xf32>
    %c1_198 = arith.constant 1 : index
    %c22_199 = arith.constant 22 : index
    %c0_200 = arith.constant 0 : index
    %373 = vector.load %arg9[%c1_198, %c22_199, %c0_200] : memref<3x72x28xf32, #tpu.memory_space<vmem>>, vector<1x2x28xf32>
    %374 = vector.shape_cast %373 : vector<1x2x28xf32> to vector<2x28xf32>
    %c2_201 = arith.constant 2 : index
    %c22_202 = arith.constant 22 : index
    %c0_203 = arith.constant 0 : index
    %375 = vector.load %arg9[%c2_201, %c22_202, %c0_203] : memref<3x72x28xf32, #tpu.memory_space<vmem>>, vector<1x2x28xf32>
    %376 = vector.shape_cast %375 : vector<1x2x28xf32> to vector<2x28xf32>
    %cst_204 = arith.constant dense<0.000000e+00> : vector<2x28xf32>
    %377 = tpu.matmul %370, %32, %cst_204 {dimension_numbers = #tpu.dot_dimension_numbers<[1], [0], [0], [1], [0, 0, 1, 1], [], []>} : vector<2x28xf32>, vector<28x28xf32>, vector<2x28xf32> -> vector<2x28xf32>
    %cst_205 = arith.constant dense<0.000000e+00> : vector<2x28xf32>
    %378 = tpu.matmul %370, %34, %cst_205 {dimension_numbers = #tpu.dot_dimension_numbers<[1], [0], [0], [1], [0, 0, 1, 1], [], []>} : vector<2x28xf32>, vector<28x28xf32>, vector<2x28xf32> -> vector<2x28xf32>
    %cst_206 = arith.constant dense<0.000000e+00> : vector<2x28xf32>
    %379 = tpu.matmul %370, %36, %cst_206 {dimension_numbers = #tpu.dot_dimension_numbers<[1], [0], [0], [1], [0, 0, 1, 1], [], []>} : vector<2x28xf32>, vector<28x28xf32>, vector<2x28xf32> -> vector<2x28xf32>
    %380 = arith.addf %379, %39 : vector<2x28xf32>
    %381 = arith.addf %372, %377 : vector<2x28xf32>
    %382 = arith.negf %381 : vector<2x28xf32>
    %383 = math.exp %382 : vector<2x28xf32>
    %cst_207 = arith.constant 1.000000e+00 : f32
    %384 = vector.broadcast %cst_207 : f32 to vector<2x28xf32>
    %385 = arith.addf %384, %383 : vector<2x28xf32>
    %386 = arith.divf %384, %385 : vector<2x28xf32>
    %387 = arith.addf %374, %378 : vector<2x28xf32>
    %388 = arith.negf %387 : vector<2x28xf32>
    %389 = math.exp %388 : vector<2x28xf32>
    %cst_208 = arith.constant 1.000000e+00 : f32
    %390 = vector.broadcast %cst_208 : f32 to vector<2x28xf32>
    %391 = arith.addf %390, %389 : vector<2x28xf32>
    %392 = arith.divf %390, %391 : vector<2x28xf32>
    %393 = arith.mulf %386, %380 : vector<2x28xf32>
    %394 = arith.addf %376, %393 : vector<2x28xf32>
    %395 = math.tanh %394 : vector<2x28xf32>
    %cst_209 = arith.constant 1.000000e+00 : f32
    %396 = vector.broadcast %cst_209 : f32 to vector<2x28xf32>
    %397 = arith.subf %396, %392 : vector<2x28xf32>
    %398 = arith.mulf %397, %395 : vector<2x28xf32>
    %399 = arith.mulf %392, %370 : vector<2x28xf32>
    %400 = arith.addf %398, %399 : vector<2x28xf32>
    %c0_210 = arith.constant 0 : index
    %c24 = arith.constant 24 : index
    %c0_211 = arith.constant 0 : index
    %401 = vector.load %arg9[%c0_210, %c24, %c0_211] : memref<3x72x28xf32, #tpu.memory_space<vmem>>, vector<1x2x28xf32>
    %402 = vector.shape_cast %401 : vector<1x2x28xf32> to vector<2x28xf32>
    %c1_212 = arith.constant 1 : index
    %c24_213 = arith.constant 24 : index
    %c0_214 = arith.constant 0 : index
    %403 = vector.load %arg9[%c1_212, %c24_213, %c0_214] : memref<3x72x28xf32, #tpu.memory_space<vmem>>, vector<1x2x28xf32>
    %404 = vector.shape_cast %403 : vector<1x2x28xf32> to vector<2x28xf32>
    %c2_215 = arith.constant 2 : index
    %c24_216 = arith.constant 24 : index
    %c0_217 = arith.constant 0 : index
    %405 = vector.load %arg9[%c2_215, %c24_216, %c0_217] : memref<3x72x28xf32, #tpu.memory_space<vmem>>, vector<1x2x28xf32>
    %406 = vector.shape_cast %405 : vector<1x2x28xf32> to vector<2x28xf32>
    %cst_218 = arith.constant dense<0.000000e+00> : vector<2x28xf32>
    %407 = tpu.matmul %400, %32, %cst_218 {dimension_numbers = #tpu.dot_dimension_numbers<[1], [0], [0], [1], [0, 0, 1, 1], [], []>} : vector<2x28xf32>, vector<28x28xf32>, vector<2x28xf32> -> vector<2x28xf32>
    %cst_219 = arith.constant dense<0.000000e+00> : vector<2x28xf32>
    %408 = tpu.matmul %400, %34, %cst_219 {dimension_numbers = #tpu.dot_dimension_numbers<[1], [0], [0], [1], [0, 0, 1, 1], [], []>} : vector<2x28xf32>, vector<28x28xf32>, vector<2x28xf32> -> vector<2x28xf32>
    %cst_220 = arith.constant dense<0.000000e+00> : vector<2x28xf32>
    %409 = tpu.matmul %400, %36, %cst_220 {dimension_numbers = #tpu.dot_dimension_numbers<[1], [0], [0], [1], [0, 0, 1, 1], [], []>} : vector<2x28xf32>, vector<28x28xf32>, vector<2x28xf32> -> vector<2x28xf32>
    %410 = arith.addf %409, %39 : vector<2x28xf32>
    %411 = arith.addf %402, %407 : vector<2x28xf32>
    %412 = arith.negf %411 : vector<2x28xf32>
    %413 = math.exp %412 : vector<2x28xf32>
    %cst_221 = arith.constant 1.000000e+00 : f32
    %414 = vector.broadcast %cst_221 : f32 to vector<2x28xf32>
    %415 = arith.addf %414, %413 : vector<2x28xf32>
    %416 = arith.divf %414, %415 : vector<2x28xf32>
    %417 = arith.addf %404, %408 : vector<2x28xf32>
    %418 = arith.negf %417 : vector<2x28xf32>
    %419 = math.exp %418 : vector<2x28xf32>
    %cst_222 = arith.constant 1.000000e+00 : f32
    %420 = vector.broadcast %cst_222 : f32 to vector<2x28xf32>
    %421 = arith.addf %420, %419 : vector<2x28xf32>
    %422 = arith.divf %420, %421 : vector<2x28xf32>
    %423 = arith.mulf %416, %410 : vector<2x28xf32>
    %424 = arith.addf %406, %423 : vector<2x28xf32>
    %425 = math.tanh %424 : vector<2x28xf32>
    %cst_223 = arith.constant 1.000000e+00 : f32
    %426 = vector.broadcast %cst_223 : f32 to vector<2x28xf32>
    %427 = arith.subf %426, %422 : vector<2x28xf32>
    %428 = arith.mulf %427, %425 : vector<2x28xf32>
    %429 = arith.mulf %422, %400 : vector<2x28xf32>
    %430 = arith.addf %428, %429 : vector<2x28xf32>
    %c0_224 = arith.constant 0 : index
    %c26 = arith.constant 26 : index
    %c0_225 = arith.constant 0 : index
    %431 = vector.load %arg9[%c0_224, %c26, %c0_225] : memref<3x72x28xf32, #tpu.memory_space<vmem>>, vector<1x2x28xf32>
    %432 = vector.shape_cast %431 : vector<1x2x28xf32> to vector<2x28xf32>
    %c1_226 = arith.constant 1 : index
    %c26_227 = arith.constant 26 : index
    %c0_228 = arith.constant 0 : index
    %433 = vector.load %arg9[%c1_226, %c26_227, %c0_228] : memref<3x72x28xf32, #tpu.memory_space<vmem>>, vector<1x2x28xf32>
    %434 = vector.shape_cast %433 : vector<1x2x28xf32> to vector<2x28xf32>
    %c2_229 = arith.constant 2 : index
    %c26_230 = arith.constant 26 : index
    %c0_231 = arith.constant 0 : index
    %435 = vector.load %arg9[%c2_229, %c26_230, %c0_231] : memref<3x72x28xf32, #tpu.memory_space<vmem>>, vector<1x2x28xf32>
    %436 = vector.shape_cast %435 : vector<1x2x28xf32> to vector<2x28xf32>
    %cst_232 = arith.constant dense<0.000000e+00> : vector<2x28xf32>
    %437 = tpu.matmul %430, %32, %cst_232 {dimension_numbers = #tpu.dot_dimension_numbers<[1], [0], [0], [1], [0, 0, 1, 1], [], []>} : vector<2x28xf32>, vector<28x28xf32>, vector<2x28xf32> -> vector<2x28xf32>
    %cst_233 = arith.constant dense<0.000000e+00> : vector<2x28xf32>
    %438 = tpu.matmul %430, %34, %cst_233 {dimension_numbers = #tpu.dot_dimension_numbers<[1], [0], [0], [1], [0, 0, 1, 1], [], []>} : vector<2x28xf32>, vector<28x28xf32>, vector<2x28xf32> -> vector<2x28xf32>
    %cst_234 = arith.constant dense<0.000000e+00> : vector<2x28xf32>
    %439 = tpu.matmul %430, %36, %cst_234 {dimension_numbers = #tpu.dot_dimension_numbers<[1], [0], [0], [1], [0, 0, 1, 1], [], []>} : vector<2x28xf32>, vector<28x28xf32>, vector<2x28xf32> -> vector<2x28xf32>
    %440 = arith.addf %439, %39 : vector<2x28xf32>
    %441 = arith.addf %432, %437 : vector<2x28xf32>
    %442 = arith.negf %441 : vector<2x28xf32>
    %443 = math.exp %442 : vector<2x28xf32>
    %cst_235 = arith.constant 1.000000e+00 : f32
    %444 = vector.broadcast %cst_235 : f32 to vector<2x28xf32>
    %445 = arith.addf %444, %443 : vector<2x28xf32>
    %446 = arith.divf %444, %445 : vector<2x28xf32>
    %447 = arith.addf %434, %438 : vector<2x28xf32>
    %448 = arith.negf %447 : vector<2x28xf32>
    %449 = math.exp %448 : vector<2x28xf32>
    %cst_236 = arith.constant 1.000000e+00 : f32
    %450 = vector.broadcast %cst_236 : f32 to vector<2x28xf32>
    %451 = arith.addf %450, %449 : vector<2x28xf32>
    %452 = arith.divf %450, %451 : vector<2x28xf32>
    %453 = arith.mulf %446, %440 : vector<2x28xf32>
    %454 = arith.addf %436, %453 : vector<2x28xf32>
    %455 = math.tanh %454 : vector<2x28xf32>
    %cst_237 = arith.constant 1.000000e+00 : f32
    %456 = vector.broadcast %cst_237 : f32 to vector<2x28xf32>
    %457 = arith.subf %456, %452 : vector<2x28xf32>
    %458 = arith.mulf %457, %455 : vector<2x28xf32>
    %459 = arith.mulf %452, %430 : vector<2x28xf32>
    %460 = arith.addf %458, %459 : vector<2x28xf32>
    %c0_238 = arith.constant 0 : index
    %c28 = arith.constant 28 : index
    %c0_239 = arith.constant 0 : index
    %461 = vector.load %arg9[%c0_238, %c28, %c0_239] : memref<3x72x28xf32, #tpu.memory_space<vmem>>, vector<1x2x28xf32>
    %462 = vector.shape_cast %461 : vector<1x2x28xf32> to vector<2x28xf32>
    %c1_240 = arith.constant 1 : index
    %c28_241 = arith.constant 28 : index
    %c0_242 = arith.constant 0 : index
    %463 = vector.load %arg9[%c1_240, %c28_241, %c0_242] : memref<3x72x28xf32, #tpu.memory_space<vmem>>, vector<1x2x28xf32>
    %464 = vector.shape_cast %463 : vector<1x2x28xf32> to vector<2x28xf32>
    %c2_243 = arith.constant 2 : index
    %c28_244 = arith.constant 28 : index
    %c0_245 = arith.constant 0 : index
    %465 = vector.load %arg9[%c2_243, %c28_244, %c0_245] : memref<3x72x28xf32, #tpu.memory_space<vmem>>, vector<1x2x28xf32>
    %466 = vector.shape_cast %465 : vector<1x2x28xf32> to vector<2x28xf32>
    %cst_246 = arith.constant dense<0.000000e+00> : vector<2x28xf32>
    %467 = tpu.matmul %460, %32, %cst_246 {dimension_numbers = #tpu.dot_dimension_numbers<[1], [0], [0], [1], [0, 0, 1, 1], [], []>} : vector<2x28xf32>, vector<28x28xf32>, vector<2x28xf32> -> vector<2x28xf32>
    %cst_247 = arith.constant dense<0.000000e+00> : vector<2x28xf32>
    %468 = tpu.matmul %460, %34, %cst_247 {dimension_numbers = #tpu.dot_dimension_numbers<[1], [0], [0], [1], [0, 0, 1, 1], [], []>} : vector<2x28xf32>, vector<28x28xf32>, vector<2x28xf32> -> vector<2x28xf32>
    %cst_248 = arith.constant dense<0.000000e+00> : vector<2x28xf32>
    %469 = tpu.matmul %460, %36, %cst_248 {dimension_numbers = #tpu.dot_dimension_numbers<[1], [0], [0], [1], [0, 0, 1, 1], [], []>} : vector<2x28xf32>, vector<28x28xf32>, vector<2x28xf32> -> vector<2x28xf32>
    %470 = arith.addf %469, %39 : vector<2x28xf32>
    %471 = arith.addf %462, %467 : vector<2x28xf32>
    %472 = arith.negf %471 : vector<2x28xf32>
    %473 = math.exp %472 : vector<2x28xf32>
    %cst_249 = arith.constant 1.000000e+00 : f32
    %474 = vector.broadcast %cst_249 : f32 to vector<2x28xf32>
    %475 = arith.addf %474, %473 : vector<2x28xf32>
    %476 = arith.divf %474, %475 : vector<2x28xf32>
    %477 = arith.addf %464, %468 : vector<2x28xf32>
    %478 = arith.negf %477 : vector<2x28xf32>
    %479 = math.exp %478 : vector<2x28xf32>
    %cst_250 = arith.constant 1.000000e+00 : f32
    %480 = vector.broadcast %cst_250 : f32 to vector<2x28xf32>
    %481 = arith.addf %480, %479 : vector<2x28xf32>
    %482 = arith.divf %480, %481 : vector<2x28xf32>
    %483 = arith.mulf %476, %470 : vector<2x28xf32>
    %484 = arith.addf %466, %483 : vector<2x28xf32>
    %485 = math.tanh %484 : vector<2x28xf32>
    %cst_251 = arith.constant 1.000000e+00 : f32
    %486 = vector.broadcast %cst_251 : f32 to vector<2x28xf32>
    %487 = arith.subf %486, %482 : vector<2x28xf32>
    %488 = arith.mulf %487, %485 : vector<2x28xf32>
    %489 = arith.mulf %482, %460 : vector<2x28xf32>
    %490 = arith.addf %488, %489 : vector<2x28xf32>
    %c0_252 = arith.constant 0 : index
    %c30 = arith.constant 30 : index
    %c0_253 = arith.constant 0 : index
    %491 = vector.load %arg9[%c0_252, %c30, %c0_253] : memref<3x72x28xf32, #tpu.memory_space<vmem>>, vector<1x2x28xf32>
    %492 = vector.shape_cast %491 : vector<1x2x28xf32> to vector<2x28xf32>
    %c1_254 = arith.constant 1 : index
    %c30_255 = arith.constant 30 : index
    %c0_256 = arith.constant 0 : index
    %493 = vector.load %arg9[%c1_254, %c30_255, %c0_256] : memref<3x72x28xf32, #tpu.memory_space<vmem>>, vector<1x2x28xf32>
    %494 = vector.shape_cast %493 : vector<1x2x28xf32> to vector<2x28xf32>
    %c2_257 = arith.constant 2 : index
    %c30_258 = arith.constant 30 : index
    %c0_259 = arith.constant 0 : index
    %495 = vector.load %arg9[%c2_257, %c30_258, %c0_259] : memref<3x72x28xf32, #tpu.memory_space<vmem>>, vector<1x2x28xf32>
    %496 = vector.shape_cast %495 : vector<1x2x28xf32> to vector<2x28xf32>
    %cst_260 = arith.constant dense<0.000000e+00> : vector<2x28xf32>
    %497 = tpu.matmul %490, %32, %cst_260 {dimension_numbers = #tpu.dot_dimension_numbers<[1], [0], [0], [1], [0, 0, 1, 1], [], []>} : vector<2x28xf32>, vector<28x28xf32>, vector<2x28xf32> -> vector<2x28xf32>
    %cst_261 = arith.constant dense<0.000000e+00> : vector<2x28xf32>
    %498 = tpu.matmul %490, %34, %cst_261 {dimension_numbers = #tpu.dot_dimension_numbers<[1], [0], [0], [1], [0, 0, 1, 1], [], []>} : vector<2x28xf32>, vector<28x28xf32>, vector<2x28xf32> -> vector<2x28xf32>
    %cst_262 = arith.constant dense<0.000000e+00> : vector<2x28xf32>
    %499 = tpu.matmul %490, %36, %cst_262 {dimension_numbers = #tpu.dot_dimension_numbers<[1], [0], [0], [1], [0, 0, 1, 1], [], []>} : vector<2x28xf32>, vector<28x28xf32>, vector<2x28xf32> -> vector<2x28xf32>
    %500 = arith.addf %499, %39 : vector<2x28xf32>
    %501 = arith.addf %492, %497 : vector<2x28xf32>
    %502 = arith.negf %501 : vector<2x28xf32>
    %503 = math.exp %502 : vector<2x28xf32>
    %cst_263 = arith.constant 1.000000e+00 : f32
    %504 = vector.broadcast %cst_263 : f32 to vector<2x28xf32>
    %505 = arith.addf %504, %503 : vector<2x28xf32>
    %506 = arith.divf %504, %505 : vector<2x28xf32>
    %507 = arith.addf %494, %498 : vector<2x28xf32>
    %508 = arith.negf %507 : vector<2x28xf32>
    %509 = math.exp %508 : vector<2x28xf32>
    %cst_264 = arith.constant 1.000000e+00 : f32
    %510 = vector.broadcast %cst_264 : f32 to vector<2x28xf32>
    %511 = arith.addf %510, %509 : vector<2x28xf32>
    %512 = arith.divf %510, %511 : vector<2x28xf32>
    %513 = arith.mulf %506, %500 : vector<2x28xf32>
    %514 = arith.addf %496, %513 : vector<2x28xf32>
    %515 = math.tanh %514 : vector<2x28xf32>
    %cst_265 = arith.constant 1.000000e+00 : f32
    %516 = vector.broadcast %cst_265 : f32 to vector<2x28xf32>
    %517 = arith.subf %516, %512 : vector<2x28xf32>
    %518 = arith.mulf %517, %515 : vector<2x28xf32>
    %519 = arith.mulf %512, %490 : vector<2x28xf32>
    %520 = arith.addf %518, %519 : vector<2x28xf32>
    %c0_266 = arith.constant 0 : index
    %c32 = arith.constant 32 : index
    %c0_267 = arith.constant 0 : index
    %521 = vector.load %arg9[%c0_266, %c32, %c0_267] : memref<3x72x28xf32, #tpu.memory_space<vmem>>, vector<1x2x28xf32>
    %522 = vector.shape_cast %521 : vector<1x2x28xf32> to vector<2x28xf32>
    %c1_268 = arith.constant 1 : index
    %c32_269 = arith.constant 32 : index
    %c0_270 = arith.constant 0 : index
    %523 = vector.load %arg9[%c1_268, %c32_269, %c0_270] : memref<3x72x28xf32, #tpu.memory_space<vmem>>, vector<1x2x28xf32>
    %524 = vector.shape_cast %523 : vector<1x2x28xf32> to vector<2x28xf32>
    %c2_271 = arith.constant 2 : index
    %c32_272 = arith.constant 32 : index
    %c0_273 = arith.constant 0 : index
    %525 = vector.load %arg9[%c2_271, %c32_272, %c0_273] : memref<3x72x28xf32, #tpu.memory_space<vmem>>, vector<1x2x28xf32>
    %526 = vector.shape_cast %525 : vector<1x2x28xf32> to vector<2x28xf32>
    %cst_274 = arith.constant dense<0.000000e+00> : vector<2x28xf32>
    %527 = tpu.matmul %520, %32, %cst_274 {dimension_numbers = #tpu.dot_dimension_numbers<[1], [0], [0], [1], [0, 0, 1, 1], [], []>} : vector<2x28xf32>, vector<28x28xf32>, vector<2x28xf32> -> vector<2x28xf32>
    %cst_275 = arith.constant dense<0.000000e+00> : vector<2x28xf32>
    %528 = tpu.matmul %520, %34, %cst_275 {dimension_numbers = #tpu.dot_dimension_numbers<[1], [0], [0], [1], [0, 0, 1, 1], [], []>} : vector<2x28xf32>, vector<28x28xf32>, vector<2x28xf32> -> vector<2x28xf32>
    %cst_276 = arith.constant dense<0.000000e+00> : vector<2x28xf32>
    %529 = tpu.matmul %520, %36, %cst_276 {dimension_numbers = #tpu.dot_dimension_numbers<[1], [0], [0], [1], [0, 0, 1, 1], [], []>} : vector<2x28xf32>, vector<28x28xf32>, vector<2x28xf32> -> vector<2x28xf32>
    %530 = arith.addf %529, %39 : vector<2x28xf32>
    %531 = arith.addf %522, %527 : vector<2x28xf32>
    %532 = arith.negf %531 : vector<2x28xf32>
    %533 = math.exp %532 : vector<2x28xf32>
    %cst_277 = arith.constant 1.000000e+00 : f32
    %534 = vector.broadcast %cst_277 : f32 to vector<2x28xf32>
    %535 = arith.addf %534, %533 : vector<2x28xf32>
    %536 = arith.divf %534, %535 : vector<2x28xf32>
    %537 = arith.addf %524, %528 : vector<2x28xf32>
    %538 = arith.negf %537 : vector<2x28xf32>
    %539 = math.exp %538 : vector<2x28xf32>
    %cst_278 = arith.constant 1.000000e+00 : f32
    %540 = vector.broadcast %cst_278 : f32 to vector<2x28xf32>
    %541 = arith.addf %540, %539 : vector<2x28xf32>
    %542 = arith.divf %540, %541 : vector<2x28xf32>
    %543 = arith.mulf %536, %530 : vector<2x28xf32>
    %544 = arith.addf %526, %543 : vector<2x28xf32>
    %545 = math.tanh %544 : vector<2x28xf32>
    %cst_279 = arith.constant 1.000000e+00 : f32
    %546 = vector.broadcast %cst_279 : f32 to vector<2x28xf32>
    %547 = arith.subf %546, %542 : vector<2x28xf32>
    %548 = arith.mulf %547, %545 : vector<2x28xf32>
    %549 = arith.mulf %542, %520 : vector<2x28xf32>
    %550 = arith.addf %548, %549 : vector<2x28xf32>
    %c0_280 = arith.constant 0 : index
    %c34 = arith.constant 34 : index
    %c0_281 = arith.constant 0 : index
    %551 = vector.load %arg9[%c0_280, %c34, %c0_281] : memref<3x72x28xf32, #tpu.memory_space<vmem>>, vector<1x2x28xf32>
    %552 = vector.shape_cast %551 : vector<1x2x28xf32> to vector<2x28xf32>
    %c1_282 = arith.constant 1 : index
    %c34_283 = arith.constant 34 : index
    %c0_284 = arith.constant 0 : index
    %553 = vector.load %arg9[%c1_282, %c34_283, %c0_284] : memref<3x72x28xf32, #tpu.memory_space<vmem>>, vector<1x2x28xf32>
    %554 = vector.shape_cast %553 : vector<1x2x28xf32> to vector<2x28xf32>
    %c2_285 = arith.constant 2 : index
    %c34_286 = arith.constant 34 : index
    %c0_287 = arith.constant 0 : index
    %555 = vector.load %arg9[%c2_285, %c34_286, %c0_287] : memref<3x72x28xf32, #tpu.memory_space<vmem>>, vector<1x2x28xf32>
    %556 = vector.shape_cast %555 : vector<1x2x28xf32> to vector<2x28xf32>
    %cst_288 = arith.constant dense<0.000000e+00> : vector<2x28xf32>
    %557 = tpu.matmul %550, %32, %cst_288 {dimension_numbers = #tpu.dot_dimension_numbers<[1], [0], [0], [1], [0, 0, 1, 1], [], []>} : vector<2x28xf32>, vector<28x28xf32>, vector<2x28xf32> -> vector<2x28xf32>
    %cst_289 = arith.constant dense<0.000000e+00> : vector<2x28xf32>
    %558 = tpu.matmul %550, %34, %cst_289 {dimension_numbers = #tpu.dot_dimension_numbers<[1], [0], [0], [1], [0, 0, 1, 1], [], []>} : vector<2x28xf32>, vector<28x28xf32>, vector<2x28xf32> -> vector<2x28xf32>
    %cst_290 = arith.constant dense<0.000000e+00> : vector<2x28xf32>
    %559 = tpu.matmul %550, %36, %cst_290 {dimension_numbers = #tpu.dot_dimension_numbers<[1], [0], [0], [1], [0, 0, 1, 1], [], []>} : vector<2x28xf32>, vector<28x28xf32>, vector<2x28xf32> -> vector<2x28xf32>
    %560 = arith.addf %559, %39 : vector<2x28xf32>
    %561 = arith.addf %552, %557 : vector<2x28xf32>
    %562 = arith.negf %561 : vector<2x28xf32>
    %563 = math.exp %562 : vector<2x28xf32>
    %cst_291 = arith.constant 1.000000e+00 : f32
    %564 = vector.broadcast %cst_291 : f32 to vector<2x28xf32>
    %565 = arith.addf %564, %563 : vector<2x28xf32>
    %566 = arith.divf %564, %565 : vector<2x28xf32>
    %567 = arith.addf %554, %558 : vector<2x28xf32>
    %568 = arith.negf %567 : vector<2x28xf32>
    %569 = math.exp %568 : vector<2x28xf32>
    %cst_292 = arith.constant 1.000000e+00 : f32
    %570 = vector.broadcast %cst_292 : f32 to vector<2x28xf32>
    %571 = arith.addf %570, %569 : vector<2x28xf32>
    %572 = arith.divf %570, %571 : vector<2x28xf32>
    %573 = arith.mulf %566, %560 : vector<2x28xf32>
    %574 = arith.addf %556, %573 : vector<2x28xf32>
    %575 = math.tanh %574 : vector<2x28xf32>
    %cst_293 = arith.constant 1.000000e+00 : f32
    %576 = vector.broadcast %cst_293 : f32 to vector<2x28xf32>
    %577 = arith.subf %576, %572 : vector<2x28xf32>
    %578 = arith.mulf %577, %575 : vector<2x28xf32>
    %579 = arith.mulf %572, %550 : vector<2x28xf32>
    %580 = arith.addf %578, %579 : vector<2x28xf32>
    %c0_294 = arith.constant 0 : index
    %c36 = arith.constant 36 : index
    %c0_295 = arith.constant 0 : index
    %581 = vector.load %arg9[%c0_294, %c36, %c0_295] : memref<3x72x28xf32, #tpu.memory_space<vmem>>, vector<1x2x28xf32>
    %582 = vector.shape_cast %581 : vector<1x2x28xf32> to vector<2x28xf32>
    %c1_296 = arith.constant 1 : index
    %c36_297 = arith.constant 36 : index
    %c0_298 = arith.constant 0 : index
    %583 = vector.load %arg9[%c1_296, %c36_297, %c0_298] : memref<3x72x28xf32, #tpu.memory_space<vmem>>, vector<1x2x28xf32>
    %584 = vector.shape_cast %583 : vector<1x2x28xf32> to vector<2x28xf32>
    %c2_299 = arith.constant 2 : index
    %c36_300 = arith.constant 36 : index
    %c0_301 = arith.constant 0 : index
    %585 = vector.load %arg9[%c2_299, %c36_300, %c0_301] : memref<3x72x28xf32, #tpu.memory_space<vmem>>, vector<1x2x28xf32>
    %586 = vector.shape_cast %585 : vector<1x2x28xf32> to vector<2x28xf32>
    %cst_302 = arith.constant dense<0.000000e+00> : vector<2x28xf32>
    %587 = tpu.matmul %580, %32, %cst_302 {dimension_numbers = #tpu.dot_dimension_numbers<[1], [0], [0], [1], [0, 0, 1, 1], [], []>} : vector<2x28xf32>, vector<28x28xf32>, vector<2x28xf32> -> vector<2x28xf32>
    %cst_303 = arith.constant dense<0.000000e+00> : vector<2x28xf32>
    %588 = tpu.matmul %580, %34, %cst_303 {dimension_numbers = #tpu.dot_dimension_numbers<[1], [0], [0], [1], [0, 0, 1, 1], [], []>} : vector<2x28xf32>, vector<28x28xf32>, vector<2x28xf32> -> vector<2x28xf32>
    %cst_304 = arith.constant dense<0.000000e+00> : vector<2x28xf32>
    %589 = tpu.matmul %580, %36, %cst_304 {dimension_numbers = #tpu.dot_dimension_numbers<[1], [0], [0], [1], [0, 0, 1, 1], [], []>} : vector<2x28xf32>, vector<28x28xf32>, vector<2x28xf32> -> vector<2x28xf32>
    %590 = arith.addf %589, %39 : vector<2x28xf32>
    %591 = arith.addf %582, %587 : vector<2x28xf32>
    %592 = arith.negf %591 : vector<2x28xf32>
    %593 = math.exp %592 : vector<2x28xf32>
    %cst_305 = arith.constant 1.000000e+00 : f32
    %594 = vector.broadcast %cst_305 : f32 to vector<2x28xf32>
    %595 = arith.addf %594, %593 : vector<2x28xf32>
    %596 = arith.divf %594, %595 : vector<2x28xf32>
    %597 = arith.addf %584, %588 : vector<2x28xf32>
    %598 = arith.negf %597 : vector<2x28xf32>
    %599 = math.exp %598 : vector<2x28xf32>
    %cst_306 = arith.constant 1.000000e+00 : f32
    %600 = vector.broadcast %cst_306 : f32 to vector<2x28xf32>
    %601 = arith.addf %600, %599 : vector<2x28xf32>
    %602 = arith.divf %600, %601 : vector<2x28xf32>
    %603 = arith.mulf %596, %590 : vector<2x28xf32>
    %604 = arith.addf %586, %603 : vector<2x28xf32>
    %605 = math.tanh %604 : vector<2x28xf32>
    %cst_307 = arith.constant 1.000000e+00 : f32
    %606 = vector.broadcast %cst_307 : f32 to vector<2x28xf32>
    %607 = arith.subf %606, %602 : vector<2x28xf32>
    %608 = arith.mulf %607, %605 : vector<2x28xf32>
    %609 = arith.mulf %602, %580 : vector<2x28xf32>
    %610 = arith.addf %608, %609 : vector<2x28xf32>
    %c0_308 = arith.constant 0 : index
    %c38 = arith.constant 38 : index
    %c0_309 = arith.constant 0 : index
    %611 = vector.load %arg9[%c0_308, %c38, %c0_309] : memref<3x72x28xf32, #tpu.memory_space<vmem>>, vector<1x2x28xf32>
    %612 = vector.shape_cast %611 : vector<1x2x28xf32> to vector<2x28xf32>
    %c1_310 = arith.constant 1 : index
    %c38_311 = arith.constant 38 : index
    %c0_312 = arith.constant 0 : index
    %613 = vector.load %arg9[%c1_310, %c38_311, %c0_312] : memref<3x72x28xf32, #tpu.memory_space<vmem>>, vector<1x2x28xf32>
    %614 = vector.shape_cast %613 : vector<1x2x28xf32> to vector<2x28xf32>
    %c2_313 = arith.constant 2 : index
    %c38_314 = arith.constant 38 : index
    %c0_315 = arith.constant 0 : index
    %615 = vector.load %arg9[%c2_313, %c38_314, %c0_315] : memref<3x72x28xf32, #tpu.memory_space<vmem>>, vector<1x2x28xf32>
    %616 = vector.shape_cast %615 : vector<1x2x28xf32> to vector<2x28xf32>
    %cst_316 = arith.constant dense<0.000000e+00> : vector<2x28xf32>
    %617 = tpu.matmul %610, %32, %cst_316 {dimension_numbers = #tpu.dot_dimension_numbers<[1], [0], [0], [1], [0, 0, 1, 1], [], []>} : vector<2x28xf32>, vector<28x28xf32>, vector<2x28xf32> -> vector<2x28xf32>
    %cst_317 = arith.constant dense<0.000000e+00> : vector<2x28xf32>
    %618 = tpu.matmul %610, %34, %cst_317 {dimension_numbers = #tpu.dot_dimension_numbers<[1], [0], [0], [1], [0, 0, 1, 1], [], []>} : vector<2x28xf32>, vector<28x28xf32>, vector<2x28xf32> -> vector<2x28xf32>
    %cst_318 = arith.constant dense<0.000000e+00> : vector<2x28xf32>
    %619 = tpu.matmul %610, %36, %cst_318 {dimension_numbers = #tpu.dot_dimension_numbers<[1], [0], [0], [1], [0, 0, 1, 1], [], []>} : vector<2x28xf32>, vector<28x28xf32>, vector<2x28xf32> -> vector<2x28xf32>
    %620 = arith.addf %619, %39 : vector<2x28xf32>
    %621 = arith.addf %612, %617 : vector<2x28xf32>
    %622 = arith.negf %621 : vector<2x28xf32>
    %623 = math.exp %622 : vector<2x28xf32>
    %cst_319 = arith.constant 1.000000e+00 : f32
    %624 = vector.broadcast %cst_319 : f32 to vector<2x28xf32>
    %625 = arith.addf %624, %623 : vector<2x28xf32>
    %626 = arith.divf %624, %625 : vector<2x28xf32>
    %627 = arith.addf %614, %618 : vector<2x28xf32>
    %628 = arith.negf %627 : vector<2x28xf32>
    %629 = math.exp %628 : vector<2x28xf32>
    %cst_320 = arith.constant 1.000000e+00 : f32
    %630 = vector.broadcast %cst_320 : f32 to vector<2x28xf32>
    %631 = arith.addf %630, %629 : vector<2x28xf32>
    %632 = arith.divf %630, %631 : vector<2x28xf32>
    %633 = arith.mulf %626, %620 : vector<2x28xf32>
    %634 = arith.addf %616, %633 : vector<2x28xf32>
    %635 = math.tanh %634 : vector<2x28xf32>
    %cst_321 = arith.constant 1.000000e+00 : f32
    %636 = vector.broadcast %cst_321 : f32 to vector<2x28xf32>
    %637 = arith.subf %636, %632 : vector<2x28xf32>
    %638 = arith.mulf %637, %635 : vector<2x28xf32>
    %639 = arith.mulf %632, %610 : vector<2x28xf32>
    %640 = arith.addf %638, %639 : vector<2x28xf32>
    %c0_322 = arith.constant 0 : index
    %c40 = arith.constant 40 : index
    %c0_323 = arith.constant 0 : index
    %641 = vector.load %arg9[%c0_322, %c40, %c0_323] : memref<3x72x28xf32, #tpu.memory_space<vmem>>, vector<1x2x28xf32>
    %642 = vector.shape_cast %641 : vector<1x2x28xf32> to vector<2x28xf32>
    %c1_324 = arith.constant 1 : index
    %c40_325 = arith.constant 40 : index
    %c0_326 = arith.constant 0 : index
    %643 = vector.load %arg9[%c1_324, %c40_325, %c0_326] : memref<3x72x28xf32, #tpu.memory_space<vmem>>, vector<1x2x28xf32>
    %644 = vector.shape_cast %643 : vector<1x2x28xf32> to vector<2x28xf32>
    %c2_327 = arith.constant 2 : index
    %c40_328 = arith.constant 40 : index
    %c0_329 = arith.constant 0 : index
    %645 = vector.load %arg9[%c2_327, %c40_328, %c0_329] : memref<3x72x28xf32, #tpu.memory_space<vmem>>, vector<1x2x28xf32>
    %646 = vector.shape_cast %645 : vector<1x2x28xf32> to vector<2x28xf32>
    %cst_330 = arith.constant dense<0.000000e+00> : vector<2x28xf32>
    %647 = tpu.matmul %640, %32, %cst_330 {dimension_numbers = #tpu.dot_dimension_numbers<[1], [0], [0], [1], [0, 0, 1, 1], [], []>} : vector<2x28xf32>, vector<28x28xf32>, vector<2x28xf32> -> vector<2x28xf32>
    %cst_331 = arith.constant dense<0.000000e+00> : vector<2x28xf32>
    %648 = tpu.matmul %640, %34, %cst_331 {dimension_numbers = #tpu.dot_dimension_numbers<[1], [0], [0], [1], [0, 0, 1, 1], [], []>} : vector<2x28xf32>, vector<28x28xf32>, vector<2x28xf32> -> vector<2x28xf32>
    %cst_332 = arith.constant dense<0.000000e+00> : vector<2x28xf32>
    %649 = tpu.matmul %640, %36, %cst_332 {dimension_numbers = #tpu.dot_dimension_numbers<[1], [0], [0], [1], [0, 0, 1, 1], [], []>} : vector<2x28xf32>, vector<28x28xf32>, vector<2x28xf32> -> vector<2x28xf32>
    %650 = arith.addf %649, %39 : vector<2x28xf32>
    %651 = arith.addf %642, %647 : vector<2x28xf32>
    %652 = arith.negf %651 : vector<2x28xf32>
    %653 = math.exp %652 : vector<2x28xf32>
    %cst_333 = arith.constant 1.000000e+00 : f32
    %654 = vector.broadcast %cst_333 : f32 to vector<2x28xf32>
    %655 = arith.addf %654, %653 : vector<2x28xf32>
    %656 = arith.divf %654, %655 : vector<2x28xf32>
    %657 = arith.addf %644, %648 : vector<2x28xf32>
    %658 = arith.negf %657 : vector<2x28xf32>
    %659 = math.exp %658 : vector<2x28xf32>
    %cst_334 = arith.constant 1.000000e+00 : f32
    %660 = vector.broadcast %cst_334 : f32 to vector<2x28xf32>
    %661 = arith.addf %660, %659 : vector<2x28xf32>
    %662 = arith.divf %660, %661 : vector<2x28xf32>
    %663 = arith.mulf %656, %650 : vector<2x28xf32>
    %664 = arith.addf %646, %663 : vector<2x28xf32>
    %665 = math.tanh %664 : vector<2x28xf32>
    %cst_335 = arith.constant 1.000000e+00 : f32
    %666 = vector.broadcast %cst_335 : f32 to vector<2x28xf32>
    %667 = arith.subf %666, %662 : vector<2x28xf32>
    %668 = arith.mulf %667, %665 : vector<2x28xf32>
    %669 = arith.mulf %662, %640 : vector<2x28xf32>
    %670 = arith.addf %668, %669 : vector<2x28xf32>
    %c0_336 = arith.constant 0 : index
    %c42 = arith.constant 42 : index
    %c0_337 = arith.constant 0 : index
    %671 = vector.load %arg9[%c0_336, %c42, %c0_337] : memref<3x72x28xf32, #tpu.memory_space<vmem>>, vector<1x2x28xf32>
    %672 = vector.shape_cast %671 : vector<1x2x28xf32> to vector<2x28xf32>
    %c1_338 = arith.constant 1 : index
    %c42_339 = arith.constant 42 : index
    %c0_340 = arith.constant 0 : index
    %673 = vector.load %arg9[%c1_338, %c42_339, %c0_340] : memref<3x72x28xf32, #tpu.memory_space<vmem>>, vector<1x2x28xf32>
    %674 = vector.shape_cast %673 : vector<1x2x28xf32> to vector<2x28xf32>
    %c2_341 = arith.constant 2 : index
    %c42_342 = arith.constant 42 : index
    %c0_343 = arith.constant 0 : index
    %675 = vector.load %arg9[%c2_341, %c42_342, %c0_343] : memref<3x72x28xf32, #tpu.memory_space<vmem>>, vector<1x2x28xf32>
    %676 = vector.shape_cast %675 : vector<1x2x28xf32> to vector<2x28xf32>
    %cst_344 = arith.constant dense<0.000000e+00> : vector<2x28xf32>
    %677 = tpu.matmul %670, %32, %cst_344 {dimension_numbers = #tpu.dot_dimension_numbers<[1], [0], [0], [1], [0, 0, 1, 1], [], []>} : vector<2x28xf32>, vector<28x28xf32>, vector<2x28xf32> -> vector<2x28xf32>
    %cst_345 = arith.constant dense<0.000000e+00> : vector<2x28xf32>
    %678 = tpu.matmul %670, %34, %cst_345 {dimension_numbers = #tpu.dot_dimension_numbers<[1], [0], [0], [1], [0, 0, 1, 1], [], []>} : vector<2x28xf32>, vector<28x28xf32>, vector<2x28xf32> -> vector<2x28xf32>
    %cst_346 = arith.constant dense<0.000000e+00> : vector<2x28xf32>
    %679 = tpu.matmul %670, %36, %cst_346 {dimension_numbers = #tpu.dot_dimension_numbers<[1], [0], [0], [1], [0, 0, 1, 1], [], []>} : vector<2x28xf32>, vector<28x28xf32>, vector<2x28xf32> -> vector<2x28xf32>
    %680 = arith.addf %679, %39 : vector<2x28xf32>
    %681 = arith.addf %672, %677 : vector<2x28xf32>
    %682 = arith.negf %681 : vector<2x28xf32>
    %683 = math.exp %682 : vector<2x28xf32>
    %cst_347 = arith.constant 1.000000e+00 : f32
    %684 = vector.broadcast %cst_347 : f32 to vector<2x28xf32>
    %685 = arith.addf %684, %683 : vector<2x28xf32>
    %686 = arith.divf %684, %685 : vector<2x28xf32>
    %687 = arith.addf %674, %678 : vector<2x28xf32>
    %688 = arith.negf %687 : vector<2x28xf32>
    %689 = math.exp %688 : vector<2x28xf32>
    %cst_348 = arith.constant 1.000000e+00 : f32
    %690 = vector.broadcast %cst_348 : f32 to vector<2x28xf32>
    %691 = arith.addf %690, %689 : vector<2x28xf32>
    %692 = arith.divf %690, %691 : vector<2x28xf32>
    %693 = arith.mulf %686, %680 : vector<2x28xf32>
    %694 = arith.addf %676, %693 : vector<2x28xf32>
    %695 = math.tanh %694 : vector<2x28xf32>
    %cst_349 = arith.constant 1.000000e+00 : f32
    %696 = vector.broadcast %cst_349 : f32 to vector<2x28xf32>
    %697 = arith.subf %696, %692 : vector<2x28xf32>
    %698 = arith.mulf %697, %695 : vector<2x28xf32>
    %699 = arith.mulf %692, %670 : vector<2x28xf32>
    %700 = arith.addf %698, %699 : vector<2x28xf32>
    %c0_350 = arith.constant 0 : index
    %c44 = arith.constant 44 : index
    %c0_351 = arith.constant 0 : index
    %701 = vector.load %arg9[%c0_350, %c44, %c0_351] : memref<3x72x28xf32, #tpu.memory_space<vmem>>, vector<1x2x28xf32>
    %702 = vector.shape_cast %701 : vector<1x2x28xf32> to vector<2x28xf32>
    %c1_352 = arith.constant 1 : index
    %c44_353 = arith.constant 44 : index
    %c0_354 = arith.constant 0 : index
    %703 = vector.load %arg9[%c1_352, %c44_353, %c0_354] : memref<3x72x28xf32, #tpu.memory_space<vmem>>, vector<1x2x28xf32>
    %704 = vector.shape_cast %703 : vector<1x2x28xf32> to vector<2x28xf32>
    %c2_355 = arith.constant 2 : index
    %c44_356 = arith.constant 44 : index
    %c0_357 = arith.constant 0 : index
    %705 = vector.load %arg9[%c2_355, %c44_356, %c0_357] : memref<3x72x28xf32, #tpu.memory_space<vmem>>, vector<1x2x28xf32>
    %706 = vector.shape_cast %705 : vector<1x2x28xf32> to vector<2x28xf32>
    %cst_358 = arith.constant dense<0.000000e+00> : vector<2x28xf32>
    %707 = tpu.matmul %700, %32, %cst_358 {dimension_numbers = #tpu.dot_dimension_numbers<[1], [0], [0], [1], [0, 0, 1, 1], [], []>} : vector<2x28xf32>, vector<28x28xf32>, vector<2x28xf32> -> vector<2x28xf32>
    %cst_359 = arith.constant dense<0.000000e+00> : vector<2x28xf32>
    %708 = tpu.matmul %700, %34, %cst_359 {dimension_numbers = #tpu.dot_dimension_numbers<[1], [0], [0], [1], [0, 0, 1, 1], [], []>} : vector<2x28xf32>, vector<28x28xf32>, vector<2x28xf32> -> vector<2x28xf32>
    %cst_360 = arith.constant dense<0.000000e+00> : vector<2x28xf32>
    %709 = tpu.matmul %700, %36, %cst_360 {dimension_numbers = #tpu.dot_dimension_numbers<[1], [0], [0], [1], [0, 0, 1, 1], [], []>} : vector<2x28xf32>, vector<28x28xf32>, vector<2x28xf32> -> vector<2x28xf32>
    %710 = arith.addf %709, %39 : vector<2x28xf32>
    %711 = arith.addf %702, %707 : vector<2x28xf32>
    %712 = arith.negf %711 : vector<2x28xf32>
    %713 = math.exp %712 : vector<2x28xf32>
    %cst_361 = arith.constant 1.000000e+00 : f32
    %714 = vector.broadcast %cst_361 : f32 to vector<2x28xf32>
    %715 = arith.addf %714, %713 : vector<2x28xf32>
    %716 = arith.divf %714, %715 : vector<2x28xf32>
    %717 = arith.addf %704, %708 : vector<2x28xf32>
    %718 = arith.negf %717 : vector<2x28xf32>
    %719 = math.exp %718 : vector<2x28xf32>
    %cst_362 = arith.constant 1.000000e+00 : f32
    %720 = vector.broadcast %cst_362 : f32 to vector<2x28xf32>
    %721 = arith.addf %720, %719 : vector<2x28xf32>
    %722 = arith.divf %720, %721 : vector<2x28xf32>
    %723 = arith.mulf %716, %710 : vector<2x28xf32>
    %724 = arith.addf %706, %723 : vector<2x28xf32>
    %725 = math.tanh %724 : vector<2x28xf32>
    %cst_363 = arith.constant 1.000000e+00 : f32
    %726 = vector.broadcast %cst_363 : f32 to vector<2x28xf32>
    %727 = arith.subf %726, %722 : vector<2x28xf32>
    %728 = arith.mulf %727, %725 : vector<2x28xf32>
    %729 = arith.mulf %722, %700 : vector<2x28xf32>
    %730 = arith.addf %728, %729 : vector<2x28xf32>
    %c0_364 = arith.constant 0 : index
    %c46 = arith.constant 46 : index
    %c0_365 = arith.constant 0 : index
    %731 = vector.load %arg9[%c0_364, %c46, %c0_365] : memref<3x72x28xf32, #tpu.memory_space<vmem>>, vector<1x2x28xf32>
    %732 = vector.shape_cast %731 : vector<1x2x28xf32> to vector<2x28xf32>
    %c1_366 = arith.constant 1 : index
    %c46_367 = arith.constant 46 : index
    %c0_368 = arith.constant 0 : index
    %733 = vector.load %arg9[%c1_366, %c46_367, %c0_368] : memref<3x72x28xf32, #tpu.memory_space<vmem>>, vector<1x2x28xf32>
    %734 = vector.shape_cast %733 : vector<1x2x28xf32> to vector<2x28xf32>
    %c2_369 = arith.constant 2 : index
    %c46_370 = arith.constant 46 : index
    %c0_371 = arith.constant 0 : index
    %735 = vector.load %arg9[%c2_369, %c46_370, %c0_371] : memref<3x72x28xf32, #tpu.memory_space<vmem>>, vector<1x2x28xf32>
    %736 = vector.shape_cast %735 : vector<1x2x28xf32> to vector<2x28xf32>
    %cst_372 = arith.constant dense<0.000000e+00> : vector<2x28xf32>
    %737 = tpu.matmul %730, %32, %cst_372 {dimension_numbers = #tpu.dot_dimension_numbers<[1], [0], [0], [1], [0, 0, 1, 1], [], []>} : vector<2x28xf32>, vector<28x28xf32>, vector<2x28xf32> -> vector<2x28xf32>
    %cst_373 = arith.constant dense<0.000000e+00> : vector<2x28xf32>
    %738 = tpu.matmul %730, %34, %cst_373 {dimension_numbers = #tpu.dot_dimension_numbers<[1], [0], [0], [1], [0, 0, 1, 1], [], []>} : vector<2x28xf32>, vector<28x28xf32>, vector<2x28xf32> -> vector<2x28xf32>
    %cst_374 = arith.constant dense<0.000000e+00> : vector<2x28xf32>
    %739 = tpu.matmul %730, %36, %cst_374 {dimension_numbers = #tpu.dot_dimension_numbers<[1], [0], [0], [1], [0, 0, 1, 1], [], []>} : vector<2x28xf32>, vector<28x28xf32>, vector<2x28xf32> -> vector<2x28xf32>
    %740 = arith.addf %739, %39 : vector<2x28xf32>
    %741 = arith.addf %732, %737 : vector<2x28xf32>
    %742 = arith.negf %741 : vector<2x28xf32>
    %743 = math.exp %742 : vector<2x28xf32>
    %cst_375 = arith.constant 1.000000e+00 : f32
    %744 = vector.broadcast %cst_375 : f32 to vector<2x28xf32>
    %745 = arith.addf %744, %743 : vector<2x28xf32>
    %746 = arith.divf %744, %745 : vector<2x28xf32>
    %747 = arith.addf %734, %738 : vector<2x28xf32>
    %748 = arith.negf %747 : vector<2x28xf32>
    %749 = math.exp %748 : vector<2x28xf32>
    %cst_376 = arith.constant 1.000000e+00 : f32
    %750 = vector.broadcast %cst_376 : f32 to vector<2x28xf32>
    %751 = arith.addf %750, %749 : vector<2x28xf32>
    %752 = arith.divf %750, %751 : vector<2x28xf32>
    %753 = arith.mulf %746, %740 : vector<2x28xf32>
    %754 = arith.addf %736, %753 : vector<2x28xf32>
    %755 = math.tanh %754 : vector<2x28xf32>
    %cst_377 = arith.constant 1.000000e+00 : f32
    %756 = vector.broadcast %cst_377 : f32 to vector<2x28xf32>
    %757 = arith.subf %756, %752 : vector<2x28xf32>
    %758 = arith.mulf %757, %755 : vector<2x28xf32>
    %759 = arith.mulf %752, %730 : vector<2x28xf32>
    %760 = arith.addf %758, %759 : vector<2x28xf32>
    %c0_378 = arith.constant 0 : index
    %c48 = arith.constant 48 : index
    %c0_379 = arith.constant 0 : index
    %761 = vector.load %arg9[%c0_378, %c48, %c0_379] : memref<3x72x28xf32, #tpu.memory_space<vmem>>, vector<1x2x28xf32>
    %762 = vector.shape_cast %761 : vector<1x2x28xf32> to vector<2x28xf32>
    %c1_380 = arith.constant 1 : index
    %c48_381 = arith.constant 48 : index
    %c0_382 = arith.constant 0 : index
    %763 = vector.load %arg9[%c1_380, %c48_381, %c0_382] : memref<3x72x28xf32, #tpu.memory_space<vmem>>, vector<1x2x28xf32>
    %764 = vector.shape_cast %763 : vector<1x2x28xf32> to vector<2x28xf32>
    %c2_383 = arith.constant 2 : index
    %c48_384 = arith.constant 48 : index
    %c0_385 = arith.constant 0 : index
    %765 = vector.load %arg9[%c2_383, %c48_384, %c0_385] : memref<3x72x28xf32, #tpu.memory_space<vmem>>, vector<1x2x28xf32>
    %766 = vector.shape_cast %765 : vector<1x2x28xf32> to vector<2x28xf32>
    %cst_386 = arith.constant dense<0.000000e+00> : vector<2x28xf32>
    %767 = tpu.matmul %760, %32, %cst_386 {dimension_numbers = #tpu.dot_dimension_numbers<[1], [0], [0], [1], [0, 0, 1, 1], [], []>} : vector<2x28xf32>, vector<28x28xf32>, vector<2x28xf32> -> vector<2x28xf32>
    %cst_387 = arith.constant dense<0.000000e+00> : vector<2x28xf32>
    %768 = tpu.matmul %760, %34, %cst_387 {dimension_numbers = #tpu.dot_dimension_numbers<[1], [0], [0], [1], [0, 0, 1, 1], [], []>} : vector<2x28xf32>, vector<28x28xf32>, vector<2x28xf32> -> vector<2x28xf32>
    %cst_388 = arith.constant dense<0.000000e+00> : vector<2x28xf32>
    %769 = tpu.matmul %760, %36, %cst_388 {dimension_numbers = #tpu.dot_dimension_numbers<[1], [0], [0], [1], [0, 0, 1, 1], [], []>} : vector<2x28xf32>, vector<28x28xf32>, vector<2x28xf32> -> vector<2x28xf32>
    %770 = arith.addf %769, %39 : vector<2x28xf32>
    %771 = arith.addf %762, %767 : vector<2x28xf32>
    %772 = arith.negf %771 : vector<2x28xf32>
    %773 = math.exp %772 : vector<2x28xf32>
    %cst_389 = arith.constant 1.000000e+00 : f32
    %774 = vector.broadcast %cst_389 : f32 to vector<2x28xf32>
    %775 = arith.addf %774, %773 : vector<2x28xf32>
    %776 = arith.divf %774, %775 : vector<2x28xf32>
    %777 = arith.addf %764, %768 : vector<2x28xf32>
    %778 = arith.negf %777 : vector<2x28xf32>
    %779 = math.exp %778 : vector<2x28xf32>
    %cst_390 = arith.constant 1.000000e+00 : f32
    %780 = vector.broadcast %cst_390 : f32 to vector<2x28xf32>
    %781 = arith.addf %780, %779 : vector<2x28xf32>
    %782 = arith.divf %780, %781 : vector<2x28xf32>
    %783 = arith.mulf %776, %770 : vector<2x28xf32>
    %784 = arith.addf %766, %783 : vector<2x28xf32>
    %785 = math.tanh %784 : vector<2x28xf32>
    %cst_391 = arith.constant 1.000000e+00 : f32
    %786 = vector.broadcast %cst_391 : f32 to vector<2x28xf32>
    %787 = arith.subf %786, %782 : vector<2x28xf32>
    %788 = arith.mulf %787, %785 : vector<2x28xf32>
    %789 = arith.mulf %782, %760 : vector<2x28xf32>
    %790 = arith.addf %788, %789 : vector<2x28xf32>
    %c0_392 = arith.constant 0 : index
    %c50 = arith.constant 50 : index
    %c0_393 = arith.constant 0 : index
    %791 = vector.load %arg9[%c0_392, %c50, %c0_393] : memref<3x72x28xf32, #tpu.memory_space<vmem>>, vector<1x2x28xf32>
    %792 = vector.shape_cast %791 : vector<1x2x28xf32> to vector<2x28xf32>
    %c1_394 = arith.constant 1 : index
    %c50_395 = arith.constant 50 : index
    %c0_396 = arith.constant 0 : index
    %793 = vector.load %arg9[%c1_394, %c50_395, %c0_396] : memref<3x72x28xf32, #tpu.memory_space<vmem>>, vector<1x2x28xf32>
    %794 = vector.shape_cast %793 : vector<1x2x28xf32> to vector<2x28xf32>
    %c2_397 = arith.constant 2 : index
    %c50_398 = arith.constant 50 : index
    %c0_399 = arith.constant 0 : index
    %795 = vector.load %arg9[%c2_397, %c50_398, %c0_399] : memref<3x72x28xf32, #tpu.memory_space<vmem>>, vector<1x2x28xf32>
    %796 = vector.shape_cast %795 : vector<1x2x28xf32> to vector<2x28xf32>
    %cst_400 = arith.constant dense<0.000000e+00> : vector<2x28xf32>
    %797 = tpu.matmul %790, %32, %cst_400 {dimension_numbers = #tpu.dot_dimension_numbers<[1], [0], [0], [1], [0, 0, 1, 1], [], []>} : vector<2x28xf32>, vector<28x28xf32>, vector<2x28xf32> -> vector<2x28xf32>
    %cst_401 = arith.constant dense<0.000000e+00> : vector<2x28xf32>
    %798 = tpu.matmul %790, %34, %cst_401 {dimension_numbers = #tpu.dot_dimension_numbers<[1], [0], [0], [1], [0, 0, 1, 1], [], []>} : vector<2x28xf32>, vector<28x28xf32>, vector<2x28xf32> -> vector<2x28xf32>
    %cst_402 = arith.constant dense<0.000000e+00> : vector<2x28xf32>
    %799 = tpu.matmul %790, %36, %cst_402 {dimension_numbers = #tpu.dot_dimension_numbers<[1], [0], [0], [1], [0, 0, 1, 1], [], []>} : vector<2x28xf32>, vector<28x28xf32>, vector<2x28xf32> -> vector<2x28xf32>
    %800 = arith.addf %799, %39 : vector<2x28xf32>
    %801 = arith.addf %792, %797 : vector<2x28xf32>
    %802 = arith.negf %801 : vector<2x28xf32>
    %803 = math.exp %802 : vector<2x28xf32>
    %cst_403 = arith.constant 1.000000e+00 : f32
    %804 = vector.broadcast %cst_403 : f32 to vector<2x28xf32>
    %805 = arith.addf %804, %803 : vector<2x28xf32>
    %806 = arith.divf %804, %805 : vector<2x28xf32>
    %807 = arith.addf %794, %798 : vector<2x28xf32>
    %808 = arith.negf %807 : vector<2x28xf32>
    %809 = math.exp %808 : vector<2x28xf32>
    %cst_404 = arith.constant 1.000000e+00 : f32
    %810 = vector.broadcast %cst_404 : f32 to vector<2x28xf32>
    %811 = arith.addf %810, %809 : vector<2x28xf32>
    %812 = arith.divf %810, %811 : vector<2x28xf32>
    %813 = arith.mulf %806, %800 : vector<2x28xf32>
    %814 = arith.addf %796, %813 : vector<2x28xf32>
    %815 = math.tanh %814 : vector<2x28xf32>
    %cst_405 = arith.constant 1.000000e+00 : f32
    %816 = vector.broadcast %cst_405 : f32 to vector<2x28xf32>
    %817 = arith.subf %816, %812 : vector<2x28xf32>
    %818 = arith.mulf %817, %815 : vector<2x28xf32>
    %819 = arith.mulf %812, %790 : vector<2x28xf32>
    %820 = arith.addf %818, %819 : vector<2x28xf32>
    %c0_406 = arith.constant 0 : index
    %c52 = arith.constant 52 : index
    %c0_407 = arith.constant 0 : index
    %821 = vector.load %arg9[%c0_406, %c52, %c0_407] : memref<3x72x28xf32, #tpu.memory_space<vmem>>, vector<1x2x28xf32>
    %822 = vector.shape_cast %821 : vector<1x2x28xf32> to vector<2x28xf32>
    %c1_408 = arith.constant 1 : index
    %c52_409 = arith.constant 52 : index
    %c0_410 = arith.constant 0 : index
    %823 = vector.load %arg9[%c1_408, %c52_409, %c0_410] : memref<3x72x28xf32, #tpu.memory_space<vmem>>, vector<1x2x28xf32>
    %824 = vector.shape_cast %823 : vector<1x2x28xf32> to vector<2x28xf32>
    %c2_411 = arith.constant 2 : index
    %c52_412 = arith.constant 52 : index
    %c0_413 = arith.constant 0 : index
    %825 = vector.load %arg9[%c2_411, %c52_412, %c0_413] : memref<3x72x28xf32, #tpu.memory_space<vmem>>, vector<1x2x28xf32>
    %826 = vector.shape_cast %825 : vector<1x2x28xf32> to vector<2x28xf32>
    %cst_414 = arith.constant dense<0.000000e+00> : vector<2x28xf32>
    %827 = tpu.matmul %820, %32, %cst_414 {dimension_numbers = #tpu.dot_dimension_numbers<[1], [0], [0], [1], [0, 0, 1, 1], [], []>} : vector<2x28xf32>, vector<28x28xf32>, vector<2x28xf32> -> vector<2x28xf32>
    %cst_415 = arith.constant dense<0.000000e+00> : vector<2x28xf32>
    %828 = tpu.matmul %820, %34, %cst_415 {dimension_numbers = #tpu.dot_dimension_numbers<[1], [0], [0], [1], [0, 0, 1, 1], [], []>} : vector<2x28xf32>, vector<28x28xf32>, vector<2x28xf32> -> vector<2x28xf32>
    %cst_416 = arith.constant dense<0.000000e+00> : vector<2x28xf32>
    %829 = tpu.matmul %820, %36, %cst_416 {dimension_numbers = #tpu.dot_dimension_numbers<[1], [0], [0], [1], [0, 0, 1, 1], [], []>} : vector<2x28xf32>, vector<28x28xf32>, vector<2x28xf32> -> vector<2x28xf32>
    %830 = arith.addf %829, %39 : vector<2x28xf32>
    %831 = arith.addf %822, %827 : vector<2x28xf32>
    %832 = arith.negf %831 : vector<2x28xf32>
    %833 = math.exp %832 : vector<2x28xf32>
    %cst_417 = arith.constant 1.000000e+00 : f32
    %834 = vector.broadcast %cst_417 : f32 to vector<2x28xf32>
    %835 = arith.addf %834, %833 : vector<2x28xf32>
    %836 = arith.divf %834, %835 : vector<2x28xf32>
    %837 = arith.addf %824, %828 : vector<2x28xf32>
    %838 = arith.negf %837 : vector<2x28xf32>
    %839 = math.exp %838 : vector<2x28xf32>
    %cst_418 = arith.constant 1.000000e+00 : f32
    %840 = vector.broadcast %cst_418 : f32 to vector<2x28xf32>
    %841 = arith.addf %840, %839 : vector<2x28xf32>
    %842 = arith.divf %840, %841 : vector<2x28xf32>
    %843 = arith.mulf %836, %830 : vector<2x28xf32>
    %844 = arith.addf %826, %843 : vector<2x28xf32>
    %845 = math.tanh %844 : vector<2x28xf32>
    %cst_419 = arith.constant 1.000000e+00 : f32
    %846 = vector.broadcast %cst_419 : f32 to vector<2x28xf32>
    %847 = arith.subf %846, %842 : vector<2x28xf32>
    %848 = arith.mulf %847, %845 : vector<2x28xf32>
    %849 = arith.mulf %842, %820 : vector<2x28xf32>
    %850 = arith.addf %848, %849 : vector<2x28xf32>
    %c0_420 = arith.constant 0 : index
    %c54 = arith.constant 54 : index
    %c0_421 = arith.constant 0 : index
    %851 = vector.load %arg9[%c0_420, %c54, %c0_421] : memref<3x72x28xf32, #tpu.memory_space<vmem>>, vector<1x2x28xf32>
    %852 = vector.shape_cast %851 : vector<1x2x28xf32> to vector<2x28xf32>
    %c1_422 = arith.constant 1 : index
    %c54_423 = arith.constant 54 : index
    %c0_424 = arith.constant 0 : index
    %853 = vector.load %arg9[%c1_422, %c54_423, %c0_424] : memref<3x72x28xf32, #tpu.memory_space<vmem>>, vector<1x2x28xf32>
    %854 = vector.shape_cast %853 : vector<1x2x28xf32> to vector<2x28xf32>
    %c2_425 = arith.constant 2 : index
    %c54_426 = arith.constant 54 : index
    %c0_427 = arith.constant 0 : index
    %855 = vector.load %arg9[%c2_425, %c54_426, %c0_427] : memref<3x72x28xf32, #tpu.memory_space<vmem>>, vector<1x2x28xf32>
    %856 = vector.shape_cast %855 : vector<1x2x28xf32> to vector<2x28xf32>
    %cst_428 = arith.constant dense<0.000000e+00> : vector<2x28xf32>
    %857 = tpu.matmul %850, %32, %cst_428 {dimension_numbers = #tpu.dot_dimension_numbers<[1], [0], [0], [1], [0, 0, 1, 1], [], []>} : vector<2x28xf32>, vector<28x28xf32>, vector<2x28xf32> -> vector<2x28xf32>
    %cst_429 = arith.constant dense<0.000000e+00> : vector<2x28xf32>
    %858 = tpu.matmul %850, %34, %cst_429 {dimension_numbers = #tpu.dot_dimension_numbers<[1], [0], [0], [1], [0, 0, 1, 1], [], []>} : vector<2x28xf32>, vector<28x28xf32>, vector<2x28xf32> -> vector<2x28xf32>
    %cst_430 = arith.constant dense<0.000000e+00> : vector<2x28xf32>
    %859 = tpu.matmul %850, %36, %cst_430 {dimension_numbers = #tpu.dot_dimension_numbers<[1], [0], [0], [1], [0, 0, 1, 1], [], []>} : vector<2x28xf32>, vector<28x28xf32>, vector<2x28xf32> -> vector<2x28xf32>
    %860 = arith.addf %859, %39 : vector<2x28xf32>
    %861 = arith.addf %852, %857 : vector<2x28xf32>
    %862 = arith.negf %861 : vector<2x28xf32>
    %863 = math.exp %862 : vector<2x28xf32>
    %cst_431 = arith.constant 1.000000e+00 : f32
    %864 = vector.broadcast %cst_431 : f32 to vector<2x28xf32>
    %865 = arith.addf %864, %863 : vector<2x28xf32>
    %866 = arith.divf %864, %865 : vector<2x28xf32>
    %867 = arith.addf %854, %858 : vector<2x28xf32>
    %868 = arith.negf %867 : vector<2x28xf32>
    %869 = math.exp %868 : vector<2x28xf32>
    %cst_432 = arith.constant 1.000000e+00 : f32
    %870 = vector.broadcast %cst_432 : f32 to vector<2x28xf32>
    %871 = arith.addf %870, %869 : vector<2x28xf32>
    %872 = arith.divf %870, %871 : vector<2x28xf32>
    %873 = arith.mulf %866, %860 : vector<2x28xf32>
    %874 = arith.addf %856, %873 : vector<2x28xf32>
    %875 = math.tanh %874 : vector<2x28xf32>
    %cst_433 = arith.constant 1.000000e+00 : f32
    %876 = vector.broadcast %cst_433 : f32 to vector<2x28xf32>
    %877 = arith.subf %876, %872 : vector<2x28xf32>
    %878 = arith.mulf %877, %875 : vector<2x28xf32>
    %879 = arith.mulf %872, %850 : vector<2x28xf32>
    %880 = arith.addf %878, %879 : vector<2x28xf32>
    %c0_434 = arith.constant 0 : index
    %c56 = arith.constant 56 : index
    %c0_435 = arith.constant 0 : index
    %881 = vector.load %arg9[%c0_434, %c56, %c0_435] : memref<3x72x28xf32, #tpu.memory_space<vmem>>, vector<1x2x28xf32>
    %882 = vector.shape_cast %881 : vector<1x2x28xf32> to vector<2x28xf32>
    %c1_436 = arith.constant 1 : index
    %c56_437 = arith.constant 56 : index
    %c0_438 = arith.constant 0 : index
    %883 = vector.load %arg9[%c1_436, %c56_437, %c0_438] : memref<3x72x28xf32, #tpu.memory_space<vmem>>, vector<1x2x28xf32>
    %884 = vector.shape_cast %883 : vector<1x2x28xf32> to vector<2x28xf32>
    %c2_439 = arith.constant 2 : index
    %c56_440 = arith.constant 56 : index
    %c0_441 = arith.constant 0 : index
    %885 = vector.load %arg9[%c2_439, %c56_440, %c0_441] : memref<3x72x28xf32, #tpu.memory_space<vmem>>, vector<1x2x28xf32>
    %886 = vector.shape_cast %885 : vector<1x2x28xf32> to vector<2x28xf32>
    %cst_442 = arith.constant dense<0.000000e+00> : vector<2x28xf32>
    %887 = tpu.matmul %880, %32, %cst_442 {dimension_numbers = #tpu.dot_dimension_numbers<[1], [0], [0], [1], [0, 0, 1, 1], [], []>} : vector<2x28xf32>, vector<28x28xf32>, vector<2x28xf32> -> vector<2x28xf32>
    %cst_443 = arith.constant dense<0.000000e+00> : vector<2x28xf32>
    %888 = tpu.matmul %880, %34, %cst_443 {dimension_numbers = #tpu.dot_dimension_numbers<[1], [0], [0], [1], [0, 0, 1, 1], [], []>} : vector<2x28xf32>, vector<28x28xf32>, vector<2x28xf32> -> vector<2x28xf32>
    %cst_444 = arith.constant dense<0.000000e+00> : vector<2x28xf32>
    %889 = tpu.matmul %880, %36, %cst_444 {dimension_numbers = #tpu.dot_dimension_numbers<[1], [0], [0], [1], [0, 0, 1, 1], [], []>} : vector<2x28xf32>, vector<28x28xf32>, vector<2x28xf32> -> vector<2x28xf32>
    %890 = arith.addf %889, %39 : vector<2x28xf32>
    %891 = arith.addf %882, %887 : vector<2x28xf32>
    %892 = arith.negf %891 : vector<2x28xf32>
    %893 = math.exp %892 : vector<2x28xf32>
    %cst_445 = arith.constant 1.000000e+00 : f32
    %894 = vector.broadcast %cst_445 : f32 to vector<2x28xf32>
    %895 = arith.addf %894, %893 : vector<2x28xf32>
    %896 = arith.divf %894, %895 : vector<2x28xf32>
    %897 = arith.addf %884, %888 : vector<2x28xf32>
    %898 = arith.negf %897 : vector<2x28xf32>
    %899 = math.exp %898 : vector<2x28xf32>
    %cst_446 = arith.constant 1.000000e+00 : f32
    %900 = vector.broadcast %cst_446 : f32 to vector<2x28xf32>
    %901 = arith.addf %900, %899 : vector<2x28xf32>
    %902 = arith.divf %900, %901 : vector<2x28xf32>
    %903 = arith.mulf %896, %890 : vector<2x28xf32>
    %904 = arith.addf %886, %903 : vector<2x28xf32>
    %905 = math.tanh %904 : vector<2x28xf32>
    %cst_447 = arith.constant 1.000000e+00 : f32
    %906 = vector.broadcast %cst_447 : f32 to vector<2x28xf32>
    %907 = arith.subf %906, %902 : vector<2x28xf32>
    %908 = arith.mulf %907, %905 : vector<2x28xf32>
    %909 = arith.mulf %902, %880 : vector<2x28xf32>
    %910 = arith.addf %908, %909 : vector<2x28xf32>
    %c0_448 = arith.constant 0 : index
    %c58 = arith.constant 58 : index
    %c0_449 = arith.constant 0 : index
    %911 = vector.load %arg9[%c0_448, %c58, %c0_449] : memref<3x72x28xf32, #tpu.memory_space<vmem>>, vector<1x2x28xf32>
    %912 = vector.shape_cast %911 : vector<1x2x28xf32> to vector<2x28xf32>
    %c1_450 = arith.constant 1 : index
    %c58_451 = arith.constant 58 : index
    %c0_452 = arith.constant 0 : index
    %913 = vector.load %arg9[%c1_450, %c58_451, %c0_452] : memref<3x72x28xf32, #tpu.memory_space<vmem>>, vector<1x2x28xf32>
    %914 = vector.shape_cast %913 : vector<1x2x28xf32> to vector<2x28xf32>
    %c2_453 = arith.constant 2 : index
    %c58_454 = arith.constant 58 : index
    %c0_455 = arith.constant 0 : index
    %915 = vector.load %arg9[%c2_453, %c58_454, %c0_455] : memref<3x72x28xf32, #tpu.memory_space<vmem>>, vector<1x2x28xf32>
    %916 = vector.shape_cast %915 : vector<1x2x28xf32> to vector<2x28xf32>
    %cst_456 = arith.constant dense<0.000000e+00> : vector<2x28xf32>
    %917 = tpu.matmul %910, %32, %cst_456 {dimension_numbers = #tpu.dot_dimension_numbers<[1], [0], [0], [1], [0, 0, 1, 1], [], []>} : vector<2x28xf32>, vector<28x28xf32>, vector<2x28xf32> -> vector<2x28xf32>
    %cst_457 = arith.constant dense<0.000000e+00> : vector<2x28xf32>
    %918 = tpu.matmul %910, %34, %cst_457 {dimension_numbers = #tpu.dot_dimension_numbers<[1], [0], [0], [1], [0, 0, 1, 1], [], []>} : vector<2x28xf32>, vector<28x28xf32>, vector<2x28xf32> -> vector<2x28xf32>
    %cst_458 = arith.constant dense<0.000000e+00> : vector<2x28xf32>
    %919 = tpu.matmul %910, %36, %cst_458 {dimension_numbers = #tpu.dot_dimension_numbers<[1], [0], [0], [1], [0, 0, 1, 1], [], []>} : vector<2x28xf32>, vector<28x28xf32>, vector<2x28xf32> -> vector<2x28xf32>
    %920 = arith.addf %919, %39 : vector<2x28xf32>
    %921 = arith.addf %912, %917 : vector<2x28xf32>
    %922 = arith.negf %921 : vector<2x28xf32>
    %923 = math.exp %922 : vector<2x28xf32>
    %cst_459 = arith.constant 1.000000e+00 : f32
    %924 = vector.broadcast %cst_459 : f32 to vector<2x28xf32>
    %925 = arith.addf %924, %923 : vector<2x28xf32>
    %926 = arith.divf %924, %925 : vector<2x28xf32>
    %927 = arith.addf %914, %918 : vector<2x28xf32>
    %928 = arith.negf %927 : vector<2x28xf32>
    %929 = math.exp %928 : vector<2x28xf32>
    %cst_460 = arith.constant 1.000000e+00 : f32
    %930 = vector.broadcast %cst_460 : f32 to vector<2x28xf32>
    %931 = arith.addf %930, %929 : vector<2x28xf32>
    %932 = arith.divf %930, %931 : vector<2x28xf32>
    %933 = arith.mulf %926, %920 : vector<2x28xf32>
    %934 = arith.addf %916, %933 : vector<2x28xf32>
    %935 = math.tanh %934 : vector<2x28xf32>
    %cst_461 = arith.constant 1.000000e+00 : f32
    %936 = vector.broadcast %cst_461 : f32 to vector<2x28xf32>
    %937 = arith.subf %936, %932 : vector<2x28xf32>
    %938 = arith.mulf %937, %935 : vector<2x28xf32>
    %939 = arith.mulf %932, %910 : vector<2x28xf32>
    %940 = arith.addf %938, %939 : vector<2x28xf32>
    %c0_462 = arith.constant 0 : index
    %c60 = arith.constant 60 : index
    %c0_463 = arith.constant 0 : index
    %941 = vector.load %arg9[%c0_462, %c60, %c0_463] : memref<3x72x28xf32, #tpu.memory_space<vmem>>, vector<1x2x28xf32>
    %942 = vector.shape_cast %941 : vector<1x2x28xf32> to vector<2x28xf32>
    %c1_464 = arith.constant 1 : index
    %c60_465 = arith.constant 60 : index
    %c0_466 = arith.constant 0 : index
    %943 = vector.load %arg9[%c1_464, %c60_465, %c0_466] : memref<3x72x28xf32, #tpu.memory_space<vmem>>, vector<1x2x28xf32>
    %944 = vector.shape_cast %943 : vector<1x2x28xf32> to vector<2x28xf32>
    %c2_467 = arith.constant 2 : index
    %c60_468 = arith.constant 60 : index
    %c0_469 = arith.constant 0 : index
    %945 = vector.load %arg9[%c2_467, %c60_468, %c0_469] : memref<3x72x28xf32, #tpu.memory_space<vmem>>, vector<1x2x28xf32>
    %946 = vector.shape_cast %945 : vector<1x2x28xf32> to vector<2x28xf32>
    %cst_470 = arith.constant dense<0.000000e+00> : vector<2x28xf32>
    %947 = tpu.matmul %940, %32, %cst_470 {dimension_numbers = #tpu.dot_dimension_numbers<[1], [0], [0], [1], [0, 0, 1, 1], [], []>} : vector<2x28xf32>, vector<28x28xf32>, vector<2x28xf32> -> vector<2x28xf32>
    %cst_471 = arith.constant dense<0.000000e+00> : vector<2x28xf32>
    %948 = tpu.matmul %940, %34, %cst_471 {dimension_numbers = #tpu.dot_dimension_numbers<[1], [0], [0], [1], [0, 0, 1, 1], [], []>} : vector<2x28xf32>, vector<28x28xf32>, vector<2x28xf32> -> vector<2x28xf32>
    %cst_472 = arith.constant dense<0.000000e+00> : vector<2x28xf32>
    %949 = tpu.matmul %940, %36, %cst_472 {dimension_numbers = #tpu.dot_dimension_numbers<[1], [0], [0], [1], [0, 0, 1, 1], [], []>} : vector<2x28xf32>, vector<28x28xf32>, vector<2x28xf32> -> vector<2x28xf32>
    %950 = arith.addf %949, %39 : vector<2x28xf32>
    %951 = arith.addf %942, %947 : vector<2x28xf32>
    %952 = arith.negf %951 : vector<2x28xf32>
    %953 = math.exp %952 : vector<2x28xf32>
    %cst_473 = arith.constant 1.000000e+00 : f32
    %954 = vector.broadcast %cst_473 : f32 to vector<2x28xf32>
    %955 = arith.addf %954, %953 : vector<2x28xf32>
    %956 = arith.divf %954, %955 : vector<2x28xf32>
    %957 = arith.addf %944, %948 : vector<2x28xf32>
    %958 = arith.negf %957 : vector<2x28xf32>
    %959 = math.exp %958 : vector<2x28xf32>
    %cst_474 = arith.constant 1.000000e+00 : f32
    %960 = vector.broadcast %cst_474 : f32 to vector<2x28xf32>
    %961 = arith.addf %960, %959 : vector<2x28xf32>
    %962 = arith.divf %960, %961 : vector<2x28xf32>
    %963 = arith.mulf %956, %950 : vector<2x28xf32>
    %964 = arith.addf %946, %963 : vector<2x28xf32>
    %965 = math.tanh %964 : vector<2x28xf32>
    %cst_475 = arith.constant 1.000000e+00 : f32
    %966 = vector.broadcast %cst_475 : f32 to vector<2x28xf32>
    %967 = arith.subf %966, %962 : vector<2x28xf32>
    %968 = arith.mulf %967, %965 : vector<2x28xf32>
    %969 = arith.mulf %962, %940 : vector<2x28xf32>
    %970 = arith.addf %968, %969 : vector<2x28xf32>
    %c0_476 = arith.constant 0 : index
    %c62 = arith.constant 62 : index
    %c0_477 = arith.constant 0 : index
    %971 = vector.load %arg9[%c0_476, %c62, %c0_477] : memref<3x72x28xf32, #tpu.memory_space<vmem>>, vector<1x2x28xf32>
    %972 = vector.shape_cast %971 : vector<1x2x28xf32> to vector<2x28xf32>
    %c1_478 = arith.constant 1 : index
    %c62_479 = arith.constant 62 : index
    %c0_480 = arith.constant 0 : index
    %973 = vector.load %arg9[%c1_478, %c62_479, %c0_480] : memref<3x72x28xf32, #tpu.memory_space<vmem>>, vector<1x2x28xf32>
    %974 = vector.shape_cast %973 : vector<1x2x28xf32> to vector<2x28xf32>
    %c2_481 = arith.constant 2 : index
    %c62_482 = arith.constant 62 : index
    %c0_483 = arith.constant 0 : index
    %975 = vector.load %arg9[%c2_481, %c62_482, %c0_483] : memref<3x72x28xf32, #tpu.memory_space<vmem>>, vector<1x2x28xf32>
    %976 = vector.shape_cast %975 : vector<1x2x28xf32> to vector<2x28xf32>
    %cst_484 = arith.constant dense<0.000000e+00> : vector<2x28xf32>
    %977 = tpu.matmul %970, %32, %cst_484 {dimension_numbers = #tpu.dot_dimension_numbers<[1], [0], [0], [1], [0, 0, 1, 1], [], []>} : vector<2x28xf32>, vector<28x28xf32>, vector<2x28xf32> -> vector<2x28xf32>
    %cst_485 = arith.constant dense<0.000000e+00> : vector<2x28xf32>
    %978 = tpu.matmul %970, %34, %cst_485 {dimension_numbers = #tpu.dot_dimension_numbers<[1], [0], [0], [1], [0, 0, 1, 1], [], []>} : vector<2x28xf32>, vector<28x28xf32>, vector<2x28xf32> -> vector<2x28xf32>
    %cst_486 = arith.constant dense<0.000000e+00> : vector<2x28xf32>
    %979 = tpu.matmul %970, %36, %cst_486 {dimension_numbers = #tpu.dot_dimension_numbers<[1], [0], [0], [1], [0, 0, 1, 1], [], []>} : vector<2x28xf32>, vector<28x28xf32>, vector<2x28xf32> -> vector<2x28xf32>
    %980 = arith.addf %979, %39 : vector<2x28xf32>
    %981 = arith.addf %972, %977 : vector<2x28xf32>
    %982 = arith.negf %981 : vector<2x28xf32>
    %983 = math.exp %982 : vector<2x28xf32>
    %cst_487 = arith.constant 1.000000e+00 : f32
    %984 = vector.broadcast %cst_487 : f32 to vector<2x28xf32>
    %985 = arith.addf %984, %983 : vector<2x28xf32>
    %986 = arith.divf %984, %985 : vector<2x28xf32>
    %987 = arith.addf %974, %978 : vector<2x28xf32>
    %988 = arith.negf %987 : vector<2x28xf32>
    %989 = math.exp %988 : vector<2x28xf32>
    %cst_488 = arith.constant 1.000000e+00 : f32
    %990 = vector.broadcast %cst_488 : f32 to vector<2x28xf32>
    %991 = arith.addf %990, %989 : vector<2x28xf32>
    %992 = arith.divf %990, %991 : vector<2x28xf32>
    %993 = arith.mulf %986, %980 : vector<2x28xf32>
    %994 = arith.addf %976, %993 : vector<2x28xf32>
    %995 = math.tanh %994 : vector<2x28xf32>
    %cst_489 = arith.constant 1.000000e+00 : f32
    %996 = vector.broadcast %cst_489 : f32 to vector<2x28xf32>
    %997 = arith.subf %996, %992 : vector<2x28xf32>
    %998 = arith.mulf %997, %995 : vector<2x28xf32>
    %999 = arith.mulf %992, %970 : vector<2x28xf32>
    %1000 = arith.addf %998, %999 : vector<2x28xf32>
    %c0_490 = arith.constant 0 : index
    %c64 = arith.constant 64 : index
    %c0_491 = arith.constant 0 : index
    %1001 = vector.load %arg9[%c0_490, %c64, %c0_491] : memref<3x72x28xf32, #tpu.memory_space<vmem>>, vector<1x2x28xf32>
    %1002 = vector.shape_cast %1001 : vector<1x2x28xf32> to vector<2x28xf32>
    %c1_492 = arith.constant 1 : index
    %c64_493 = arith.constant 64 : index
    %c0_494 = arith.constant 0 : index
    %1003 = vector.load %arg9[%c1_492, %c64_493, %c0_494] : memref<3x72x28xf32, #tpu.memory_space<vmem>>, vector<1x2x28xf32>
    %1004 = vector.shape_cast %1003 : vector<1x2x28xf32> to vector<2x28xf32>
    %c2_495 = arith.constant 2 : index
    %c64_496 = arith.constant 64 : index
    %c0_497 = arith.constant 0 : index
    %1005 = vector.load %arg9[%c2_495, %c64_496, %c0_497] : memref<3x72x28xf32, #tpu.memory_space<vmem>>, vector<1x2x28xf32>
    %1006 = vector.shape_cast %1005 : vector<1x2x28xf32> to vector<2x28xf32>
    %cst_498 = arith.constant dense<0.000000e+00> : vector<2x28xf32>
    %1007 = tpu.matmul %1000, %32, %cst_498 {dimension_numbers = #tpu.dot_dimension_numbers<[1], [0], [0], [1], [0, 0, 1, 1], [], []>} : vector<2x28xf32>, vector<28x28xf32>, vector<2x28xf32> -> vector<2x28xf32>
    %cst_499 = arith.constant dense<0.000000e+00> : vector<2x28xf32>
    %1008 = tpu.matmul %1000, %34, %cst_499 {dimension_numbers = #tpu.dot_dimension_numbers<[1], [0], [0], [1], [0, 0, 1, 1], [], []>} : vector<2x28xf32>, vector<28x28xf32>, vector<2x28xf32> -> vector<2x28xf32>
    %cst_500 = arith.constant dense<0.000000e+00> : vector<2x28xf32>
    %1009 = tpu.matmul %1000, %36, %cst_500 {dimension_numbers = #tpu.dot_dimension_numbers<[1], [0], [0], [1], [0, 0, 1, 1], [], []>} : vector<2x28xf32>, vector<28x28xf32>, vector<2x28xf32> -> vector<2x28xf32>
    %1010 = arith.addf %1009, %39 : vector<2x28xf32>
    %1011 = arith.addf %1002, %1007 : vector<2x28xf32>
    %1012 = arith.negf %1011 : vector<2x28xf32>
    %1013 = math.exp %1012 : vector<2x28xf32>
    %cst_501 = arith.constant 1.000000e+00 : f32
    %1014 = vector.broadcast %cst_501 : f32 to vector<2x28xf32>
    %1015 = arith.addf %1014, %1013 : vector<2x28xf32>
    %1016 = arith.divf %1014, %1015 : vector<2x28xf32>
    %1017 = arith.addf %1004, %1008 : vector<2x28xf32>
    %1018 = arith.negf %1017 : vector<2x28xf32>
    %1019 = math.exp %1018 : vector<2x28xf32>
    %cst_502 = arith.constant 1.000000e+00 : f32
    %1020 = vector.broadcast %cst_502 : f32 to vector<2x28xf32>
    %1021 = arith.addf %1020, %1019 : vector<2x28xf32>
    %1022 = arith.divf %1020, %1021 : vector<2x28xf32>
    %1023 = arith.mulf %1016, %1010 : vector<2x28xf32>
    %1024 = arith.addf %1006, %1023 : vector<2x28xf32>
    %1025 = math.tanh %1024 : vector<2x28xf32>
    %cst_503 = arith.constant 1.000000e+00 : f32
    %1026 = vector.broadcast %cst_503 : f32 to vector<2x28xf32>
    %1027 = arith.subf %1026, %1022 : vector<2x28xf32>
    %1028 = arith.mulf %1027, %1025 : vector<2x28xf32>
    %1029 = arith.mulf %1022, %1000 : vector<2x28xf32>
    %1030 = arith.addf %1028, %1029 : vector<2x28xf32>
    %c0_504 = arith.constant 0 : index
    %c66 = arith.constant 66 : index
    %c0_505 = arith.constant 0 : index
    %1031 = vector.load %arg9[%c0_504, %c66, %c0_505] : memref<3x72x28xf32, #tpu.memory_space<vmem>>, vector<1x2x28xf32>
    %1032 = vector.shape_cast %1031 : vector<1x2x28xf32> to vector<2x28xf32>
    %c1_506 = arith.constant 1 : index
    %c66_507 = arith.constant 66 : index
    %c0_508 = arith.constant 0 : index
    %1033 = vector.load %arg9[%c1_506, %c66_507, %c0_508] : memref<3x72x28xf32, #tpu.memory_space<vmem>>, vector<1x2x28xf32>
    %1034 = vector.shape_cast %1033 : vector<1x2x28xf32> to vector<2x28xf32>
    %c2_509 = arith.constant 2 : index
    %c66_510 = arith.constant 66 : index
    %c0_511 = arith.constant 0 : index
    %1035 = vector.load %arg9[%c2_509, %c66_510, %c0_511] : memref<3x72x28xf32, #tpu.memory_space<vmem>>, vector<1x2x28xf32>
    %1036 = vector.shape_cast %1035 : vector<1x2x28xf32> to vector<2x28xf32>
    %cst_512 = arith.constant dense<0.000000e+00> : vector<2x28xf32>
    %1037 = tpu.matmul %1030, %32, %cst_512 {dimension_numbers = #tpu.dot_dimension_numbers<[1], [0], [0], [1], [0, 0, 1, 1], [], []>} : vector<2x28xf32>, vector<28x28xf32>, vector<2x28xf32> -> vector<2x28xf32>
    %cst_513 = arith.constant dense<0.000000e+00> : vector<2x28xf32>
    %1038 = tpu.matmul %1030, %34, %cst_513 {dimension_numbers = #tpu.dot_dimension_numbers<[1], [0], [0], [1], [0, 0, 1, 1], [], []>} : vector<2x28xf32>, vector<28x28xf32>, vector<2x28xf32> -> vector<2x28xf32>
    %cst_514 = arith.constant dense<0.000000e+00> : vector<2x28xf32>
    %1039 = tpu.matmul %1030, %36, %cst_514 {dimension_numbers = #tpu.dot_dimension_numbers<[1], [0], [0], [1], [0, 0, 1, 1], [], []>} : vector<2x28xf32>, vector<28x28xf32>, vector<2x28xf32> -> vector<2x28xf32>
    %1040 = arith.addf %1039, %39 : vector<2x28xf32>
    %1041 = arith.addf %1032, %1037 : vector<2x28xf32>
    %1042 = arith.negf %1041 : vector<2x28xf32>
    %1043 = math.exp %1042 : vector<2x28xf32>
    %cst_515 = arith.constant 1.000000e+00 : f32
    %1044 = vector.broadcast %cst_515 : f32 to vector<2x28xf32>
    %1045 = arith.addf %1044, %1043 : vector<2x28xf32>
    %1046 = arith.divf %1044, %1045 : vector<2x28xf32>
    %1047 = arith.addf %1034, %1038 : vector<2x28xf32>
    %1048 = arith.negf %1047 : vector<2x28xf32>
    %1049 = math.exp %1048 : vector<2x28xf32>
    %cst_516 = arith.constant 1.000000e+00 : f32
    %1050 = vector.broadcast %cst_516 : f32 to vector<2x28xf32>
    %1051 = arith.addf %1050, %1049 : vector<2x28xf32>
    %1052 = arith.divf %1050, %1051 : vector<2x28xf32>
    %1053 = arith.mulf %1046, %1040 : vector<2x28xf32>
    %1054 = arith.addf %1036, %1053 : vector<2x28xf32>
    %1055 = math.tanh %1054 : vector<2x28xf32>
    %cst_517 = arith.constant 1.000000e+00 : f32
    %1056 = vector.broadcast %cst_517 : f32 to vector<2x28xf32>
    %1057 = arith.subf %1056, %1052 : vector<2x28xf32>
    %1058 = arith.mulf %1057, %1055 : vector<2x28xf32>
    %1059 = arith.mulf %1052, %1030 : vector<2x28xf32>
    %1060 = arith.addf %1058, %1059 : vector<2x28xf32>
    %c0_518 = arith.constant 0 : index
    %c68 = arith.constant 68 : index
    %c0_519 = arith.constant 0 : index
    %1061 = vector.load %arg9[%c0_518, %c68, %c0_519] : memref<3x72x28xf32, #tpu.memory_space<vmem>>, vector<1x2x28xf32>
    %1062 = vector.shape_cast %1061 : vector<1x2x28xf32> to vector<2x28xf32>
    %c1_520 = arith.constant 1 : index
    %c68_521 = arith.constant 68 : index
    %c0_522 = arith.constant 0 : index
    %1063 = vector.load %arg9[%c1_520, %c68_521, %c0_522] : memref<3x72x28xf32, #tpu.memory_space<vmem>>, vector<1x2x28xf32>
    %1064 = vector.shape_cast %1063 : vector<1x2x28xf32> to vector<2x28xf32>
    %c2_523 = arith.constant 2 : index
    %c68_524 = arith.constant 68 : index
    %c0_525 = arith.constant 0 : index
    %1065 = vector.load %arg9[%c2_523, %c68_524, %c0_525] : memref<3x72x28xf32, #tpu.memory_space<vmem>>, vector<1x2x28xf32>
    %1066 = vector.shape_cast %1065 : vector<1x2x28xf32> to vector<2x28xf32>
    %cst_526 = arith.constant dense<0.000000e+00> : vector<2x28xf32>
    %1067 = tpu.matmul %1060, %32, %cst_526 {dimension_numbers = #tpu.dot_dimension_numbers<[1], [0], [0], [1], [0, 0, 1, 1], [], []>} : vector<2x28xf32>, vector<28x28xf32>, vector<2x28xf32> -> vector<2x28xf32>
    %cst_527 = arith.constant dense<0.000000e+00> : vector<2x28xf32>
    %1068 = tpu.matmul %1060, %34, %cst_527 {dimension_numbers = #tpu.dot_dimension_numbers<[1], [0], [0], [1], [0, 0, 1, 1], [], []>} : vector<2x28xf32>, vector<28x28xf32>, vector<2x28xf32> -> vector<2x28xf32>
    %cst_528 = arith.constant dense<0.000000e+00> : vector<2x28xf32>
    %1069 = tpu.matmul %1060, %36, %cst_528 {dimension_numbers = #tpu.dot_dimension_numbers<[1], [0], [0], [1], [0, 0, 1, 1], [], []>} : vector<2x28xf32>, vector<28x28xf32>, vector<2x28xf32> -> vector<2x28xf32>
    %1070 = arith.addf %1069, %39 : vector<2x28xf32>
    %1071 = arith.addf %1062, %1067 : vector<2x28xf32>
    %1072 = arith.negf %1071 : vector<2x28xf32>
    %1073 = math.exp %1072 : vector<2x28xf32>
    %cst_529 = arith.constant 1.000000e+00 : f32
    %1074 = vector.broadcast %cst_529 : f32 to vector<2x28xf32>
    %1075 = arith.addf %1074, %1073 : vector<2x28xf32>
    %1076 = arith.divf %1074, %1075 : vector<2x28xf32>
    %1077 = arith.addf %1064, %1068 : vector<2x28xf32>
    %1078 = arith.negf %1077 : vector<2x28xf32>
    %1079 = math.exp %1078 : vector<2x28xf32>
    %cst_530 = arith.constant 1.000000e+00 : f32
    %1080 = vector.broadcast %cst_530 : f32 to vector<2x28xf32>
    %1081 = arith.addf %1080, %1079 : vector<2x28xf32>
    %1082 = arith.divf %1080, %1081 : vector<2x28xf32>
    %1083 = arith.mulf %1076, %1070 : vector<2x28xf32>
    %1084 = arith.addf %1066, %1083 : vector<2x28xf32>
    %1085 = math.tanh %1084 : vector<2x28xf32>
    %cst_531 = arith.constant 1.000000e+00 : f32
    %1086 = vector.broadcast %cst_531 : f32 to vector<2x28xf32>
    %1087 = arith.subf %1086, %1082 : vector<2x28xf32>
    %1088 = arith.mulf %1087, %1085 : vector<2x28xf32>
    %1089 = arith.mulf %1082, %1060 : vector<2x28xf32>
    %1090 = arith.addf %1088, %1089 : vector<2x28xf32>
    %c0_532 = arith.constant 0 : index
    %c70 = arith.constant 70 : index
    %c0_533 = arith.constant 0 : index
    %1091 = vector.load %arg9[%c0_532, %c70, %c0_533] : memref<3x72x28xf32, #tpu.memory_space<vmem>>, vector<1x2x28xf32>
    %1092 = vector.shape_cast %1091 : vector<1x2x28xf32> to vector<2x28xf32>
    %c1_534 = arith.constant 1 : index
    %c70_535 = arith.constant 70 : index
    %c0_536 = arith.constant 0 : index
    %1093 = vector.load %arg9[%c1_534, %c70_535, %c0_536] : memref<3x72x28xf32, #tpu.memory_space<vmem>>, vector<1x2x28xf32>
    %1094 = vector.shape_cast %1093 : vector<1x2x28xf32> to vector<2x28xf32>
    %c2_537 = arith.constant 2 : index
    %c70_538 = arith.constant 70 : index
    %c0_539 = arith.constant 0 : index
    %1095 = vector.load %arg9[%c2_537, %c70_538, %c0_539] : memref<3x72x28xf32, #tpu.memory_space<vmem>>, vector<1x2x28xf32>
    %1096 = vector.shape_cast %1095 : vector<1x2x28xf32> to vector<2x28xf32>
    %cst_540 = arith.constant dense<0.000000e+00> : vector<2x28xf32>
    %1097 = tpu.matmul %1090, %32, %cst_540 {dimension_numbers = #tpu.dot_dimension_numbers<[1], [0], [0], [1], [0, 0, 1, 1], [], []>} : vector<2x28xf32>, vector<28x28xf32>, vector<2x28xf32> -> vector<2x28xf32>
    %cst_541 = arith.constant dense<0.000000e+00> : vector<2x28xf32>
    %1098 = tpu.matmul %1090, %34, %cst_541 {dimension_numbers = #tpu.dot_dimension_numbers<[1], [0], [0], [1], [0, 0, 1, 1], [], []>} : vector<2x28xf32>, vector<28x28xf32>, vector<2x28xf32> -> vector<2x28xf32>
    %cst_542 = arith.constant dense<0.000000e+00> : vector<2x28xf32>
    %1099 = tpu.matmul %1090, %36, %cst_542 {dimension_numbers = #tpu.dot_dimension_numbers<[1], [0], [0], [1], [0, 0, 1, 1], [], []>} : vector<2x28xf32>, vector<28x28xf32>, vector<2x28xf32> -> vector<2x28xf32>
    %1100 = arith.addf %1099, %39 : vector<2x28xf32>
    %1101 = arith.addf %1092, %1097 : vector<2x28xf32>
    %1102 = arith.negf %1101 : vector<2x28xf32>
    %1103 = math.exp %1102 : vector<2x28xf32>
    %cst_543 = arith.constant 1.000000e+00 : f32
    %1104 = vector.broadcast %cst_543 : f32 to vector<2x28xf32>
    %1105 = arith.addf %1104, %1103 : vector<2x28xf32>
    %1106 = arith.divf %1104, %1105 : vector<2x28xf32>
    %1107 = arith.addf %1094, %1098 : vector<2x28xf32>
    %1108 = arith.negf %1107 : vector<2x28xf32>
    %1109 = math.exp %1108 : vector<2x28xf32>
    %cst_544 = arith.constant 1.000000e+00 : f32
    %1110 = vector.broadcast %cst_544 : f32 to vector<2x28xf32>
    %1111 = arith.addf %1110, %1109 : vector<2x28xf32>
    %1112 = arith.divf %1110, %1111 : vector<2x28xf32>
    %1113 = arith.mulf %1106, %1100 : vector<2x28xf32>
    %1114 = arith.addf %1096, %1113 : vector<2x28xf32>
    %1115 = math.tanh %1114 : vector<2x28xf32>
    %cst_545 = arith.constant 1.000000e+00 : f32
    %1116 = vector.broadcast %cst_545 : f32 to vector<2x28xf32>
    %1117 = arith.subf %1116, %1112 : vector<2x28xf32>
    %1118 = arith.mulf %1117, %1115 : vector<2x28xf32>
    %1119 = arith.mulf %1112, %1090 : vector<2x28xf32>
    %1120 = arith.addf %1118, %1119 : vector<2x28xf32>
    %c0_546 = arith.constant 0 : index
    %c0_547 = arith.constant 0 : index
    %1121 = vector.load %arg6[%c0_546, %c0_547] : memref<28x5xf32, #tpu.memory_space<vmem>>, vector<28x5xf32>
    %cst_548 = arith.constant dense<0.000000e+00> : vector<2x5xf32>
    %1122 = tpu.matmul %1120, %1121, %cst_548 {dimension_numbers = #tpu.dot_dimension_numbers<[1], [0], [0], [1], [0, 0, 1, 1], [], []>} : vector<2x28xf32>, vector<28x5xf32>, vector<2x5xf32> -> vector<2x5xf32>
    %c0_549 = arith.constant 0 : index
    %c0_550 = arith.constant 0 : index
    %1123 = vector.load %arg7[%c0_549, %c0_550] : memref<1x5xf32, #tpu.memory_space<vmem>>, vector<1x5xf32>
    %1124 = vector.broadcast %1123 : vector<1x5xf32> to vector<2x5xf32>
    %1125 = arith.addf %1122, %1124 : vector<2x5xf32>
    %c0_551 = arith.constant 0 : index
    %c0_552 = arith.constant 0 : index
    %1126 = vector.load %arg8[%c0_551, %c0_552] : memref<2x5xf32, #tpu.memory_space<vmem>>, vector<2x5xf32>
    tpu.vector_store %arg8[%c0_551, %c0_552], %1125 {strides = array<i32>} : memref<2x5xf32, #tpu.memory_space<vmem>>, vector<2x5xf32>,
    return
  }
  func.func @transform_0(%arg0: i32) -> (i32, i32) {
    %c0_i32 = arith.constant 0 : i32
    %c0_i32_0 = arith.constant 0 : i32
    %c0_i32_1 = arith.constant 0 : i32
    return %c0_i32, %c0_i32_0 : i32, i32
  }
  func.func @transform_1(%arg0: i32) -> (i32, i32, i32) {
    %c0_i32 = arith.constant 0 : i32
    %c0_i32_0 = arith.constant 0 : i32
    %c0_i32_1 = arith.constant 0 : i32
    %c0_i32_2 = arith.constant 0 : i32
    return %c0_i32, %c0_i32_0, %c0_i32_1 : i32, i32, i32
  }
  func.func @transform_2(%arg0: i32) -> (i32, i32, i32) {
    %c0_i32 = arith.constant 0 : i32
    %c0_i32_0 = arith.constant 0 : i32
    %c0_i32_1 = arith.constant 0 : i32
    %c0_i32_2 = arith.constant 0 : i32
    return %c0_i32, %c0_i32_0, %c0_i32_1 : i32, i32, i32
  }
  func.func @transform_3(%arg0: i32) -> (i32, i32, i32) {
    %c0_i32 = arith.constant 0 : i32
    %c0_i32_0 = arith.constant 0 : i32
    %c0_i32_1 = arith.constant 0 : i32
    %c0_i32_2 = arith.constant 0 : i32
    return %c0_i32, %c0_i32_0, %c0_i32_1 : i32, i32, i32
  }
  func.func @transform_4(%arg0: i32) -> (i32, i32) {
    %c0_i32 = arith.constant 0 : i32
    %c0_i32_0 = arith.constant 0 : i32
    %c0_i32_1 = arith.constant 0 : i32
    return %c0_i32, %c0_i32_0 : i32, i32
  }
  func.func @transform_5(%arg0: i32) -> (i32, i32) {
    %c0_i32 = arith.constant 0 : i32
    %c0_i32_0 = arith.constant 0 : i32
    %c0_i32_1 = arith.constant 0 : i32
    return %c0_i32, %c0_i32_0 : i32, i32
  }
  func.func @transform_6(%arg0: i32) -> (i32, i32) {
    %c0_i32 = arith.constant 0 : i32
    %c0_i32_0 = arith.constant 0 : i32
    %c0_i32_1 = arith.constant 0 : i32
    return %c0_i32, %c0_i32_0 : i32, i32
  }
  func.func @transform_7(%arg0: i32) -> (i32, i32) {
    %c0_i32 = arith.constant 0 : i32
    %c0_i32_0 = arith.constant 0 : i32
    %c0_i32_1 = arith.constant 0 : i32
    return %c0_i32, %c0_i32_0 : i32, i32
  }
}

</mosaic_0001>

<llo_original>
// kernel: my_gru_net.1
$region0: #{my_gru_net.1}
  #allocation0 [shape = 'u32[]', space=smem, size = 0x4, offset = 0x4, fixed_abs, tag = 'smem constant byte address 0x4 - core index']
  #allocation1 [shape = 'u32[144,128]{1,0:T(1,128)}', space=vmem, size = 0x12000, scoped, tag = 'internal scratch']
  #allocation2 [shape = 'f32[3,72,28]{2,1,0:T(8,128)}', space=vmem, size = 0x1b000, scoped, tag = 'scratch operand']
  %s0 = inlined_call_operand.vmem [shape: f32[72,28], index: 0, kind: input, shape index: {}]
  %s1 = inlined_call_operand.vmem [shape: f32[3,28,28], index: 1, kind: input, shape index: {}]
  %s2 = inlined_call_operand.vmem [shape: f32[3,28,28], index: 2, kind: input, shape index: {}]
  %s3 = inlined_call_operand.vmem [shape: f32[3,1,28], index: 3, kind: input, shape index: {}]
  %s4 = inlined_call_operand.vmem [shape: f32[1,28], index: 4, kind: input, shape index: {}]
  %s5 = inlined_call_operand.vmem [shape: f32[28,5], index: 5, kind: input, shape index: {}]
  %s6 = inlined_call_operand.vmem [shape: f32[1,5], index: 6, kind: input, shape index: {}]
  %s7 = inlined_call_operand.hbm [shape: f32[2,5], index: 7, kind: output, shape index: {}]
  %s8 = sld [smem:[#allocation0]]
  $region38: #{my_gru_net.1} parent=0
    _
  %s10 = ssub.s32 1, %s8
  %s11 = scalar_select 0, %s10, %s8
  $region1: #{my_gru_net.1} parent=0
    #allocation3 [shape = 'u8[1024]{0}', space=vmem, size = 0x400, scoped, tag = 'output window, operand 0, single buffered']
    #allocation4 [shape = 's32[1]{0}', space=sflag, size = 0x4, scoped, tag = 'scoped memory for my_gru_net.1']
    %12 = vsyncpa [#allocation4], 0
    // Predicated region
    $region2: #{my_gru_net.1} parent=1 // pred_check
      _
    $region3: #{my_gru_net.1} parent=1 // pred_check_branch
      %14 = sbr.rel (0) target = $region5
    $region4: #{my_gru_net.1} parent=1 // pred_region
      _
    $region5: #{my_gru_net.1} parent=1 // pred_fallthru
      _
    // Predicated region
    $region6: #{my_gru_net.1} parent=1 // pred_check
      _
    $region7: #{my_gru_net.1} parent=1 // pred_check_branch
      %16 = sbr.rel (0) target = $region9
    $region8: #{my_gru_net.1} parent=1 // pred_region
      _
    $region9: #{my_gru_net.1} parent=1 // pred_fallthru
      _
    // Predicated region
    $region10: #{my_gru_net.1} parent=1 // pred_check
      _
    $region11: #{my_gru_net.1} parent=1 // pred_check_branch
      %18 = sbr.rel (0) target = $region13
    $region12: #{my_gru_net.1} parent=1 // pred_region
      _
    $region13: #{my_gru_net.1} parent=1 // pred_fallthru
      _
    // Predicated region
    $region14: #{my_gru_net.1} parent=1 // pred_check
      _
    $region15: #{my_gru_net.1} parent=1 // pred_check_branch
      %20 = sbr.rel (0) target = $region17
    $region16: #{my_gru_net.1} parent=1 // pred_region
      _
    $region17: #{my_gru_net.1} parent=1 // pred_fallthru
      _
    // Predicated region
    $region18: #{my_gru_net.1} parent=1 // pred_check
      _
    $region19: #{my_gru_net.1} parent=1 // pred_check_branch
      %22 = sbr.rel (0) target = $region21
    $region20: #{my_gru_net.1} parent=1 // pred_region
      _
    $region21: #{my_gru_net.1} parent=1 // pred_fallthru
      _
    // Predicated region
    $region22: #{my_gru_net.1} parent=1 // pred_check
      _
    $region23: #{my_gru_net.1} parent=1 // pred_check_branch
      %24 = sbr.rel (0) target = $region25
    $region24: #{my_gru_net.1} parent=1 // pred_region
      _
    $region25: #{my_gru_net.1} parent=1 // pred_fallthru
      _
    // Predicated region
    $region26: #{my_gru_net.1} parent=1 // pred_check
      _
    $region27: #{my_gru_net.1} parent=1 // pred_check_branch
      %26 = sbr.rel (0) target = $region29
    $region28: #{my_gru_net.1} parent=1 // pred_region
      _
    $region29: #{my_gru_net.1} parent=1 // pred_fallthru
      _
    %v27 = vld [vmem:[%s0] sm:$0xff]
    %v28 = vld [vmem:[%s0 + $0x8] sm:$0xff]
    %v29 = vld [vmem:[%s0 + $0x10] sm:$0xff]
    %v30 = vld [vmem:[%s0 + $0x18] sm:$0xff]
    %v31 = vld [vmem:[%s0 + $0x20] sm:$0xff]
    %v32 = vld [vmem:[%s0 + $0x28] sm:$0xff]
    %v33 = vld [vmem:[%s0 + $0x30] sm:$0xff]
    %v34 = vld [vmem:[%s0 + $0x38] sm:$0xff]
    %v35 = vld [vmem:[%s0 + $0x40] sm:$0xff]
    %v36 = vld [vmem:[%s1] sm:$0xff]
    %v37 = vld [vmem:[%s1 + $0x8] sm:$0xff]
    %v38 = vld [vmem:[%s1 + $0x10] sm:$0xff]
    %v39 = vld [vmem:[%s1 + $0x18] sm:$0xf]
    %v40 = vld [vmem:[%s3] sm:$0x1]
    %v42 = vlaneseq
    %v43 = vshrl.u32 %v42, 7
    %v44 = vsub.s32 0, %v43
    %v45 = vrot.slane %v40, %v44
    %vm47 = vcmask 228352
    %v49 = vsel %vm47, %v27, 0
    %v52 = vsel %vm47, %v28, 0
    %v55 = vsel %vm47, %v29, 0
    %v58 = vsel %vm47, %v30, 0
    %v61 = vsel %vm47, %v31, 0
    %v64 = vsel %vm47, %v32, 0
    %v67 = vsel %vm47, %v33, 0
    %v70 = vsel %vm47, %v34, 0
    %v73 = vsel %vm47, %v35, 0
    %vm75 = vcmask 1043456
    %v77 = vsel %vm75, %v39, 0
    %79 = vmatprep.subr.mxu0 0.0
    %80 = vmatpush1.msra.mxu0 0.0
    %81 = vmatprep.subr.mxu0 0.0
    %82 = vmatpush1.msra.mxu0 0.0
    %83 = vmatprep.subr.mxu0 0.0
    %84 = vmatpush1.msra.mxu0 0.0
    %85 = vmatprep.subr.mxu0 0.0
    %86 = vmatpush1.msra.mxu0 0.0
    %87 = vmatprep.subr.mxu0 0.0
    %88 = vmatpush1.msra.mxu0 0.0
    %89 = vmatprep.subr.mxu0 0.0
    %90 = vmatpush1.msra.mxu0 0.0
    %91 = vmatprep.subr.mxu0 0.0
    %92 = vmatpush1.msra.mxu0 0.0
    %93 = vmatprep.subr.mxu0 0.0
    %94 = vmatpush1.msra.mxu0 0.0
    %95 = vmatprep.subr.mxu0 0.0
    %96 = vmatpush1.msra.mxu0 0.0
    %97 = vmatprep.subr.mxu0 0.0
    %98 = vmatpush1.msra.mxu0 0.0
    %99 = vmatprep.subr.mxu0 0.0
    %100 = vmatpush1.msra.mxu0 0.0
    %101 = vmatprep.subr.mxu0 0.0
    %102 = vmatpush1.msra.mxu0 0.0
    %103 = vmatprep.subr.mxu0 0.0
    %104 = vmatpush1.msra.mxu0 %v77
    %105 = vmatprep.subr.mxu0 0.0
    %106 = vmatpush1.msra.mxu0 %v38
    %107 = vmatprep.subr.mxu0 0.0
    %108 = vmatpush1.msra.mxu0 %v37
    %109 = vmatprep.subr.mxu0 0.0
    %110 = vmatpush1.msra.mxu0 %v36
    %111 = vmatprep.subr.mxu0 0.0
    %112 = vmatpush2.msra.mxu0 0.0
    %113 = vmatprep.subr.mxu0 0.0
    %114 = vmatpush2.msra.mxu0 0.0
    %115 = vmatprep.subr.mxu0 0.0
    %116 = vmatpush2.msra.mxu0 0.0
    %117 = vmatprep.subr.mxu0 0.0
    %118 = vmatpush2.msra.mxu0 0.0
    %119 = vmatprep.subr.mxu0 0.0
    %120 = vmatpush2.msra.mxu0 0.0
    %121 = vmatprep.subr.mxu0 0.0
    %122 = vmatpush2.msra.mxu0 0.0
    %123 = vmatprep.subr.mxu0 0.0
    %124 = vmatpush2.msra.mxu0 0.0
    %125 = vmatprep.subr.mxu0 0.0
    %126 = vmatpush2.msra.mxu0 0.0
    %127 = vmatprep.subr.mxu0 0.0
    %128 = vmatpush2.msra.mxu0 0.0
    %129 = vmatprep.subr.mxu0 0.0
    %130 = vmatpush2.msra.mxu0 0.0
    %131 = vmatprep.subr.mxu0 0.0
    %132 = vmatpush2.msra.mxu0 0.0
    %133 = vmatprep.subr.mxu0 0.0
    %134 = vmatpush2.msra.mxu0 0.0
    %135 = vmatprep.subr.mxu0 0.0
    %136 = vmatpush2.msra.mxu0 0.0
    %137 = vmatprep.subr.mxu0 0.0
    %138 = vmatpush2.msra.mxu0 0.0
    %139 = vmatprep.subr.mxu0 0.0
    %140 = vmatpush2.msra.mxu0 0.0
    %141 = vmatprep.subr.mxu0 0.0
    %142 = vmatpush2.msra.mxu0 0.0
    %143 = vmatprep.mubr.f32.mxu0 0.0
    %144 = vmatmul.mubr.f32.gmra.mxu0 %v49
    %v145 = vpop.f32.mrf.mxu0
    %v146 = vadd.f32 %v45, %v145
    %v147 = vpop.f32.mrf.mxu0
    %148 = vmatprep.mubr.f32.mxu0 0.0
    %149 = vmatmul.mubr.f32.gmra.mxu0 %v52
    %v150 = vpop.f32.mrf.mxu0
    %v151 = vadd.f32 %v45, %v150
    %v152 = vpop.f32.mrf.mxu0
    %153 = vmatprep.mubr.f32.mxu0 0.0
    %154 = vmatmul.mubr.f32.gmra.mxu0 %v55
    %v155 = vpop.f32.mrf.mxu0
    %v156 = vadd.f32 %v45, %v155
    %v157 = vpop.f32.mrf.mxu0
    %158 = vmatprep.mubr.f32.mxu0 0.0
    %159 = vmatmul.mubr.f32.gmra.mxu0 %v58
    %v160 = vpop.f32.mrf.mxu0
    %v161 = vadd.f32 %v45, %v160
    %v162 = vpop.f32.mrf.mxu0
    %163 = vmatprep.mubr.f32.mxu0 0.0
    %164 = vmatmul.mubr.f32.gmra.mxu0 %v61
    %v165 = vpop.f32.mrf.mxu0
    %v166 = vadd.f32 %v45, %v165
    %v167 = vpop.f32.mrf.mxu0
    %168 = vmatprep.mubr.f32.mxu0 0.0
    %169 = vmatmul.mubr.f32.gmra.mxu0 %v64
    %v170 = vpop.f32.mrf.mxu0
    %v171 = vadd.f32 %v45, %v170
    %v172 = vpop.f32.mrf.mxu0
    %173 = vmatprep.mubr.f32.mxu0 0.0
    %174 = vmatmul.mubr.f32.gmra.mxu0 %v67
    %v175 = vpop.f32.mrf.mxu0
    %v176 = vadd.f32 %v45, %v175
    %v177 = vpop.f32.mrf.mxu0
    %178 = vmatprep.mubr.f32.mxu0 0.0
    %179 = vmatmul.mubr.f32.gmra.mxu0 %v70
    %v180 = vpop.f32.mrf.mxu0
    %v181 = vadd.f32 %v45, %v180
    %v182 = vpop.f32.mrf.mxu0
    %183 = vmatprep.mubr.f32.mxu0 0.0
    %184 = vmatmul.mubr.f32.gmra.mxu0 %v73
    %v185 = vpop.f32.mrf.mxu0
    %v186 = vadd.f32 %v45, %v185
    %v187 = vpop.f32.mrf.mxu0
    %188 = vdwg.mxu0
    %189 = vst.msk [vmem:[#allocation2] sm:$0xff] %vm47, %v146
    %190 = vst.msk [vmem:[#allocation2 + $0x8] sm:$0xff] %vm47, %v151
    %191 = vst.msk [vmem:[#allocation2 + $0x10] sm:$0xff] %vm47, %v156
    %192 = vst.msk [vmem:[#allocation2 + $0x18] sm:$0xff] %vm47, %v161
    %193 = vst.msk [vmem:[#allocation2 + $0x20] sm:$0xff] %vm47, %v166
    %194 = vst.msk [vmem:[#allocation2 + $0x28] sm:$0xff] %vm47, %v171
    %195 = vst.msk [vmem:[#allocation2 + $0x30] sm:$0xff] %vm47, %v176
    %196 = vst.msk [vmem:[#allocation2 + $0x38] sm:$0xff] %vm47, %v181
    %197 = vst.msk [vmem:[#allocation2 + $0x40] sm:$0xff] %vm47, %v186
    %s198 = scalar_lea.vmem %s1, 32
    %v199 = vld [vmem:[%s198] sm:$0xff]
    %v200 = vld [vmem:[%s198 + $0x8] sm:$0xff]
    %v201 = vld [vmem:[%s198 + $0x10] sm:$0xff]
    %v202 = vld [vmem:[%s198 + $0x18] sm:$0xf]
    %s203 = scalar_lea.vmem %s3, 1
    %v204 = vld [vmem:[%s203] sm:$0x1]
    %v206 = vlaneseq
    %v207 = vshrl.u32 %v206, 7
    %v208 = vsub.s32 0, %v207
    %v209 = vrot.slane %v204, %v208
    %v212 = vsel %vm75, %v202, 0
    %214 = vmatprep.subr.mxu0 0.0
    %215 = vmatpush1.msra.mxu0 0.0
    %216 = vmatprep.subr.mxu0 0.0
    %217 = vmatpush1.msra.mxu0 0.0
    %218 = vmatprep.subr.mxu0 0.0
    %219 = vmatpush1.msra.mxu0 0.0
    %220 = vmatprep.subr.mxu0 0.0
    %221 = vmatpush1.msra.mxu0 0.0
    %222 = vmatprep.subr.mxu0 0.0
    %223 = vmatpush1.msra.mxu0 0.0
    %224 = vmatprep.subr.mxu0 0.0
    %225 = vmatpush1.msra.mxu0 0.0
    %226 = vmatprep.subr.mxu0 0.0
    %227 = vmatpush1.msra.mxu0 0.0
    %228 = vmatprep.subr.mxu0 0.0
    %229 = vmatpush1.msra.mxu0 0.0
    %230 = vmatprep.subr.mxu0 0.0
    %231 = vmatpush1.msra.mxu0 0.0
    %232 = vmatprep.subr.mxu0 0.0
    %233 = vmatpush1.msra.mxu0 0.0
    %234 = vmatprep.subr.mxu0 0.0
    %235 = vmatpush1.msra.mxu0 0.0
    %236 = vmatprep.subr.mxu0 0.0
    %237 = vmatpush1.msra.mxu0 0.0
    %238 = vmatprep.subr.mxu0 0.0
    %239 = vmatpush1.msra.mxu0 %v212
    %240 = vmatprep.subr.mxu0 0.0
    %241 = vmatpush1.msra.mxu0 %v201
    %242 = vmatprep.subr.mxu0 0.0
    %243 = vmatpush1.msra.mxu0 %v200
    %244 = vmatprep.subr.mxu0 0.0
    %245 = vmatpush1.msra.mxu0 %v199
    %246 = vmatprep.subr.mxu0 0.0
    %247 = vmatpush2.msra.mxu0 0.0
    %248 = vmatprep.subr.mxu0 0.0
    %249 = vmatpush2.msra.mxu0 0.0
    %250 = vmatprep.subr.mxu0 0.0
    %251 = vmatpush2.msra.mxu0 0.0
    %252 = vmatprep.subr.mxu0 0.0
    %253 = vmatpush2.msra.mxu0 0.0
    %254 = vmatprep.subr.mxu0 0.0
    %255 = vmatpush2.msra.mxu0 0.0
    %256 = vmatprep.subr.mxu0 0.0
    %257 = vmatpush2.msra.mxu0 0.0
    %258 = vmatprep.subr.mxu0 0.0
    %259 = vmatpush2.msra.mxu0 0.0
    %260 = vmatprep.subr.mxu0 0.0
    %261 = vmatpush2.msra.mxu0 0.0
    %262 = vmatprep.subr.mxu0 0.0
    %263 = vmatpush2.msra.mxu0 0.0
    %264 = vmatprep.subr.mxu0 0.0
    %265 = vmatpush2.msra.mxu0 0.0
    %266 = vmatprep.subr.mxu0 0.0
    %267 = vmatpush2.msra.mxu0 0.0
    %268 = vmatprep.subr.mxu0 0.0
    %269 = vmatpush2.msra.mxu0 0.0
    %270 = vmatprep.subr.mxu0 0.0
    %271 = vmatpush2.msra.mxu0 0.0
    %272 = vmatprep.subr.mxu0 0.0
    %273 = vmatpush2.msra.mxu0 0.0
    %274 = vmatprep.subr.mxu0 0.0
    %275 = vmatpush2.msra.mxu0 0.0
    %276 = vmatprep.subr.mxu0 0.0
    %277 = vmatpush2.msra.mxu0 0.0
    %278 = vmatprep.mubr.f32.mxu0 0.0
    %279 = vmatmul.mubr.f32.gmra.mxu0 %v49
    %v280 = vpop.f32.mrf.mxu0
    %v281 = vadd.f32 %v209, %v280
    %v282 = vpop.f32.mrf.mxu0
    %283 = vmatprep.mubr.f32.mxu0 0.0
    %284 = vmatmul.mubr.f32.gmra.mxu0 %v52
    %v285 = vpop.f32.mrf.mxu0
    %v286 = vadd.f32 %v209, %v285
    %v287 = vpop.f32.mrf.mxu0
    %288 = vmatprep.mubr.f32.mxu0 0.0
    %289 = vmatmul.mubr.f32.gmra.mxu0 %v55
    %v290 = vpop.f32.mrf.mxu0
    %v291 = vadd.f32 %v209, %v290
    %v292 = vpop.f32.mrf.mxu0
    %293 = vmatprep.mubr.f32.mxu0 0.0
    %294 = vmatmul.mubr.f32.gmra.mxu0 %v58
    %v295 = vpop.f32.mrf.mxu0
    %v296 = vadd.f32 %v209, %v295
    %v297 = vpop.f32.mrf.mxu0
    %298 = vmatprep.mubr.f32.mxu0 0.0
    %299 = vmatmul.mubr.f32.gmra.mxu0 %v61
    %v300 = vpop.f32.mrf.mxu0
    %v301 = vadd.f32 %v209, %v300
    %v302 = vpop.f32.mrf.mxu0
    %303 = vmatprep.mubr.f32.mxu0 0.0
    %304 = vmatmul.mubr.f32.gmra.mxu0 %v64
    %v305 = vpop.f32.mrf.mxu0
    %v306 = vadd.f32 %v209, %v305
    %v307 = vpop.f32.mrf.mxu0
    %308 = vmatprep.mubr.f32.mxu0 0.0
    %309 = vmatmul.mubr.f32.gmra.mxu0 %v67
    %v310 = vpop.f32.mrf.mxu0
    %v311 = vadd.f32 %v209, %v310
    %v312 = vpop.f32.mrf.mxu0
    %313 = vmatprep.mubr.f32.mxu0 0.0
    %314 = vmatmul.mubr.f32.gmra.mxu0 %v70
    %v315 = vpop.f32.mrf.mxu0
    %v316 = vadd.f32 %v209, %v315
    %v317 = vpop.f32.mrf.mxu0
    %318 = vmatprep.mubr.f32.mxu0 0.0
    %319 = vmatmul.mubr.f32.gmra.mxu0 %v73
    %v320 = vpop.f32.mrf.mxu0
    %v321 = vadd.f32 %v209, %v320
    %v322 = vpop.f32.mrf.mxu0
    %323 = vdwg.mxu0
    %s324 = scalar_lea.vmem [#allocation2], 72
    %325 = vst.msk [vmem:[%s324] sm:$0xff] %vm47, %v281
    %326 = vst.msk [vmem:[%s324 + $0x8] sm:$0xff] %vm47, %v286
    %327 = vst.msk [vmem:[%s324 + $0x10] sm:$0xff] %vm47, %v291
    %328 = vst.msk [vmem:[%s324 + $0x18] sm:$0xff] %vm47, %v296
    %329 = vst.msk [vmem:[%s324 + $0x20] sm:$0xff] %vm47, %v301
    %330 = vst.msk [vmem:[%s324 + $0x28] sm:$0xff] %vm47, %v306
    %331 = vst.msk [vmem:[%s324 + $0x30] sm:$0xff] %vm47, %v311
    %332 = vst.msk [vmem:[%s324 + $0x38] sm:$0xff] %vm47, %v316
    %333 = vst.msk [vmem:[%s324 + $0x40] sm:$0xff] %vm47, %v321
    %s334 = scalar_lea.vmem %s1, 64
    %v335 = vld [vmem:[%s334] sm:$0xff]
    %v336 = vld [vmem:[%s334 + $0x8] sm:$0xff]
    %v337 = vld [vmem:[%s334 + $0x10] sm:$0xff]
    %v338 = vld [vmem:[%s334 + $0x18] sm:$0xf]
    %s339 = scalar_lea.vmem %s3, 2
    %v340 = vld [vmem:[%s339] sm:$0x1]
    %v342 = vlaneseq
    %v343 = vshrl.u32 %v342, 7
    %v344 = vsub.s32 0, %v343
    %v345 = vrot.slane %v340, %v344
    %v348 = vsel %vm75, %v338, 0
    %350 = vmatprep.subr.mxu0 0.0
    %351 = vmatpush1.msra.mxu0 0.0
    %352 = vmatprep.subr.mxu0 0.0
    %353 = vmatpush1.msra.mxu0 0.0
    %354 = vmatprep.subr.mxu0 0.0
    %355 = vmatpush1.msra.mxu0 0.0
    %356 = vmatprep.subr.mxu0 0.0
    %357 = vmatpush1.msra.mxu0 0.0
    %358 = vmatprep.subr.mxu0 0.0
    %359 = vmatpush1.msra.mxu0 0.0
    %360 = vmatprep.subr.mxu0 0.0
    %361 = vmatpush1.msra.mxu0 0.0
    %362 = vmatprep.subr.mxu0 0.0
    %363 = vmatpush1.msra.mxu0 0.0
    %364 = vmatprep.subr.mxu0 0.0
    %365 = vmatpush1.msra.mxu0 0.0
    %366 = vmatprep.subr.mxu0 0.0
    %367 = vmatpush1.msra.mxu0 0.0
    %368 = vmatprep.subr.mxu0 0.0
    %369 = vmatpush1.msra.mxu0 0.0
    %370 = vmatprep.subr.mxu0 0.0
    %371 = vmatpush1.msra.mxu0 0.0
    %372 = vmatprep.subr.mxu0 0.0
    %373 = vmatpush1.msra.mxu0 0.0
    %374 = vmatprep.subr.mxu0 0.0
    %375 = vmatpush1.msra.mxu0 %v348
    %376 = vmatprep.subr.mxu0 0.0
    %377 = vmatpush1.msra.mxu0 %v337
    %378 = vmatprep.subr.mxu0 0.0
    %379 = vmatpush1.msra.mxu0 %v336
    %380 = vmatprep.subr.mxu0 0.0
    %381 = vmatpush1.msra.mxu0 %v335
    %382 = vmatprep.subr.mxu0 0.0
    %383 = vmatpush2.msra.mxu0 0.0
    %384 = vmatprep.subr.mxu0 0.0
    %385 = vmatpush2.msra.mxu0 0.0
    %386 = vmatprep.subr.mxu0 0.0
    %387 = vmatpush2.msra.mxu0 0.0
    %388 = vmatprep.subr.mxu0 0.0
    %389 = vmatpush2.msra.mxu0 0.0
    %390 = vmatprep.subr.mxu0 0.0
    %391 = vmatpush2.msra.mxu0 0.0
    %392 = vmatprep.subr.mxu0 0.0
    %393 = vmatpush2.msra.mxu0 0.0
    %394 = vmatprep.subr.mxu0 0.0
    %395 = vmatpush2.msra.mxu0 0.0
    %396 = vmatprep.subr.mxu0 0.0
    %397 = vmatpush2.msra.mxu0 0.0
    %398 = vmatprep.subr.mxu0 0.0
    %399 = vmatpush2.msra.mxu0 0.0
    %400 = vmatprep.subr.mxu0 0.0
    %401 = vmatpush2.msra.mxu0 0.0
    %402 = vmatprep.subr.mxu0 0.0
    %403 = vmatpush2.msra.mxu0 0.0
    %404 = vmatprep.subr.mxu0 0.0
    %405 = vmatpush2.msra.mxu0 0.0
    %406 = vmatprep.subr.mxu0 0.0
    %407 = vmatpush2.msra.mxu0 0.0
    %408 = vmatprep.subr.mxu0 0.0
    %409 = vmatpush2.msra.mxu0 0.0
    %410 = vmatprep.subr.mxu0 0.0
    %411 = vmatpush2.msra.mxu0 0.0
    %412 = vmatprep.subr.mxu0 0.0
    %413 = vmatpush2.msra.mxu0 0.0
    %414 = vmatprep.mubr.f32.mxu0 0.0
    %415 = vmatmul.mubr.f32.gmra.mxu0 %v49
    %v416 = vpop.f32.mrf.mxu0
    %v417 = vadd.f32 %v345, %v416
    %v418 = vpop.f32.mrf.mxu0
    %419 = vmatprep.mubr.f32.mxu0 0.0
    %420 = vmatmul.mubr.f32.gmra.mxu0 %v52
    %v421 = vpop.f32.mrf.mxu0
    %v422 = vadd.f32 %v345, %v421
    %v423 = vpop.f32.mrf.mxu0
    %424 = vmatprep.mubr.f32.mxu0 0.0
    %425 = vmatmul.mubr.f32.gmra.mxu0 %v55
    %v426 = vpop.f32.mrf.mxu0
    %v427 = vadd.f32 %v345, %v426
    %v428 = vpop.f32.mrf.mxu0
    %429 = vmatprep.mubr.f32.mxu0 0.0
    %430 = vmatmul.mubr.f32.gmra.mxu0 %v58
    %v431 = vpop.f32.mrf.mxu0
    %v432 = vadd.f32 %v345, %v431
    %v433 = vpop.f32.mrf.mxu0
    %434 = vmatprep.mubr.f32.mxu0 0.0
    %435 = vmatmul.mubr.f32.gmra.mxu0 %v61
    %v436 = vpop.f32.mrf.mxu0
    %v437 = vadd.f32 %v345, %v436
    %v438 = vpop.f32.mrf.mxu0
    %439 = vmatprep.mubr.f32.mxu0 0.0
    %440 = vmatmul.mubr.f32.gmra.mxu0 %v64
    %v441 = vpop.f32.mrf.mxu0
    %v442 = vadd.f32 %v345, %v441
    %v443 = vpop.f32.mrf.mxu0
    %444 = vmatprep.mubr.f32.mxu0 0.0
    %445 = vmatmul.mubr.f32.gmra.mxu0 %v67
    %v446 = vpop.f32.mrf.mxu0
    %v447 = vadd.f32 %v345, %v446
    %v448 = vpop.f32.mrf.mxu0
    %449 = vmatprep.mubr.f32.mxu0 0.0
    %450 = vmatmul.mubr.f32.gmra.mxu0 %v70
    %v451 = vpop.f32.mrf.mxu0
    %v452 = vadd.f32 %v345, %v451
    %v453 = vpop.f32.mrf.mxu0
    %454 = vmatprep.mubr.f32.mxu0 0.0
    %455 = vmatmul.mubr.f32.gmra.mxu0 %v73
    %v456 = vpop.f32.mrf.mxu0
    %v457 = vadd.f32 %v345, %v456
    %v458 = vpop.f32.mrf.mxu0
    %459 = vdwg.mxu0
    %s460 = scalar_lea.vmem [#allocation2], 144
    %461 = vst.msk [vmem:[%s460] sm:$0xff] %vm47, %v417
    %462 = vst.msk [vmem:[%s460 + $0x8] sm:$0xff] %vm47, %v422
    %463 = vst.msk [vmem:[%s460 + $0x10] sm:$0xff] %vm47, %v427
    %464 = vst.msk [vmem:[%s460 + $0x18] sm:$0xff] %vm47, %v432
    %465 = vst.msk [vmem:[%s460 + $0x20] sm:$0xff] %vm47, %v437
    %466 = vst.msk [vmem:[%s460 + $0x28] sm:$0xff] %vm47, %v442
    %467 = vst.msk [vmem:[%s460 + $0x30] sm:$0xff] %vm47, %v447
    %468 = vst.msk [vmem:[%s460 + $0x38] sm:$0xff] %vm47, %v452
    %469 = vst.msk [vmem:[%s460 + $0x40] sm:$0xff] %vm47, %v457
    %v470 = vld [vmem:[%s2] sm:$0xff]
    %v471 = vld [vmem:[%s2 + $0x8] sm:$0xff]
    %v472 = vld [vmem:[%s2 + $0x10] sm:$0xff]
    %v473 = vld [vmem:[%s2 + $0x18] sm:$0xf]
    %s474 = scalar_lea.vmem %s2, 32
    %v475 = vld [vmem:[%s474] sm:$0xff]
    %v476 = vld [vmem:[%s474 + $0x8] sm:$0xff]
    %v477 = vld [vmem:[%s474 + $0x10] sm:$0xff]
    %v478 = vld [vmem:[%s474 + $0x18] sm:$0xf]
    %s479 = scalar_lea.vmem %s2, 64
    %v480 = vld [vmem:[%s479] sm:$0xff]
    %v481 = vld [vmem:[%s479 + $0x8] sm:$0xff]
    %v482 = vld [vmem:[%s479 + $0x10] sm:$0xff]
    %v483 = vld [vmem:[%s479 + $0x18] sm:$0xf]
    %v484 = vld [vmem:[%s4] sm:$0x1]
    %v486 = vlaneseq
    %v487 = vshrl.u32 %v486, 7
    %v488 = vsub.s32 0, %v487
    %v489 = vrot.slane %v484, %v488
    %v491 = vld [vmem:[#allocation2] sm:$0x3]
    %v492 = vld [vmem:[%s324] sm:$0x3]
    %v493 = vld [vmem:[%s460] sm:$0x3]
    %v495 = vsel %vm47, 0.0, 0
    %v498 = vsel %vm75, %v473, 0
    %500 = vmatprep.subr.mxu0 0.0
    %501 = vmatpush1.msra.mxu0 0.0
    %502 = vmatprep.subr.mxu0 0.0
    %503 = vmatpush1.msra.mxu0 0.0
    %504 = vmatprep.subr.mxu0 0.0
    %505 = vmatpush1.msra.mxu0 0.0
    %506 = vmatprep.subr.mxu0 0.0
    %507 = vmatpush1.msra.mxu0 0.0
    %508 = vmatprep.subr.mxu0 0.0
    %509 = vmatpush1.msra.mxu0 0.0
    %510 = vmatprep.subr.mxu0 0.0
    %511 = vmatpush1.msra.mxu0 0.0
    %512 = vmatprep.subr.mxu0 0.0
    %513 = vmatpush1.msra.mxu0 0.0
    %514 = vmatprep.subr.mxu0 0.0
    %515 = vmatpush1.msra.mxu0 0.0
    %516 = vmatprep.subr.mxu0 0.0
    %517 = vmatpush1.msra.mxu0 0.0
    %518 = vmatprep.subr.mxu0 0.0
    %519 = vmatpush1.msra.mxu0 0.0
    %520 = vmatprep.subr.mxu0 0.0
    %521 = vmatpush1.msra.mxu0 0.0
    %522 = vmatprep.subr.mxu0 0.0
    %523 = vmatpush1.msra.mxu0 0.0
    %524 = vmatprep.subr.mxu0 0.0
    %525 = vmatpush1.msra.mxu0 %v498
    %526 = vmatprep.subr.mxu0 0.0
    %527 = vmatpush1.msra.mxu0 %v472
    %528 = vmatprep.subr.mxu0 0.0
    %529 = vmatpush1.msra.mxu0 %v471
    %530 = vmatprep.subr.mxu0 0.0
    %531 = vmatpush1.msra.mxu0 %v470
    %532 = vmatprep.subr.mxu0 0.0
    %533 = vmatpush2.msra.mxu0 0.0
    %534 = vmatprep.subr.mxu0 0.0
    %535 = vmatpush2.msra.mxu0 0.0
    %536 = vmatprep.subr.mxu0 0.0
    %537 = vmatpush2.msra.mxu0 0.0
    %538 = vmatprep.subr.mxu0 0.0
    %539 = vmatpush2.msra.mxu0 0.0
    %540 = vmatprep.subr.mxu0 0.0
    %541 = vmatpush2.msra.mxu0 0.0
    %542 = vmatprep.subr.mxu0 0.0
    %543 = vmatpush2.msra.mxu0 0.0
    %544 = vmatprep.subr.mxu0 0.0
    %545 = vmatpush2.msra.mxu0 0.0
    %546 = vmatprep.subr.mxu0 0.0
    %547 = vmatpush2.msra.mxu0 0.0
    %548 = vmatprep.subr.mxu0 0.0
    %549 = vmatpush2.msra.mxu0 0.0
    %550 = vmatprep.subr.mxu0 0.0
    %551 = vmatpush2.msra.mxu0 0.0
    %552 = vmatprep.subr.mxu0 0.0
    %553 = vmatpush2.msra.mxu0 0.0
    %554 = vmatprep.subr.mxu0 0.0
    %555 = vmatpush2.msra.mxu0 0.0
    %556 = vmatprep.subr.mxu0 0.0
    %557 = vmatpush2.msra.mxu0 0.0
    %558 = vmatprep.subr.mxu0 0.0
    %559 = vmatpush2.msra.mxu0 0.0
    %560 = vmatprep.subr.mxu0 0.0
    %561 = vmatpush2.msra.mxu0 0.0
    %562 = vmatprep.subr.mxu0 0.0
    %563 = vmatpush2.msra.mxu0 0.0
    %564 = vmatprep.mubr.f32.mxu0 0.0
    %565 = vmatmul.mubr.f32.gmra.mxu0 %v495
    %v566 = vpop.f32.mrf.mxu0
    %v567 = vadd.f32 0.0, %v566
    %v568 = vpop.f32.mrf.mxu0
    %569 = vdwg.mxu0
    %v571 = vsel %vm75, %v478, 0
    %573 = vmatprep.subr.mxu0 0.0
    %574 = vmatpush1.msra.mxu0 0.0
    %575 = vmatprep.subr.mxu0 0.0
    %576 = vmatpush1.msra.mxu0 0.0
    %577 = vmatprep.subr.mxu0 0.0
    %578 = vmatpush1.msra.mxu0 0.0
    %579 = vmatprep.subr.mxu0 0.0
    %580 = vmatpush1.msra.mxu0 0.0
    %581 = vmatprep.subr.mxu0 0.0
    %582 = vmatpush1.msra.mxu0 0.0
    %583 = vmatprep.subr.mxu0 0.0
    %584 = vmatpush1.msra.mxu0 0.0
    %585 = vmatprep.subr.mxu0 0.0
    %586 = vmatpush1.msra.mxu0 0.0
    %587 = vmatprep.subr.mxu0 0.0
    %588 = vmatpush1.msra.mxu0 0.0
    %589 = vmatprep.subr.mxu0 0.0
    %590 = vmatpush1.msra.mxu0 0.0
    %591 = vmatprep.subr.mxu0 0.0
    %592 = vmatpush1.msra.mxu0 0.0
    %593 = vmatprep.subr.mxu0 0.0
    %594 = vmatpush1.msra.mxu0 0.0
    %595 = vmatprep.subr.mxu0 0.0
    %596 = vmatpush1.msra.mxu0 0.0
    %597 = vmatprep.subr.mxu0 0.0
    %598 = vmatpush1.msra.mxu0 %v571
    %599 = vmatprep.subr.mxu0 0.0
    %600 = vmatpush1.msra.mxu0 %v477
    %601 = vmatprep.subr.mxu0 0.0
    %602 = vmatpush1.msra.mxu0 %v476
    %603 = vmatprep.subr.mxu0 0.0
    %604 = vmatpush1.msra.mxu0 %v475
    %605 = vmatprep.subr.mxu0 0.0
    %606 = vmatpush2.msra.mxu0 0.0
    %607 = vmatprep.subr.mxu0 0.0
    %608 = vmatpush2.msra.mxu0 0.0
    %609 = vmatprep.subr.mxu0 0.0
    %610 = vmatpush2.msra.mxu0 0.0
    %611 = vmatprep.subr.mxu0 0.0
    %612 = vmatpush2.msra.mxu0 0.0
    %613 = vmatprep.subr.mxu0 0.0
    %614 = vmatpush2.msra.mxu0 0.0
    %615 = vmatprep.subr.mxu0 0.0
    %616 = vmatpush2.msra.mxu0 0.0
    %617 = vmatprep.subr.mxu0 0.0
    %618 = vmatpush2.msra.mxu0 0.0
    %619 = vmatprep.subr.mxu0 0.0
    %620 = vmatpush2.msra.mxu0 0.0
    %621 = vmatprep.subr.mxu0 0.0
    %622 = vmatpush2.msra.mxu0 0.0
    %623 = vmatprep.subr.mxu0 0.0
    %624 = vmatpush2.msra.mxu0 0.0
    %625 = vmatprep.subr.mxu0 0.0
    %626 = vmatpush2.msra.mxu0 0.0
    %627 = vmatprep.subr.mxu0 0.0
    %628 = vmatpush2.msra.mxu0 0.0
    %629 = vmatprep.subr.mxu0 0.0
    %630 = vmatpush2.msra.mxu0 0.0
    %631 = vmatprep.subr.mxu0 0.0
    %632 = vmatpush2.msra.mxu0 0.0
    %633 = vmatprep.subr.mxu0 0.0
    %634 = vmatpush2.msra.mxu0 0.0
    %635 = vmatprep.subr.mxu0 0.0
    %636 = vmatpush2.msra.mxu0 0.0
    %637 = vmatprep.mubr.f32.mxu0 0.0
    %638 = vmatmul.mubr.f32.gmra.mxu0 %v495
    %v639 = vpop.f32.mrf.mxu0
    %v640 = vadd.f32 0.0, %v639
    %v641 = vpop.f32.mrf.mxu0
    %642 = vdwg.mxu0
    %v644 = vsel %vm75, %v483, 0
    %646 = vmatprep.subr.mxu0 0.0
    %647 = vmatpush1.msra.mxu0 0.0
    %648 = vmatprep.subr.mxu0 0.0
    %649 = vmatpush1.msra.mxu0 0.0
    %650 = vmatprep.subr.mxu0 0.0
    %651 = vmatpush1.msra.mxu0 0.0
    %652 = vmatprep.subr.mxu0 0.0
    %653 = vmatpush1.msra.mxu0 0.0
    %654 = vmatprep.subr.mxu0 0.0
    %655 = vmatpush1.msra.mxu0 0.0
    %656 = vmatprep.subr.mxu0 0.0
    %657 = vmatpush1.msra.mxu0 0.0
    %658 = vmatprep.subr.mxu0 0.0
    %659 = vmatpush1.msra.mxu0 0.0
    %660 = vmatprep.subr.mxu0 0.0
    %661 = vmatpush1.msra.mxu0 0.0
    %662 = vmatprep.subr.mxu0 0.0
    %663 = vmatpush1.msra.mxu0 0.0
    %664 = vmatprep.subr.mxu0 0.0
    %665 = vmatpush1.msra.mxu0 0.0
    %666 = vmatprep.subr.mxu0 0.0
    %667 = vmatpush1.msra.mxu0 0.0
    %668 = vmatprep.subr.mxu0 0.0
    %669 = vmatpush1.msra.mxu0 0.0
    %670 = vmatprep.subr.mxu0 0.0
    %671 = vmatpush1.msra.mxu0 %v644
    %672 = vmatprep.subr.mxu0 0.0
    %673 = vmatpush1.msra.mxu0 %v482
    %674 = vmatprep.subr.mxu0 0.0
    %675 = vmatpush1.msra.mxu0 %v481
    %676 = vmatprep.subr.mxu0 0.0
    %677 = vmatpush1.msra.mxu0 %v480
    %678 = vmatprep.subr.mxu0 0.0
    %679 = vmatpush2.msra.mxu0 0.0
    %680 = vmatprep.subr.mxu0 0.0
    %681 = vmatpush2.msra.mxu0 0.0
    %682 = vmatprep.subr.mxu0 0.0
    %683 = vmatpush2.msra.mxu0 0.0
    %684 = vmatprep.subr.mxu0 0.0
    %685 = vmatpush2.msra.mxu0 0.0
    %686 = vmatprep.subr.mxu0 0.0
    %687 = vmatpush2.msra.mxu0 0.0
    %688 = vmatprep.subr.mxu0 0.0
    %689 = vmatpush2.msra.mxu0 0.0
    %690 = vmatprep.subr.mxu0 0.0
    %691 = vmatpush2.msra.mxu0 0.0
    %692 = vmatprep.subr.mxu0 0.0
    %693 = vmatpush2.msra.mxu0 0.0
    %694 = vmatprep.subr.mxu0 0.0
    %695 = vmatpush2.msra.mxu0 0.0
    %696 = vmatprep.subr.mxu0 0.0
    %697 = vmatpush2.msra.mxu0 0.0
    %698 = vmatprep.subr.mxu0 0.0
    %699 = vmatpush2.msra.mxu0 0.0
    %700 = vmatprep.subr.mxu0 0.0
    %701 = vmatpush2.msra.mxu0 0.0
    %702 = vmatprep.subr.mxu0 0.0
    %703 = vmatpush2.msra.mxu0 0.0
    %704 = vmatprep.subr.mxu0 0.0
    %705 = vmatpush2.msra.mxu0 0.0
    %706 = vmatprep.subr.mxu0 0.0
    %707 = vmatpush2.msra.mxu0 0.0
    %708 = vmatprep.subr.mxu0 0.0
    %709 = vmatpush2.msra.mxu0 0.0
    %710 = vmatprep.mubr.f32.mxu0 0.0
    %711 = vmatmul.mubr.f32.gmra.mxu0 %v495
    %v712 = vpop.f32.mrf.mxu0
    %v713 = vadd.f32 %v489, %v712
    %v714 = vpop.f32.mrf.mxu0
    %715 = vdwg.mxu0
    %v716 = vadd.f32 %v491, %v567
    %v717 = vxor.u32 %v716, 2147483648
    %v718 = vmul.f32 %v717, 1.442695
    %v719 = vpow.pop %v718
    %v720 = vadd.f32 %v719, 1.0
    %v721 = vrcp.pop %v720
    %v722 = vmul.f32 1.0, %v721
    %v723 = vadd.f32 %v492, %v640
    %v724 = vxor.u32 %v723, 2147483648
    %v725 = vmul.f32 %v724, 1.442695
    %v726 = vpow.pop %v725
    %v727 = vadd.f32 %v726, 1.0
    %v728 = vrcp.pop %v727
    %v729 = vmul.f32 1.0, %v728
    %v730 = vmul.f32 %v722, %v713
    %v731 = vadd.f32 %v493, %v730
    %v732 = vtanh.pop %v731
    %v733 = vsub.f32 1.0, %v729
    %v734 = vmul.f32 %v733, %v732
    %v735 = vmul.f32 %v729, 0.0
    %v736 = vadd.f32 %v734, %v735
    %v737 = vld [vmem:[#allocation2 + $0x2] sm:$0x3]
    %v738 = vld [vmem:[%s324 + $0x2] sm:$0x3]
    %v739 = vld [vmem:[%s460 + $0x2] sm:$0x3]
    %v741 = vsel %vm47, %v736, 0
    %743 = vmatprep.subr.mxu0 0.0
    %744 = vmatpush1.msra.mxu0 0.0
    %745 = vmatprep.subr.mxu0 0.0
    %746 = vmatpush1.msra.mxu0 0.0
    %747 = vmatprep.subr.mxu0 0.0
    %748 = vmatpush1.msra.mxu0 0.0
    %749 = vmatprep.subr.mxu0 0.0
    %750 = vmatpush1.msra.mxu0 0.0
    %751 = vmatprep.subr.mxu0 0.0
    %752 = vmatpush1.msra.mxu0 0.0
    %753 = vmatprep.subr.mxu0 0.0
    %754 = vmatpush1.msra.mxu0 0.0
    %755 = vmatprep.subr.mxu0 0.0
    %756 = vmatpush1.msra.mxu0 0.0
    %757 = vmatprep.subr.mxu0 0.0
    %758 = vmatpush1.msra.mxu0 0.0
    %759 = vmatprep.subr.mxu0 0.0
    %760 = vmatpush1.msra.mxu0 0.0
    %761 = vmatprep.subr.mxu0 0.0
    %762 = vmatpush1.msra.mxu0 0.0
    %763 = vmatprep.subr.mxu0 0.0
    %764 = vmatpush1.msra.mxu0 0.0
    %765 = vmatprep.subr.mxu0 0.0
    %766 = vmatpush1.msra.mxu0 0.0
    %767 = vmatprep.subr.mxu0 0.0
    %768 = vmatpush1.msra.mxu0 %v498
    %769 = vmatprep.subr.mxu0 0.0
    %770 = vmatpush1.msra.mxu0 %v472
    %771 = vmatprep.subr.mxu0 0.0
    %772 = vmatpush1.msra.mxu0 %v471
    %773 = vmatprep.subr.mxu0 0.0
    %774 = vmatpush1.msra.mxu0 %v470
    %775 = vmatprep.subr.mxu0 0.0
    %776 = vmatpush2.msra.mxu0 0.0
    %777 = vmatprep.subr.mxu0 0.0
    %778 = vmatpush2.msra.mxu0 0.0
    %779 = vmatprep.subr.mxu0 0.0
    %780 = vmatpush2.msra.mxu0 0.0
    %781 = vmatprep.subr.mxu0 0.0
    %782 = vmatpush2.msra.mxu0 0.0
    %783 = vmatprep.subr.mxu0 0.0
    %784 = vmatpush2.msra.mxu0 0.0
    %785 = vmatprep.subr.mxu0 0.0
    %786 = vmatpush2.msra.mxu0 0.0
    %787 = vmatprep.subr.mxu0 0.0
    %788 = vmatpush2.msra.mxu0 0.0
    %789 = vmatprep.subr.mxu0 0.0
    %790 = vmatpush2.msra.mxu0 0.0
    %791 = vmatprep.subr.mxu0 0.0
    %792 = vmatpush2.msra.mxu0 0.0
    %793 = vmatprep.subr.mxu0 0.0
    %794 = vmatpush2.msra.mxu0 0.0
    %795 = vmatprep.subr.mxu0 0.0
    %796 = vmatpush2.msra.mxu0 0.0
    %797 = vmatprep.subr.mxu0 0.0
    %798 = vmatpush2.msra.mxu0 0.0
    %799 = vmatprep.subr.mxu0 0.0
    %800 = vmatpush2.msra.mxu0 0.0
    %801 = vmatprep.subr.mxu0 0.0
    %802 = vmatpush2.msra.mxu0 0.0
    %803 = vmatprep.subr.mxu0 0.0
    %804 = vmatpush2.msra.mxu0 0.0
    %805 = vmatprep.subr.mxu0 0.0
    %806 = vmatpush2.msra.mxu0 0.0
    %807 = vmatprep.mubr.f32.mxu0 0.0
    %808 = vmatmul.mubr.f32.gmra.mxu0 %v741
    %v809 = vpop.f32.mrf.mxu0
    %v810 = vadd.f32 0.0, %v809
    %v811 = vpop.f32.mrf.mxu0
    %812 = vdwg.mxu0
    %813 = vmatprep.subr.mxu0 0.0
    %814 = vmatpush1.msra.mxu0 0.0
    %815 = vmatprep.subr.mxu0 0.0
    %816 = vmatpush1.msra.mxu0 0.0
    %817 = vmatprep.subr.mxu0 0.0
    %818 = vmatpush1.msra.mxu0 0.0
    %819 = vmatprep.subr.mxu0 0.0
    %820 = vmatpush1.msra.mxu0 0.0
    %821 = vmatprep.subr.mxu0 0.0
    %822 = vmatpush1.msra.mxu0 0.0
    %823 = vmatprep.subr.mxu0 0.0
    %824 = vmatpush1.msra.mxu0 0.0
    %825 = vmatprep.subr.mxu0 0.0
    %826 = vmatpush1.msra.mxu0 0.0
    %827 = vmatprep.subr.mxu0 0.0
    %828 = vmatpush1.msra.mxu0 0.0
    %829 = vmatprep.subr.mxu0 0.0
    %830 = vmatpush1.msra.mxu0 0.0
    %831 = vmatprep.subr.mxu0 0.0
    %832 = vmatpush1.msra.mxu0 0.0
    %833 = vmatprep.subr.mxu0 0.0
    %834 = vmatpush1.msra.mxu0 0.0
    %835 = vmatprep.subr.mxu0 0.0
    %836 = vmatpush1.msra.mxu0 0.0
    %837 = vmatprep.subr.mxu0 0.0
    %838 = vmatpush1.msra.mxu0 %v571
    %839 = vmatprep.subr.mxu0 0.0
    %840 = vmatpush1.msra.mxu0 %v477
    %841 = vmatprep.subr.mxu0 0.0
    %842 = vmatpush1.msra.mxu0 %v476
    %843 = vmatprep.subr.mxu0 0.0
    %844 = vmatpush1.msra.mxu0 %v475
    %845 = vmatprep.subr.mxu0 0.0
    %846 = vmatpush2.msra.mxu0 0.0
    %847 = vmatprep.subr.mxu0 0.0
    %848 = vmatpush2.msra.mxu0 0.0
    %849 = vmatprep.subr.mxu0 0.0
    %850 = vmatpush2.msra.mxu0 0.0
    %851 = vmatprep.subr.mxu0 0.0
    %852 = vmatpush2.msra.mxu0 0.0
    %853 = vmatprep.subr.mxu0 0.0
    %854 = vmatpush2.msra.mxu0 0.0
    %855 = vmatprep.subr.mxu0 0.0
    %856 = vmatpush2.msra.mxu0 0.0
    %857 = vmatprep.subr.mxu0 0.0
    %858 = vmatpush2.msra.mxu0 0.0
    %859 = vmatprep.subr.mxu0 0.0
    %860 = vmatpush2.msra.mxu0 0.0
    %861 = vmatprep.subr.mxu0 0.0
    %862 = vmatpush2.msra.mxu0 0.0
    %863 = vmatprep.subr.mxu0 0.0
    %864 = vmatpush2.msra.mxu0 0.0
    %865 = vmatprep.subr.mxu0 0.0
    %866 = vmatpush2.msra.mxu0 0.0
    %867 = vmatprep.subr.mxu0 0.0
    %868 = vmatpush2.msra.mxu0 0.0
    %869 = vmatprep.subr.mxu0 0.0
    %870 = vmatpush2.msra.mxu0 0.0
    %871 = vmatprep.subr.mxu0 0.0
    %872 = vmatpush2.msra.mxu0 0.0
    %873 = vmatprep.subr.mxu0 0.0
    %874 = vmatpush2.msra.mxu0 0.0
    %875 = vmatprep.subr.mxu0 0.0
    %876 = vmatpush2.msra.mxu0 0.0
    %877 = vmatprep.mubr.f32.mxu0 0.0
    %878 = vmatmul.mubr.f32.gmra.mxu0 %v741
    %v879 = vpop.f32.mrf.mxu0
    %v880 = vadd.f32 0.0, %v879
    %v881 = vpop.f32.mrf.mxu0
    %882 = vdwg.mxu0
    %883 = vmatprep.subr.mxu0 0.0
    %884 = vmatpush1.msra.mxu0 0.0
    %885 = vmatprep.subr.mxu0 0.0
    %886 = vmatpush1.msra.mxu0 0.0
    %887 = vmatprep.subr.mxu0 0.0
    %888 = vmatpush1.msra.mxu0 0.0
    %889 = vmatprep.subr.mxu0 0.0
    %890 = vmatpush1.msra.mxu0 0.0
    %891 = vmatprep.subr.mxu0 0.0
    %892 = vmatpush1.msra.mxu0 0.0
    %893 = vmatprep.subr.mxu0 0.0
    %894 = vmatpush1.msra.mxu0 0.0
    %895 = vmatprep.subr.mxu0 0.0
    %896 = vmatpush1.msra.mxu0 0.0
    %897 = vmatprep.subr.mxu0 0.0
    %898 = vmatpush1.msra.mxu0 0.0
    %899 = vmatprep.subr.mxu0 0.0
    %900 = vmatpush1.msra.mxu0 0.0
    %901 = vmatprep.subr.mxu0 0.0
    %902 = vmatpush1.msra.mxu0 0.0
    %903 = vmatprep.subr.mxu0 0.0
    %904 = vmatpush1.msra.mxu0 0.0
    %905 = vmatprep.subr.mxu0 0.0
    %906 = vmatpush1.msra.mxu0 0.0
    %907 = vmatprep.subr.mxu0 0.0
    %908 = vmatpush1.msra.mxu0 %v644
    %909 = vmatprep.subr.mxu0 0.0
    %910 = vmatpush1.msra.mxu0 %v482
    %911 = vmatprep.subr.mxu0 0.0
    %912 = vmatpush1.msra.mxu0 %v481
    %913 = vmatprep.subr.mxu0 0.0
    %914 = vmatpush1.msra.mxu0 %v480
    %915 = vmatprep.subr.mxu0 0.0
    %916 = vmatpush2.msra.mxu0 0.0
    %917 = vmatprep.subr.mxu0 0.0
    %918 = vmatpush2.msra.mxu0 0.0
    %919 = vmatprep.subr.mxu0 0.0
    %920 = vmatpush2.msra.mxu0 0.0
    %921 = vmatprep.subr.mxu0 0.0
    %922 = vmatpush2.msra.mxu0 0.0
    %923 = vmatprep.subr.mxu0 0.0
    %924 = vmatpush2.msra.mxu0 0.0
    %925 = vmatprep.subr.mxu0 0.0
    %926 = vmatpush2.msra.mxu0 0.0
    %927 = vmatprep.subr.mxu0 0.0
    %928 = vmatpush2.msra.mxu0 0.0
    %929 = vmatprep.subr.mxu0 0.0
    %930 = vmatpush2.msra.mxu0 0.0
    %931 = vmatprep.subr.mxu0 0.0
    %932 = vmatpush2.msra.mxu0 0.0
    %933 = vmatprep.subr.mxu0 0.0
    %934 = vmatpush2.msra.mxu0 0.0
    %935 = vmatprep.subr.mxu0 0.0
    %936 = vmatpush2.msra.mxu0 0.0
    %937 = vmatprep.subr.mxu0 0.0
    %938 = vmatpush2.msra.mxu0 0.0
    %939 = vmatprep.subr.mxu0 0.0
    %940 = vmatpush2.msra.mxu0 0.0
    %941 = vmatprep.subr.mxu0 0.0
    %942 = vmatpush2.msra.mxu0 0.0
    %943 = vmatprep.subr.mxu0 0.0
    %944 = vmatpush2.msra.mxu0 0.0
    %945 = vmatprep.subr.mxu0 0.0
    %946 = vmatpush2.msra.mxu0 0.0
    %947 = vmatprep.mubr.f32.mxu0 0.0
    %948 = vmatmul.mubr.f32.gmra.mxu0 %v741
    %v949 = vpop.f32.mrf.mxu0
    %v950 = vadd.f32 %v489, %v949
    %v951 = vpop.f32.mrf.mxu0
    %952 = vdwg.mxu0
    %v953 = vadd.f32 %v737, %v810
    %v954 = vxor.u32 %v953, 2147483648
    %v955 = vmul.f32 %v954, 1.442695
    %v956 = vpow.pop %v955
    %v957 = vadd.f32 %v956, 1.0
    %v958 = vrcp.pop %v957
    %v959 = vmul.f32 1.0, %v958
    %v960 = vadd.f32 %v738, %v880
    %v961 = vxor.u32 %v960, 2147483648
    %v962 = vmul.f32 %v961, 1.442695
    %v963 = vpow.pop %v962
    %v964 = vadd.f32 %v963, 1.0
    %v965 = vrcp.pop %v964
    %v966 = vmul.f32 1.0, %v965
    %v967 = vmul.f32 %v959, %v950
    %v968 = vadd.f32 %v739, %v967
    %v969 = vtanh.pop %v968
    %v970 = vsub.f32 1.0, %v966
    %v971 = vmul.f32 %v970, %v969
    %v972 = vmul.f32 %v966, %v736
    %v973 = vadd.f32 %v971, %v972
    %v974 = vld [vmem:[#allocation2 + $0x4] sm:$0x3]
    %v975 = vld [vmem:[%s324 + $0x4] sm:$0x3]
    %v976 = vld [vmem:[%s460 + $0x4] sm:$0x3]
    %v978 = vsel %vm47, %v973, 0
    %980 = vmatprep.subr.mxu0 0.0
    %981 = vmatpush1.msra.mxu0 0.0
    %982 = vmatprep.subr.mxu0 0.0
    %983 = vmatpush1.msra.mxu0 0.0
    %984 = vmatprep.subr.mxu0 0.0
    %985 = vmatpush1.msra.mxu0 0.0
    %986 = vmatprep.subr.mxu0 0.0
    %987 = vmatpush1.msra.mxu0 0.0
    %988 = vmatprep.subr.mxu0 0.0
    %989 = vmatpush1.msra.mxu0 0.0
    %990 = vmatprep.subr.mxu0 0.0
    %991 = vmatpush1.msra.mxu0 0.0
    %992 = vmatprep.subr.mxu0 0.0
    %993 = vmatpush1.msra.mxu0 0.0
    %994 = vmatprep.subr.mxu0 0.0
    %995 = vmatpush1.msra.mxu0 0.0
    %996 = vmatprep.subr.mxu0 0.0
    %997 = vmatpush1.msra.mxu0 0.0
    %998 = vmatprep.subr.mxu0 0.0
    %999 = vmatpush1.msra.mxu0 0.0
    %1000 = vmatprep.subr.mxu0 0.0
    %1001 = vmatpush1.msra.mxu0 0.0
    %1002 = vmatprep.subr.mxu0 0.0
    %1003 = vmatpush1.msra.mxu0 0.0
    %1004 = vmatprep.subr.mxu0 0.0
    %1005 = vmatpush1.msra.mxu0 %v498
    %1006 = vmatprep.subr.mxu0 0.0
    %1007 = vmatpush1.msra.mxu0 %v472
    %1008 = vmatprep.subr.mxu0 0.0
    %1009 = vmatpush1.msra.mxu0 %v471
    %1010 = vmatprep.subr.mxu0 0.0
    %1011 = vmatpush1.msra.mxu0 %v470
    %1012 = vmatprep.subr.mxu0 0.0
    %1013 = vmatpush2.msra.mxu0 0.0
    %1014 = vmatprep.subr.mxu0 0.0
    %1015 = vmatpush2.msra.mxu0 0.0
    %1016 = vmatprep.subr.mxu0 0.0
    %1017 = vmatpush2.msra.mxu0 0.0
    %1018 = vmatprep.subr.mxu0 0.0
    %1019 = vmatpush2.msra.mxu0 0.0
    %1020 = vmatprep.subr.mxu0 0.0
    %1021 = vmatpush2.msra.mxu0 0.0
    %1022 = vmatprep.subr.mxu0 0.0
    %1023 = vmatpush2.msra.mxu0 0.0
    %1024 = vmatprep.subr.mxu0 0.0
    %1025 = vmatpush2.msra.mxu0 0.0
    %1026 = vmatprep.subr.mxu0 0.0
    %1027 = vmatpush2.msra.mxu0 0.0
    %1028 = vmatprep.subr.mxu0 0.0
    %1029 = vmatpush2.msra.mxu0 0.0
    %1030 = vmatprep.subr.mxu0 0.0
    %1031 = vmatpush2.msra.mxu0 0.0
    %1032 = vmatprep.subr.mxu0 0.0
    %1033 = vmatpush2.msra.mxu0 0.0
    %1034 = vmatprep.subr.mxu0 0.0
    %1035 = vmatpush2.msra.mxu0 0.0
    %1036 = vmatprep.subr.mxu0 0.0
    %1037 = vmatpush2.msra.mxu0 0.0
    %1038 = vmatprep.subr.mxu0 0.0
    %1039 = vmatpush2.msra.mxu0 0.0
    %1040 = vmatprep.subr.mxu0 0.0
    %1041 = vmatpush2.msra.mxu0 0.0
    %1042 = vmatprep.subr.mxu0 0.0
    %1043 = vmatpush2.msra.mxu0 0.0
    %1044 = vmatprep.mubr.f32.mxu0 0.0
    %1045 = vmatmul.mubr.f32.gmra.mxu0 %v978
    %v1046 = vpop.f32.mrf.mxu0
    %v1047 = vadd.f32 0.0, %v1046
    %v1048 = vpop.f32.mrf.mxu0
    %1049 = vdwg.mxu0
    %1050 = vmatprep.subr.mxu0 0.0
    %1051 = vmatpush1.msra.mxu0 0.0
    %1052 = vmatprep.subr.mxu0 0.0
    %1053 = vmatpush1.msra.mxu0 0.0
    %1054 = vmatprep.subr.mxu0 0.0
    %1055 = vmatpush1.msra.mxu0 0.0
    %1056 = vmatprep.subr.mxu0 0.0
    %1057 = vmatpush1.msra.mxu0 0.0
    %1058 = vmatprep.subr.mxu0 0.0
    %1059 = vmatpush1.msra.mxu0 0.0
    %1060 = vmatprep.subr.mxu0 0.0
    %1061 = vmatpush1.msra.mxu0 0.0
    %1062 = vmatprep.subr.mxu0 0.0
    %1063 = vmatpush1.msra.mxu0 0.0
    %1064 = vmatprep.subr.mxu0 0.0
    %1065 = vmatpush1.msra.mxu0 0.0
    %1066 = vmatprep.subr.mxu0 0.0
    %1067 = vmatpush1.msra.mxu0 0.0
    %1068 = vmatprep.subr.mxu0 0.0
    %1069 = vmatpush1.msra.mxu0 0.0
    %1070 = vmatprep.subr.mxu0 0.0
    %1071 = vmatpush1.msra.mxu0 0.0
    %1072 = vmatprep.subr.mxu0 0.0
    %1073 = vmatpush1.msra.mxu0 0.0
    %1074 = vmatprep.subr.mxu0 0.0
    %1075 = vmatpush1.msra.mxu0 %v571
    %1076 = vmatprep.subr.mxu0 0.0
    %1077 = vmatpush1.msra.mxu0 %v477
    %1078 = vmatprep.subr.mxu0 0.0
    %1079 = vmatpush1.msra.mxu0 %v476
    %1080 = vmatprep.subr.mxu0 0.0
    %1081 = vmatpush1.msra.mxu0 %v475
    %1082 = vmatprep.subr.mxu0 0.0
    %1083 = vmatpush2.msra.mxu0 0.0
    %1084 = vmatprep.subr.mxu0 0.0
    %1085 = vmatpush2.msra.mxu0 0.0
    %1086 = vmatprep.subr.mxu0 0.0
    %1087 = vmatpush2.msra.mxu0 0.0
    %1088 = vmatprep.subr.mxu0 0.0
    %1089 = vmatpush2.msra.mxu0 0.0
    %1090 = vmatprep.subr.mxu0 0.0
    %1091 = vmatpush2.msra.mxu0 0.0
    %1092 = vmatprep.subr.mxu0 0.0
    %1093 = vmatpush2.msra.mxu0 0.0
    %1094 = vmatprep.subr.mxu0 0.0
    %1095 = vmatpush2.msra.mxu0 0.0
    %1096 = vmatprep.subr.mxu0 0.0
    %1097 = vmatpush2.msra.mxu0 0.0
    %1098 = vmatprep.subr.mxu0 0.0
    %1099 = vmatpush2.msra.mxu0 0.0
    %1100 = vmatprep.subr.mxu0 0.0
    %1101 = vmatpush2.msra.mxu0 0.0
    %1102 = vmatprep.subr.mxu0 0.0
    %1103 = vmatpush2.msra.mxu0 0.0
    %1104 = vmatprep.subr.mxu0 0.0
    %1105 = vmatpush2.msra.mxu0 0.0
    %1106 = vmatprep.subr.mxu0 0.0
    %1107 = vmatpush2.msra.mxu0 0.0
    %1108 = vmatprep.subr.mxu0 0.0
    %1109 = vmatpush2.msra.mxu0 0.0
    %1110 = vmatprep.subr.mxu0 0.0
    %1111 = vmatpush2.msra.mxu0 0.0
    %1112 = vmatprep.subr.mxu0 0.0
    %1113 = vmatpush2.msra.mxu0 0.0
    %1114 = vmatprep.mubr.f32.mxu0 0.0
    %1115 = vmatmul.mubr.f32.gmra.mxu0 %v978
    %v1116 = vpop.f32.mrf.mxu0
    %v1117 = vadd.f32 0.0, %v1116
    %v1118 = vpop.f32.mrf.mxu0
    %1119 = vdwg.mxu0
    %1120 = vmatprep.subr.mxu0 0.0
    %1121 = vmatpush1.msra.mxu0 0.0
    %1122 = vmatprep.subr.mxu0 0.0
    %1123 = vmatpush1.msra.mxu0 0.0
    %1124 = vmatprep.subr.mxu0 0.0
    %1125 = vmatpush1.msra.mxu0 0.0
    %1126 = vmatprep.subr.mxu0 0.0
    %1127 = vmatpush1.msra.mxu0 0.0
    %1128 = vmatprep.subr.mxu0 0.0
    %1129 = vmatpush1.msra.mxu0 0.0
    %1130 = vmatprep.subr.mxu0 0.0
    %1131 = vmatpush1.msra.mxu0 0.0
    %1132 = vmatprep.subr.mxu0 0.0
    %1133 = vmatpush1.msra.mxu0 0.0
    %1134 = vmatprep.subr.mxu0 0.0
    %1135 = vmatpush1.msra.mxu0 0.0
    %1136 = vmatprep.subr.mxu0 0.0
    %1137 = vmatpush1.msra.mxu0 0.0
    %1138 = vmatprep.subr.mxu0 0.0
    %1139 = vmatpush1.msra.mxu0 0.0
    %1140 = vmatprep.subr.mxu0 0.0
    %1141 = vmatpush1.msra.mxu0 0.0
    %1142 = vmatprep.subr.mxu0 0.0
    %1143 = vmatpush1.msra.mxu0 0.0
    %1144 = vmatprep.subr.mxu0 0.0
    %1145 = vmatpush1.msra.mxu0 %v644
    %1146 = vmatprep.subr.mxu0 0.0
    %1147 = vmatpush1.msra.mxu0 %v482
    %1148 = vmatprep.subr.mxu0 0.0
    %1149 = vmatpush1.msra.mxu0 %v481
    %1150 = vmatprep.subr.mxu0 0.0
    %1151 = vmatpush1.msra.mxu0 %v480
    %1152 = vmatprep.subr.mxu0 0.0
    %1153 = vmatpush2.msra.mxu0 0.0
    %1154 = vmatprep.subr.mxu0 0.0
    %1155 = vmatpush2.msra.mxu0 0.0
    %1156 = vmatprep.subr.mxu0 0.0
    %1157 = vmatpush2.msra.mxu0 0.0
    %1158 = vmatprep.subr.mxu0 0.0
    %1159 = vmatpush2.msra.mxu0 0.0
    %1160 = vmatprep.subr.mxu0 0.0
    %1161 = vmatpush2.msra.mxu0 0.0
    %1162 = vmatprep.subr.mxu0 0.0
    %1163 = vmatpush2.msra.mxu0 0.0
    %1164 = vmatprep.subr.mxu0 0.0
    %1165 = vmatpush2.msra.mxu0 0.0
    %1166 = vmatprep.subr.mxu0 0.0
    %1167 = vmatpush2.msra.mxu0 0.0
    %1168 = vmatprep.subr.mxu0 0.0
    %1169 = vmatpush2.msra.mxu0 0.0
    %1170 = vmatprep.subr.mxu0 0.0
    %1171 = vmatpush2.msra.mxu0 0.0
    %1172 = vmatprep.subr.mxu0 0.0
    %1173 = vmatpush2.msra.mxu0 0.0
    %1174 = vmatprep.subr.mxu0 0.0
    %1175 = vmatpush2.msra.mxu0 0.0
    %1176 = vmatprep.subr.mxu0 0.0
    %1177 = vmatpush2.msra.mxu0 0.0
    %1178 = vmatprep.subr.mxu0 0.0
    %1179 = vmatpush2.msra.mxu0 0.0
    %1180 = vmatprep.subr.mxu0 0.0
    %1181 = vmatpush2.msra.mxu0 0.0
    %1182 = vmatprep.subr.mxu0 0.0
    %1183 = vmatpush2.msra.mxu0 0.0
    %1184 = vmatprep.mubr.f32.mxu0 0.0
    %1185 = vmatmul.mubr.f32.gmra.mxu0 %v978
    %v1186 = vpop.f32.mrf.mxu0
    %v1187 = vadd.f32 %v489, %v1186
    %v1188 = vpop.f32.mrf.mxu0
    %1189 = vdwg.mxu0
    %v1190 = vadd.f32 %v974, %v1047
    %v1191 = vxor.u32 %v1190, 2147483648
    %v1192 = vmul.f32 %v1191, 1.442695
    %v1193 = vpow.pop %v1192
    %v1194 = vadd.f32 %v1193, 1.0
    %v1195 = vrcp.pop %v1194
    %v1196 = vmul.f32 1.0, %v1195
    %v1197 = vadd.f32 %v975, %v1117
    %v1198 = vxor.u32 %v1197, 2147483648
    %v1199 = vmul.f32 %v1198, 1.442695
    %v1200 = vpow.pop %v1199
    %v1201 = vadd.f32 %v1200, 1.0
    %v1202 = vrcp.pop %v1201
    %v1203 = vmul.f32 1.0, %v1202
    %v1204 = vmul.f32 %v1196, %v1187
    %v1205 = vadd.f32 %v976, %v1204
    %v1206 = vtanh.pop %v1205
    %v1207 = vsub.f32 1.0, %v1203
    %v1208 = vmul.f32 %v1207, %v1206
    %v1209 = vmul.f32 %v1203, %v973
    %v1210 = vadd.f32 %v1208, %v1209
    %v1211 = vld [vmem:[#allocation2 + $0x6] sm:$0x3]
    %v1212 = vld [vmem:[%s324 + $0x6] sm:$0x3]
    %v1213 = vld [vmem:[%s460 + $0x6] sm:$0x3]
    %v1215 = vsel %vm47, %v1210, 0
    %1217 = vmatprep.subr.mxu0 0.0
    %1218 = vmatpush1.msra.mxu0 0.0
    %1219 = vmatprep.subr.mxu0 0.0
    %1220 = vmatpush1.msra.mxu0 0.0
    %1221 = vmatprep.subr.mxu0 0.0
    %1222 = vmatpush1.msra.mxu0 0.0
    %1223 = vmatprep.subr.mxu0 0.0
    %1224 = vmatpush1.msra.mxu0 0.0
    %1225 = vmatprep.subr.mxu0 0.0
    %1226 = vmatpush1.msra.mxu0 0.0
    %1227 = vmatprep.subr.mxu0 0.0
    %1228 = vmatpush1.msra.mxu0 0.0
    %1229 = vmatprep.subr.mxu0 0.0
    %1230 = vmatpush1.msra.mxu0 0.0
    %1231 = vmatprep.subr.mxu0 0.0
    %1232 = vmatpush1.msra.mxu0 0.0
    %1233 = vmatprep.subr.mxu0 0.0
    %1234 = vmatpush1.msra.mxu0 0.0
    %1235 = vmatprep.subr.mxu0 0.0
    %1236 = vmatpush1.msra.mxu0 0.0
    %1237 = vmatprep.subr.mxu0 0.0
    %1238 = vmatpush1.msra.mxu0 0.0
    %1239 = vmatprep.subr.mxu0 0.0
    %1240 = vmatpush1.msra.mxu0 0.0
    %1241 = vmatprep.subr.mxu0 0.0
    %1242 = vmatpush1.msra.mxu0 %v498
    %1243 = vmatprep.subr.mxu0 0.0
    %1244 = vmatpush1.msra.mxu0 %v472
    %1245 = vmatprep.subr.mxu0 0.0
    %1246 = vmatpush1.msra.mxu0 %v471
    %1247 = vmatprep.subr.mxu0 0.0
    %1248 = vmatpush1.msra.mxu0 %v470
    %1249 = vmatprep.subr.mxu0 0.0
    %1250 = vmatpush2.msra.mxu0 0.0
    %1251 = vmatprep.subr.mxu0 0.0
    %1252 = vmatpush2.msra.mxu0 0.0
    %1253 = vmatprep.subr.mxu0 0.0
    %1254 = vmatpush2.msra.mxu0 0.0
    %1255 = vmatprep.subr.mxu0 0.0
    %1256 = vmatpush2.msra.mxu0 0.0
    %1257 = vmatprep.subr.mxu0 0.0
    %1258 = vmatpush2.msra.mxu0 0.0
    %1259 = vmatprep.subr.mxu0 0.0
    %1260 = vmatpush2.msra.mxu0 0.0
    %1261 = vmatprep.subr.mxu0 0.0
    %1262 = vmatpush2.msra.mxu0 0.0
    %1263 = vmatprep.subr.mxu0 0.0
    %1264 = vmatpush2.msra.mxu0 0.0
    %1265 = vmatprep.subr.mxu0 0.0
    %1266 = vmatpush2.msra.mxu0 0.0
    %1267 = vmatprep.subr.mxu0 0.0
    %1268 = vmatpush2.msra.mxu0 0.0
    %1269 = vmatprep.subr.mxu0 0.0
    %1270 = vmatpush2.msra.mxu0 0.0
    %1271 = vmatprep.subr.mxu0 0.0
    %1272 = vmatpush2.msra.mxu0 0.0
    %1273 = vmatprep.subr.mxu0 0.0
    %1274 = vmatpush2.msra.mxu0 0.0
    %1275 = vmatprep.subr.mxu0 0.0
    %1276 = vmatpush2.msra.mxu0 0.0
    %1277 = vmatprep.subr.mxu0 0.0
    %1278 = vmatpush2.msra.mxu0 0.0
    %1279 = vmatprep.subr.mxu0 0.0
    %1280 = vmatpush2.msra.mxu0 0.0
    %1281 = vmatprep.mubr.f32.mxu0 0.0
    %1282 = vmatmul.mubr.f32.gmra.mxu0 %v1215
    %v1283 = vpop.f32.mrf.mxu0
    %v1284 = vadd.f32 0.0, %v1283
    %v1285 = vpop.f32.mrf.mxu0
    %1286 = vdwg.mxu0
    %1287 = vmatprep.subr.mxu0 0.0
    %1288 = vmatpush1.msra.mxu0 0.0
    %1289 = vmatprep.subr.mxu0 0.0
    %1290 = vmatpush1.msra.mxu0 0.0
    %1291 = vmatprep.subr.mxu0 0.0
    %1292 = vmatpush1.msra.mxu0 0.0
    %1293 = vmatprep.subr.mxu0 0.0
    %1294 = vmatpush1.msra.mxu0 0.0
    %1295 = vmatprep.subr.mxu0 0.0
    %1296 = vmatpush1.msra.mxu0 0.0
    %1297 = vmatprep.subr.mxu0 0.0
    %1298 = vmatpush1.msra.mxu0 0.0
    %1299 = vmatprep.subr.mxu0 0.0
    %1300 = vmatpush1.msra.mxu0 0.0
    %1301 = vmatprep.subr.mxu0 0.0
    %1302 = vmatpush1.msra.mxu0 0.0
    %1303 = vmatprep.subr.mxu0 0.0
    %1304 = vmatpush1.msra.mxu0 0.0
    %1305 = vmatprep.subr.mxu0 0.0
    %1306 = vmatpush1.msra.mxu0 0.0
    %1307 = vmatprep.subr.mxu0 0.0
    %1308 = vmatpush1.msra.mxu0 0.0
    %1309 = vmatprep.subr.mxu0 0.0
    %1310 = vmatpush1.msra.mxu0 0.0
    %1311 = vmatprep.subr.mxu0 0.0
    %1312 = vmatpush1.msra.mxu0 %v571
    %1313 = vmatprep.subr.mxu0 0.0
    %1314 = vmatpush1.msra.mxu0 %v477
    %1315 = vmatprep.subr.mxu0 0.0
    %1316 = vmatpush1.msra.mxu0 %v476
    %1317 = vmatprep.subr.mxu0 0.0
    %1318 = vmatpush1.msra.mxu0 %v475
    %1319 = vmatprep.subr.mxu0 0.0
    %1320 = vmatpush2.msra.mxu0 0.0
    %1321 = vmatprep.subr.mxu0 0.0
    %1322 = vmatpush2.msra.mxu0 0.0
    %1323 = vmatprep.subr.mxu0 0.0
    %1324 = vmatpush2.msra.mxu0 0.0
    %1325 = vmatprep.subr.mxu0 0.0
    %1326 = vmatpush2.msra.mxu0 0.0
    %1327 = vmatprep.subr.mxu0 0.0
    %1328 = vmatpush2.msra.mxu0 0.0
    %1329 = vmatprep.subr.mxu0 0.0
    %1330 = vmatpush2.msra.mxu0 0.0
    %1331 = vmatprep.subr.mxu0 0.0
    %1332 = vmatpush2.msra.mxu0 0.0
    %1333 = vmatprep.subr.mxu0 0.0
    %1334 = vmatpush2.msra.mxu0 0.0
    %1335 = vmatprep.subr.mxu0 0.0
    %1336 = vmatpush2.msra.mxu0 0.0
    %1337 = vmatprep.subr.mxu0 0.0
    %1338 = vmatpush2.msra.mxu0 0.0
    %1339 = vmatprep.subr.mxu0 0.0
    %1340 = vmatpush2.msra.mxu0 0.0
    %1341 = vmatprep.subr.mxu0 0.0
    %1342 = vmatpush2.msra.mxu0 0.0
    %1343 = vmatprep.subr.mxu0 0.0
    %1344 = vmatpush2.msra.mxu0 0.0
    %1345 = vmatprep.subr.mxu0 0.0
    %1346 = vmatpush2.msra.mxu0 0.0
    %1347 = vmatprep.subr.mxu0 0.0
    %1348 = vmatpush2.msra.mxu0 0.0
    %1349 = vmatprep.subr.mxu0 0.0
    %1350 = vmatpush2.msra.mxu0 0.0
    %1351 = vmatprep.mubr.f32.mxu0 0.0
    %1352 = vmatmul.mubr.f32.gmra.mxu0 %v1215
    %v1353 = vpop.f32.mrf.mxu0
    %v1354 = vadd.f32 0.0, %v1353
    %v1355 = vpop.f32.mrf.mxu0
    %1356 = vdwg.mxu0
    %1357 = vmatprep.subr.mxu0 0.0
    %1358 = vmatpush1.msra.mxu0 0.0
    %1359 = vmatprep.subr.mxu0 0.0
    %1360 = vmatpush1.msra.mxu0 0.0
    %1361 = vmatprep.subr.mxu0 0.0
    %1362 = vmatpush1.msra.mxu0 0.0
    %1363 = vmatprep.subr.mxu0 0.0
    %1364 = vmatpush1.msra.mxu0 0.0
    %1365 = vmatprep.subr.mxu0 0.0
    %1366 = vmatpush1.msra.mxu0 0.0
    %1367 = vmatprep.subr.mxu0 0.0
    %1368 = vmatpush1.msra.mxu0 0.0
    %1369 = vmatprep.subr.mxu0 0.0
    %1370 = vmatpush1.msra.mxu0 0.0
    %1371 = vmatprep.subr.mxu0 0.0
    %1372 = vmatpush1.msra.mxu0 0.0
    %1373 = vmatprep.subr.mxu0 0.0
    %1374 = vmatpush1.msra.mxu0 0.0
    %1375 = vmatprep.subr.mxu0 0.0
    %1376 = vmatpush1.msra.mxu0 0.0
    %1377 = vmatprep.subr.mxu0 0.0
    %1378 = vmatpush1.msra.mxu0 0.0
    %1379 = vmatprep.subr.mxu0 0.0
    %1380 = vmatpush1.msra.mxu0 0.0
    %1381 = vmatprep.subr.mxu0 0.0
    %1382 = vmatpush1.msra.mxu0 %v644
    %1383 = vmatprep.subr.mxu0 0.0
    %1384 = vmatpush1.msra.mxu0 %v482
    %1385 = vmatprep.subr.mxu0 0.0
    %1386 = vmatpush1.msra.mxu0 %v481
    %1387 = vmatprep.subr.mxu0 0.0
    %1388 = vmatpush1.msra.mxu0 %v480
    %1389 = vmatprep.subr.mxu0 0.0
    %1390 = vmatpush2.msra.mxu0 0.0
    %1391 = vmatprep.subr.mxu0 0.0
    %1392 = vmatpush2.msra.mxu0 0.0
    %1393 = vmatprep.subr.mxu0 0.0
    %1394 = vmatpush2.msra.mxu0 0.0
    %1395 = vmatprep.subr.mxu0 0.0
    %1396 = vmatpush2.msra.mxu0 0.0
    %1397 = vmatprep.subr.mxu0 0.0
    %1398 = vmatpush2.msra.mxu0 0.0
    %1399 = vmatprep.subr.mxu0 0.0
    %1400 = vmatpush2.msra.mxu0 0.0
    %1401 = vmatprep.subr.mxu0 0.0
    %1402 = vmatpush2.msra.mxu0 0.0
    %1403 = vmatprep.subr.mxu0 0.0
    %1404 = vmatpush2.msra.mxu0 0.0
    %1405 = vmatprep.subr.mxu0 0.0
    %1406 = vmatpush2.msra.mxu0 0.0
    %1407 = vmatprep.subr.mxu0 0.0
    %1408 = vmatpush2.msra.mxu0 0.0
    %1409 = vmatprep.subr.mxu0 0.0
    %1410 = vmatpush2.msra.mxu0 0.0
    %1411 = vmatprep.subr.mxu0 0.0
    %1412 = vmatpush2.msra.mxu0 0.0
    %1413 = vmatprep.subr.mxu0 0.0
    %1414 = vmatpush2.msra.mxu0 0.0
    %1415 = vmatprep.subr.mxu0 0.0
    %1416 = vmatpush2.msra.mxu0 0.0
    %1417 = vmatprep.subr.mxu0 0.0
    %1418 = vmatpush2.msra.mxu0 0.0
    %1419 = vmatprep.subr.mxu0 0.0
    %1420 = vmatpush2.msra.mxu0 0.0
    %1421 = vmatprep.mubr.f32.mxu0 0.0
    %1422 = vmatmul.mubr.f32.gmra.mxu0 %v1215
    %v1423 = vpop.f32.mrf.mxu0
    %v1424 = vadd.f32 %v489, %v1423
    %v1425 = vpop.f32.mrf.mxu0
    %1426 = vdwg.mxu0
    %v1427 = vadd.f32 %v1211, %v1284
    %v1428 = vxor.u32 %v1427, 2147483648
    %v1429 = vmul.f32 %v1428, 1.442695
    %v1430 = vpow.pop %v1429
    %v1431 = vadd.f32 %v1430, 1.0
    %v1432 = vrcp.pop %v1431
    %v1433 = vmul.f32 1.0, %v1432
    %v1434 = vadd.f32 %v1212, %v1354
    %v1435 = vxor.u32 %v1434, 2147483648
    %v1436 = vmul.f32 %v1435, 1.442695
    %v1437 = vpow.pop %v1436
    %v1438 = vadd.f32 %v1437, 1.0
    %v1439 = vrcp.pop %v1438
    %v1440 = vmul.f32 1.0, %v1439
    %v1441 = vmul.f32 %v1433, %v1424
    %v1442 = vadd.f32 %v1213, %v1441
    %v1443 = vtanh.pop %v1442
    %v1444 = vsub.f32 1.0, %v1440
    %v1445 = vmul.f32 %v1444, %v1443
    %v1446 = vmul.f32 %v1440, %v1210
    %v1447 = vadd.f32 %v1445, %v1446
    %v1448 = vld [vmem:[#allocation2 + $0x8] sm:$0x3]
    %v1449 = vld [vmem:[%s324 + $0x8] sm:$0x3]
    %v1450 = vld [vmem:[%s460 + $0x8] sm:$0x3]
    %v1452 = vsel %vm47, %v1447, 0
    %1454 = vmatprep.subr.mxu0 0.0
    %1455 = vmatpush1.msra.mxu0 0.0
    %1456 = vmatprep.subr.mxu0 0.0
    %1457 = vmatpush1.msra.mxu0 0.0
    %1458 = vmatprep.subr.mxu0 0.0
    %1459 = vmatpush1.msra.mxu0 0.0
    %1460 = vmatprep.subr.mxu0 0.0
    %1461 = vmatpush1.msra.mxu0 0.0
    %1462 = vmatprep.subr.mxu0 0.0
    %1463 = vmatpush1.msra.mxu0 0.0
    %1464 = vmatprep.subr.mxu0 0.0
    %1465 = vmatpush1.msra.mxu0 0.0
    %1466 = vmatprep.subr.mxu0 0.0
    %1467 = vmatpush1.msra.mxu0 0.0
    %1468 = vmatprep.subr.mxu0 0.0
    %1469 = vmatpush1.msra.mxu0 0.0
    %1470 = vmatprep.subr.mxu0 0.0
    %1471 = vmatpush1.msra.mxu0 0.0
    %1472 = vmatprep.subr.mxu0 0.0
    %1473 = vmatpush1.msra.mxu0 0.0
    %1474 = vmatprep.subr.mxu0 0.0
    %1475 = vmatpush1.msra.mxu0 0.0
    %1476 = vmatprep.subr.mxu0 0.0
    %1477 = vmatpush1.msra.mxu0 0.0
    %1478 = vmatprep.subr.mxu0 0.0
    %1479 = vmatpush1.msra.mxu0 %v498
    %1480 = vmatprep.subr.mxu0 0.0
    %1481 = vmatpush1.msra.mxu0 %v472
    %1482 = vmatprep.subr.mxu0 0.0
    %1483 = vmatpush1.msra.mxu0 %v471
    %1484 = vmatprep.subr.mxu0 0.0
    %1485 = vmatpush1.msra.mxu0 %v470
    %1486 = vmatprep.subr.mxu0 0.0
    %1487 = vmatpush2.msra.mxu0 0.0
    %1488 = vmatprep.subr.mxu0 0.0
    %1489 = vmatpush2.msra.mxu0 0.0
    %1490 = vmatprep.subr.mxu0 0.0
    %1491 = vmatpush2.msra.mxu0 0.0
    %1492 = vmatprep.subr.mxu0 0.0
    %1493 = vmatpush2.msra.mxu0 0.0
    %1494 = vmatprep.subr.mxu0 0.0
    %1495 = vmatpush2.msra.mxu0 0.0
    %1496 = vmatprep.subr.mxu0 0.0
    %1497 = vmatpush2.msra.mxu0 0.0
    %1498 = vmatprep.subr.mxu0 0.0
    %1499 = vmatpush2.msra.mxu0 0.0
    %1500 = vmatprep.subr.mxu0 0.0
    %1501 = vmatpush2.msra.mxu0 0.0
    %1502 = vmatprep.subr.mxu0 0.0
    %1503 = vmatpush2.msra.mxu0 0.0
    %1504 = vmatprep.subr.mxu0 0.0
    %1505 = vmatpush2.msra.mxu0 0.0
    %1506 = vmatprep.subr.mxu0 0.0
    %1507 = vmatpush2.msra.mxu0 0.0
    %1508 = vmatprep.subr.mxu0 0.0
    %1509 = vmatpush2.msra.mxu0 0.0
    %1510 = vmatprep.subr.mxu0 0.0
    %1511 = vmatpush2.msra.mxu0 0.0
    %1512 = vmatprep.subr.mxu0 0.0
    %1513 = vmatpush2.msra.mxu0 0.0
    %1514 = vmatprep.subr.mxu0 0.0
    %1515 = vmatpush2.msra.mxu0 0.0
    %1516 = vmatprep.subr.mxu0 0.0
    %1517 = vmatpush2.msra.mxu0 0.0
    %1518 = vmatprep.mubr.f32.mxu0 0.0
    %1519 = vmatmul.mubr.f32.gmra.mxu0 %v1452
    %v1520 = vpop.f32.mrf.mxu0
    %v1521 = vadd.f32 0.0, %v1520
    %v1522 = vpop.f32.mrf.mxu0
    %1523 = vdwg.mxu0
    %1524 = vmatprep.subr.mxu0 0.0
    %1525 = vmatpush1.msra.mxu0 0.0
    %1526 = vmatprep.subr.mxu0 0.0
    %1527 = vmatpush1.msra.mxu0 0.0
    %1528 = vmatprep.subr.mxu0 0.0
    %1529 = vmatpush1.msra.mxu0 0.0
    %1530 = vmatprep.subr.mxu0 0.0
    %1531 = vmatpush1.msra.mxu0 0.0
    %1532 = vmatprep.subr.mxu0 0.0
    %1533 = vmatpush1.msra.mxu0 0.0
    %1534 = vmatprep.subr.mxu0 0.0
    %1535 = vmatpush1.msra.mxu0 0.0
    %1536 = vmatprep.subr.mxu0 0.0
    %1537 = vmatpush1.msra.mxu0 0.0
    %1538 = vmatprep.subr.mxu0 0.0
    %1539 = vmatpush1.msra.mxu0 0.0
    %1540 = vmatprep.subr.mxu0 0.0
    %1541 = vmatpush1.msra.mxu0 0.0
    %1542 = vmatprep.subr.mxu0 0.0
    %1543 = vmatpush1.msra.mxu0 0.0
    %1544 = vmatprep.subr.mxu0 0.0
    %1545 = vmatpush1.msra.mxu0 0.0
    %1546 = vmatprep.subr.mxu0 0.0
    %1547 = vmatpush1.msra.mxu0 0.0
    %1548 = vmatprep.subr.mxu0 0.0
    %1549 = vmatpush1.msra.mxu0 %v571
    %1550 = vmatprep.subr.mxu0 0.0
    %1551 = vmatpush1.msra.mxu0 %v477
    %1552 = vmatprep.subr.mxu0 0.0
    %1553 = vmatpush1.msra.mxu0 %v476
    %1554 = vmatprep.subr.mxu0 0.0
    %1555 = vmatpush1.msra.mxu0 %v475
    %1556 = vmatprep.subr.mxu0 0.0
    %1557 = vmatpush2.msra.mxu0 0.0
    %1558 = vmatprep.subr.mxu0 0.0
    %1559 = vmatpush2.msra.mxu0 0.0
    %1560 = vmatprep.subr.mxu0 0.0
    %1561 = vmatpush2.msra.mxu0 0.0
    %1562 = vmatprep.subr.mxu0 0.0
    %1563 = vmatpush2.msra.mxu0 0.0
    %1564 = vmatprep.subr.mxu0 0.0
    %1565 = vmatpush2.msra.mxu0 0.0
    %1566 = vmatprep.subr.mxu0 0.0
    %1567 = vmatpush2.msra.mxu0 0.0
    %1568 = vmatprep.subr.mxu0 0.0
    %1569 = vmatpush2.msra.mxu0 0.0
    %1570 = vmatprep.subr.mxu0 0.0
    %1571 = vmatpush2.msra.mxu0 0.0
    %1572 = vmatprep.subr.mxu0 0.0
    %1573 = vmatpush2.msra.mxu0 0.0
    %1574 = vmatprep.subr.mxu0 0.0
    %1575 = vmatpush2.msra.mxu0 0.0
    %1576 = vmatprep.subr.mxu0 0.0
    %1577 = vmatpush2.msra.mxu0 0.0
    %1578 = vmatprep.subr.mxu0 0.0
    %1579 = vmatpush2.msra.mxu0 0.0
    %1580 = vmatprep.subr.mxu0 0.0
    %1581 = vmatpush2.msra.mxu0 0.0
    %1582 = vmatprep.subr.mxu0 0.0
    %1583 = vmatpush2.msra.mxu0 0.0
    %1584 = vmatprep.subr.mxu0 0.0
    %1585 = vmatpush2.msra.mxu0 0.0
    %1586 = vmatprep.subr.mxu0 0.0
    %1587 = vmatpush2.msra.mxu0 0.0
    %1588 = vmatprep.mubr.f32.mxu0 0.0
    %1589 = vmatmul.mubr.f32.gmra.mxu0 %v1452
    %v1590 = vpop.f32.mrf.mxu0
    %v1591 = vadd.f32 0.0, %v1590
    %v1592 = vpop.f32.mrf.mxu0
    %1593 = vdwg.mxu0
    %1594 = vmatprep.subr.mxu0 0.0
    %1595 = vmatpush1.msra.mxu0 0.0
    %1596 = vmatprep.subr.mxu0 0.0
    %1597 = vmatpush1.msra.mxu0 0.0
    %1598 = vmatprep.subr.mxu0 0.0
    %1599 = vmatpush1.msra.mxu0 0.0
    %1600 = vmatprep.subr.mxu0 0.0
    %1601 = vmatpush1.msra.mxu0 0.0
    %1602 = vmatprep.subr.mxu0 0.0
    %1603 = vmatpush1.msra.mxu0 0.0
    %1604 = vmatprep.subr.mxu0 0.0
    %1605 = vmatpush1.msra.mxu0 0.0
    %1606 = vmatprep.subr.mxu0 0.0
    %1607 = vmatpush1.msra.mxu0 0.0
    %1608 = vmatprep.subr.mxu0 0.0
    %1609 = vmatpush1.msra.mxu0 0.0
    %1610 = vmatprep.subr.mxu0 0.0
    %1611 = vmatpush1.msra.mxu0 0.0
    %1612 = vmatprep.subr.mxu0 0.0
    %1613 = vmatpush1.msra.mxu0 0.0
    %1614 = vmatprep.subr.mxu0 0.0
    %1615 = vmatpush1.msra.mxu0 0.0
    %1616 = vmatprep.subr.mxu0 0.0
    %1617 = vmatpush1.msra.mxu0 0.0
    %1618 = vmatprep.subr.mxu0 0.0
    %1619 = vmatpush1.msra.mxu0 %v644
    %1620 = vmatprep.subr.mxu0 0.0
    %1621 = vmatpush1.msra.mxu0 %v482
    %1622 = vmatprep.subr.mxu0 0.0
    %1623 = vmatpush1.msra.mxu0 %v481
    %1624 = vmatprep.subr.mxu0 0.0
    %1625 = vmatpush1.msra.mxu0 %v480
    %1626 = vmatprep.subr.mxu0 0.0
    %1627 = vmatpush2.msra.mxu0 0.0
    %1628 = vmatprep.subr.mxu0 0.0
    %1629 = vmatpush2.msra.mxu0 0.0
    %1630 = vmatprep.subr.mxu0 0.0
    %1631 = vmatpush2.msra.mxu0 0.0
    %1632 = vmatprep.subr.mxu0 0.0
    %1633 = vmatpush2.msra.mxu0 0.0
    %1634 = vmatprep.subr.mxu0 0.0
    %1635 = vmatpush2.msra.mxu0 0.0
    %1636 = vmatprep.subr.mxu0 0.0
    %1637 = vmatpush2.msra.mxu0 0.0
    %1638 = vmatprep.subr.mxu0 0.0
    %1639 = vmatpush2.msra.mxu0 0.0
    %1640 = vmatprep.subr.mxu0 0.0
    %1641 = vmatpush2.msra.mxu0 0.0
    %1642 = vmatprep.subr.mxu0 0.0
    %1643 = vmatpush2.msra.mxu0 0.0
    %1644 = vmatprep.subr.mxu0 0.0
    %1645 = vmatpush2.msra.mxu0 0.0
    %1646 = vmatprep.subr.mxu0 0.0
    %1647 = vmatpush2.msra.mxu0 0.0
    %1648 = vmatprep.subr.mxu0 0.0
    %1649 = vmatpush2.msra.mxu0 0.0
    %1650 = vmatprep.subr.mxu0 0.0
    %1651 = vmatpush2.msra.mxu0 0.0
    %1652 = vmatprep.subr.mxu0 0.0
    %1653 = vmatpush2.msra.mxu0 0.0
    %1654 = vmatprep.subr.mxu0 0.0
    %1655 = vmatpush2.msra.mxu0 0.0
    %1656 = vmatprep.subr.mxu0 0.0
    %1657 = vmatpush2.msra.mxu0 0.0
    %1658 = vmatprep.mubr.f32.mxu0 0.0
    %1659 = vmatmul.mubr.f32.gmra.mxu0 %v1452
    %v1660 = vpop.f32.mrf.mxu0
    %v1661 = vadd.f32 %v489, %v1660
    %v1662 = vpop.f32.mrf.mxu0
    %1663 = vdwg.mxu0
    %v1664 = vadd.f32 %v1448, %v1521
    %v1665 = vxor.u32 %v1664, 2147483648
    %v1666 = vmul.f32 %v1665, 1.442695
    %v1667 = vpow.pop %v1666
    %v1668 = vadd.f32 %v1667, 1.0
    %v1669 = vrcp.pop %v1668
    %v1670 = vmul.f32 1.0, %v1669
    %v1671 = vadd.f32 %v1449, %v1591
    %v1672 = vxor.u32 %v1671, 2147483648
    %v1673 = vmul.f32 %v1672, 1.442695
    %v1674 = vpow.pop %v1673
    %v1675 = vadd.f32 %v1674, 1.0
    %v1676 = vrcp.pop %v1675
    %v1677 = vmul.f32 1.0, %v1676
    %v1678 = vmul.f32 %v1670, %v1661
    %v1679 = vadd.f32 %v1450, %v1678
    %v1680 = vtanh.pop %v1679
    %v1681 = vsub.f32 1.0, %v1677
    %v1682 = vmul.f32 %v1681, %v1680
    %v1683 = vmul.f32 %v1677, %v1447
    %v1684 = vadd.f32 %v1682, %v1683
    %v1685 = vld [vmem:[#allocation2 + $0xa] sm:$0x3]
    %v1686 = vld [vmem:[%s324 + $0xa] sm:$0x3]
    %v1687 = vld [vmem:[%s460 + $0xa] sm:$0x3]
    %v1689 = vsel %vm47, %v1684, 0
    %1691 = vmatprep.subr.mxu0 0.0
    %1692 = vmatpush1.msra.mxu0 0.0
    %1693 = vmatprep.subr.mxu0 0.0
    %1694 = vmatpush1.msra.mxu0 0.0
    %1695 = vmatprep.subr.mxu0 0.0
    %1696 = vmatpush1.msra.mxu0 0.0
    %1697 = vmatprep.subr.mxu0 0.0
    %1698 = vmatpush1.msra.mxu0 0.0
    %1699 = vmatprep.subr.mxu0 0.0
    %1700 = vmatpush1.msra.mxu0 0.0
    %1701 = vmatprep.subr.mxu0 0.0
    %1702 = vmatpush1.msra.mxu0 0.0
    %1703 = vmatprep.subr.mxu0 0.0
    %1704 = vmatpush1.msra.mxu0 0.0
    %1705 = vmatprep.subr.mxu0 0.0
    %1706 = vmatpush1.msra.mxu0 0.0
    %1707 = vmatprep.subr.mxu0 0.0
    %1708 = vmatpush1.msra.mxu0 0.0
    %1709 = vmatprep.subr.mxu0 0.0
    %1710 = vmatpush1.msra.mxu0 0.0
    %1711 = vmatprep.subr.mxu0 0.0
    %1712 = vmatpush1.msra.mxu0 0.0
    %1713 = vmatprep.subr.mxu0 0.0
    %1714 = vmatpush1.msra.mxu0 0.0
    %1715 = vmatprep.subr.mxu0 0.0
    %1716 = vmatpush1.msra.mxu0 %v498
    %1717 = vmatprep.subr.mxu0 0.0
    %1718 = vmatpush1.msra.mxu0 %v472
    %1719 = vmatprep.subr.mxu0 0.0
    %1720 = vmatpush1.msra.mxu0 %v471
    %1721 = vmatprep.subr.mxu0 0.0
    %1722 = vmatpush1.msra.mxu0 %v470
    %1723 = vmatprep.subr.mxu0 0.0
    %1724 = vmatpush2.msra.mxu0 0.0
    %1725 = vmatprep.subr.mxu0 0.0
    %1726 = vmatpush2.msra.mxu0 0.0
    %1727 = vmatprep.subr.mxu0 0.0
    %1728 = vmatpush2.msra.mxu0 0.0
    %1729 = vmatprep.subr.mxu0 0.0
    %1730 = vmatpush2.msra.mxu0 0.0
    %1731 = vmatprep.subr.mxu0 0.0
    %1732 = vmatpush2.msra.mxu0 0.0
    %1733 = vmatprep.subr.mxu0 0.0
    %1734 = vmatpush2.msra.mxu0 0.0
    %1735 = vmatprep.subr.mxu0 0.0
    %1736 = vmatpush2.msra.mxu0 0.0
    %1737 = vmatprep.subr.mxu0 0.0
    %1738 = vmatpush2.msra.mxu0 0.0
    %1739 = vmatprep.subr.mxu0 0.0
    %1740 = vmatpush2.msra.mxu0 0.0
    %1741 = vmatprep.subr.mxu0 0.0
    %1742 = vmatpush2.msra.mxu0 0.0
    %1743 = vmatprep.subr.mxu0 0.0
    %1744 = vmatpush2.msra.mxu0 0.0
    %1745 = vmatprep.subr.mxu0 0.0
    %1746 = vmatpush2.msra.mxu0 0.0
    %1747 = vmatprep.subr.mxu0 0.0
    %1748 = vmatpush2.msra.mxu0 0.0
    %1749 = vmatprep.subr.mxu0 0.0
    %1750 = vmatpush2.msra.mxu0 0.0
    %1751 = vmatprep.subr.mxu0 0.0
    %1752 = vmatpush2.msra.mxu0 0.0
    %1753 = vmatprep.subr.mxu0 0.0
    %1754 = vmatpush2.msra.mxu0 0.0
    %1755 = vmatprep.mubr.f32.mxu0 0.0
    %1756 = vmatmul.mubr.f32.gmra.mxu0 %v1689
    %v1757 = vpop.f32.mrf.mxu0
    %v1758 = vadd.f32 0.0, %v1757
    %v1759 = vpop.f32.mrf.mxu0
    %1760 = vdwg.mxu0
    %1761 = vmatprep.subr.mxu0 0.0
    %1762 = vmatpush1.msra.mxu0 0.0
    %1763 = vmatprep.subr.mxu0 0.0
    %1764 = vmatpush1.msra.mxu0 0.0
    %1765 = vmatprep.subr.mxu0 0.0
    %1766 = vmatpush1.msra.mxu0 0.0
    %1767 = vmatprep.subr.mxu0 0.0
    %1768 = vmatpush1.msra.mxu0 0.0
    %1769 = vmatprep.subr.mxu0 0.0
    %1770 = vmatpush1.msra.mxu0 0.0
    %1771 = vmatprep.subr.mxu0 0.0
    %1772 = vmatpush1.msra.mxu0 0.0
    %1773 = vmatprep.subr.mxu0 0.0
    %1774 = vmatpush1.msra.mxu0 0.0
    %1775 = vmatprep.subr.mxu0 0.0
    %1776 = vmatpush1.msra.mxu0 0.0
    %1777 = vmatprep.subr.mxu0 0.0
    %1778 = vmatpush1.msra.mxu0 0.0
    %1779 = vmatprep.subr.mxu0 0.0
    %1780 = vmatpush1.msra.mxu0 0.0
    %1781 = vmatprep.subr.mxu0 0.0
    %1782 = vmatpush1.msra.mxu0 0.0
    %1783 = vmatprep.subr.mxu0 0.0
    %1784 = vmatpush1.msra.mxu0 0.0
    %1785 = vmatprep.subr.mxu0 0.0
    %1786 = vmatpush1.msra.mxu0 %v571
    %1787 = vmatprep.subr.mxu0 0.0
    %1788 = vmatpush1.msra.mxu0 %v477
    %1789 = vmatprep.subr.mxu0 0.0
    %1790 = vmatpush1.msra.mxu0 %v476
    %1791 = vmatprep.subr.mxu0 0.0
    %1792 = vmatpush1.msra.mxu0 %v475
    %1793 = vmatprep.subr.mxu0 0.0
    %1794 = vmatpush2.msra.mxu0 0.0
    %1795 = vmatprep.subr.mxu0 0.0
    %1796 = vmatpush2.msra.mxu0 0.0
    %1797 = vmatprep.subr.mxu0 0.0
    %1798 = vmatpush2.msra.mxu0 0.0
    %1799 = vmatprep.subr.mxu0 0.0
    %1800 = vmatpush2.msra.mxu0 0.0
    %1801 = vmatprep.subr.mxu0 0.0
    %1802 = vmatpush2.msra.mxu0 0.0
    %1803 = vmatprep.subr.mxu0 0.0
    %1804 = vmatpush2.msra.mxu0 0.0
    %1805 = vmatprep.subr.mxu0 0.0
    %1806 = vmatpush2.msra.mxu0 0.0
    %1807 = vmatprep.subr.mxu0 0.0
    %1808 = vmatpush2.msra.mxu0 0.0
    %1809 = vmatprep.subr.mxu0 0.0
    %1810 = vmatpush2.msra.mxu0 0.0
    %1811 = vmatprep.subr.mxu0 0.0
    %1812 = vmatpush2.msra.mxu0 0.0
    %1813 = vmatprep.subr.mxu0 0.0
    %1814 = vmatpush2.msra.mxu0 0.0
    %1815 = vmatprep.subr.mxu0 0.0
    %1816 = vmatpush2.msra.mxu0 0.0
    %1817 = vmatprep.subr.mxu0 0.0
    %1818 = vmatpush2.msra.mxu0 0.0
    %1819 = vmatprep.subr.mxu0 0.0
    %1820 = vmatpush2.msra.mxu0 0.0
    %1821 = vmatprep.subr.mxu0 0.0
    %1822 = vmatpush2.msra.mxu0 0.0
    %1823 = vmatprep.subr.mxu0 0.0
    %1824 = vmatpush2.msra.mxu0 0.0
    %1825 = vmatprep.mubr.f32.mxu0 0.0
    %1826 = vmatmul.mubr.f32.gmra.mxu0 %v1689
    %v1827 = vpop.f32.mrf.mxu0
    %v1828 = vadd.f32 0.0, %v1827
    %v1829 = vpop.f32.mrf.mxu0
    %1830 = vdwg.mxu0
    %1831 = vmatprep.subr.mxu0 0.0
    %1832 = vmatpush1.msra.mxu0 0.0
    %1833 = vmatprep.subr.mxu0 0.0
    %1834 = vmatpush1.msra.mxu0 0.0
    %1835 = vmatprep.subr.mxu0 0.0
    %1836 = vmatpush1.msra.mxu0 0.0
    %1837 = vmatprep.subr.mxu0 0.0
    %1838 = vmatpush1.msra.mxu0 0.0
    %1839 = vmatprep.subr.mxu0 0.0
    %1840 = vmatpush1.msra.mxu0 0.0
    %1841 = vmatprep.subr.mxu0 0.0
    %1842 = vmatpush1.msra.mxu0 0.0
    %1843 = vmatprep.subr.mxu0 0.0
    %1844 = vmatpush1.msra.mxu0 0.0
    %1845 = vmatprep.subr.mxu0 0.0
    %1846 = vmatpush1.msra.mxu0 0.0
    %1847 = vmatprep.subr.mxu0 0.0
    %1848 = vmatpush1.msra.mxu0 0.0
    %1849 = vmatprep.subr.mxu0 0.0
    %1850 = vmatpush1.msra.mxu0 0.0
    %1851 = vmatprep.subr.mxu0 0.0
    %1852 = vmatpush1.msra.mxu0 0.0
    %1853 = vmatprep.subr.mxu0 0.0
    %1854 = vmatpush1.msra.mxu0 0.0
    %1855 = vmatprep.subr.mxu0 0.0
    %1856 = vmatpush1.msra.mxu0 %v644
    %1857 = vmatprep.subr.mxu0 0.0
    %1858 = vmatpush1.msra.mxu0 %v482
    %1859 = vmatprep.subr.mxu0 0.0
    %1860 = vmatpush1.msra.mxu0 %v481
    %1861 = vmatprep.subr.mxu0 0.0
    %1862 = vmatpush1.msra.mxu0 %v480
    %1863 = vmatprep.subr.mxu0 0.0
    %1864 = vmatpush2.msra.mxu0 0.0
    %1865 = vmatprep.subr.mxu0 0.0
    %1866 = vmatpush2.msra.mxu0 0.0
    %1867 = vmatprep.subr.mxu0 0.0
    %1868 = vmatpush2.msra.mxu0 0.0
    %1869 = vmatprep.subr.mxu0 0.0
    %1870 = vmatpush2.msra.mxu0 0.0
    %1871 = vmatprep.subr.mxu0 0.0
    %1872 = vmatpush2.msra.mxu0 0.0
    %1873 = vmatprep.subr.mxu0 0.0
    %1874 = vmatpush2.msra.mxu0 0.0
    %1875 = vmatprep.subr.mxu0 0.0
    %1876 = vmatpush2.msra.mxu0 0.0
    %1877 = vmatprep.subr.mxu0 0.0
    %1878 = vmatpush2.msra.mxu0 0.0
    %1879 = vmatprep.subr.mxu0 0.0
    %1880 = vmatpush2.msra.mxu0 0.0
    %1881 = vmatprep.subr.mxu0 0.0
    %1882 = vmatpush2.msra.mxu0 0.0
    %1883 = vmatprep.subr.mxu0 0.0
    %1884 = vmatpush2.msra.mxu0 0.0
    %1885 = vmatprep.subr.mxu0 0.0
    %1886 = vmatpush2.msra.mxu0 0.0
    %1887 = vmatprep.subr.mxu0 0.0
    %1888 = vmatpush2.msra.mxu0 0.0
    %1889 = vmatprep.subr.mxu0 0.0
    %1890 = vmatpush2.msra.mxu0 0.0
    %1891 = vmatprep.subr.mxu0 0.0
    %1892 = vmatpush2.msra.mxu0 0.0
    %1893 = vmatprep.subr.mxu0 0.0
    %1894 = vmatpush2.msra.mxu0 0.0
    %1895 = vmatprep.mubr.f32.mxu0 0.0
    %1896 = vmatmul.mubr.f32.gmra.mxu0 %v1689
    %v1897 = vpop.f32.mrf.mxu0
    %v1898 = vadd.f32 %v489, %v1897
    %v1899 = vpop.f32.mrf.mxu0
    %1900 = vdwg.mxu0
    %v1901 = vadd.f32 %v1685, %v1758
    %v1902 = vxor.u32 %v1901, 2147483648
    %v1903 = vmul.f32 %v1902, 1.442695
    %v1904 = vpow.pop %v1903
    %v1905 = vadd.f32 %v1904, 1.0
    %v1906 = vrcp.pop %v1905
    %v1907 = vmul.f32 1.0, %v1906
    %v1908 = vadd.f32 %v1686, %v1828
    %v1909 = vxor.u32 %v1908, 2147483648
    %v1910 = vmul.f32 %v1909, 1.442695
    %v1911 = vpow.pop %v1910
    %v1912 = vadd.f32 %v1911, 1.0
    %v1913 = vrcp.pop %v1912
    %v1914 = vmul.f32 1.0, %v1913
    %v1915 = vmul.f32 %v1907, %v1898
    %v1916 = vadd.f32 %v1687, %v1915
    %v1917 = vtanh.pop %v1916
    %v1918 = vsub.f32 1.0, %v1914
    %v1919 = vmul.f32 %v1918, %v1917
    %v1920 = vmul.f32 %v1914, %v1684
    %v1921 = vadd.f32 %v1919, %v1920
    %v1922 = vld [vmem:[#allocation2 + $0xc] sm:$0x3]
    %v1923 = vld [vmem:[%s324 + $0xc] sm:$0x3]
    %v1924 = vld [vmem:[%s460 + $0xc] sm:$0x3]
    %v1926 = vsel %vm47, %v1921, 0
    %1928 = vmatprep.subr.mxu0 0.0
    %1929 = vmatpush1.msra.mxu0 0.0
    %1930 = vmatprep.subr.mxu0 0.0
    %1931 = vmatpush1.msra.mxu0 0.0
    %1932 = vmatprep.subr.mxu0 0.0
    %1933 = vmatpush1.msra.mxu0 0.0
    %1934 = vmatprep.subr.mxu0 0.0
    %1935 = vmatpush1.msra.mxu0 0.0
    %1936 = vmatprep.subr.mxu0 0.0
    %1937 = vmatpush1.msra.mxu0 0.0
    %1938 = vmatprep.subr.mxu0 0.0
    %1939 = vmatpush1.msra.mxu0 0.0
    %1940 = vmatprep.subr.mxu0 0.0
    %1941 = vmatpush1.msra.mxu0 0.0
    %1942 = vmatprep.subr.mxu0 0.0
    %1943 = vmatpush1.msra.mxu0 0.0
    %1944 = vmatprep.subr.mxu0 0.0
    %1945 = vmatpush1.msra.mxu0 0.0
    %1946 = vmatprep.subr.mxu0 0.0
    %1947 = vmatpush1.msra.mxu0 0.0
    %1948 = vmatprep.subr.mxu0 0.0
    %1949 = vmatpush1.msra.mxu0 0.0
    %1950 = vmatprep.subr.mxu0 0.0
    %1951 = vmatpush1.msra.mxu0 0.0
    %1952 = vmatprep.subr.mxu0 0.0
    %1953 = vmatpush1.msra.mxu0 %v498
    %1954 = vmatprep.subr.mxu0 0.0
    %1955 = vmatpush1.msra.mxu0 %v472
    %1956 = vmatprep.subr.mxu0 0.0
    %1957 = vmatpush1.msra.mxu0 %v471
    %1958 = vmatprep.subr.mxu0 0.0
    %1959 = vmatpush1.msra.mxu0 %v470
    %1960 = vmatprep.subr.mxu0 0.0
    %1961 = vmatpush2.msra.mxu0 0.0
    %1962 = vmatprep.subr.mxu0 0.0
    %1963 = vmatpush2.msra.mxu0 0.0
    %1964 = vmatprep.subr.mxu0 0.0
    %1965 = vmatpush2.msra.mxu0 0.0
    %1966 = vmatprep.subr.mxu0 0.0
    %1967 = vmatpush2.msra.mxu0 0.0
    %1968 = vmatprep.subr.mxu0 0.0
    %1969 = vmatpush2.msra.mxu0 0.0
    %1970 = vmatprep.subr.mxu0 0.0
    %1971 = vmatpush2.msra.mxu0 0.0
    %1972 = vmatprep.subr.mxu0 0.0
    %1973 = vmatpush2.msra.mxu0 0.0
    %1974 = vmatprep.subr.mxu0 0.0
    %1975 = vmatpush2.msra.mxu0 0.0
    %1976 = vmatprep.subr.mxu0 0.0
    %1977 = vmatpush2.msra.mxu0 0.0
    %1978 = vmatprep.subr.mxu0 0.0
    %1979 = vmatpush2.msra.mxu0 0.0
    %1980 = vmatprep.subr.mxu0 0.0
    %1981 = vmatpush2.msra.mxu0 0.0
    %1982 = vmatprep.subr.mxu0 0.0
    %1983 = vmatpush2.msra.mxu0 0.0
    %1984 = vmatprep.subr.mxu0 0.0
    %1985 = vmatpush2.msra.mxu0 0.0
    %1986 = vmatprep.subr.mxu0 0.0
    %1987 = vmatpush2.msra.mxu0 0.0
    %1988 = vmatprep.subr.mxu0 0.0
    %1989 = vmatpush2.msra.mxu0 0.0
    %1990 = vmatprep.subr.mxu0 0.0
    %1991 = vmatpush2.msra.mxu0 0.0
    %1992 = vmatprep.mubr.f32.mxu0 0.0
    %1993 = vmatmul.mubr.f32.gmra.mxu0 %v1926
    %v1994 = vpop.f32.mrf.mxu0
    %v1995 = vadd.f32 0.0, %v1994
    %v1996 = vpop.f32.mrf.mxu0
    %1997 = vdwg.mxu0
    %1998 = vmatprep.subr.mxu0 0.0
    %1999 = vmatpush1.msra.mxu0 0.0
    %2000 = vmatprep.subr.mxu0 0.0
    %2001 = vmatpush1.msra.mxu0 0.0
    %2002 = vmatprep.subr.mxu0 0.0
    %2003 = vmatpush1.msra.mxu0 0.0
    %2004 = vmatprep.subr.mxu0 0.0
    %2005 = vmatpush1.msra.mxu0 0.0
    %2006 = vmatprep.subr.mxu0 0.0
    %2007 = vmatpush1.msra.mxu0 0.0
    %2008 = vmatprep.subr.mxu0 0.0
    %2009 = vmatpush1.msra.mxu0 0.0
    %2010 = vmatprep.subr.mxu0 0.0
    %2011 = vmatpush1.msra.mxu0 0.0
    %2012 = vmatprep.subr.mxu0 0.0
    %2013 = vmatpush1.msra.mxu0 0.0
    %2014 = vmatprep.subr.mxu0 0.0
    %2015 = vmatpush1.msra.mxu0 0.0
    %2016 = vmatprep.subr.mxu0 0.0
    %2017 = vmatpush1.msra.mxu0 0.0
    %2018 = vmatprep.subr.mxu0 0.0
    %2019 = vmatpush1.msra.mxu0 0.0
    %2020 = vmatprep.subr.mxu0 0.0
    %2021 = vmatpush1.msra.mxu0 0.0
    %2022 = vmatprep.subr.mxu0 0.0
    %2023 = vmatpush1.msra.mxu0 %v571
    %2024 = vmatprep.subr.mxu0 0.0
    %2025 = vmatpush1.msra.mxu0 %v477
    %2026 = vmatprep.subr.mxu0 0.0
    %2027 = vmatpush1.msra.mxu0 %v476
    %2028 = vmatprep.subr.mxu0 0.0
    %2029 = vmatpush1.msra.mxu0 %v475
    %2030 = vmatprep.subr.mxu0 0.0
    %2031 = vmatpush2.msra.mxu0 0.0
    %2032 = vmatprep.subr.mxu0 0.0
    %2033 = vmatpush2.msra.mxu0 0.0
    %2034 = vmatprep.subr.mxu0 0.0
    %2035 = vmatpush2.msra.mxu0 0.0
    %2036 = vmatprep.subr.mxu0 0.0
    %2037 = vmatpush2.msra.mxu0 0.0
    %2038 = vmatprep.subr.mxu0 0.0
    %2039 = vmatpush2.msra.mxu0 0.0
    %2040 = vmatprep.subr.mxu0 0.0
    %2041 = vmatpush2.msra.mxu0 0.0
    %2042 = vmatprep.subr.mxu0 0.0
    %2043 = vmatpush2.msra.mxu0 0.0
    %2044 = vmatprep.subr.mxu0 0.0
    %2045 = vmatpush2.msra.mxu0 0.0
    %2046 = vmatprep.subr.mxu0 0.0
    %2047 = vmatpush2.msra.mxu0 0.0
    %2048 = vmatprep.subr.mxu0 0.0
    %2049 = vmatpush2.msra.mxu0 0.0
    %2050 = vmatprep.subr.mxu0 0.0
    %2051 = vmatpush2.msra.mxu0 0.0
    %2052 = vmatprep.subr.mxu0 0.0
    %2053 = vmatpush2.msra.mxu0 0.0
    %2054 = vmatprep.subr.mxu0 0.0
    %2055 = vmatpush2.msra.mxu0 0.0
    %2056 = vmatprep.subr.mxu0 0.0
    %2057 = vmatpush2.msra.mxu0 0.0
    %2058 = vmatprep.subr.mxu0 0.0
    %2059 = vmatpush2.msra.mxu0 0.0
    %2060 = vmatprep.subr.mxu0 0.0
    %2061 = vmatpush2.msra.mxu0 0.0
    %2062 = vmatprep.mubr.f32.mxu0 0.0
    %2063 = vmatmul.mubr.f32.gmra.mxu0 %v1926
    %v2064 = vpop.f32.mrf.mxu0
    %v2065 = vadd.f32 0.0, %v2064
    %v2066 = vpop.f32.mrf.mxu0
    %2067 = vdwg.mxu0
    %2068 = vmatprep.subr.mxu0 0.0
    %2069 = vmatpush1.msra.mxu0 0.0
    %2070 = vmatprep.subr.mxu0 0.0
    %2071 = vmatpush1.msra.mxu0 0.0
    %2072 = vmatprep.subr.mxu0 0.0
    %2073 = vmatpush1.msra.mxu0 0.0
    %2074 = vmatprep.subr.mxu0 0.0
    %2075 = vmatpush1.msra.mxu0 0.0
    %2076 = vmatprep.subr.mxu0 0.0
    %2077 = vmatpush1.msra.mxu0 0.0
    %2078 = vmatprep.subr.mxu0 0.0
    %2079 = vmatpush1.msra.mxu0 0.0
    %2080 = vmatprep.subr.mxu0 0.0
    %2081 = vmatpush1.msra.mxu0 0.0
    %2082 = vmatprep.subr.mxu0 0.0
    %2083 = vmatpush1.msra.mxu0 0.0
    %2084 = vmatprep.subr.mxu0 0.0
    %2085 = vmatpush1.msra.mxu0 0.0
    %2086 = vmatprep.subr.mxu0 0.0
    %2087 = vmatpush1.msra.mxu0 0.0
    %2088 = vmatprep.subr.mxu0 0.0
    %2089 = vmatpush1.msra.mxu0 0.0
    %2090 = vmatprep.subr.mxu0 0.0
    %2091 = vmatpush1.msra.mxu0 0.0
    %2092 = vmatprep.subr.mxu0 0.0
    %2093 = vmatpush1.msra.mxu0 %v644
    %2094 = vmatprep.subr.mxu0 0.0
    %2095 = vmatpush1.msra.mxu0 %v482
    %2096 = vmatprep.subr.mxu0 0.0
    %2097 = vmatpush1.msra.mxu0 %v481
    %2098 = vmatprep.subr.mxu0 0.0
    %2099 = vmatpush1.msra.mxu0 %v480
    %2100 = vmatprep.subr.mxu0 0.0
    %2101 = vmatpush2.msra.mxu0 0.0
    %2102 = vmatprep.subr.mxu0 0.0
    %2103 = vmatpush2.msra.mxu0 0.0
    %2104 = vmatprep.subr.mxu0 0.0
    %2105 = vmatpush2.msra.mxu0 0.0
    %2106 = vmatprep.subr.mxu0 0.0
    %2107 = vmatpush2.msra.mxu0 0.0
    %2108 = vmatprep.subr.mxu0 0.0
    %2109 = vmatpush2.msra.mxu0 0.0
    %2110 = vmatprep.subr.mxu0 0.0
    %2111 = vmatpush2.msra.mxu0 0.0
    %2112 = vmatprep.subr.mxu0 0.0
    %2113 = vmatpush2.msra.mxu0 0.0
    %2114 = vmatprep.subr.mxu0 0.0
    %2115 = vmatpush2.msra.mxu0 0.0
    %2116 = vmatprep.subr.mxu0 0.0
    %2117 = vmatpush2.msra.mxu0 0.0
    %2118 = vmatprep.subr.mxu0 0.0
    %2119 = vmatpush2.msra.mxu0 0.0
    %2120 = vmatprep.subr.mxu0 0.0
    %2121 = vmatpush2.msra.mxu0 0.0
    %2122 = vmatprep.subr.mxu0 0.0
    %2123 = vmatpush2.msra.mxu0 0.0
    %2124 = vmatprep.subr.mxu0 0.0
    %2125 = vmatpush2.msra.mxu0 0.0
    %2126 = vmatprep.subr.mxu0 0.0
    %2127 = vmatpush2.msra.mxu0 0.0
    %2128 = vmatprep.subr.mxu0 0.0
    %2129 = vmatpush2.msra.mxu0 0.0
    %2130 = vmatprep.subr.mxu0 0.0
    %2131 = vmatpush2.msra.mxu0 0.0
    %2132 = vmatprep.mubr.f32.mxu0 0.0
    %2133 = vmatmul.mubr.f32.gmra.mxu0 %v1926
    %v2134 = vpop.f32.mrf.mxu0
    %v2135 = vadd.f32 %v489, %v2134
    %v2136 = vpop.f32.mrf.mxu0
    %2137 = vdwg.mxu0
    %v2138 = vadd.f32 %v1922, %v1995
    %v2139 = vxor.u32 %v2138, 2147483648
    %v2140 = vmul.f32 %v2139, 1.442695
    %v2141 = vpow.pop %v2140
    %v2142 = vadd.f32 %v2141, 1.0
    %v2143 = vrcp.pop %v2142
    %v2144 = vmul.f32 1.0, %v2143
    %v2145 = vadd.f32 %v1923, %v2065
    %v2146 = vxor.u32 %v2145, 2147483648
    %v2147 = vmul.f32 %v2146, 1.442695
    %v2148 = vpow.pop %v2147
    %v2149 = vadd.f32 %v2148, 1.0
    %v2150 = vrcp.pop %v2149
    %v2151 = vmul.f32 1.0, %v2150
    %v2152 = vmul.f32 %v2144, %v2135
    %v2153 = vadd.f32 %v1924, %v2152
    %v2154 = vtanh.pop %v2153
    %v2155 = vsub.f32 1.0, %v2151
    %v2156 = vmul.f32 %v2155, %v2154
    %v2157 = vmul.f32 %v2151, %v1921
    %v2158 = vadd.f32 %v2156, %v2157
    %v2159 = vld [vmem:[#allocation2 + $0xe] sm:$0x3]
    %v2160 = vld [vmem:[%s324 + $0xe] sm:$0x3]
    %v2161 = vld [vmem:[%s460 + $0xe] sm:$0x3]
    %v2163 = vsel %vm47, %v2158, 0
    %2165 = vmatprep.subr.mxu0 0.0
    %2166 = vmatpush1.msra.mxu0 0.0
    %2167 = vmatprep.subr.mxu0 0.0
    %2168 = vmatpush1.msra.mxu0 0.0
    %2169 = vmatprep.subr.mxu0 0.0
    %2170 = vmatpush1.msra.mxu0 0.0
    %2171 = vmatprep.subr.mxu0 0.0
    %2172 = vmatpush1.msra.mxu0 0.0
    %2173 = vmatprep.subr.mxu0 0.0
    %2174 = vmatpush1.msra.mxu0 0.0
    %2175 = vmatprep.subr.mxu0 0.0
    %2176 = vmatpush1.msra.mxu0 0.0
    %2177 = vmatprep.subr.mxu0 0.0
    %2178 = vmatpush1.msra.mxu0 0.0
    %2179 = vmatprep.subr.mxu0 0.0
    %2180 = vmatpush1.msra.mxu0 0.0
    %2181 = vmatprep.subr.mxu0 0.0
    %2182 = vmatpush1.msra.mxu0 0.0
    %2183 = vmatprep.subr.mxu0 0.0
    %2184 = vmatpush1.msra.mxu0 0.0
    %2185 = vmatprep.subr.mxu0 0.0
    %2186 = vmatpush1.msra.mxu0 0.0
    %2187 = vmatprep.subr.mxu0 0.0
    %2188 = vmatpush1.msra.mxu0 0.0
    %2189 = vmatprep.subr.mxu0 0.0
    %2190 = vmatpush1.msra.mxu0 %v498
    %2191 = vmatprep.subr.mxu0 0.0
    %2192 = vmatpush1.msra.mxu0 %v472
    %2193 = vmatprep.subr.mxu0 0.0
    %2194 = vmatpush1.msra.mxu0 %v471
    %2195 = vmatprep.subr.mxu0 0.0
    %2196 = vmatpush1.msra.mxu0 %v470
    %2197 = vmatprep.subr.mxu0 0.0
    %2198 = vmatpush2.msra.mxu0 0.0
    %2199 = vmatprep.subr.mxu0 0.0
    %2200 = vmatpush2.msra.mxu0 0.0
    %2201 = vmatprep.subr.mxu0 0.0
    %2202 = vmatpush2.msra.mxu0 0.0
    %2203 = vmatprep.subr.mxu0 0.0
    %2204 = vmatpush2.msra.mxu0 0.0
    %2205 = vmatprep.subr.mxu0 0.0
    %2206 = vmatpush2.msra.mxu0 0.0
    %2207 = vmatprep.subr.mxu0 0.0
    %2208 = vmatpush2.msra.mxu0 0.0
    %2209 = vmatprep.subr.mxu0 0.0
    %2210 = vmatpush2.msra.mxu0 0.0
    %2211 = vmatprep.subr.mxu0 0.0
    %2212 = vmatpush2.msra.mxu0 0.0
    %2213 = vmatprep.subr.mxu0 0.0
    %2214 = vmatpush2.msra.mxu0 0.0
    %2215 = vmatprep.subr.mxu0 0.0
    %2216 = vmatpush2.msra.mxu0 0.0
    %2217 = vmatprep.subr.mxu0 0.0
    %2218 = vmatpush2.msra.mxu0 0.0
    %2219 = vmatprep.subr.mxu0 0.0
    %2220 = vmatpush2.msra.mxu0 0.0
    %2221 = vmatprep.subr.mxu0 0.0
    %2222 = vmatpush2.msra.mxu0 0.0
    %2223 = vmatprep.subr.mxu0 0.0
    %2224 = vmatpush2.msra.mxu0 0.0
    %2225 = vmatprep.subr.mxu0 0.0
    %2226 = vmatpush2.msra.mxu0 0.0
    %2227 = vmatprep.subr.mxu0 0.0
    %2228 = vmatpush2.msra.mxu0 0.0
    %2229 = vmatprep.mubr.f32.mxu0 0.0
    %2230 = vmatmul.mubr.f32.gmra.mxu0 %v2163
    %v2231 = vpop.f32.mrf.mxu0
    %v2232 = vadd.f32 0.0, %v2231
    %v2233 = vpop.f32.mrf.mxu0
    %2234 = vdwg.mxu0
    %2235 = vmatprep.subr.mxu0 0.0
    %2236 = vmatpush1.msra.mxu0 0.0
    %2237 = vmatprep.subr.mxu0 0.0
    %2238 = vmatpush1.msra.mxu0 0.0
    %2239 = vmatprep.subr.mxu0 0.0
    %2240 = vmatpush1.msra.mxu0 0.0
    %2241 = vmatprep.subr.mxu0 0.0
    %2242 = vmatpush1.msra.mxu0 0.0
    %2243 = vmatprep.subr.mxu0 0.0
    %2244 = vmatpush1.msra.mxu0 0.0
    %2245 = vmatprep.subr.mxu0 0.0
    %2246 = vmatpush1.msra.mxu0 0.0
    %2247 = vmatprep.subr.mxu0 0.0
    %2248 = vmatpush1.msra.mxu0 0.0
    %2249 = vmatprep.subr.mxu0 0.0
    %2250 = vmatpush1.msra.mxu0 0.0
    %2251 = vmatprep.subr.mxu0 0.0
    %2252 = vmatpush1.msra.mxu0 0.0
    %2253 = vmatprep.subr.mxu0 0.0
    %2254 = vmatpush1.msra.mxu0 0.0
    %2255 = vmatprep.subr.mxu0 0.0
    %2256 = vmatpush1.msra.mxu0 0.0
    %2257 = vmatprep.subr.mxu0 0.0
    %2258 = vmatpush1.msra.mxu0 0.0
    %2259 = vmatprep.subr.mxu0 0.0
    %2260 = vmatpush1.msra.mxu0 %v571
    %2261 = vmatprep.subr.mxu0 0.0
    %2262 = vmatpush1.msra.mxu0 %v477
    %2263 = vmatprep.subr.mxu0 0.0
    %2264 = vmatpush1.msra.mxu0 %v476
    %2265 = vmatprep.subr.mxu0 0.0
    %2266 = vmatpush1.msra.mxu0 %v475
    %2267 = vmatprep.subr.mxu0 0.0
    %2268 = vmatpush2.msra.mxu0 0.0
    %2269 = vmatprep.subr.mxu0 0.0
    %2270 = vmatpush2.msra.mxu0 0.0
    %2271 = vmatprep.subr.mxu0 0.0
    %2272 = vmatpush2.msra.mxu0 0.0
    %2273 = vmatprep.subr.mxu0 0.0
    %2274 = vmatpush2.msra.mxu0 0.0
    %2275 = vmatprep.subr.mxu0 0.0
    %2276 = vmatpush2.msra.mxu0 0.0
    %2277 = vmatprep.subr.mxu0 0.0
    %2278 = vmatpush2.msra.mxu0 0.0
    %2279 = vmatprep.subr.mxu0 0.0
    %2280 = vmatpush2.msra.mxu0 0.0
    %2281 = vmatprep.subr.mxu0 0.0
    %2282 = vmatpush2.msra.mxu0 0.0
    %2283 = vmatprep.subr.mxu0 0.0
    %2284 = vmatpush2.msra.mxu0 0.0
    %2285 = vmatprep.subr.mxu0 0.0
    %2286 = vmatpush2.msra.mxu0 0.0
    %2287 = vmatprep.subr.mxu0 0.0
    %2288 = vmatpush2.msra.mxu0 0.0
    %2289 = vmatprep.subr.mxu0 0.0
    %2290 = vmatpush2.msra.mxu0 0.0
    %2291 = vmatprep.subr.mxu0 0.0
    %2292 = vmatpush2.msra.mxu0 0.0
    %2293 = vmatprep.subr.mxu0 0.0
    %2294 = vmatpush2.msra.mxu0 0.0
    %2295 = vmatprep.subr.mxu0 0.0
    %2296 = vmatpush2.msra.mxu0 0.0
    %2297 = vmatprep.subr.mxu0 0.0
    %2298 = vmatpush2.msra.mxu0 0.0
    %2299 = vmatprep.mubr.f32.mxu0 0.0
    %2300 = vmatmul.mubr.f32.gmra.mxu0 %v2163
    %v2301 = vpop.f32.mrf.mxu0
    %v2302 = vadd.f32 0.0, %v2301
    %v2303 = vpop.f32.mrf.mxu0
    %2304 = vdwg.mxu0
    %2305 = vmatprep.subr.mxu0 0.0
    %2306 = vmatpush1.msra.mxu0 0.0
    %2307 = vmatprep.subr.mxu0 0.0
    %2308 = vmatpush1.msra.mxu0 0.0
    %2309 = vmatprep.subr.mxu0 0.0
    %2310 = vmatpush1.msra.mxu0 0.0
    %2311 = vmatprep.subr.mxu0 0.0
    %2312 = vmatpush1.msra.mxu0 0.0
    %2313 = vmatprep.subr.mxu0 0.0
    %2314 = vmatpush1.msra.mxu0 0.0
    %2315 = vmatprep.subr.mxu0 0.0
    %2316 = vmatpush1.msra.mxu0 0.0
    %2317 = vmatprep.subr.mxu0 0.0
    %2318 = vmatpush1.msra.mxu0 0.0
    %2319 = vmatprep.subr.mxu0 0.0
    %2320 = vmatpush1.msra.mxu0 0.0
    %2321 = vmatprep.subr.mxu0 0.0
    %2322 = vmatpush1.msra.mxu0 0.0
    %2323 = vmatprep.subr.mxu0 0.0
    %2324 = vmatpush1.msra.mxu0 0.0
    %2325 = vmatprep.subr.mxu0 0.0
    %2326 = vmatpush1.msra.mxu0 0.0
    %2327 = vmatprep.subr.mxu0 0.0
    %2328 = vmatpush1.msra.mxu0 0.0
    %2329 = vmatprep.subr.mxu0 0.0
    %2330 = vmatpush1.msra.mxu0 %v644
    %2331 = vmatprep.subr.mxu0 0.0
    %2332 = vmatpush1.msra.mxu0 %v482
    %2333 = vmatprep.subr.mxu0 0.0
    %2334 = vmatpush1.msra.mxu0 %v481
    %2335 = vmatprep.subr.mxu0 0.0
    %2336 = vmatpush1.msra.mxu0 %v480
    %2337 = vmatprep.subr.mxu0 0.0
    %2338 = vmatpush2.msra.mxu0 0.0
    %2339 = vmatprep.subr.mxu0 0.0
    %2340 = vmatpush2.msra.mxu0 0.0
    %2341 = vmatprep.subr.mxu0 0.0
    %2342 = vmatpush2.msra.mxu0 0.0
    %2343 = vmatprep.subr.mxu0 0.0
    %2344 = vmatpush2.msra.mxu0 0.0
    %2345 = vmatprep.subr.mxu0 0.0
    %2346 = vmatpush2.msra.mxu0 0.0
    %2347 = vmatprep.subr.mxu0 0.0
    %2348 = vmatpush2.msra.mxu0 0.0
    %2349 = vmatprep.subr.mxu0 0.0
    %2350 = vmatpush2.msra.mxu0 0.0
    %2351 = vmatprep.subr.mxu0 0.0
    %2352 = vmatpush2.msra.mxu0 0.0
    %2353 = vmatprep.subr.mxu0 0.0
    %2354 = vmatpush2.msra.mxu0 0.0
    %2355 = vmatprep.subr.mxu0 0.0
    %2356 = vmatpush2.msra.mxu0 0.0
    %2357 = vmatprep.subr.mxu0 0.0
    %2358 = vmatpush2.msra.mxu0 0.0
    %2359 = vmatprep.subr.mxu0 0.0
    %2360 = vmatpush2.msra.mxu0 0.0
    %2361 = vmatprep.subr.mxu0 0.0
    %2362 = vmatpush2.msra.mxu0 0.0
    %2363 = vmatprep.subr.mxu0 0.0
    %2364 = vmatpush2.msra.mxu0 0.0
    %2365 = vmatprep.subr.mxu0 0.0
    %2366 = vmatpush2.msra.mxu0 0.0
    %2367 = vmatprep.subr.mxu0 0.0
    %2368 = vmatpush2.msra.mxu0 0.0
    %2369 = vmatprep.mubr.f32.mxu0 0.0
    %2370 = vmatmul.mubr.f32.gmra.mxu0 %v2163
    %v2371 = vpop.f32.mrf.mxu0
    %v2372 = vadd.f32 %v489, %v2371
    %v2373 = vpop.f32.mrf.mxu0
    %2374 = vdwg.mxu0
    %v2375 = vadd.f32 %v2159, %v2232
    %v2376 = vxor.u32 %v2375, 2147483648
    %v2377 = vmul.f32 %v2376, 1.442695
    %v2378 = vpow.pop %v2377
    %v2379 = vadd.f32 %v2378, 1.0
    %v2380 = vrcp.pop %v2379
    %v2381 = vmul.f32 1.0, %v2380
    %v2382 = vadd.f32 %v2160, %v2302
    %v2383 = vxor.u32 %v2382, 2147483648
    %v2384 = vmul.f32 %v2383, 1.442695
    %v2385 = vpow.pop %v2384
    %v2386 = vadd.f32 %v2385, 1.0
    %v2387 = vrcp.pop %v2386
    %v2388 = vmul.f32 1.0, %v2387
    %v2389 = vmul.f32 %v2381, %v2372
    %v2390 = vadd.f32 %v2161, %v2389
    %v2391 = vtanh.pop %v2390
    %v2392 = vsub.f32 1.0, %v2388
    %v2393 = vmul.f32 %v2392, %v2391
    %v2394 = vmul.f32 %v2388, %v2158
    %v2395 = vadd.f32 %v2393, %v2394
    %v2396 = vld [vmem:[#allocation2 + $0x10] sm:$0x3]
    %v2397 = vld [vmem:[%s324 + $0x10] sm:$0x3]
    %v2398 = vld [vmem:[%s460 + $0x10] sm:$0x3]
    %v2400 = vsel %vm47, %v2395, 0
    %2402 = vmatprep.subr.mxu0 0.0
    %2403 = vmatpush1.msra.mxu0 0.0
    %2404 = vmatprep.subr.mxu0 0.0
    %2405 = vmatpush1.msra.mxu0 0.0
    %2406 = vmatprep.subr.mxu0 0.0
    %2407 = vmatpush1.msra.mxu0 0.0
    %2408 = vmatprep.subr.mxu0 0.0
    %2409 = vmatpush1.msra.mxu0 0.0
    %2410 = vmatprep.subr.mxu0 0.0
    %2411 = vmatpush1.msra.mxu0 0.0
    %2412 = vmatprep.subr.mxu0 0.0
    %2413 = vmatpush1.msra.mxu0 0.0
    %2414 = vmatprep.subr.mxu0 0.0
    %2415 = vmatpush1.msra.mxu0 0.0
    %2416 = vmatprep.subr.mxu0 0.0
    %2417 = vmatpush1.msra.mxu0 0.0
    %2418 = vmatprep.subr.mxu0 0.0
    %2419 = vmatpush1.msra.mxu0 0.0
    %2420 = vmatprep.subr.mxu0 0.0
    %2421 = vmatpush1.msra.mxu0 0.0
    %2422 = vmatprep.subr.mxu0 0.0
    %2423 = vmatpush1.msra.mxu0 0.0
    %2424 = vmatprep.subr.mxu0 0.0
    %2425 = vmatpush1.msra.mxu0 0.0
    %2426 = vmatprep.subr.mxu0 0.0
    %2427 = vmatpush1.msra.mxu0 %v498
    %2428 = vmatprep.subr.mxu0 0.0
    %2429 = vmatpush1.msra.mxu0 %v472
    %2430 = vmatprep.subr.mxu0 0.0
    %2431 = vmatpush1.msra.mxu0 %v471
    %2432 = vmatprep.subr.mxu0 0.0
    %2433 = vmatpush1.msra.mxu0 %v470
    %2434 = vmatprep.subr.mxu0 0.0
    %2435 = vmatpush2.msra.mxu0 0.0
    %2436 = vmatprep.subr.mxu0 0.0
    %2437 = vmatpush2.msra.mxu0 0.0
    %2438 = vmatprep.subr.mxu0 0.0
    %2439 = vmatpush2.msra.mxu0 0.0
    %2440 = vmatprep.subr.mxu0 0.0
    %2441 = vmatpush2.msra.mxu0 0.0
    %2442 = vmatprep.subr.mxu0 0.0
    %2443 = vmatpush2.msra.mxu0 0.0
    %2444 = vmatprep.subr.mxu0 0.0
    %2445 = vmatpush2.msra.mxu0 0.0
    %2446 = vmatprep.subr.mxu0 0.0
    %2447 = vmatpush2.msra.mxu0 0.0
    %2448 = vmatprep.subr.mxu0 0.0
    %2449 = vmatpush2.msra.mxu0 0.0
    %2450 = vmatprep.subr.mxu0 0.0
    %2451 = vmatpush2.msra.mxu0 0.0
    %2452 = vmatprep.subr.mxu0 0.0
    %2453 = vmatpush2.msra.mxu0 0.0
    %2454 = vmatprep.subr.mxu0 0.0
    %2455 = vmatpush2.msra.mxu0 0.0
    %2456 = vmatprep.subr.mxu0 0.0
    %2457 = vmatpush2.msra.mxu0 0.0
    %2458 = vmatprep.subr.mxu0 0.0
    %2459 = vmatpush2.msra.mxu0 0.0
    %2460 = vmatprep.subr.mxu0 0.0
    %2461 = vmatpush2.msra.mxu0 0.0
    %2462 = vmatprep.subr.mxu0 0.0
    %2463 = vmatpush2.msra.mxu0 0.0
    %2464 = vmatprep.subr.mxu0 0.0
    %2465 = vmatpush2.msra.mxu0 0.0
    %2466 = vmatprep.mubr.f32.mxu0 0.0
    %2467 = vmatmul.mubr.f32.gmra.mxu0 %v2400
    %v2468 = vpop.f32.mrf.mxu0
    %v2469 = vadd.f32 0.0, %v2468
    %v2470 = vpop.f32.mrf.mxu0
    %2471 = vdwg.mxu0
    %2472 = vmatprep.subr.mxu0 0.0
    %2473 = vmatpush1.msra.mxu0 0.0
    %2474 = vmatprep.subr.mxu0 0.0
    %2475 = vmatpush1.msra.mxu0 0.0
    %2476 = vmatprep.subr.mxu0 0.0
    %2477 = vmatpush1.msra.mxu0 0.0
    %2478 = vmatprep.subr.mxu0 0.0
    %2479 = vmatpush1.msra.mxu0 0.0
    %2480 = vmatprep.subr.mxu0 0.0
    %2481 = vmatpush1.msra.mxu0 0.0
    %2482 = vmatprep.subr.mxu0 0.0
    %2483 = vmatpush1.msra.mxu0 0.0
    %2484 = vmatprep.subr.mxu0 0.0
    %2485 = vmatpush1.msra.mxu0 0.0
    %2486 = vmatprep.subr.mxu0 0.0
    %2487 = vmatpush1.msra.mxu0 0.0
    %2488 = vmatprep.subr.mxu0 0.0
    %2489 = vmatpush1.msra.mxu0 0.0
    %2490 = vmatprep.subr.mxu0 0.0
    %2491 = vmatpush1.msra.mxu0 0.0
    %2492 = vmatprep.subr.mxu0 0.0
    %2493 = vmatpush1.msra.mxu0 0.0
    %2494 = vmatprep.subr.mxu0 0.0
    %2495 = vmatpush1.msra.mxu0 0.0
    %2496 = vmatprep.subr.mxu0 0.0
    %2497 = vmatpush1.msra.mxu0 %v571
    %2498 = vmatprep.subr.mxu0 0.0
    %2499 = vmatpush1.msra.mxu0 %v477
    %2500 = vmatprep.subr.mxu0 0.0
    %2501 = vmatpush1.msra.mxu0 %v476
    %2502 = vmatprep.subr.mxu0 0.0
    %2503 = vmatpush1.msra.mxu0 %v475
    %2504 = vmatprep.subr.mxu0 0.0
    %2505 = vmatpush2.msra.mxu0 0.0
    %2506 = vmatprep.subr.mxu0 0.0
    %2507 = vmatpush2.msra.mxu0 0.0
    %2508 = vmatprep.subr.mxu0 0.0
    %2509 = vmatpush2.msra.mxu0 0.0
    %2510 = vmatprep.subr.mxu0 0.0
    %2511 = vmatpush2.msra.mxu0 0.0
    %2512 = vmatprep.subr.mxu0 0.0
    %2513 = vmatpush2.msra.mxu0 0.0
    %2514 = vmatprep.subr.mxu0 0.0
    %2515 = vmatpush2.msra.mxu0 0.0
    %2516 = vmatprep.subr.mxu0 0.0
    %2517 = vmatpush2.msra.mxu0 0.0
    %2518 = vmatprep.subr.mxu0 0.0
    %2519 = vmatpush2.msra.mxu0 0.0
    %2520 = vmatprep.subr.mxu0 0.0
    %2521 = vmatpush2.msra.mxu0 0.0
    %2522 = vmatprep.subr.mxu0 0.0
    %2523 = vmatpush2.msra.mxu0 0.0
    %2524 = vmatprep.subr.mxu0 0.0
    %2525 = vmatpush2.msra.mxu0 0.0
    %2526 = vmatprep.subr.mxu0 0.0
    %2527 = vmatpush2.msra.mxu0 0.0
    %2528 = vmatprep.subr.mxu0 0.0
    %2529 = vmatpush2.msra.mxu0 0.0
    %2530 = vmatprep.subr.mxu0 0.0
    %2531 = vmatpush2.msra.mxu0 0.0
    %2532 = vmatprep.subr.mxu0 0.0
    %2533 = vmatpush2.msra.mxu0 0.0
    %2534 = vmatprep.subr.mxu0 0.0
    %2535 = vmatpush2.msra.mxu0 0.0
    %2536 = vmatprep.mubr.f32.mxu0 0.0
    %2537 = vmatmul.mubr.f32.gmra.mxu0 %v2400
    %v2538 = vpop.f32.mrf.mxu0
    %v2539 = vadd.f32 0.0, %v2538
    %v2540 = vpop.f32.mrf.mxu0
    %2541 = vdwg.mxu0
    %2542 = vmatprep.subr.mxu0 0.0
    %2543 = vmatpush1.msra.mxu0 0.0
    %2544 = vmatprep.subr.mxu0 0.0
    %2545 = vmatpush1.msra.mxu0 0.0
    %2546 = vmatprep.subr.mxu0 0.0
    %2547 = vmatpush1.msra.mxu0 0.0
    %2548 = vmatprep.subr.mxu0 0.0
    %2549 = vmatpush1.msra.mxu0 0.0
    %2550 = vmatprep.subr.mxu0 0.0
    %2551 = vmatpush1.msra.mxu0 0.0
    %2552 = vmatprep.subr.mxu0 0.0
    %2553 = vmatpush1.msra.mxu0 0.0
    %2554 = vmatprep.subr.mxu0 0.0
    %2555 = vmatpush1.msra.mxu0 0.0
    %2556 = vmatprep.subr.mxu0 0.0
    %2557 = vmatpush1.msra.mxu0 0.0
    %2558 = vmatprep.subr.mxu0 0.0
    %2559 = vmatpush1.msra.mxu0 0.0
    %2560 = vmatprep.subr.mxu0 0.0
    %2561 = vmatpush1.msra.mxu0 0.0
    %2562 = vmatprep.subr.mxu0 0.0
    %2563 = vmatpush1.msra.mxu0 0.0
    %2564 = vmatprep.subr.mxu0 0.0
    %2565 = vmatpush1.msra.mxu0 0.0
    %2566 = vmatprep.subr.mxu0 0.0
    %2567 = vmatpush1.msra.mxu0 %v644
    %2568 = vmatprep.subr.mxu0 0.0
    %2569 = vmatpush1.msra.mxu0 %v482
    %2570 = vmatprep.subr.mxu0 0.0
    %2571 = vmatpush1.msra.mxu0 %v481
    %2572 = vmatprep.subr.mxu0 0.0
    %2573 = vmatpush1.msra.mxu0 %v480
    %2574 = vmatprep.subr.mxu0 0.0
    %2575 = vmatpush2.msra.mxu0 0.0
    %2576 = vmatprep.subr.mxu0 0.0
    %2577 = vmatpush2.msra.mxu0 0.0
    %2578 = vmatprep.subr.mxu0 0.0
    %2579 = vmatpush2.msra.mxu0 0.0
    %2580 = vmatprep.subr.mxu0 0.0
    %2581 = vmatpush2.msra.mxu0 0.0
    %2582 = vmatprep.subr.mxu0 0.0
    %2583 = vmatpush2.msra.mxu0 0.0
    %2584 = vmatprep.subr.mxu0 0.0
    %2585 = vmatpush2.msra.mxu0 0.0
    %2586 = vmatprep.subr.mxu0 0.0
    %2587 = vmatpush2.msra.mxu0 0.0
    %2588 = vmatprep.subr.mxu0 0.0
    %2589 = vmatpush2.msra.mxu0 0.0
    %2590 = vmatprep.subr.mxu0 0.0
    %2591 = vmatpush2.msra.mxu0 0.0
    %2592 = vmatprep.subr.mxu0 0.0
    %2593 = vmatpush2.msra.mxu0 0.0
    %2594 = vmatprep.subr.mxu0 0.0
    %2595 = vmatpush2.msra.mxu0 0.0
    %2596 = vmatprep.subr.mxu0 0.0
    %2597 = vmatpush2.msra.mxu0 0.0
    %2598 = vmatprep.subr.mxu0 0.0
    %2599 = vmatpush2.msra.mxu0 0.0
    %2600 = vmatprep.subr.mxu0 0.0
    %2601 = vmatpush2.msra.mxu0 0.0
    %2602 = vmatprep.subr.mxu0 0.0
    %2603 = vmatpush2.msra.mxu0 0.0
    %2604 = vmatprep.subr.mxu0 0.0
    %2605 = vmatpush2.msra.mxu0 0.0
    %2606 = vmatprep.mubr.f32.mxu0 0.0
    %2607 = vmatmul.mubr.f32.gmra.mxu0 %v2400
    %v2608 = vpop.f32.mrf.mxu0
    %v2609 = vadd.f32 %v489, %v2608
    %v2610 = vpop.f32.mrf.mxu0
    %2611 = vdwg.mxu0
    %v2612 = vadd.f32 %v2396, %v2469
    %v2613 = vxor.u32 %v2612, 2147483648
    %v2614 = vmul.f32 %v2613, 1.442695
    %v2615 = vpow.pop %v2614
    %v2616 = vadd.f32 %v2615, 1.0
    %v2617 = vrcp.pop %v2616
    %v2618 = vmul.f32 1.0, %v2617
    %v2619 = vadd.f32 %v2397, %v2539
    %v2620 = vxor.u32 %v2619, 2147483648
    %v2621 = vmul.f32 %v2620, 1.442695
    %v2622 = vpow.pop %v2621
    %v2623 = vadd.f32 %v2622, 1.0
    %v2624 = vrcp.pop %v2623
    %v2625 = vmul.f32 1.0, %v2624
    %v2626 = vmul.f32 %v2618, %v2609
    %v2627 = vadd.f32 %v2398, %v2626
    %v2628 = vtanh.pop %v2627
    %v2629 = vsub.f32 1.0, %v2625
    %v2630 = vmul.f32 %v2629, %v2628
    %v2631 = vmul.f32 %v2625, %v2395
    %v2632 = vadd.f32 %v2630, %v2631
    %v2633 = vld [vmem:[#allocation2 + $0x12] sm:$0x3]
    %v2634 = vld [vmem:[%s324 + $0x12] sm:$0x3]
    %v2635 = vld [vmem:[%s460 + $0x12] sm:$0x3]
    %v2637 = vsel %vm47, %v2632, 0
    %2639 = vmatprep.subr.mxu0 0.0
    %2640 = vmatpush1.msra.mxu0 0.0
    %2641 = vmatprep.subr.mxu0 0.0
    %2642 = vmatpush1.msra.mxu0 0.0
    %2643 = vmatprep.subr.mxu0 0.0
    %2644 = vmatpush1.msra.mxu0 0.0
    %2645 = vmatprep.subr.mxu0 0.0
    %2646 = vmatpush1.msra.mxu0 0.0
    %2647 = vmatprep.subr.mxu0 0.0
    %2648 = vmatpush1.msra.mxu0 0.0
    %2649 = vmatprep.subr.mxu0 0.0
    %2650 = vmatpush1.msra.mxu0 0.0
    %2651 = vmatprep.subr.mxu0 0.0
    %2652 = vmatpush1.msra.mxu0 0.0
    %2653 = vmatprep.subr.mxu0 0.0
    %2654 = vmatpush1.msra.mxu0 0.0
    %2655 = vmatprep.subr.mxu0 0.0
    %2656 = vmatpush1.msra.mxu0 0.0
    %2657 = vmatprep.subr.mxu0 0.0
    %2658 = vmatpush1.msra.mxu0 0.0
    %2659 = vmatprep.subr.mxu0 0.0
    %2660 = vmatpush1.msra.mxu0 0.0
    %2661 = vmatprep.subr.mxu0 0.0
    %2662 = vmatpush1.msra.mxu0 0.0
    %2663 = vmatprep.subr.mxu0 0.0
    %2664 = vmatpush1.msra.mxu0 %v498
    %2665 = vmatprep.subr.mxu0 0.0
    %2666 = vmatpush1.msra.mxu0 %v472
    %2667 = vmatprep.subr.mxu0 0.0
    %2668 = vmatpush1.msra.mxu0 %v471
    %2669 = vmatprep.subr.mxu0 0.0
    %2670 = vmatpush1.msra.mxu0 %v470
    %2671 = vmatprep.subr.mxu0 0.0
    %2672 = vmatpush2.msra.mxu0 0.0
    %2673 = vmatprep.subr.mxu0 0.0
    %2674 = vmatpush2.msra.mxu0 0.0
    %2675 = vmatprep.subr.mxu0 0.0
    %2676 = vmatpush2.msra.mxu0 0.0
    %2677 = vmatprep.subr.mxu0 0.0
    %2678 = vmatpush2.msra.mxu0 0.0
    %2679 = vmatprep.subr.mxu0 0.0
    %2680 = vmatpush2.msra.mxu0 0.0
    %2681 = vmatprep.subr.mxu0 0.0
    %2682 = vmatpush2.msra.mxu0 0.0
    %2683 = vmatprep.subr.mxu0 0.0
    %2684 = vmatpush2.msra.mxu0 0.0
    %2685 = vmatprep.subr.mxu0 0.0
    %2686 = vmatpush2.msra.mxu0 0.0
    %2687 = vmatprep.subr.mxu0 0.0
    %2688 = vmatpush2.msra.mxu0 0.0
    %2689 = vmatprep.subr.mxu0 0.0
    %2690 = vmatpush2.msra.mxu0 0.0
    %2691 = vmatprep.subr.mxu0 0.0
    %2692 = vmatpush2.msra.mxu0 0.0
    %2693 = vmatprep.subr.mxu0 0.0
    %2694 = vmatpush2.msra.mxu0 0.0
    %2695 = vmatprep.subr.mxu0 0.0
    %2696 = vmatpush2.msra.mxu0 0.0
    %2697 = vmatprep.subr.mxu0 0.0
    %2698 = vmatpush2.msra.mxu0 0.0
    %2699 = vmatprep.subr.mxu0 0.0
    %2700 = vmatpush2.msra.mxu0 0.0
    %2701 = vmatprep.subr.mxu0 0.0
    %2702 = vmatpush2.msra.mxu0 0.0
    %2703 = vmatprep.mubr.f32.mxu0 0.0
    %2704 = vmatmul.mubr.f32.gmra.mxu0 %v2637
    %v2705 = vpop.f32.mrf.mxu0
    %v2706 = vadd.f32 0.0, %v2705
    %v2707 = vpop.f32.mrf.mxu0
    %2708 = vdwg.mxu0
    %2709 = vmatprep.subr.mxu0 0.0
    %2710 = vmatpush1.msra.mxu0 0.0
    %2711 = vmatprep.subr.mxu0 0.0
    %2712 = vmatpush1.msra.mxu0 0.0
    %2713 = vmatprep.subr.mxu0 0.0
    %2714 = vmatpush1.msra.mxu0 0.0
    %2715 = vmatprep.subr.mxu0 0.0
    %2716 = vmatpush1.msra.mxu0 0.0
    %2717 = vmatprep.subr.mxu0 0.0
    %2718 = vmatpush1.msra.mxu0 0.0
    %2719 = vmatprep.subr.mxu0 0.0
    %2720 = vmatpush1.msra.mxu0 0.0
    %2721 = vmatprep.subr.mxu0 0.0
    %2722 = vmatpush1.msra.mxu0 0.0
    %2723 = vmatprep.subr.mxu0 0.0
    %2724 = vmatpush1.msra.mxu0 0.0
    %2725 = vmatprep.subr.mxu0 0.0
    %2726 = vmatpush1.msra.mxu0 0.0
    %2727 = vmatprep.subr.mxu0 0.0
    %2728 = vmatpush1.msra.mxu0 0.0
    %2729 = vmatprep.subr.mxu0 0.0
    %2730 = vmatpush1.msra.mxu0 0.0
    %2731 = vmatprep.subr.mxu0 0.0
    %2732 = vmatpush1.msra.mxu0 0.0
    %2733 = vmatprep.subr.mxu0 0.0
    %2734 = vmatpush1.msra.mxu0 %v571
    %2735 = vmatprep.subr.mxu0 0.0
    %2736 = vmatpush1.msra.mxu0 %v477
    %2737 = vmatprep.subr.mxu0 0.0
    %2738 = vmatpush1.msra.mxu0 %v476
    %2739 = vmatprep.subr.mxu0 0.0
    %2740 = vmatpush1.msra.mxu0 %v475
    %2741 = vmatprep.subr.mxu0 0.0
    %2742 = vmatpush2.msra.mxu0 0.0
    %2743 = vmatprep.subr.mxu0 0.0
    %2744 = vmatpush2.msra.mxu0 0.0
    %2745 = vmatprep.subr.mxu0 0.0
    %2746 = vmatpush2.msra.mxu0 0.0
    %2747 = vmatprep.subr.mxu0 0.0
    %2748 = vmatpush2.msra.mxu0 0.0
    %2749 = vmatprep.subr.mxu0 0.0
    %2750 = vmatpush2.msra.mxu0 0.0
    %2751 = vmatprep.subr.mxu0 0.0
    %2752 = vmatpush2.msra.mxu0 0.0
    %2753 = vmatprep.subr.mxu0 0.0
    %2754 = vmatpush2.msra.mxu0 0.0
    %2755 = vmatprep.subr.mxu0 0.0
    %2756 = vmatpush2.msra.mxu0 0.0
    %2757 = vmatprep.subr.mxu0 0.0
    %2758 = vmatpush2.msra.mxu0 0.0
    %2759 = vmatprep.subr.mxu0 0.0
    %2760 = vmatpush2.msra.mxu0 0.0
    %2761 = vmatprep.subr.mxu0 0.0
    %2762 = vmatpush2.msra.mxu0 0.0
    %2763 = vmatprep.subr.mxu0 0.0
    %2764 = vmatpush2.msra.mxu0 0.0
    %2765 = vmatprep.subr.mxu0 0.0
    %2766 = vmatpush2.msra.mxu0 0.0
    %2767 = vmatprep.subr.mxu0 0.0
    %2768 = vmatpush2.msra.mxu0 0.0
    %2769 = vmatprep.subr.mxu0 0.0
    %2770 = vmatpush2.msra.mxu0 0.0
    %2771 = vmatprep.subr.mxu0 0.0
    %2772 = vmatpush2.msra.mxu0 0.0
    %2773 = vmatprep.mubr.f32.mxu0 0.0
    %2774 = vmatmul.mubr.f32.gmra.mxu0 %v2637
    %v2775 = vpop.f32.mrf.mxu0
    %v2776 = vadd.f32 0.0, %v2775
    %v2777 = vpop.f32.mrf.mxu0
    %2778 = vdwg.mxu0
    %2779 = vmatprep.subr.mxu0 0.0
    %2780 = vmatpush1.msra.mxu0 0.0
    %2781 = vmatprep.subr.mxu0 0.0
    %2782 = vmatpush1.msra.mxu0 0.0
    %2783 = vmatprep.subr.mxu0 0.0
    %2784 = vmatpush1.msra.mxu0 0.0
    %2785 = vmatprep.subr.mxu0 0.0
    %2786 = vmatpush1.msra.mxu0 0.0
    %2787 = vmatprep.subr.mxu0 0.0
    %2788 = vmatpush1.msra.mxu0 0.0
    %2789 = vmatprep.subr.mxu0 0.0
    %2790 = vmatpush1.msra.mxu0 0.0
    %2791 = vmatprep.subr.mxu0 0.0
    %2792 = vmatpush1.msra.mxu0 0.0
    %2793 = vmatprep.subr.mxu0 0.0
    %2794 = vmatpush1.msra.mxu0 0.0
    %2795 = vmatprep.subr.mxu0 0.0
    %2796 = vmatpush1.msra.mxu0 0.0
    %2797 = vmatprep.subr.mxu0 0.0
    %2798 = vmatpush1.msra.mxu0 0.0
    %2799 = vmatprep.subr.mxu0 0.0
    %2800 = vmatpush1.msra.mxu0 0.0
    %2801 = vmatprep.subr.mxu0 0.0
    %2802 = vmatpush1.msra.mxu0 0.0
    %2803 = vmatprep.subr.mxu0 0.0
    %2804 = vmatpush1.msra.mxu0 %v644
    %2805 = vmatprep.subr.mxu0 0.0
    %2806 = vmatpush1.msra.mxu0 %v482
    %2807 = vmatprep.subr.mxu0 0.0
    %2808 = vmatpush1.msra.mxu0 %v481
    %2809 = vmatprep.subr.mxu0 0.0
    %2810 = vmatpush1.msra.mxu0 %v480
    %2811 = vmatprep.subr.mxu0 0.0
    %2812 = vmatpush2.msra.mxu0 0.0
    %2813 = vmatprep.subr.mxu0 0.0
    %2814 = vmatpush2.msra.mxu0 0.0
    %2815 = vmatprep.subr.mxu0 0.0
    %2816 = vmatpush2.msra.mxu0 0.0
    %2817 = vmatprep.subr.mxu0 0.0
    %2818 = vmatpush2.msra.mxu0 0.0
    %2819 = vmatprep.subr.mxu0 0.0
    %2820 = vmatpush2.msra.mxu0 0.0
    %2821 = vmatprep.subr.mxu0 0.0
    %2822 = vmatpush2.msra.mxu0 0.0
    %2823 = vmatprep.subr.mxu0 0.0
    %2824 = vmatpush2.msra.mxu0 0.0
    %2825 = vmatprep.subr.mxu0 0.0
    %2826 = vmatpush2.msra.mxu0 0.0
    %2827 = vmatprep.subr.mxu0 0.0
    %2828 = vmatpush2.msra.mxu0 0.0
    %2829 = vmatprep.subr.mxu0 0.0
    %2830 = vmatpush2.msra.mxu0 0.0
    %2831 = vmatprep.subr.mxu0 0.0
    %2832 = vmatpush2.msra.mxu0 0.0
    %2833 = vmatprep.subr.mxu0 0.0
    %2834 = vmatpush2.msra.mxu0 0.0
    %2835 = vmatprep.subr.mxu0 0.0
    %2836 = vmatpush2.msra.mxu0 0.0
    %2837 = vmatprep.subr.mxu0 0.0
    %2838 = vmatpush2.msra.mxu0 0.0
    %2839 = vmatprep.subr.mxu0 0.0
    %2840 = vmatpush2.msra.mxu0 0.0
    %2841 = vmatprep.subr.mxu0 0.0
    %2842 = vmatpush2.msra.mxu0 0.0
    %2843 = vmatprep.mubr.f32.mxu0 0.0
    %2844 = vmatmul.mubr.f32.gmra.mxu0 %v2637
    %v2845 = vpop.f32.mrf.mxu0
    %v2846 = vadd.f32 %v489, %v2845
    %v2847 = vpop.f32.mrf.mxu0
    %2848 = vdwg.mxu0
    %v2849 = vadd.f32 %v2633, %v2706
    %v2850 = vxor.u32 %v2849, 2147483648
    %v2851 = vmul.f32 %v2850, 1.442695
    %v2852 = vpow.pop %v2851
    %v2853 = vadd.f32 %v2852, 1.0
    %v2854 = vrcp.pop %v2853
    %v2855 = vmul.f32 1.0, %v2854
    %v2856 = vadd.f32 %v2634, %v2776
    %v2857 = vxor.u32 %v2856, 2147483648
    %v2858 = vmul.f32 %v2857, 1.442695
    %v2859 = vpow.pop %v2858
    %v2860 = vadd.f32 %v2859, 1.0
    %v2861 = vrcp.pop %v2860
    %v2862 = vmul.f32 1.0, %v2861
    %v2863 = vmul.f32 %v2855, %v2846
    %v2864 = vadd.f32 %v2635, %v2863
    %v2865 = vtanh.pop %v2864
    %v2866 = vsub.f32 1.0, %v2862
    %v2867 = vmul.f32 %v2866, %v2865
    %v2868 = vmul.f32 %v2862, %v2632
    %v2869 = vadd.f32 %v2867, %v2868
    %v2870 = vld [vmem:[#allocation2 + $0x14] sm:$0x3]
    %v2871 = vld [vmem:[%s324 + $0x14] sm:$0x3]
    %v2872 = vld [vmem:[%s460 + $0x14] sm:$0x3]
    %v2874 = vsel %vm47, %v2869, 0
    %2876 = vmatprep.subr.mxu0 0.0
    %2877 = vmatpush1.msra.mxu0 0.0
    %2878 = vmatprep.subr.mxu0 0.0
    %2879 = vmatpush1.msra.mxu0 0.0
    %2880 = vmatprep.subr.mxu0 0.0
    %2881 = vmatpush1.msra.mxu0 0.0
    %2882 = vmatprep.subr.mxu0 0.0
    %2883 = vmatpush1.msra.mxu0 0.0
    %2884 = vmatprep.subr.mxu0 0.0
    %2885 = vmatpush1.msra.mxu0 0.0
    %2886 = vmatprep.subr.mxu0 0.0
    %2887 = vmatpush1.msra.mxu0 0.0
    %2888 = vmatprep.subr.mxu0 0.0
    %2889 = vmatpush1.msra.mxu0 0.0
    %2890 = vmatprep.subr.mxu0 0.0
    %2891 = vmatpush1.msra.mxu0 0.0
    %2892 = vmatprep.subr.mxu0 0.0
    %2893 = vmatpush1.msra.mxu0 0.0
    %2894 = vmatprep.subr.mxu0 0.0
    %2895 = vmatpush1.msra.mxu0 0.0
    %2896 = vmatprep.subr.mxu0 0.0
    %2897 = vmatpush1.msra.mxu0 0.0
    %2898 = vmatprep.subr.mxu0 0.0
    %2899 = vmatpush1.msra.mxu0 0.0
    %2900 = vmatprep.subr.mxu0 0.0
    %2901 = vmatpush1.msra.mxu0 %v498
    %2902 = vmatprep.subr.mxu0 0.0
    %2903 = vmatpush1.msra.mxu0 %v472
    %2904 = vmatprep.subr.mxu0 0.0
    %2905 = vmatpush1.msra.mxu0 %v471
    %2906 = vmatprep.subr.mxu0 0.0
    %2907 = vmatpush1.msra.mxu0 %v470
    %2908 = vmatprep.subr.mxu0 0.0
    %2909 = vmatpush2.msra.mxu0 0.0
    %2910 = vmatprep.subr.mxu0 0.0
    %2911 = vmatpush2.msra.mxu0 0.0
    %2912 = vmatprep.subr.mxu0 0.0
    %2913 = vmatpush2.msra.mxu0 0.0
    %2914 = vmatprep.subr.mxu0 0.0
    %2915 = vmatpush2.msra.mxu0 0.0
    %2916 = vmatprep.subr.mxu0 0.0
    %2917 = vmatpush2.msra.mxu0 0.0
    %2918 = vmatprep.subr.mxu0 0.0
    %2919 = vmatpush2.msra.mxu0 0.0
    %2920 = vmatprep.subr.mxu0 0.0
    %2921 = vmatpush2.msra.mxu0 0.0
    %2922 = vmatprep.subr.mxu0 0.0
    %2923 = vmatpush2.msra.mxu0 0.0
    %2924 = vmatprep.subr.mxu0 0.0
    %2925 = vmatpush2.msra.mxu0 0.0
    %2926 = vmatprep.subr.mxu0 0.0
    %2927 = vmatpush2.msra.mxu0 0.0
    %2928 = vmatprep.subr.mxu0 0.0
    %2929 = vmatpush2.msra.mxu0 0.0
    %2930 = vmatprep.subr.mxu0 0.0
    %2931 = vmatpush2.msra.mxu0 0.0
    %2932 = vmatprep.subr.mxu0 0.0
    %2933 = vmatpush2.msra.mxu0 0.0
    %2934 = vmatprep.subr.mxu0 0.0
    %2935 = vmatpush2.msra.mxu0 0.0
    %2936 = vmatprep.subr.mxu0 0.0
    %2937 = vmatpush2.msra.mxu0 0.0
    %2938 = vmatprep.subr.mxu0 0.0
    %2939 = vmatpush2.msra.mxu0 0.0
    %2940 = vmatprep.mubr.f32.mxu0 0.0
    %2941 = vmatmul.mubr.f32.gmra.mxu0 %v2874
    %v2942 = vpop.f32.mrf.mxu0
    %v2943 = vadd.f32 0.0, %v2942
    %v2944 = vpop.f32.mrf.mxu0
    %2945 = vdwg.mxu0
    %2946 = vmatprep.subr.mxu0 0.0
    %2947 = vmatpush1.msra.mxu0 0.0
    %2948 = vmatprep.subr.mxu0 0.0
    %2949 = vmatpush1.msra.mxu0 0.0
    %2950 = vmatprep.subr.mxu0 0.0
    %2951 = vmatpush1.msra.mxu0 0.0
    %2952 = vmatprep.subr.mxu0 0.0
    %2953 = vmatpush1.msra.mxu0 0.0
    %2954 = vmatprep.subr.mxu0 0.0
    %2955 = vmatpush1.msra.mxu0 0.0
    %2956 = vmatprep.subr.mxu0 0.0
    %2957 = vmatpush1.msra.mxu0 0.0
    %2958 = vmatprep.subr.mxu0 0.0
    %2959 = vmatpush1.msra.mxu0 0.0
    %2960 = vmatprep.subr.mxu0 0.0
    %2961 = vmatpush1.msra.mxu0 0.0
    %2962 = vmatprep.subr.mxu0 0.0
    %2963 = vmatpush1.msra.mxu0 0.0
    %2964 = vmatprep.subr.mxu0 0.0
    %2965 = vmatpush1.msra.mxu0 0.0
    %2966 = vmatprep.subr.mxu0 0.0
    %2967 = vmatpush1.msra.mxu0 0.0
    %2968 = vmatprep.subr.mxu0 0.0
    %2969 = vmatpush1.msra.mxu0 0.0
    %2970 = vmatprep.subr.mxu0 0.0
    %2971 = vmatpush1.msra.mxu0 %v571
    %2972 = vmatprep.subr.mxu0 0.0
    %2973 = vmatpush1.msra.mxu0 %v477
    %2974 = vmatprep.subr.mxu0 0.0
    %2975 = vmatpush1.msra.mxu0 %v476
    %2976 = vmatprep.subr.mxu0 0.0
    %2977 = vmatpush1.msra.mxu0 %v475
    %2978 = vmatprep.subr.mxu0 0.0
    %2979 = vmatpush2.msra.mxu0 0.0
    %2980 = vmatprep.subr.mxu0 0.0
    %2981 = vmatpush2.msra.mxu0 0.0
    %2982 = vmatprep.subr.mxu0 0.0
    %2983 = vmatpush2.msra.mxu0 0.0
    %2984 = vmatprep.subr.mxu0 0.0
    %2985 = vmatpush2.msra.mxu0 0.0
    %2986 = vmatprep.subr.mxu0 0.0
    %2987 = vmatpush2.msra.mxu0 0.0
    %2988 = vmatprep.subr.mxu0 0.0
    %2989 = vmatpush2.msra.mxu0 0.0
    %2990 = vmatprep.subr.mxu0 0.0
    %2991 = vmatpush2.msra.mxu0 0.0
    %2992 = vmatprep.subr.mxu0 0.0
    %2993 = vmatpush2.msra.mxu0 0.0
    %2994 = vmatprep.subr.mxu0 0.0
    %2995 = vmatpush2.msra.mxu0 0.0
    %2996 = vmatprep.subr.mxu0 0.0
    %2997 = vmatpush2.msra.mxu0 0.0
    %2998 = vmatprep.subr.mxu0 0.0
    %2999 = vmatpush2.msra.mxu0 0.0
    %3000 = vmatprep.subr.mxu0 0.0
    %3001 = vmatpush2.msra.mxu0 0.0
    %3002 = vmatprep.subr.mxu0 0.0
    %3003 = vmatpush2.msra.mxu0 0.0
    %3004 = vmatprep.subr.mxu0 0.0
    %3005 = vmatpush2.msra.mxu0 0.0
    %3006 = vmatprep.subr.mxu0 0.0
    %3007 = vmatpush2.msra.mxu0 0.0
    %3008 = vmatprep.subr.mxu0 0.0
    %3009 = vmatpush2.msra.mxu0 0.0
    %3010 = vmatprep.mubr.f32.mxu0 0.0
    %3011 = vmatmul.mubr.f32.gmra.mxu0 %v2874
    %v3012 = vpop.f32.mrf.mxu0
    %v3013 = vadd.f32 0.0, %v3012
    %v3014 = vpop.f32.mrf.mxu0
    %3015 = vdwg.mxu0
    %3016 = vmatprep.subr.mxu0 0.0
    %3017 = vmatpush1.msra.mxu0 0.0
    %3018 = vmatprep.subr.mxu0 0.0
    %3019 = vmatpush1.msra.mxu0 0.0
    %3020 = vmatprep.subr.mxu0 0.0
    %3021 = vmatpush1.msra.mxu0 0.0
    %3022 = vmatprep.subr.mxu0 0.0
    %3023 = vmatpush1.msra.mxu0 0.0
    %3024 = vmatprep.subr.mxu0 0.0
    %3025 = vmatpush1.msra.mxu0 0.0
    %3026 = vmatprep.subr.mxu0 0.0
    %3027 = vmatpush1.msra.mxu0 0.0
    %3028 = vmatprep.subr.mxu0 0.0
    %3029 = vmatpush1.msra.mxu0 0.0
    %3030 = vmatprep.subr.mxu0 0.0
    %3031 = vmatpush1.msra.mxu0 0.0
    %3032 = vmatprep.subr.mxu0 0.0
    %3033 = vmatpush1.msra.mxu0 0.0
    %3034 = vmatprep.subr.mxu0 0.0
    %3035 = vmatpush1.msra.mxu0 0.0
    %3036 = vmatprep.subr.mxu0 0.0
    %3037 = vmatpush1.msra.mxu0 0.0
    %3038 = vmatprep.subr.mxu0 0.0
    %3039 = vmatpush1.msra.mxu0 0.0
    %3040 = vmatprep.subr.mxu0 0.0
    %3041 = vmatpush1.msra.mxu0 %v644
    %3042 = vmatprep.subr.mxu0 0.0
    %3043 = vmatpush1.msra.mxu0 %v482
    %3044 = vmatprep.subr.mxu0 0.0
    %3045 = vmatpush1.msra.mxu0 %v481
    %3046 = vmatprep.subr.mxu0 0.0
    %3047 = vmatpush1.msra.mxu0 %v480
    %3048 = vmatprep.subr.mxu0 0.0
    %3049 = vmatpush2.msra.mxu0 0.0
    %3050 = vmatprep.subr.mxu0 0.0
    %3051 = vmatpush2.msra.mxu0 0.0
    %3052 = vmatprep.subr.mxu0 0.0
    %3053 = vmatpush2.msra.mxu0 0.0
    %3054 = vmatprep.subr.mxu0 0.0
    %3055 = vmatpush2.msra.mxu0 0.0
    %3056 = vmatprep.subr.mxu0 0.0
    %3057 = vmatpush2.msra.mxu0 0.0
    %3058 = vmatprep.subr.mxu0 0.0
    %3059 = vmatpush2.msra.mxu0 0.0
    %3060 = vmatprep.subr.mxu0 0.0
    %3061 = vmatpush2.msra.mxu0 0.0
    %3062 = vmatprep.subr.mxu0 0.0
    %3063 = vmatpush2.msra.mxu0 0.0
    %3064 = vmatprep.subr.mxu0 0.0
    %3065 = vmatpush2.msra.mxu0 0.0
    %3066 = vmatprep.subr.mxu0 0.0
    %3067 = vmatpush2.msra.mxu0 0.0
    %3068 = vmatprep.subr.mxu0 0.0
    %3069 = vmatpush2.msra.mxu0 0.0
    %3070 = vmatprep.subr.mxu0 0.0
    %3071 = vmatpush2.msra.mxu0 0.0
    %3072 = vmatprep.subr.mxu0 0.0
    %3073 = vmatpush2.msra.mxu0 0.0
    %3074 = vmatprep.subr.mxu0 0.0
    %3075 = vmatpush2.msra.mxu0 0.0
    %3076 = vmatprep.subr.mxu0 0.0
    %3077 = vmatpush2.msra.mxu0 0.0
    %3078 = vmatprep.subr.mxu0 0.0
    %3079 = vmatpush2.msra.mxu0 0.0
    %3080 = vmatprep.mubr.f32.mxu0 0.0
    %3081 = vmatmul.mubr.f32.gmra.mxu0 %v2874
    %v3082 = vpop.f32.mrf.mxu0
    %v3083 = vadd.f32 %v489, %v3082
    %v3084 = vpop.f32.mrf.mxu0
    %3085 = vdwg.mxu0
    %v3086 = vadd.f32 %v2870, %v2943
    %v3087 = vxor.u32 %v3086, 2147483648
    %v3088 = vmul.f32 %v3087, 1.442695
    %v3089 = vpow.pop %v3088
    %v3090 = vadd.f32 %v3089, 1.0
    %v3091 = vrcp.pop %v3090
    %v3092 = vmul.f32 1.0, %v3091
    %v3093 = vadd.f32 %v2871, %v3013
    %v3094 = vxor.u32 %v3093, 2147483648
    %v3095 = vmul.f32 %v3094, 1.442695
    %v3096 = vpow.pop %v3095
    %v3097 = vadd.f32 %v3096, 1.0
    %v3098 = vrcp.pop %v3097
    %v3099 = vmul.f32 1.0, %v3098
    %v3100 = vmul.f32 %v3092, %v3083
    %v3101 = vadd.f32 %v2872, %v3100
    %v3102 = vtanh.pop %v3101
    %v3103 = vsub.f32 1.0, %v3099
    %v3104 = vmul.f32 %v3103, %v3102
    %v3105 = vmul.f32 %v3099, %v2869
    %v3106 = vadd.f32 %v3104, %v3105
    %v3107 = vld [vmem:[#allocation2 + $0x16] sm:$0x3]
    %v3108 = vld [vmem:[%s324 + $0x16] sm:$0x3]
    %v3109 = vld [vmem:[%s460 + $0x16] sm:$0x3]
    %v3111 = vsel %vm47, %v3106, 0
    %3113 = vmatprep.subr.mxu0 0.0
    %3114 = vmatpush1.msra.mxu0 0.0
    %3115 = vmatprep.subr.mxu0 0.0
    %3116 = vmatpush1.msra.mxu0 0.0
    %3117 = vmatprep.subr.mxu0 0.0
    %3118 = vmatpush1.msra.mxu0 0.0
    %3119 = vmatprep.subr.mxu0 0.0
    %3120 = vmatpush1.msra.mxu0 0.0
    %3121 = vmatprep.subr.mxu0 0.0
    %3122 = vmatpush1.msra.mxu0 0.0
    %3123 = vmatprep.subr.mxu0 0.0
    %3124 = vmatpush1.msra.mxu0 0.0
    %3125 = vmatprep.subr.mxu0 0.0
    %3126 = vmatpush1.msra.mxu0 0.0
    %3127 = vmatprep.subr.mxu0 0.0
    %3128 = vmatpush1.msra.mxu0 0.0
    %3129 = vmatprep.subr.mxu0 0.0
    %3130 = vmatpush1.msra.mxu0 0.0
    %3131 = vmatprep.subr.mxu0 0.0
    %3132 = vmatpush1.msra.mxu0 0.0
    %3133 = vmatprep.subr.mxu0 0.0
    %3134 = vmatpush1.msra.mxu0 0.0
    %3135 = vmatprep.subr.mxu0 0.0
    %3136 = vmatpush1.msra.mxu0 0.0
    %3137 = vmatprep.subr.mxu0 0.0
    %3138 = vmatpush1.msra.mxu0 %v498
    %3139 = vmatprep.subr.mxu0 0.0
    %3140 = vmatpush1.msra.mxu0 %v472
    %3141 = vmatprep.subr.mxu0 0.0
    %3142 = vmatpush1.msra.mxu0 %v471
    %3143 = vmatprep.subr.mxu0 0.0
    %3144 = vmatpush1.msra.mxu0 %v470
    %3145 = vmatprep.subr.mxu0 0.0
    %3146 = vmatpush2.msra.mxu0 0.0
    %3147 = vmatprep.subr.mxu0 0.0
    %3148 = vmatpush2.msra.mxu0 0.0
    %3149 = vmatprep.subr.mxu0 0.0
    %3150 = vmatpush2.msra.mxu0 0.0
    %3151 = vmatprep.subr.mxu0 0.0
    %3152 = vmatpush2.msra.mxu0 0.0
    %3153 = vmatprep.subr.mxu0 0.0
    %3154 = vmatpush2.msra.mxu0 0.0
    %3155 = vmatprep.subr.mxu0 0.0
    %3156 = vmatpush2.msra.mxu0 0.0
    %3157 = vmatprep.subr.mxu0 0.0
    %3158 = vmatpush2.msra.mxu0 0.0
    %3159 = vmatprep.subr.mxu0 0.0
    %3160 = vmatpush2.msra.mxu0 0.0
    %3161 = vmatprep.subr.mxu0 0.0
    %3162 = vmatpush2.msra.mxu0 0.0
    %3163 = vmatprep.subr.mxu0 0.0
    %3164 = vmatpush2.msra.mxu0 0.0
    %3165 = vmatprep.subr.mxu0 0.0
    %3166 = vmatpush2.msra.mxu0 0.0
    %3167 = vmatprep.subr.mxu0 0.0
    %3168 = vmatpush2.msra.mxu0 0.0
    %3169 = vmatprep.subr.mxu0 0.0
    %3170 = vmatpush2.msra.mxu0 0.0
    %3171 = vmatprep.subr.mxu0 0.0
    %3172 = vmatpush2.msra.mxu0 0.0
    %3173 = vmatprep.subr.mxu0 0.0
    %3174 = vmatpush2.msra.mxu0 0.0
    %3175 = vmatprep.subr.mxu0 0.0
    %3176 = vmatpush2.msra.mxu0 0.0
    %3177 = vmatprep.mubr.f32.mxu0 0.0
    %3178 = vmatmul.mubr.f32.gmra.mxu0 %v3111
    %v3179 = vpop.f32.mrf.mxu0
    %v3180 = vadd.f32 0.0, %v3179
    %v3181 = vpop.f32.mrf.mxu0
    %3182 = vdwg.mxu0
    %3183 = vmatprep.subr.mxu0 0.0
    %3184 = vmatpush1.msra.mxu0 0.0
    %3185 = vmatprep.subr.mxu0 0.0
    %3186 = vmatpush1.msra.mxu0 0.0
    %3187 = vmatprep.subr.mxu0 0.0
    %3188 = vmatpush1.msra.mxu0 0.0
    %3189 = vmatprep.subr.mxu0 0.0
    %3190 = vmatpush1.msra.mxu0 0.0
    %3191 = vmatprep.subr.mxu0 0.0
    %3192 = vmatpush1.msra.mxu0 0.0
    %3193 = vmatprep.subr.mxu0 0.0
    %3194 = vmatpush1.msra.mxu0 0.0
    %3195 = vmatprep.subr.mxu0 0.0
    %3196 = vmatpush1.msra.mxu0 0.0
    %3197 = vmatprep.subr.mxu0 0.0
    %3198 = vmatpush1.msra.mxu0 0.0
    %3199 = vmatprep.subr.mxu0 0.0
    %3200 = vmatpush1.msra.mxu0 0.0
    %3201 = vmatprep.subr.mxu0 0.0
    %3202 = vmatpush1.msra.mxu0 0.0
    %3203 = vmatprep.subr.mxu0 0.0
    %3204 = vmatpush1.msra.mxu0 0.0
    %3205 = vmatprep.subr.mxu0 0.0
    %3206 = vmatpush1.msra.mxu0 0.0
    %3207 = vmatprep.subr.mxu0 0.0
    %3208 = vmatpush1.msra.mxu0 %v571
    %3209 = vmatprep.subr.mxu0 0.0
    %3210 = vmatpush1.msra.mxu0 %v477
    %3211 = vmatprep.subr.mxu0 0.0
    %3212 = vmatpush1.msra.mxu0 %v476
    %3213 = vmatprep.subr.mxu0 0.0
    %3214 = vmatpush1.msra.mxu0 %v475
    %3215 = vmatprep.subr.mxu0 0.0
    %3216 = vmatpush2.msra.mxu0 0.0
    %3217 = vmatprep.subr.mxu0 0.0
    %3218 = vmatpush2.msra.mxu0 0.0
    %3219 = vmatprep.subr.mxu0 0.0
    %3220 = vmatpush2.msra.mxu0 0.0
    %3221 = vmatprep.subr.mxu0 0.0
    %3222 = vmatpush2.msra.mxu0 0.0
    %3223 = vmatprep.subr.mxu0 0.0
    %3224 = vmatpush2.msra.mxu0 0.0
    %3225 = vmatprep.subr.mxu0 0.0
    %3226 = vmatpush2.msra.mxu0 0.0
    %3227 = vmatprep.subr.mxu0 0.0
    %3228 = vmatpush2.msra.mxu0 0.0
    %3229 = vmatprep.subr.mxu0 0.0
    %3230 = vmatpush2.msra.mxu0 0.0
    %3231 = vmatprep.subr.mxu0 0.0
    %3232 = vmatpush2.msra.mxu0 0.0
    %3233 = vmatprep.subr.mxu0 0.0
    %3234 = vmatpush2.msra.mxu0 0.0
    %3235 = vmatprep.subr.mxu0 0.0
    %3236 = vmatpush2.msra.mxu0 0.0
    %3237 = vmatprep.subr.mxu0 0.0
    %3238 = vmatpush2.msra.mxu0 0.0
    %3239 = vmatprep.subr.mxu0 0.0
    %3240 = vmatpush2.msra.mxu0 0.0
    %3241 = vmatprep.subr.mxu0 0.0
    %3242 = vmatpush2.msra.mxu0 0.0
    %3243 = vmatprep.subr.mxu0 0.0
    %3244 = vmatpush2.msra.mxu0 0.0
    %3245 = vmatprep.subr.mxu0 0.0
    %3246 = vmatpush2.msra.mxu0 0.0
    %3247 = vmatprep.mubr.f32.mxu0 0.0
    %3248 = vmatmul.mubr.f32.gmra.mxu0 %v3111
    %v3249 = vpop.f32.mrf.mxu0
    %v3250 = vadd.f32 0.0, %v3249
    %v3251 = vpop.f32.mrf.mxu0
    %3252 = vdwg.mxu0
    %3253 = vmatprep.subr.mxu0 0.0
    %3254 = vmatpush1.msra.mxu0 0.0
    %3255 = vmatprep.subr.mxu0 0.0
    %3256 = vmatpush1.msra.mxu0 0.0
    %3257 = vmatprep.subr.mxu0 0.0
    %3258 = vmatpush1.msra.mxu0 0.0
    %3259 = vmatprep.subr.mxu0 0.0
    %3260 = vmatpush1.msra.mxu0 0.0
    %3261 = vmatprep.subr.mxu0 0.0
    %3262 = vmatpush1.msra.mxu0 0.0
    %3263 = vmatprep.subr.mxu0 0.0
    %3264 = vmatpush1.msra.mxu0 0.0
    %3265 = vmatprep.subr.mxu0 0.0
    %3266 = vmatpush1.msra.mxu0 0.0
    %3267 = vmatprep.subr.mxu0 0.0
    %3268 = vmatpush1.msra.mxu0 0.0
    %3269 = vmatprep.subr.mxu0 0.0
    %3270 = vmatpush1.msra.mxu0 0.0
    %3271 = vmatprep.subr.mxu0 0.0
    %3272 = vmatpush1.msra.mxu0 0.0
    %3273 = vmatprep.subr.mxu0 0.0
    %3274 = vmatpush1.msra.mxu0 0.0
    %3275 = vmatprep.subr.mxu0 0.0
    %3276 = vmatpush1.msra.mxu0 0.0
    %3277 = vmatprep.subr.mxu0 0.0
    %3278 = vmatpush1.msra.mxu0 %v644
    %3279 = vmatprep.subr.mxu0 0.0
    %3280 = vmatpush1.msra.mxu0 %v482
    %3281 = vmatprep.subr.mxu0 0.0
    %3282 = vmatpush1.msra.mxu0 %v481
    %3283 = vmatprep.subr.mxu0 0.0
    %3284 = vmatpush1.msra.mxu0 %v480
    %3285 = vmatprep.subr.mxu0 0.0
    %3286 = vmatpush2.msra.mxu0 0.0
    %3287 = vmatprep.subr.mxu0 0.0
    %3288 = vmatpush2.msra.mxu0 0.0
    %3289 = vmatprep.subr.mxu0 0.0
    %3290 = vmatpush2.msra.mxu0 0.0
    %3291 = vmatprep.subr.mxu0 0.0
    %3292 = vmatpush2.msra.mxu0 0.0
    %3293 = vmatprep.subr.mxu0 0.0
    %3294 = vmatpush2.msra.mxu0 0.0
    %3295 = vmatprep.subr.mxu0 0.0
    %3296 = vmatpush2.msra.mxu0 0.0
    %3297 = vmatprep.subr.mxu0 0.0
    %3298 = vmatpush2.msra.mxu0 0.0
    %3299 = vmatprep.subr.mxu0 0.0
    %3300 = vmatpush2.msra.mxu0 0.0
    %3301 = vmatprep.subr.mxu0 0.0
    %3302 = vmatpush2.msra.mxu0 0.0
    %3303 = vmatprep.subr.mxu0 0.0
    %3304 = vmatpush2.msra.mxu0 0.0
    %3305 = vmatprep.subr.mxu0 0.0
    %3306 = vmatpush2.msra.mxu0 0.0
    %3307 = vmatprep.subr.mxu0 0.0
    %3308 = vmatpush2.msra.mxu0 0.0
    %3309 = vmatprep.subr.mxu0 0.0
    %3310 = vmatpush2.msra.mxu0 0.0
    %3311 = vmatprep.subr.mxu0 0.0
    %3312 = vmatpush2.msra.mxu0 0.0
    %3313 = vmatprep.subr.mxu0 0.0
    %3314 = vmatpush2.msra.mxu0 0.0
    %3315 = vmatprep.subr.mxu0 0.0
    %3316 = vmatpush2.msra.mxu0 0.0
    %3317 = vmatprep.mubr.f32.mxu0 0.0
    %3318 = vmatmul.mubr.f32.gmra.mxu0 %v3111
    %v3319 = vpop.f32.mrf.mxu0
    %v3320 = vadd.f32 %v489, %v3319
    %v3321 = vpop.f32.mrf.mxu0
    %3322 = vdwg.mxu0
    %v3323 = vadd.f32 %v3107, %v3180
    %v3324 = vxor.u32 %v3323, 2147483648
    %v3325 = vmul.f32 %v3324, 1.442695
    %v3326 = vpow.pop %v3325
    %v3327 = vadd.f32 %v3326, 1.0
    %v3328 = vrcp.pop %v3327
    %v3329 = vmul.f32 1.0, %v3328
    %v3330 = vadd.f32 %v3108, %v3250
    %v3331 = vxor.u32 %v3330, 2147483648
    %v3332 = vmul.f32 %v3331, 1.442695
    %v3333 = vpow.pop %v3332
    %v3334 = vadd.f32 %v3333, 1.0
    %v3335 = vrcp.pop %v3334
    %v3336 = vmul.f32 1.0, %v3335
    %v3337 = vmul.f32 %v3329, %v3320
    %v3338 = vadd.f32 %v3109, %v3337
    %v3339 = vtanh.pop %v3338
    %v3340 = vsub.f32 1.0, %v3336
    %v3341 = vmul.f32 %v3340, %v3339
    %v3342 = vmul.f32 %v3336, %v3106
    %v3343 = vadd.f32 %v3341, %v3342
    %v3344 = vld [vmem:[#allocation2 + $0x18] sm:$0x3]
    %v3345 = vld [vmem:[%s324 + $0x18] sm:$0x3]
    %v3346 = vld [vmem:[%s460 + $0x18] sm:$0x3]
    %v3348 = vsel %vm47, %v3343, 0
    %3350 = vmatprep.subr.mxu0 0.0
    %3351 = vmatpush1.msra.mxu0 0.0
    %3352 = vmatprep.subr.mxu0 0.0
    %3353 = vmatpush1.msra.mxu0 0.0
    %3354 = vmatprep.subr.mxu0 0.0
    %3355 = vmatpush1.msra.mxu0 0.0
    %3356 = vmatprep.subr.mxu0 0.0
    %3357 = vmatpush1.msra.mxu0 0.0
    %3358 = vmatprep.subr.mxu0 0.0
    %3359 = vmatpush1.msra.mxu0 0.0
    %3360 = vmatprep.subr.mxu0 0.0
    %3361 = vmatpush1.msra.mxu0 0.0
    %3362 = vmatprep.subr.mxu0 0.0
    %3363 = vmatpush1.msra.mxu0 0.0
    %3364 = vmatprep.subr.mxu0 0.0
    %3365 = vmatpush1.msra.mxu0 0.0
    %3366 = vmatprep.subr.mxu0 0.0
    %3367 = vmatpush1.msra.mxu0 0.0
    %3368 = vmatprep.subr.mxu0 0.0
    %3369 = vmatpush1.msra.mxu0 0.0
    %3370 = vmatprep.subr.mxu0 0.0
    %3371 = vmatpush1.msra.mxu0 0.0
    %3372 = vmatprep.subr.mxu0 0.0
    %3373 = vmatpush1.msra.mxu0 0.0
    %3374 = vmatprep.subr.mxu0 0.0
    %3375 = vmatpush1.msra.mxu0 %v498
    %3376 = vmatprep.subr.mxu0 0.0
    %3377 = vmatpush1.msra.mxu0 %v472
    %3378 = vmatprep.subr.mxu0 0.0
    %3379 = vmatpush1.msra.mxu0 %v471
    %3380 = vmatprep.subr.mxu0 0.0
    %3381 = vmatpush1.msra.mxu0 %v470
    %3382 = vmatprep.subr.mxu0 0.0
    %3383 = vmatpush2.msra.mxu0 0.0
    %3384 = vmatprep.subr.mxu0 0.0
    %3385 = vmatpush2.msra.mxu0 0.0
    %3386 = vmatprep.subr.mxu0 0.0
    %3387 = vmatpush2.msra.mxu0 0.0
    %3388 = vmatprep.subr.mxu0 0.0
    %3389 = vmatpush2.msra.mxu0 0.0
    %3390 = vmatprep.subr.mxu0 0.0
    %3391 = vmatpush2.msra.mxu0 0.0
    %3392 = vmatprep.subr.mxu0 0.0
    %3393 = vmatpush2.msra.mxu0 0.0
    %3394 = vmatprep.subr.mxu0 0.0
    %3395 = vmatpush2.msra.mxu0 0.0
    %3396 = vmatprep.subr.mxu0 0.0
    %3397 = vmatpush2.msra.mxu0 0.0
    %3398 = vmatprep.subr.mxu0 0.0
    %3399 = vmatpush2.msra.mxu0 0.0
    %3400 = vmatprep.subr.mxu0 0.0
    %3401 = vmatpush2.msra.mxu0 0.0
    %3402 = vmatprep.subr.mxu0 0.0
    %3403 = vmatpush2.msra.mxu0 0.0
    %3404 = vmatprep.subr.mxu0 0.0
    %3405 = vmatpush2.msra.mxu0 0.0
    %3406 = vmatprep.subr.mxu0 0.0
    %3407 = vmatpush2.msra.mxu0 0.0
    %3408 = vmatprep.subr.mxu0 0.0
    %3409 = vmatpush2.msra.mxu0 0.0
    %3410 = vmatprep.subr.mxu0 0.0
    %3411 = vmatpush2.msra.mxu0 0.0
    %3412 = vmatprep.subr.mxu0 0.0
    %3413 = vmatpush2.msra.mxu0 0.0
    %3414 = vmatprep.mubr.f32.mxu0 0.0
    %3415 = vmatmul.mubr.f32.gmra.mxu0 %v3348
    %v3416 = vpop.f32.mrf.mxu0
    %v3417 = vadd.f32 0.0, %v3416
    %v3418 = vpop.f32.mrf.mxu0
    %3419 = vdwg.mxu0
    %3420 = vmatprep.subr.mxu0 0.0
    %3421 = vmatpush1.msra.mxu0 0.0
    %3422 = vmatprep.subr.mxu0 0.0
    %3423 = vmatpush1.msra.mxu0 0.0
    %3424 = vmatprep.subr.mxu0 0.0
    %3425 = vmatpush1.msra.mxu0 0.0
    %3426 = vmatprep.subr.mxu0 0.0
    %3427 = vmatpush1.msra.mxu0 0.0
    %3428 = vmatprep.subr.mxu0 0.0
    %3429 = vmatpush1.msra.mxu0 0.0
    %3430 = vmatprep.subr.mxu0 0.0
    %3431 = vmatpush1.msra.mxu0 0.0
    %3432 = vmatprep.subr.mxu0 0.0
    %3433 = vmatpush1.msra.mxu0 0.0
    %3434 = vmatprep.subr.mxu0 0.0
    %3435 = vmatpush1.msra.mxu0 0.0
    %3436 = vmatprep.subr.mxu0 0.0
    %3437 = vmatpush1.msra.mxu0 0.0
    %3438 = vmatprep.subr.mxu0 0.0
    %3439 = vmatpush1.msra.mxu0 0.0
    %3440 = vmatprep.subr.mxu0 0.0
    %3441 = vmatpush1.msra.mxu0 0.0
    %3442 = vmatprep.subr.mxu0 0.0
    %3443 = vmatpush1.msra.mxu0 0.0
    %3444 = vmatprep.subr.mxu0 0.0
    %3445 = vmatpush1.msra.mxu0 %v571
    %3446 = vmatprep.subr.mxu0 0.0
    %3447 = vmatpush1.msra.mxu0 %v477
    %3448 = vmatprep.subr.mxu0 0.0
    %3449 = vmatpush1.msra.mxu0 %v476
    %3450 = vmatprep.subr.mxu0 0.0
    %3451 = vmatpush1.msra.mxu0 %v475
    %3452 = vmatprep.subr.mxu0 0.0
    %3453 = vmatpush2.msra.mxu0 0.0
    %3454 = vmatprep.subr.mxu0 0.0
    %3455 = vmatpush2.msra.mxu0 0.0
    %3456 = vmatprep.subr.mxu0 0.0
    %3457 = vmatpush2.msra.mxu0 0.0
    %3458 = vmatprep.subr.mxu0 0.0
    %3459 = vmatpush2.msra.mxu0 0.0
    %3460 = vmatprep.subr.mxu0 0.0
    %3461 = vmatpush2.msra.mxu0 0.0
    %3462 = vmatprep.subr.mxu0 0.0
    %3463 = vmatpush2.msra.mxu0 0.0
    %3464 = vmatprep.subr.mxu0 0.0
    %3465 = vmatpush2.msra.mxu0 0.0
    %3466 = vmatprep.subr.mxu0 0.0
    %3467 = vmatpush2.msra.mxu0 0.0
    %3468 = vmatprep.subr.mxu0 0.0
    %3469 = vmatpush2.msra.mxu0 0.0
    %3470 = vmatprep.subr.mxu0 0.0
    %3471 = vmatpush2.msra.mxu0 0.0
    %3472 = vmatprep.subr.mxu0 0.0
    %3473 = vmatpush2.msra.mxu0 0.0
    %3474 = vmatprep.subr.mxu0 0.0
    %3475 = vmatpush2.msra.mxu0 0.0
    %3476 = vmatprep.subr.mxu0 0.0
    %3477 = vmatpush2.msra.mxu0 0.0
    %3478 = vmatprep.subr.mxu0 0.0
    %3479 = vmatpush2.msra.mxu0 0.0
    %3480 = vmatprep.subr.mxu0 0.0
    %3481 = vmatpush2.msra.mxu0 0.0
    %3482 = vmatprep.subr.mxu0 0.0
    %3483 = vmatpush2.msra.mxu0 0.0
    %3484 = vmatprep.mubr.f32.mxu0 0.0
    %3485 = vmatmul.mubr.f32.gmra.mxu0 %v3348
    %v3486 = vpop.f32.mrf.mxu0
    %v3487 = vadd.f32 0.0, %v3486
    %v3488 = vpop.f32.mrf.mxu0
    %3489 = vdwg.mxu0
    %3490 = vmatprep.subr.mxu0 0.0
    %3491 = vmatpush1.msra.mxu0 0.0
    %3492 = vmatprep.subr.mxu0 0.0
    %3493 = vmatpush1.msra.mxu0 0.0
    %3494 = vmatprep.subr.mxu0 0.0
    %3495 = vmatpush1.msra.mxu0 0.0
    %3496 = vmatprep.subr.mxu0 0.0
    %3497 = vmatpush1.msra.mxu0 0.0
    %3498 = vmatprep.subr.mxu0 0.0
    %3499 = vmatpush1.msra.mxu0 0.0
    %3500 = vmatprep.subr.mxu0 0.0
    %3501 = vmatpush1.msra.mxu0 0.0
    %3502 = vmatprep.subr.mxu0 0.0
    %3503 = vmatpush1.msra.mxu0 0.0
    %3504 = vmatprep.subr.mxu0 0.0
    %3505 = vmatpush1.msra.mxu0 0.0
    %3506 = vmatprep.subr.mxu0 0.0
    %3507 = vmatpush1.msra.mxu0 0.0
    %3508 = vmatprep.subr.mxu0 0.0
    %3509 = vmatpush1.msra.mxu0 0.0
    %3510 = vmatprep.subr.mxu0 0.0
    %3511 = vmatpush1.msra.mxu0 0.0
    %3512 = vmatprep.subr.mxu0 0.0
    %3513 = vmatpush1.msra.mxu0 0.0
    %3514 = vmatprep.subr.mxu0 0.0
    %3515 = vmatpush1.msra.mxu0 %v644
    %3516 = vmatprep.subr.mxu0 0.0
    %3517 = vmatpush1.msra.mxu0 %v482
    %3518 = vmatprep.subr.mxu0 0.0
    %3519 = vmatpush1.msra.mxu0 %v481
    %3520 = vmatprep.subr.mxu0 0.0
    %3521 = vmatpush1.msra.mxu0 %v480
    %3522 = vmatprep.subr.mxu0 0.0
    %3523 = vmatpush2.msra.mxu0 0.0
    %3524 = vmatprep.subr.mxu0 0.0
    %3525 = vmatpush2.msra.mxu0 0.0
    %3526 = vmatprep.subr.mxu0 0.0
    %3527 = vmatpush2.msra.mxu0 0.0
    %3528 = vmatprep.subr.mxu0 0.0
    %3529 = vmatpush2.msra.mxu0 0.0
    %3530 = vmatprep.subr.mxu0 0.0
    %3531 = vmatpush2.msra.mxu0 0.0
    %3532 = vmatprep.subr.mxu0 0.0
    %3533 = vmatpush2.msra.mxu0 0.0
    %3534 = vmatprep.subr.mxu0 0.0
    %3535 = vmatpush2.msra.mxu0 0.0
    %3536 = vmatprep.subr.mxu0 0.0
    %3537 = vmatpush2.msra.mxu0 0.0
    %3538 = vmatprep.subr.mxu0 0.0
    %3539 = vmatpush2.msra.mxu0 0.0
    %3540 = vmatprep.subr.mxu0 0.0
    %3541 = vmatpush2.msra.mxu0 0.0
    %3542 = vmatprep.subr.mxu0 0.0
    %3543 = vmatpush2.msra.mxu0 0.0
    %3544 = vmatprep.subr.mxu0 0.0
    %3545 = vmatpush2.msra.mxu0 0.0
    %3546 = vmatprep.subr.mxu0 0.0
    %3547 = vmatpush2.msra.mxu0 0.0
    %3548 = vmatprep.subr.mxu0 0.0
    %3549 = vmatpush2.msra.mxu0 0.0
    %3550 = vmatprep.subr.mxu0 0.0
    %3551 = vmatpush2.msra.mxu0 0.0
    %3552 = vmatprep.subr.mxu0 0.0
    %3553 = vmatpush2.msra.mxu0 0.0
    %3554 = vmatprep.mubr.f32.mxu0 0.0
    %3555 = vmatmul.mubr.f32.gmra.mxu0 %v3348
    %v3556 = vpop.f32.mrf.mxu0
    %v3557 = vadd.f32 %v489, %v3556
    %v3558 = vpop.f32.mrf.mxu0
    %3559 = vdwg.mxu0
    %v3560 = vadd.f32 %v3344, %v3417
    %v3561 = vxor.u32 %v3560, 2147483648
    %v3562 = vmul.f32 %v3561, 1.442695
    %v3563 = vpow.pop %v3562
    %v3564 = vadd.f32 %v3563, 1.0
    %v3565 = vrcp.pop %v3564
    %v3566 = vmul.f32 1.0, %v3565
    %v3567 = vadd.f32 %v3345, %v3487
    %v3568 = vxor.u32 %v3567, 2147483648
    %v3569 = vmul.f32 %v3568, 1.442695
    %v3570 = vpow.pop %v3569
    %v3571 = vadd.f32 %v3570, 1.0
    %v3572 = vrcp.pop %v3571
    %v3573 = vmul.f32 1.0, %v3572
    %v3574 = vmul.f32 %v3566, %v3557
    %v3575 = vadd.f32 %v3346, %v3574
    %v3576 = vtanh.pop %v3575
    %v3577 = vsub.f32 1.0, %v3573
    %v3578 = vmul.f32 %v3577, %v3576
    %v3579 = vmul.f32 %v3573, %v3343
    %v3580 = vadd.f32 %v3578, %v3579
    %v3581 = vld [vmem:[#allocation2 + $0x1a] sm:$0x3]
    %v3582 = vld [vmem:[%s324 + $0x1a] sm:$0x3]
    %v3583 = vld [vmem:[%s460 + $0x1a] sm:$0x3]
    %v3585 = vsel %vm47, %v3580, 0
    %3587 = vmatprep.subr.mxu0 0.0
    %3588 = vmatpush1.msra.mxu0 0.0
    %3589 = vmatprep.subr.mxu0 0.0
    %3590 = vmatpush1.msra.mxu0 0.0
    %3591 = vmatprep.subr.mxu0 0.0
    %3592 = vmatpush1.msra.mxu0 0.0
    %3593 = vmatprep.subr.mxu0 0.0
    %3594 = vmatpush1.msra.mxu0 0.0
    %3595 = vmatprep.subr.mxu0 0.0
    %3596 = vmatpush1.msra.mxu0 0.0
    %3597 = vmatprep.subr.mxu0 0.0
    %3598 = vmatpush1.msra.mxu0 0.0
    %3599 = vmatprep.subr.mxu0 0.0
    %3600 = vmatpush1.msra.mxu0 0.0
    %3601 = vmatprep.subr.mxu0 0.0
    %3602 = vmatpush1.msra.mxu0 0.0
    %3603 = vmatprep.subr.mxu0 0.0
    %3604 = vmatpush1.msra.mxu0 0.0
    %3605 = vmatprep.subr.mxu0 0.0
    %3606 = vmatpush1.msra.mxu0 0.0
    %3607 = vmatprep.subr.mxu0 0.0
    %3608 = vmatpush1.msra.mxu0 0.0
    %3609 = vmatprep.subr.mxu0 0.0
    %3610 = vmatpush1.msra.mxu0 0.0
    %3611 = vmatprep.subr.mxu0 0.0
    %3612 = vmatpush1.msra.mxu0 %v498
    %3613 = vmatprep.subr.mxu0 0.0
    %3614 = vmatpush1.msra.mxu0 %v472
    %3615 = vmatprep.subr.mxu0 0.0
    %3616 = vmatpush1.msra.mxu0 %v471
    %3617 = vmatprep.subr.mxu0 0.0
    %3618 = vmatpush1.msra.mxu0 %v470
    %3619 = vmatprep.subr.mxu0 0.0
    %3620 = vmatpush2.msra.mxu0 0.0
    %3621 = vmatprep.subr.mxu0 0.0
    %3622 = vmatpush2.msra.mxu0 0.0
    %3623 = vmatprep.subr.mxu0 0.0
    %3624 = vmatpush2.msra.mxu0 0.0
    %3625 = vmatprep.subr.mxu0 0.0
    %3626 = vmatpush2.msra.mxu0 0.0
    %3627 = vmatprep.subr.mxu0 0.0
    %3628 = vmatpush2.msra.mxu0 0.0
    %3629 = vmatprep.subr.mxu0 0.0
    %3630 = vmatpush2.msra.mxu0 0.0
    %3631 = vmatprep.subr.mxu0 0.0
    %3632 = vmatpush2.msra.mxu0 0.0
    %3633 = vmatprep.subr.mxu0 0.0
    %3634 = vmatpush2.msra.mxu0 0.0
    %3635 = vmatprep.subr.mxu0 0.0
    %3636 = vmatpush2.msra.mxu0 0.0
    %3637 = vmatprep.subr.mxu0 0.0
    %3638 = vmatpush2.msra.mxu0 0.0
    %3639 = vmatprep.subr.mxu0 0.0
    %3640 = vmatpush2.msra.mxu0 0.0
    %3641 = vmatprep.subr.mxu0 0.0
    %3642 = vmatpush2.msra.mxu0 0.0
    %3643 = vmatprep.subr.mxu0 0.0
    %3644 = vmatpush2.msra.mxu0 0.0
    %3645 = vmatprep.subr.mxu0 0.0
    %3646 = vmatpush2.msra.mxu0 0.0
    %3647 = vmatprep.subr.mxu0 0.0
    %3648 = vmatpush2.msra.mxu0 0.0
    %3649 = vmatprep.subr.mxu0 0.0
    %3650 = vmatpush2.msra.mxu0 0.0
    %3651 = vmatprep.mubr.f32.mxu0 0.0
    %3652 = vmatmul.mubr.f32.gmra.mxu0 %v3585
    %v3653 = vpop.f32.mrf.mxu0
    %v3654 = vadd.f32 0.0, %v3653
    %v3655 = vpop.f32.mrf.mxu0
    %3656 = vdwg.mxu0
    %3657 = vmatprep.subr.mxu0 0.0
    %3658 = vmatpush1.msra.mxu0 0.0
    %3659 = vmatprep.subr.mxu0 0.0
    %3660 = vmatpush1.msra.mxu0 0.0
    %3661 = vmatprep.subr.mxu0 0.0
    %3662 = vmatpush1.msra.mxu0 0.0
    %3663 = vmatprep.subr.mxu0 0.0
    %3664 = vmatpush1.msra.mxu0 0.0
    %3665 = vmatprep.subr.mxu0 0.0
    %3666 = vmatpush1.msra.mxu0 0.0
    %3667 = vmatprep.subr.mxu0 0.0
    %3668 = vmatpush1.msra.mxu0 0.0
    %3669 = vmatprep.subr.mxu0 0.0
    %3670 = vmatpush1.msra.mxu0 0.0
    %3671 = vmatprep.subr.mxu0 0.0
    %3672 = vmatpush1.msra.mxu0 0.0
    %3673 = vmatprep.subr.mxu0 0.0
    %3674 = vmatpush1.msra.mxu0 0.0
    %3675 = vmatprep.subr.mxu0 0.0
    %3676 = vmatpush1.msra.mxu0 0.0
    %3677 = vmatprep.subr.mxu0 0.0
    %3678 = vmatpush1.msra.mxu0 0.0
    %3679 = vmatprep.subr.mxu0 0.0
    %3680 = vmatpush1.msra.mxu0 0.0
    %3681 = vmatprep.subr.mxu0 0.0
    %3682 = vmatpush1.msra.mxu0 %v571
    %3683 = vmatprep.subr.mxu0 0.0
    %3684 = vmatpush1.msra.mxu0 %v477
    %3685 = vmatprep.subr.mxu0 0.0
    %3686 = vmatpush1.msra.mxu0 %v476
    %3687 = vmatprep.subr.mxu0 0.0
    %3688 = vmatpush1.msra.mxu0 %v475
    %3689 = vmatprep.subr.mxu0 0.0
    %3690 = vmatpush2.msra.mxu0 0.0
    %3691 = vmatprep.subr.mxu0 0.0
    %3692 = vmatpush2.msra.mxu0 0.0
    %3693 = vmatprep.subr.mxu0 0.0
    %3694 = vmatpush2.msra.mxu0 0.0
    %3695 = vmatprep.subr.mxu0 0.0
    %3696 = vmatpush2.msra.mxu0 0.0
    %3697 = vmatprep.subr.mxu0 0.0
    %3698 = vmatpush2.msra.mxu0 0.0
    %3699 = vmatprep.subr.mxu0 0.0
    %3700 = vmatpush2.msra.mxu0 0.0
    %3701 = vmatprep.subr.mxu0 0.0
    %3702 = vmatpush2.msra.mxu0 0.0
    %3703 = vmatprep.subr.mxu0 0.0
    %3704 = vmatpush2.msra.mxu0 0.0
    %3705 = vmatprep.subr.mxu0 0.0
    %3706 = vmatpush2.msra.mxu0 0.0
    %3707 = vmatprep.subr.mxu0 0.0
    %3708 = vmatpush2.msra.mxu0 0.0
    %3709 = vmatprep.subr.mxu0 0.0
    %3710 = vmatpush2.msra.mxu0 0.0
    %3711 = vmatprep.subr.mxu0 0.0
    %3712 = vmatpush2.msra.mxu0 0.0
    %3713 = vmatprep.subr.mxu0 0.0
    %3714 = vmatpush2.msra.mxu0 0.0
    %3715 = vmatprep.subr.mxu0 0.0
    %3716 = vmatpush2.msra.mxu0 0.0
    %3717 = vmatprep.subr.mxu0 0.0
    %3718 = vmatpush2.msra.mxu0 0.0
    %3719 = vmatprep.subr.mxu0 0.0
    %3720 = vmatpush2.msra.mxu0 0.0
    %3721 = vmatprep.mubr.f32.mxu0 0.0
    %3722 = vmatmul.mubr.f32.gmra.mxu0 %v3585
    %v3723 = vpop.f32.mrf.mxu0
    %v3724 = vadd.f32 0.0, %v3723
    %v3725 = vpop.f32.mrf.mxu0
    %3726 = vdwg.mxu0
    %3727 = vmatprep.subr.mxu0 0.0
    %3728 = vmatpush1.msra.mxu0 0.0
    %3729 = vmatprep.subr.mxu0 0.0
    %3730 = vmatpush1.msra.mxu0 0.0
    %3731 = vmatprep.subr.mxu0 0.0
    %3732 = vmatpush1.msra.mxu0 0.0
    %3733 = vmatprep.subr.mxu0 0.0
    %3734 = vmatpush1.msra.mxu0 0.0
    %3735 = vmatprep.subr.mxu0 0.0
    %3736 = vmatpush1.msra.mxu0 0.0
    %3737 = vmatprep.subr.mxu0 0.0
    %3738 = vmatpush1.msra.mxu0 0.0
    %3739 = vmatprep.subr.mxu0 0.0
    %3740 = vmatpush1.msra.mxu0 0.0
    %3741 = vmatprep.subr.mxu0 0.0
    %3742 = vmatpush1.msra.mxu0 0.0
    %3743 = vmatprep.subr.mxu0 0.0
    %3744 = vmatpush1.msra.mxu0 0.0
    %3745 = vmatprep.subr.mxu0 0.0
    %3746 = vmatpush1.msra.mxu0 0.0
    %3747 = vmatprep.subr.mxu0 0.0
    %3748 = vmatpush1.msra.mxu0 0.0
    %3749 = vmatprep.subr.mxu0 0.0
    %3750 = vmatpush1.msra.mxu0 0.0
    %3751 = vmatprep.subr.mxu0 0.0
    %3752 = vmatpush1.msra.mxu0 %v644
    %3753 = vmatprep.subr.mxu0 0.0
    %3754 = vmatpush1.msra.mxu0 %v482
    %3755 = vmatprep.subr.mxu0 0.0
    %3756 = vmatpush1.msra.mxu0 %v481
    %3757 = vmatprep.subr.mxu0 0.0
    %3758 = vmatpush1.msra.mxu0 %v480
    %3759 = vmatprep.subr.mxu0 0.0
    %3760 = vmatpush2.msra.mxu0 0.0
    %3761 = vmatprep.subr.mxu0 0.0
    %3762 = vmatpush2.msra.mxu0 0.0
    %3763 = vmatprep.subr.mxu0 0.0
    %3764 = vmatpush2.msra.mxu0 0.0
    %3765 = vmatprep.subr.mxu0 0.0
    %3766 = vmatpush2.msra.mxu0 0.0
    %3767 = vmatprep.subr.mxu0 0.0
    %3768 = vmatpush2.msra.mxu0 0.0
    %3769 = vmatprep.subr.mxu0 0.0
    %3770 = vmatpush2.msra.mxu0 0.0
    %3771 = vmatprep.subr.mxu0 0.0
    %3772 = vmatpush2.msra.mxu0 0.0
    %3773 = vmatprep.subr.mxu0 0.0
    %3774 = vmatpush2.msra.mxu0 0.0
    %3775 = vmatprep.subr.mxu0 0.0
    %3776 = vmatpush2.msra.mxu0 0.0
    %3777 = vmatprep.subr.mxu0 0.0
    %3778 = vmatpush2.msra.mxu0 0.0
    %3779 = vmatprep.subr.mxu0 0.0
    %3780 = vmatpush2.msra.mxu0 0.0
    %3781 = vmatprep.subr.mxu0 0.0
    %3782 = vmatpush2.msra.mxu0 0.0
    %3783 = vmatprep.subr.mxu0 0.0
    %3784 = vmatpush2.msra.mxu0 0.0
    %3785 = vmatprep.subr.mxu0 0.0
    %3786 = vmatpush2.msra.mxu0 0.0
    %3787 = vmatprep.subr.mxu0 0.0
    %3788 = vmatpush2.msra.mxu0 0.0
    %3789 = vmatprep.subr.mxu0 0.0
    %3790 = vmatpush2.msra.mxu0 0.0
    %3791 = vmatprep.mubr.f32.mxu0 0.0
    %3792 = vmatmul.mubr.f32.gmra.mxu0 %v3585
    %v3793 = vpop.f32.mrf.mxu0
    %v3794 = vadd.f32 %v489, %v3793
    %v3795 = vpop.f32.mrf.mxu0
    %3796 = vdwg.mxu0
    %v3797 = vadd.f32 %v3581, %v3654
    %v3798 = vxor.u32 %v3797, 2147483648
    %v3799 = vmul.f32 %v3798, 1.442695
    %v3800 = vpow.pop %v3799
    %v3801 = vadd.f32 %v3800, 1.0
    %v3802 = vrcp.pop %v3801
    %v3803 = vmul.f32 1.0, %v3802
    %v3804 = vadd.f32 %v3582, %v3724
    %v3805 = vxor.u32 %v3804, 2147483648
    %v3806 = vmul.f32 %v3805, 1.442695
    %v3807 = vpow.pop %v3806
    %v3808 = vadd.f32 %v3807, 1.0
    %v3809 = vrcp.pop %v3808
    %v3810 = vmul.f32 1.0, %v3809
    %v3811 = vmul.f32 %v3803, %v3794
    %v3812 = vadd.f32 %v3583, %v3811
    %v3813 = vtanh.pop %v3812
    %v3814 = vsub.f32 1.0, %v3810
    %v3815 = vmul.f32 %v3814, %v3813
    %v3816 = vmul.f32 %v3810, %v3580
    %v3817 = vadd.f32 %v3815, %v3816
    %v3818 = vld [vmem:[#allocation2 + $0x1c] sm:$0x3]
    %v3819 = vld [vmem:[%s324 + $0x1c] sm:$0x3]
    %v3820 = vld [vmem:[%s460 + $0x1c] sm:$0x3]
    %v3822 = vsel %vm47, %v3817, 0
    %3824 = vmatprep.subr.mxu0 0.0
    %3825 = vmatpush1.msra.mxu0 0.0
    %3826 = vmatprep.subr.mxu0 0.0
    %3827 = vmatpush1.msra.mxu0 0.0
    %3828 = vmatprep.subr.mxu0 0.0
    %3829 = vmatpush1.msra.mxu0 0.0
    %3830 = vmatprep.subr.mxu0 0.0
    %3831 = vmatpush1.msra.mxu0 0.0
    %3832 = vmatprep.subr.mxu0 0.0
    %3833 = vmatpush1.msra.mxu0 0.0
    %3834 = vmatprep.subr.mxu0 0.0
    %3835 = vmatpush1.msra.mxu0 0.0
    %3836 = vmatprep.subr.mxu0 0.0
    %3837 = vmatpush1.msra.mxu0 0.0
    %3838 = vmatprep.subr.mxu0 0.0
    %3839 = vmatpush1.msra.mxu0 0.0
    %3840 = vmatprep.subr.mxu0 0.0
    %3841 = vmatpush1.msra.mxu0 0.0
    %3842 = vmatprep.subr.mxu0 0.0
    %3843 = vmatpush1.msra.mxu0 0.0
    %3844 = vmatprep.subr.mxu0 0.0
    %3845 = vmatpush1.msra.mxu0 0.0
    %3846 = vmatprep.subr.mxu0 0.0
    %3847 = vmatpush1.msra.mxu0 0.0
    %3848 = vmatprep.subr.mxu0 0.0
    %3849 = vmatpush1.msra.mxu0 %v498
    %3850 = vmatprep.subr.mxu0 0.0
    %3851 = vmatpush1.msra.mxu0 %v472
    %3852 = vmatprep.subr.mxu0 0.0
    %3853 = vmatpush1.msra.mxu0 %v471
    %3854 = vmatprep.subr.mxu0 0.0
    %3855 = vmatpush1.msra.mxu0 %v470
    %3856 = vmatprep.subr.mxu0 0.0
    %3857 = vmatpush2.msra.mxu0 0.0
    %3858 = vmatprep.subr.mxu0 0.0
    %3859 = vmatpush2.msra.mxu0 0.0
    %3860 = vmatprep.subr.mxu0 0.0
    %3861 = vmatpush2.msra.mxu0 0.0
    %3862 = vmatprep.subr.mxu0 0.0
    %3863 = vmatpush2.msra.mxu0 0.0
    %3864 = vmatprep.subr.mxu0 0.0
    %3865 = vmatpush2.msra.mxu0 0.0
    %3866 = vmatprep.subr.mxu0 0.0
    %3867 = vmatpush2.msra.mxu0 0.0
    %3868 = vmatprep.subr.mxu0 0.0
    %3869 = vmatpush2.msra.mxu0 0.0
    %3870 = vmatprep.subr.mxu0 0.0
    %3871 = vmatpush2.msra.mxu0 0.0
    %3872 = vmatprep.subr.mxu0 0.0
    %3873 = vmatpush2.msra.mxu0 0.0
    %3874 = vmatprep.subr.mxu0 0.0
    %3875 = vmatpush2.msra.mxu0 0.0
    %3876 = vmatprep.subr.mxu0 0.0
    %3877 = vmatpush2.msra.mxu0 0.0
    %3878 = vmatprep.subr.mxu0 0.0
    %3879 = vmatpush2.msra.mxu0 0.0
    %3880 = vmatprep.subr.mxu0 0.0
    %3881 = vmatpush2.msra.mxu0 0.0
    %3882 = vmatprep.subr.mxu0 0.0
    %3883 = vmatpush2.msra.mxu0 0.0
    %3884 = vmatprep.subr.mxu0 0.0
    %3885 = vmatpush2.msra.mxu0 0.0
    %3886 = vmatprep.subr.mxu0 0.0
    %3887 = vmatpush2.msra.mxu0 0.0
    %3888 = vmatprep.mubr.f32.mxu0 0.0
    %3889 = vmatmul.mubr.f32.gmra.mxu0 %v3822
    %v3890 = vpop.f32.mrf.mxu0
    %v3891 = vadd.f32 0.0, %v3890
    %v3892 = vpop.f32.mrf.mxu0
    %3893 = vdwg.mxu0
    %3894 = vmatprep.subr.mxu0 0.0
    %3895 = vmatpush1.msra.mxu0 0.0
    %3896 = vmatprep.subr.mxu0 0.0
    %3897 = vmatpush1.msra.mxu0 0.0
    %3898 = vmatprep.subr.mxu0 0.0
    %3899 = vmatpush1.msra.mxu0 0.0
    %3900 = vmatprep.subr.mxu0 0.0
    %3901 = vmatpush1.msra.mxu0 0.0
    %3902 = vmatprep.subr.mxu0 0.0
    %3903 = vmatpush1.msra.mxu0 0.0
    %3904 = vmatprep.subr.mxu0 0.0
    %3905 = vmatpush1.msra.mxu0 0.0
    %3906 = vmatprep.subr.mxu0 0.0
    %3907 = vmatpush1.msra.mxu0 0.0
    %3908 = vmatprep.subr.mxu0 0.0
    %3909 = vmatpush1.msra.mxu0 0.0
    %3910 = vmatprep.subr.mxu0 0.0
    %3911 = vmatpush1.msra.mxu0 0.0
    %3912 = vmatprep.subr.mxu0 0.0
    %3913 = vmatpush1.msra.mxu0 0.0
    %3914 = vmatprep.subr.mxu0 0.0
    %3915 = vmatpush1.msra.mxu0 0.0
    %3916 = vmatprep.subr.mxu0 0.0
    %3917 = vmatpush1.msra.mxu0 0.0
    %3918 = vmatprep.subr.mxu0 0.0
    %3919 = vmatpush1.msra.mxu0 %v571
    %3920 = vmatprep.subr.mxu0 0.0
    %3921 = vmatpush1.msra.mxu0 %v477
    %3922 = vmatprep.subr.mxu0 0.0
    %3923 = vmatpush1.msra.mxu0 %v476
    %3924 = vmatprep.subr.mxu0 0.0
    %3925 = vmatpush1.msra.mxu0 %v475
    %3926 = vmatprep.subr.mxu0 0.0
    %3927 = vmatpush2.msra.mxu0 0.0
    %3928 = vmatprep.subr.mxu0 0.0
    %3929 = vmatpush2.msra.mxu0 0.0
    %3930 = vmatprep.subr.mxu0 0.0
    %3931 = vmatpush2.msra.mxu0 0.0
    %3932 = vmatprep.subr.mxu0 0.0
    %3933 = vmatpush2.msra.mxu0 0.0
    %3934 = vmatprep.subr.mxu0 0.0
    %3935 = vmatpush2.msra.mxu0 0.0
    %3936 = vmatprep.subr.mxu0 0.0
    %3937 = vmatpush2.msra.mxu0 0.0
    %3938 = vmatprep.subr.mxu0 0.0
    %3939 = vmatpush2.msra.mxu0 0.0
    %3940 = vmatprep.subr.mxu0 0.0
    %3941 = vmatpush2.msra.mxu0 0.0
    %3942 = vmatprep.subr.mxu0 0.0
    %3943 = vmatpush2.msra.mxu0 0.0
    %3944 = vmatprep.subr.mxu0 0.0
    %3945 = vmatpush2.msra.mxu0 0.0
    %3946 = vmatprep.subr.mxu0 0.0
    %3947 = vmatpush2.msra.mxu0 0.0
    %3948 = vmatprep.subr.mxu0 0.0
    %3949 = vmatpush2.msra.mxu0 0.0
    %3950 = vmatprep.subr.mxu0 0.0
    %3951 = vmatpush2.msra.mxu0 0.0
    %3952 = vmatprep.subr.mxu0 0.0
    %3953 = vmatpush2.msra.mxu0 0.0
    %3954 = vmatprep.subr.mxu0 0.0
    %3955 = vmatpush2.msra.mxu0 0.0
    %3956 = vmatprep.subr.mxu0 0.0
    %3957 = vmatpush2.msra.mxu0 0.0
    %3958 = vmatprep.mubr.f32.mxu0 0.0
    %3959 = vmatmul.mubr.f32.gmra.mxu0 %v3822
    %v3960 = vpop.f32.mrf.mxu0
    %v3961 = vadd.f32 0.0, %v3960
    %v3962 = vpop.f32.mrf.mxu0
    %3963 = vdwg.mxu0
    %3964 = vmatprep.subr.mxu0 0.0
    %3965 = vmatpush1.msra.mxu0 0.0
    %3966 = vmatprep.subr.mxu0 0.0
    %3967 = vmatpush1.msra.mxu0 0.0
    %3968 = vmatprep.subr.mxu0 0.0
    %3969 = vmatpush1.msra.mxu0 0.0
    %3970 = vmatprep.subr.mxu0 0.0
    %3971 = vmatpush1.msra.mxu0 0.0
    %3972 = vmatprep.subr.mxu0 0.0
    %3973 = vmatpush1.msra.mxu0 0.0
    %3974 = vmatprep.subr.mxu0 0.0
    %3975 = vmatpush1.msra.mxu0 0.0
    %3976 = vmatprep.subr.mxu0 0.0
    %3977 = vmatpush1.msra.mxu0 0.0
    %3978 = vmatprep.subr.mxu0 0.0
    %3979 = vmatpush1.msra.mxu0 0.0
    %3980 = vmatprep.subr.mxu0 0.0
    %3981 = vmatpush1.msra.mxu0 0.0
    %3982 = vmatprep.subr.mxu0 0.0
    %3983 = vmatpush1.msra.mxu0 0.0
    %3984 = vmatprep.subr.mxu0 0.0
    %3985 = vmatpush1.msra.mxu0 0.0
    %3986 = vmatprep.subr.mxu0 0.0
    %3987 = vmatpush1.msra.mxu0 0.0
    %3988 = vmatprep.subr.mxu0 0.0
    %3989 = vmatpush1.msra.mxu0 %v644
    %3990 = vmatprep.subr.mxu0 0.0
    %3991 = vmatpush1.msra.mxu0 %v482
    %3992 = vmatprep.subr.mxu0 0.0
    %3993 = vmatpush1.msra.mxu0 %v481
    %3994 = vmatprep.subr.mxu0 0.0
    %3995 = vmatpush1.msra.mxu0 %v480
    %3996 = vmatprep.subr.mxu0 0.0
    %3997 = vmatpush2.msra.mxu0 0.0
    %3998 = vmatprep.subr.mxu0 0.0
    %3999 = vmatpush2.msra.mxu0 0.0
    %4000 = vmatprep.subr.mxu0 0.0
    %4001 = vmatpush2.msra.mxu0 0.0
    %4002 = vmatprep.subr.mxu0 0.0
    %4003 = vmatpush2.msra.mxu0 0.0
    %4004 = vmatprep.subr.mxu0 0.0
    %4005 = vmatpush2.msra.mxu0 0.0
    %4006 = vmatprep.subr.mxu0 0.0
    %4007 = vmatpush2.msra.mxu0 0.0
    %4008 = vmatprep.subr.mxu0 0.0
    %4009 = vmatpush2.msra.mxu0 0.0
    %4010 = vmatprep.subr.mxu0 0.0
    %4011 = vmatpush2.msra.mxu0 0.0
    %4012 = vmatprep.subr.mxu0 0.0
    %4013 = vmatpush2.msra.mxu0 0.0
    %4014 = vmatprep.subr.mxu0 0.0
    %4015 = vmatpush2.msra.mxu0 0.0
    %4016 = vmatprep.subr.mxu0 0.0
    %4017 = vmatpush2.msra.mxu0 0.0
    %4018 = vmatprep.subr.mxu0 0.0
    %4019 = vmatpush2.msra.mxu0 0.0
    %4020 = vmatprep.subr.mxu0 0.0
    %4021 = vmatpush2.msra.mxu0 0.0
    %4022 = vmatprep.subr.mxu0 0.0
    %4023 = vmatpush2.msra.mxu0 0.0
    %4024 = vmatprep.subr.mxu0 0.0
    %4025 = vmatpush2.msra.mxu0 0.0
    %4026 = vmatprep.subr.mxu0 0.0
    %4027 = vmatpush2.msra.mxu0 0.0
    %4028 = vmatprep.mubr.f32.mxu0 0.0
    %4029 = vmatmul.mubr.f32.gmra.mxu0 %v3822
    %v4030 = vpop.f32.mrf.mxu0
    %v4031 = vadd.f32 %v489, %v4030
    %v4032 = vpop.f32.mrf.mxu0
    %4033 = vdwg.mxu0
    %v4034 = vadd.f32 %v3818, %v3891
    %v4035 = vxor.u32 %v4034, 2147483648
    %v4036 = vmul.f32 %v4035, 1.442695
    %v4037 = vpow.pop %v4036
    %v4038 = vadd.f32 %v4037, 1.0
    %v4039 = vrcp.pop %v4038
    %v4040 = vmul.f32 1.0, %v4039
    %v4041 = vadd.f32 %v3819, %v3961
    %v4042 = vxor.u32 %v4041, 2147483648
    %v4043 = vmul.f32 %v4042, 1.442695
    %v4044 = vpow.pop %v4043
    %v4045 = vadd.f32 %v4044, 1.0
    %v4046 = vrcp.pop %v4045
    %v4047 = vmul.f32 1.0, %v4046
    %v4048 = vmul.f32 %v4040, %v4031
    %v4049 = vadd.f32 %v3820, %v4048
    %v4050 = vtanh.pop %v4049
    %v4051 = vsub.f32 1.0, %v4047
    %v4052 = vmul.f32 %v4051, %v4050
    %v4053 = vmul.f32 %v4047, %v3817
    %v4054 = vadd.f32 %v4052, %v4053
    %v4055 = vld [vmem:[#allocation2 + $0x1e] sm:$0x3]
    %v4056 = vld [vmem:[%s324 + $0x1e] sm:$0x3]
    %v4057 = vld [vmem:[%s460 + $0x1e] sm:$0x3]
    %v4059 = vsel %vm47, %v4054, 0
    %4061 = vmatprep.subr.mxu0 0.0
    %4062 = vmatpush1.msra.mxu0 0.0
    %4063 = vmatprep.subr.mxu0 0.0
    %4064 = vmatpush1.msra.mxu0 0.0
    %4065 = vmatprep.subr.mxu0 0.0
    %4066 = vmatpush1.msra.mxu0 0.0
    %4067 = vmatprep.subr.mxu0 0.0
    %4068 = vmatpush1.msra.mxu0 0.0
    %4069 = vmatprep.subr.mxu0 0.0
    %4070 = vmatpush1.msra.mxu0 0.0
    %4071 = vmatprep.subr.mxu0 0.0
    %4072 = vmatpush1.msra.mxu0 0.0
    %4073 = vmatprep.subr.mxu0 0.0
    %4074 = vmatpush1.msra.mxu0 0.0
    %4075 = vmatprep.subr.mxu0 0.0
    %4076 = vmatpush1.msra.mxu0 0.0
    %4077 = vmatprep.subr.mxu0 0.0
    %4078 = vmatpush1.msra.mxu0 0.0
    %4079 = vmatprep.subr.mxu0 0.0
    %4080 = vmatpush1.msra.mxu0 0.0
    %4081 = vmatprep.subr.mxu0 0.0
    %4082 = vmatpush1.msra.mxu0 0.0
    %4083 = vmatprep.subr.mxu0 0.0
    %4084 = vmatpush1.msra.mxu0 0.0
    %4085 = vmatprep.subr.mxu0 0.0
    %4086 = vmatpush1.msra.mxu0 %v498
    %4087 = vmatprep.subr.mxu0 0.0
    %4088 = vmatpush1.msra.mxu0 %v472
    %4089 = vmatprep.subr.mxu0 0.0
    %4090 = vmatpush1.msra.mxu0 %v471
    %4091 = vmatprep.subr.mxu0 0.0
    %4092 = vmatpush1.msra.mxu0 %v470
    %4093 = vmatprep.subr.mxu0 0.0
    %4094 = vmatpush2.msra.mxu0 0.0
    %4095 = vmatprep.subr.mxu0 0.0
    %4096 = vmatpush2.msra.mxu0 0.0
    %4097 = vmatprep.subr.mxu0 0.0
    %4098 = vmatpush2.msra.mxu0 0.0
    %4099 = vmatprep.subr.mxu0 0.0
    %4100 = vmatpush2.msra.mxu0 0.0
    %4101 = vmatprep.subr.mxu0 0.0
    %4102 = vmatpush2.msra.mxu0 0.0
    %4103 = vmatprep.subr.mxu0 0.0
    %4104 = vmatpush2.msra.mxu0 0.0
    %4105 = vmatprep.subr.mxu0 0.0
    %4106 = vmatpush2.msra.mxu0 0.0
    %4107 = vmatprep.subr.mxu0 0.0
    %4108 = vmatpush2.msra.mxu0 0.0
    %4109 = vmatprep.subr.mxu0 0.0
    %4110 = vmatpush2.msra.mxu0 0.0
    %4111 = vmatprep.subr.mxu0 0.0
    %4112 = vmatpush2.msra.mxu0 0.0
    %4113 = vmatprep.subr.mxu0 0.0
    %4114 = vmatpush2.msra.mxu0 0.0
    %4115 = vmatprep.subr.mxu0 0.0
    %4116 = vmatpush2.msra.mxu0 0.0
    %4117 = vmatprep.subr.mxu0 0.0
    %4118 = vmatpush2.msra.mxu0 0.0
    %4119 = vmatprep.subr.mxu0 0.0
    %4120 = vmatpush2.msra.mxu0 0.0
    %4121 = vmatprep.subr.mxu0 0.0
    %4122 = vmatpush2.msra.mxu0 0.0
    %4123 = vmatprep.subr.mxu0 0.0
    %4124 = vmatpush2.msra.mxu0 0.0
    %4125 = vmatprep.mubr.f32.mxu0 0.0
    %4126 = vmatmul.mubr.f32.gmra.mxu0 %v4059
    %v4127 = vpop.f32.mrf.mxu0
    %v4128 = vadd.f32 0.0, %v4127
    %v4129 = vpop.f32.mrf.mxu0
    %4130 = vdwg.mxu0
    %4131 = vmatprep.subr.mxu0 0.0
    %4132 = vmatpush1.msra.mxu0 0.0
    %4133 = vmatprep.subr.mxu0 0.0
    %4134 = vmatpush1.msra.mxu0 0.0
    %4135 = vmatprep.subr.mxu0 0.0
    %4136 = vmatpush1.msra.mxu0 0.0
    %4137 = vmatprep.subr.mxu0 0.0
    %4138 = vmatpush1.msra.mxu0 0.0
    %4139 = vmatprep.subr.mxu0 0.0
    %4140 = vmatpush1.msra.mxu0 0.0
    %4141 = vmatprep.subr.mxu0 0.0
    %4142 = vmatpush1.msra.mxu0 0.0
    %4143 = vmatprep.subr.mxu0 0.0
    %4144 = vmatpush1.msra.mxu0 0.0
    %4145 = vmatprep.subr.mxu0 0.0
    %4146 = vmatpush1.msra.mxu0 0.0
    %4147 = vmatprep.subr.mxu0 0.0
    %4148 = vmatpush1.msra.mxu0 0.0
    %4149 = vmatprep.subr.mxu0 0.0
    %4150 = vmatpush1.msra.mxu0 0.0
    %4151 = vmatprep.subr.mxu0 0.0
    %4152 = vmatpush1.msra.mxu0 0.0
    %4153 = vmatprep.subr.mxu0 0.0
    %4154 = vmatpush1.msra.mxu0 0.0
    %4155 = vmatprep.subr.mxu0 0.0
    %4156 = vmatpush1.msra.mxu0 %v571
    %4157 = vmatprep.subr.mxu0 0.0
    %4158 = vmatpush1.msra.mxu0 %v477
    %4159 = vmatprep.subr.mxu0 0.0
    %4160 = vmatpush1.msra.mxu0 %v476
    %4161 = vmatprep.subr.mxu0 0.0
    %4162 = vmatpush1.msra.mxu0 %v475
    %4163 = vmatprep.subr.mxu0 0.0
    %4164 = vmatpush2.msra.mxu0 0.0
    %4165 = vmatprep.subr.mxu0 0.0
    %4166 = vmatpush2.msra.mxu0 0.0
    %4167 = vmatprep.subr.mxu0 0.0
    %4168 = vmatpush2.msra.mxu0 0.0
    %4169 = vmatprep.subr.mxu0 0.0
    %4170 = vmatpush2.msra.mxu0 0.0
    %4171 = vmatprep.subr.mxu0 0.0
    %4172 = vmatpush2.msra.mxu0 0.0
    %4173 = vmatprep.subr.mxu0 0.0
    %4174 = vmatpush2.msra.mxu0 0.0
    %4175 = vmatprep.subr.mxu0 0.0
    %4176 = vmatpush2.msra.mxu0 0.0
    %4177 = vmatprep.subr.mxu0 0.0
    %4178 = vmatpush2.msra.mxu0 0.0
    %4179 = vmatprep.subr.mxu0 0.0
    %4180 = vmatpush2.msra.mxu0 0.0
    %4181 = vmatprep.subr.mxu0 0.0
    %4182 = vmatpush2.msra.mxu0 0.0
    %4183 = vmatprep.subr.mxu0 0.0
    %4184 = vmatpush2.msra.mxu0 0.0
    %4185 = vmatprep.subr.mxu0 0.0
    %4186 = vmatpush2.msra.mxu0 0.0
    %4187 = vmatprep.subr.mxu0 0.0
    %4188 = vmatpush2.msra.mxu0 0.0
    %4189 = vmatprep.subr.mxu0 0.0
    %4190 = vmatpush2.msra.mxu0 0.0
    %4191 = vmatprep.subr.mxu0 0.0
    %4192 = vmatpush2.msra.mxu0 0.0
    %4193 = vmatprep.subr.mxu0 0.0
    %4194 = vmatpush2.msra.mxu0 0.0
    %4195 = vmatprep.mubr.f32.mxu0 0.0
    %4196 = vmatmul.mubr.f32.gmra.mxu0 %v4059
    %v4197 = vpop.f32.mrf.mxu0
    %v4198 = vadd.f32 0.0, %v4197
    %v4199 = vpop.f32.mrf.mxu0
    %4200 = vdwg.mxu0
    %4201 = vmatprep.subr.mxu0 0.0
    %4202 = vmatpush1.msra.mxu0 0.0
    %4203 = vmatprep.subr.mxu0 0.0
    %4204 = vmatpush1.msra.mxu0 0.0
    %4205 = vmatprep.subr.mxu0 0.0
    %4206 = vmatpush1.msra.mxu0 0.0
    %4207 = vmatprep.subr.mxu0 0.0
    %4208 = vmatpush1.msra.mxu0 0.0
    %4209 = vmatprep.subr.mxu0 0.0
    %4210 = vmatpush1.msra.mxu0 0.0
    %4211 = vmatprep.subr.mxu0 0.0
    %4212 = vmatpush1.msra.mxu0 0.0
    %4213 = vmatprep.subr.mxu0 0.0
    %4214 = vmatpush1.msra.mxu0 0.0
    %4215 = vmatprep.subr.mxu0 0.0
    %4216 = vmatpush1.msra.mxu0 0.0
    %4217 = vmatprep.subr.mxu0 0.0
    %4218 = vmatpush1.msra.mxu0 0.0
    %4219 = vmatprep.subr.mxu0 0.0
    %4220 = vmatpush1.msra.mxu0 0.0
    %4221 = vmatprep.subr.mxu0 0.0
    %4222 = vmatpush1.msra.mxu0 0.0
    %4223 = vmatprep.subr.mxu0 0.0
    %4224 = vmatpush1.msra.mxu0 0.0
    %4225 = vmatprep.subr.mxu0 0.0
    %4226 = vmatpush1.msra.mxu0 %v644
    %4227 = vmatprep.subr.mxu0 0.0
    %4228 = vmatpush1.msra.mxu0 %v482
    %4229 = vmatprep.subr.mxu0 0.0
    %4230 = vmatpush1.msra.mxu0 %v481
    %4231 = vmatprep.subr.mxu0 0.0
    %4232 = vmatpush1.msra.mxu0 %v480
    %4233 = vmatprep.subr.mxu0 0.0
    %4234 = vmatpush2.msra.mxu0 0.0
    %4235 = vmatprep.subr.mxu0 0.0
    %4236 = vmatpush2.msra.mxu0 0.0
    %4237 = vmatprep.subr.mxu0 0.0
    %4238 = vmatpush2.msra.mxu0 0.0
    %4239 = vmatprep.subr.mxu0 0.0
    %4240 = vmatpush2.msra.mxu0 0.0
    %4241 = vmatprep.subr.mxu0 0.0
    %4242 = vmatpush2.msra.mxu0 0.0
    %4243 = vmatprep.subr.mxu0 0.0
    %4244 = vmatpush2.msra.mxu0 0.0
    %4245 = vmatprep.subr.mxu0 0.0
    %4246 = vmatpush2.msra.mxu0 0.0
    %4247 = vmatprep.subr.mxu0 0.0
    %4248 = vmatpush2.msra.mxu0 0.0
    %4249 = vmatprep.subr.mxu0 0.0
    %4250 = vmatpush2.msra.mxu0 0.0
    %4251 = vmatprep.subr.mxu0 0.0
    %4252 = vmatpush2.msra.mxu0 0.0
    %4253 = vmatprep.subr.mxu0 0.0
    %4254 = vmatpush2.msra.mxu0 0.0
    %4255 = vmatprep.subr.mxu0 0.0
    %4256 = vmatpush2.msra.mxu0 0.0
    %4257 = vmatprep.subr.mxu0 0.0
    %4258 = vmatpush2.msra.mxu0 0.0
    %4259 = vmatprep.subr.mxu0 0.0
    %4260 = vmatpush2.msra.mxu0 0.0
    %4261 = vmatprep.subr.mxu0 0.0
    %4262 = vmatpush2.msra.mxu0 0.0
    %4263 = vmatprep.subr.mxu0 0.0
    %4264 = vmatpush2.msra.mxu0 0.0
    %4265 = vmatprep.mubr.f32.mxu0 0.0
    %4266 = vmatmul.mubr.f32.gmra.mxu0 %v4059
    %v4267 = vpop.f32.mrf.mxu0
    %v4268 = vadd.f32 %v489, %v4267
    %v4269 = vpop.f32.mrf.mxu0
    %4270 = vdwg.mxu0
    %v4271 = vadd.f32 %v4055, %v4128
    %v4272 = vxor.u32 %v4271, 2147483648
    %v4273 = vmul.f32 %v4272, 1.442695
    %v4274 = vpow.pop %v4273
    %v4275 = vadd.f32 %v4274, 1.0
    %v4276 = vrcp.pop %v4275
    %v4277 = vmul.f32 1.0, %v4276
    %v4278 = vadd.f32 %v4056, %v4198
    %v4279 = vxor.u32 %v4278, 2147483648
    %v4280 = vmul.f32 %v4279, 1.442695
    %v4281 = vpow.pop %v4280
    %v4282 = vadd.f32 %v4281, 1.0
    %v4283 = vrcp.pop %v4282
    %v4284 = vmul.f32 1.0, %v4283
    %v4285 = vmul.f32 %v4277, %v4268
    %v4286 = vadd.f32 %v4057, %v4285
    %v4287 = vtanh.pop %v4286
    %v4288 = vsub.f32 1.0, %v4284
    %v4289 = vmul.f32 %v4288, %v4287
    %v4290 = vmul.f32 %v4284, %v4054
    %v4291 = vadd.f32 %v4289, %v4290
    %v4292 = vld [vmem:[#allocation2 + $0x20] sm:$0x3]
    %v4293 = vld [vmem:[%s324 + $0x20] sm:$0x3]
    %v4294 = vld [vmem:[%s460 + $0x20] sm:$0x3]
    %v4296 = vsel %vm47, %v4291, 0
    %4298 = vmatprep.subr.mxu0 0.0
    %4299 = vmatpush1.msra.mxu0 0.0
    %4300 = vmatprep.subr.mxu0 0.0
    %4301 = vmatpush1.msra.mxu0 0.0
    %4302 = vmatprep.subr.mxu0 0.0
    %4303 = vmatpush1.msra.mxu0 0.0
    %4304 = vmatprep.subr.mxu0 0.0
    %4305 = vmatpush1.msra.mxu0 0.0
    %4306 = vmatprep.subr.mxu0 0.0
    %4307 = vmatpush1.msra.mxu0 0.0
    %4308 = vmatprep.subr.mxu0 0.0
    %4309 = vmatpush1.msra.mxu0 0.0
    %4310 = vmatprep.subr.mxu0 0.0
    %4311 = vmatpush1.msra.mxu0 0.0
    %4312 = vmatprep.subr.mxu0 0.0
    %4313 = vmatpush1.msra.mxu0 0.0
    %4314 = vmatprep.subr.mxu0 0.0
    %4315 = vmatpush1.msra.mxu0 0.0
    %4316 = vmatprep.subr.mxu0 0.0
    %4317 = vmatpush1.msra.mxu0 0.0
    %4318 = vmatprep.subr.mxu0 0.0
    %4319 = vmatpush1.msra.mxu0 0.0
    %4320 = vmatprep.subr.mxu0 0.0
    %4321 = vmatpush1.msra.mxu0 0.0
    %4322 = vmatprep.subr.mxu0 0.0
    %4323 = vmatpush1.msra.mxu0 %v498
    %4324 = vmatprep.subr.mxu0 0.0
    %4325 = vmatpush1.msra.mxu0 %v472
    %4326 = vmatprep.subr.mxu0 0.0
    %4327 = vmatpush1.msra.mxu0 %v471
    %4328 = vmatprep.subr.mxu0 0.0
    %4329 = vmatpush1.msra.mxu0 %v470
    %4330 = vmatprep.subr.mxu0 0.0
    %4331 = vmatpush2.msra.mxu0 0.0
    %4332 = vmatprep.subr.mxu0 0.0
    %4333 = vmatpush2.msra.mxu0 0.0
    %4334 = vmatprep.subr.mxu0 0.0
    %4335 = vmatpush2.msra.mxu0 0.0
    %4336 = vmatprep.subr.mxu0 0.0
    %4337 = vmatpush2.msra.mxu0 0.0
    %4338 = vmatprep.subr.mxu0 0.0
    %4339 = vmatpush2.msra.mxu0 0.0
    %4340 = vmatprep.subr.mxu0 0.0
    %4341 = vmatpush2.msra.mxu0 0.0
    %4342 = vmatprep.subr.mxu0 0.0
    %4343 = vmatpush2.msra.mxu0 0.0
    %4344 = vmatprep.subr.mxu0 0.0
    %4345 = vmatpush2.msra.mxu0 0.0
    %4346 = vmatprep.subr.mxu0 0.0
    %4347 = vmatpush2.msra.mxu0 0.0
    %4348 = vmatprep.subr.mxu0 0.0
    %4349 = vmatpush2.msra.mxu0 0.0
    %4350 = vmatprep.subr.mxu0 0.0
    %4351 = vmatpush2.msra.mxu0 0.0
    %4352 = vmatprep.subr.mxu0 0.0
    %4353 = vmatpush2.msra.mxu0 0.0
    %4354 = vmatprep.subr.mxu0 0.0
    %4355 = vmatpush2.msra.mxu0 0.0
    %4356 = vmatprep.subr.mxu0 0.0
    %4357 = vmatpush2.msra.mxu0 0.0
    %4358 = vmatprep.subr.mxu0 0.0
    %4359 = vmatpush2.msra.mxu0 0.0
    %4360 = vmatprep.subr.mxu0 0.0
    %4361 = vmatpush2.msra.mxu0 0.0
    %4362 = vmatprep.mubr.f32.mxu0 0.0
    %4363 = vmatmul.mubr.f32.gmra.mxu0 %v4296
    %v4364 = vpop.f32.mrf.mxu0
    %v4365 = vadd.f32 0.0, %v4364
    %v4366 = vpop.f32.mrf.mxu0
    %4367 = vdwg.mxu0
    %4368 = vmatprep.subr.mxu0 0.0
    %4369 = vmatpush1.msra.mxu0 0.0
    %4370 = vmatprep.subr.mxu0 0.0
    %4371 = vmatpush1.msra.mxu0 0.0
    %4372 = vmatprep.subr.mxu0 0.0
    %4373 = vmatpush1.msra.mxu0 0.0
    %4374 = vmatprep.subr.mxu0 0.0
    %4375 = vmatpush1.msra.mxu0 0.0
    %4376 = vmatprep.subr.mxu0 0.0
    %4377 = vmatpush1.msra.mxu0 0.0
    %4378 = vmatprep.subr.mxu0 0.0
    %4379 = vmatpush1.msra.mxu0 0.0
    %4380 = vmatprep.subr.mxu0 0.0
    %4381 = vmatpush1.msra.mxu0 0.0
    %4382 = vmatprep.subr.mxu0 0.0
    %4383 = vmatpush1.msra.mxu0 0.0
    %4384 = vmatprep.subr.mxu0 0.0
    %4385 = vmatpush1.msra.mxu0 0.0
    %4386 = vmatprep.subr.mxu0 0.0
    %4387 = vmatpush1.msra.mxu0 0.0
    %4388 = vmatprep.subr.mxu0 0.0
    %4389 = vmatpush1.msra.mxu0 0.0
    %4390 = vmatprep.subr.mxu0 0.0
    %4391 = vmatpush1.msra.mxu0 0.0
    %4392 = vmatprep.subr.mxu0 0.0
    %4393 = vmatpush1.msra.mxu0 %v571
    %4394 = vmatprep.subr.mxu0 0.0
    %4395 = vmatpush1.msra.mxu0 %v477
    %4396 = vmatprep.subr.mxu0 0.0
    %4397 = vmatpush1.msra.mxu0 %v476
    %4398 = vmatprep.subr.mxu0 0.0
    %4399 = vmatpush1.msra.mxu0 %v475
    %4400 = vmatprep.subr.mxu0 0.0
    %4401 = vmatpush2.msra.mxu0 0.0
    %4402 = vmatprep.subr.mxu0 0.0
    %4403 = vmatpush2.msra.mxu0 0.0
    %4404 = vmatprep.subr.mxu0 0.0
    %4405 = vmatpush2.msra.mxu0 0.0
    %4406 = vmatprep.subr.mxu0 0.0
    %4407 = vmatpush2.msra.mxu0 0.0
    %4408 = vmatprep.subr.mxu0 0.0
    %4409 = vmatpush2.msra.mxu0 0.0
    %4410 = vmatprep.subr.mxu0 0.0
    %4411 = vmatpush2.msra.mxu0 0.0
    %4412 = vmatprep.subr.mxu0 0.0
    %4413 = vmatpush2.msra.mxu0 0.0
    %4414 = vmatprep.subr.mxu0 0.0
    %4415 = vmatpush2.msra.mxu0 0.0
    %4416 = vmatprep.subr.mxu0 0.0
    %4417 = vmatpush2.msra.mxu0 0.0
    %4418 = vmatprep.subr.mxu0 0.0
    %4419 = vmatpush2.msra.mxu0 0.0
    %4420 = vmatprep.subr.mxu0 0.0
    %4421 = vmatpush2.msra.mxu0 0.0
    %4422 = vmatprep.subr.mxu0 0.0
    %4423 = vmatpush2.msra.mxu0 0.0
    %4424 = vmatprep.subr.mxu0 0.0
    %4425 = vmatpush2.msra.mxu0 0.0
    %4426 = vmatprep.subr.mxu0 0.0
    %4427 = vmatpush2.msra.mxu0 0.0
    %4428 = vmatprep.subr.mxu0 0.0
    %4429 = vmatpush2.msra.mxu0 0.0
    %4430 = vmatprep.subr.mxu0 0.0
    %4431 = vmatpush2.msra.mxu0 0.0
    %4432 = vmatprep.mubr.f32.mxu0 0.0
    %4433 = vmatmul.mubr.f32.gmra.mxu0 %v4296
    %v4434 = vpop.f32.mrf.mxu0
    %v4435 = vadd.f32 0.0, %v4434
    %v4436 = vpop.f32.mrf.mxu0
    %4437 = vdwg.mxu0
    %4438 = vmatprep.subr.mxu0 0.0
    %4439 = vmatpush1.msra.mxu0 0.0
    %4440 = vmatprep.subr.mxu0 0.0
    %4441 = vmatpush1.msra.mxu0 0.0
    %4442 = vmatprep.subr.mxu0 0.0
    %4443 = vmatpush1.msra.mxu0 0.0
    %4444 = vmatprep.subr.mxu0 0.0
    %4445 = vmatpush1.msra.mxu0 0.0
    %4446 = vmatprep.subr.mxu0 0.0
    %4447 = vmatpush1.msra.mxu0 0.0
    %4448 = vmatprep.subr.mxu0 0.0
    %4449 = vmatpush1.msra.mxu0 0.0
    %4450 = vmatprep.subr.mxu0 0.0
    %4451 = vmatpush1.msra.mxu0 0.0
    %4452 = vmatprep.subr.mxu0 0.0
    %4453 = vmatpush1.msra.mxu0 0.0
    %4454 = vmatprep.subr.mxu0 0.0
    %4455 = vmatpush1.msra.mxu0 0.0
    %4456 = vmatprep.subr.mxu0 0.0
    %4457 = vmatpush1.msra.mxu0 0.0
    %4458 = vmatprep.subr.mxu0 0.0
    %4459 = vmatpush1.msra.mxu0 0.0
    %4460 = vmatprep.subr.mxu0 0.0
    %4461 = vmatpush1.msra.mxu0 0.0
    %4462 = vmatprep.subr.mxu0 0.0
    %4463 = vmatpush1.msra.mxu0 %v644
    %4464 = vmatprep.subr.mxu0 0.0
    %4465 = vmatpush1.msra.mxu0 %v482
    %4466 = vmatprep.subr.mxu0 0.0
    %4467 = vmatpush1.msra.mxu0 %v481
    %4468 = vmatprep.subr.mxu0 0.0
    %4469 = vmatpush1.msra.mxu0 %v480
    %4470 = vmatprep.subr.mxu0 0.0
    %4471 = vmatpush2.msra.mxu0 0.0
    %4472 = vmatprep.subr.mxu0 0.0
    %4473 = vmatpush2.msra.mxu0 0.0
    %4474 = vmatprep.subr.mxu0 0.0
    %4475 = vmatpush2.msra.mxu0 0.0
    %4476 = vmatprep.subr.mxu0 0.0
    %4477 = vmatpush2.msra.mxu0 0.0
    %4478 = vmatprep.subr.mxu0 0.0
    %4479 = vmatpush2.msra.mxu0 0.0
    %4480 = vmatprep.subr.mxu0 0.0
    %4481 = vmatpush2.msra.mxu0 0.0
    %4482 = vmatprep.subr.mxu0 0.0
    %4483 = vmatpush2.msra.mxu0 0.0
    %4484 = vmatprep.subr.mxu0 0.0
    %4485 = vmatpush2.msra.mxu0 0.0
    %4486 = vmatprep.subr.mxu0 0.0
    %4487 = vmatpush2.msra.mxu0 0.0
    %4488 = vmatprep.subr.mxu0 0.0
    %4489 = vmatpush2.msra.mxu0 0.0
    %4490 = vmatprep.subr.mxu0 0.0
    %4491 = vmatpush2.msra.mxu0 0.0
    %4492 = vmatprep.subr.mxu0 0.0
    %4493 = vmatpush2.msra.mxu0 0.0
    %4494 = vmatprep.subr.mxu0 0.0
    %4495 = vmatpush2.msra.mxu0 0.0
    %4496 = vmatprep.subr.mxu0 0.0
    %4497 = vmatpush2.msra.mxu0 0.0
    %4498 = vmatprep.subr.mxu0 0.0
    %4499 = vmatpush2.msra.mxu0 0.0
    %4500 = vmatprep.subr.mxu0 0.0
    %4501 = vmatpush2.msra.mxu0 0.0
    %4502 = vmatprep.mubr.f32.mxu0 0.0
    %4503 = vmatmul.mubr.f32.gmra.mxu0 %v4296
    %v4504 = vpop.f32.mrf.mxu0
    %v4505 = vadd.f32 %v489, %v4504
    %v4506 = vpop.f32.mrf.mxu0
    %4507 = vdwg.mxu0
    %v4508 = vadd.f32 %v4292, %v4365
    %v4509 = vxor.u32 %v4508, 2147483648
    %v4510 = vmul.f32 %v4509, 1.442695
    %v4511 = vpow.pop %v4510
    %v4512 = vadd.f32 %v4511, 1.0
    %v4513 = vrcp.pop %v4512
    %v4514 = vmul.f32 1.0, %v4513
    %v4515 = vadd.f32 %v4293, %v4435
    %v4516 = vxor.u32 %v4515, 2147483648
    %v4517 = vmul.f32 %v4516, 1.442695
    %v4518 = vpow.pop %v4517
    %v4519 = vadd.f32 %v4518, 1.0
    %v4520 = vrcp.pop %v4519
    %v4521 = vmul.f32 1.0, %v4520
    %v4522 = vmul.f32 %v4514, %v4505
    %v4523 = vadd.f32 %v4294, %v4522
    %v4524 = vtanh.pop %v4523
    %v4525 = vsub.f32 1.0, %v4521
    %v4526 = vmul.f32 %v4525, %v4524
    %v4527 = vmul.f32 %v4521, %v4291
    %v4528 = vadd.f32 %v4526, %v4527
    %v4529 = vld [vmem:[#allocation2 + $0x22] sm:$0x3]
    %v4530 = vld [vmem:[%s324 + $0x22] sm:$0x3]
    %v4531 = vld [vmem:[%s460 + $0x22] sm:$0x3]
    %v4533 = vsel %vm47, %v4528, 0
    %4535 = vmatprep.subr.mxu0 0.0
    %4536 = vmatpush1.msra.mxu0 0.0
    %4537 = vmatprep.subr.mxu0 0.0
    %4538 = vmatpush1.msra.mxu0 0.0
    %4539 = vmatprep.subr.mxu0 0.0
    %4540 = vmatpush1.msra.mxu0 0.0
    %4541 = vmatprep.subr.mxu0 0.0
    %4542 = vmatpush1.msra.mxu0 0.0
    %4543 = vmatprep.subr.mxu0 0.0
    %4544 = vmatpush1.msra.mxu0 0.0
    %4545 = vmatprep.subr.mxu0 0.0
    %4546 = vmatpush1.msra.mxu0 0.0
    %4547 = vmatprep.subr.mxu0 0.0
    %4548 = vmatpush1.msra.mxu0 0.0
    %4549 = vmatprep.subr.mxu0 0.0
    %4550 = vmatpush1.msra.mxu0 0.0
    %4551 = vmatprep.subr.mxu0 0.0
    %4552 = vmatpush1.msra.mxu0 0.0
    %4553 = vmatprep.subr.mxu0 0.0
    %4554 = vmatpush1.msra.mxu0 0.0
    %4555 = vmatprep.subr.mxu0 0.0
    %4556 = vmatpush1.msra.mxu0 0.0
    %4557 = vmatprep.subr.mxu0 0.0
    %4558 = vmatpush1.msra.mxu0 0.0
    %4559 = vmatprep.subr.mxu0 0.0
    %4560 = vmatpush1.msra.mxu0 %v498
    %4561 = vmatprep.subr.mxu0 0.0
    %4562 = vmatpush1.msra.mxu0 %v472
    %4563 = vmatprep.subr.mxu0 0.0
    %4564 = vmatpush1.msra.mxu0 %v471
    %4565 = vmatprep.subr.mxu0 0.0
    %4566 = vmatpush1.msra.mxu0 %v470
    %4567 = vmatprep.subr.mxu0 0.0
    %4568 = vmatpush2.msra.mxu0 0.0
    %4569 = vmatprep.subr.mxu0 0.0
    %4570 = vmatpush2.msra.mxu0 0.0
    %4571 = vmatprep.subr.mxu0 0.0
    %4572 = vmatpush2.msra.mxu0 0.0
    %4573 = vmatprep.subr.mxu0 0.0
    %4574 = vmatpush2.msra.mxu0 0.0
    %4575 = vmatprep.subr.mxu0 0.0
    %4576 = vmatpush2.msra.mxu0 0.0
    %4577 = vmatprep.subr.mxu0 0.0
    %4578 = vmatpush2.msra.mxu0 0.0
    %4579 = vmatprep.subr.mxu0 0.0
    %4580 = vmatpush2.msra.mxu0 0.0
    %4581 = vmatprep.subr.mxu0 0.0
    %4582 = vmatpush2.msra.mxu0 0.0
    %4583 = vmatprep.subr.mxu0 0.0
    %4584 = vmatpush2.msra.mxu0 0.0
    %4585 = vmatprep.subr.mxu0 0.0
    %4586 = vmatpush2.msra.mxu0 0.0
    %4587 = vmatprep.subr.mxu0 0.0
    %4588 = vmatpush2.msra.mxu0 0.0
    %4589 = vmatprep.subr.mxu0 0.0
    %4590 = vmatpush2.msra.mxu0 0.0
    %4591 = vmatprep.subr.mxu0 0.0
    %4592 = vmatpush2.msra.mxu0 0.0
    %4593 = vmatprep.subr.mxu0 0.0
    %4594 = vmatpush2.msra.mxu0 0.0
    %4595 = vmatprep.subr.mxu0 0.0
    %4596 = vmatpush2.msra.mxu0 0.0
    %4597 = vmatprep.subr.mxu0 0.0
    %4598 = vmatpush2.msra.mxu0 0.0
    %4599 = vmatprep.mubr.f32.mxu0 0.0
    %4600 = vmatmul.mubr.f32.gmra.mxu0 %v4533
    %v4601 = vpop.f32.mrf.mxu0
    %v4602 = vadd.f32 0.0, %v4601
    %v4603 = vpop.f32.mrf.mxu0
    %4604 = vdwg.mxu0
    %4605 = vmatprep.subr.mxu0 0.0
    %4606 = vmatpush1.msra.mxu0 0.0
    %4607 = vmatprep.subr.mxu0 0.0
    %4608 = vmatpush1.msra.mxu0 0.0
    %4609 = vmatprep.subr.mxu0 0.0
    %4610 = vmatpush1.msra.mxu0 0.0
    %4611 = vmatprep.subr.mxu0 0.0
    %4612 = vmatpush1.msra.mxu0 0.0
    %4613 = vmatprep.subr.mxu0 0.0
    %4614 = vmatpush1.msra.mxu0 0.0
    %4615 = vmatprep.subr.mxu0 0.0
    %4616 = vmatpush1.msra.mxu0 0.0
    %4617 = vmatprep.subr.mxu0 0.0
    %4618 = vmatpush1.msra.mxu0 0.0
    %4619 = vmatprep.subr.mxu0 0.0
    %4620 = vmatpush1.msra.mxu0 0.0
    %4621 = vmatprep.subr.mxu0 0.0
    %4622 = vmatpush1.msra.mxu0 0.0
    %4623 = vmatprep.subr.mxu0 0.0
    %4624 = vmatpush1.msra.mxu0 0.0
    %4625 = vmatprep.subr.mxu0 0.0
    %4626 = vmatpush1.msra.mxu0 0.0
    %4627 = vmatprep.subr.mxu0 0.0
    %4628 = vmatpush1.msra.mxu0 0.0
    %4629 = vmatprep.subr.mxu0 0.0
    %4630 = vmatpush1.msra.mxu0 %v571
    %4631 = vmatprep.subr.mxu0 0.0
    %4632 = vmatpush1.msra.mxu0 %v477
    %4633 = vmatprep.subr.mxu0 0.0
    %4634 = vmatpush1.msra.mxu0 %v476
    %4635 = vmatprep.subr.mxu0 0.0
    %4636 = vmatpush1.msra.mxu0 %v475
    %4637 = vmatprep.subr.mxu0 0.0
    %4638 = vmatpush2.msra.mxu0 0.0
    %4639 = vmatprep.subr.mxu0 0.0
    %4640 = vmatpush2.msra.mxu0 0.0
    %4641 = vmatprep.subr.mxu0 0.0
    %4642 = vmatpush2.msra.mxu0 0.0
    %4643 = vmatprep.subr.mxu0 0.0
    %4644 = vmatpush2.msra.mxu0 0.0
    %4645 = vmatprep.subr.mxu0 0.0
    %4646 = vmatpush2.msra.mxu0 0.0
    %4647 = vmatprep.subr.mxu0 0.0
    %4648 = vmatpush2.msra.mxu0 0.0
    %4649 = vmatprep.subr.mxu0 0.0
    %4650 = vmatpush2.msra.mxu0 0.0
    %4651 = vmatprep.subr.mxu0 0.0
    %4652 = vmatpush2.msra.mxu0 0.0
    %4653 = vmatprep.subr.mxu0 0.0
    %4654 = vmatpush2.msra.mxu0 0.0
    %4655 = vmatprep.subr.mxu0 0.0
    %4656 = vmatpush2.msra.mxu0 0.0
    %4657 = vmatprep.subr.mxu0 0.0
    %4658 = vmatpush2.msra.mxu0 0.0
    %4659 = vmatprep.subr.mxu0 0.0
    %4660 = vmatpush2.msra.mxu0 0.0
    %4661 = vmatprep.subr.mxu0 0.0
    %4662 = vmatpush2.msra.mxu0 0.0
    %4663 = vmatprep.subr.mxu0 0.0
    %4664 = vmatpush2.msra.mxu0 0.0
    %4665 = vmatprep.subr.mxu0 0.0
    %4666 = vmatpush2.msra.mxu0 0.0
    %4667 = vmatprep.subr.mxu0 0.0
    %4668 = vmatpush2.msra.mxu0 0.0
    %4669 = vmatprep.mubr.f32.mxu0 0.0
    %4670 = vmatmul.mubr.f32.gmra.mxu0 %v4533
    %v4671 = vpop.f32.mrf.mxu0
    %v4672 = vadd.f32 0.0, %v4671
    %v4673 = vpop.f32.mrf.mxu0
    %4674 = vdwg.mxu0
    %4675 = vmatprep.subr.mxu0 0.0
    %4676 = vmatpush1.msra.mxu0 0.0
    %4677 = vmatprep.subr.mxu0 0.0
    %4678 = vmatpush1.msra.mxu0 0.0
    %4679 = vmatprep.subr.mxu0 0.0
    %4680 = vmatpush1.msra.mxu0 0.0
    %4681 = vmatprep.subr.mxu0 0.0
    %4682 = vmatpush1.msra.mxu0 0.0
    %4683 = vmatprep.subr.mxu0 0.0
    %4684 = vmatpush1.msra.mxu0 0.0
    %4685 = vmatprep.subr.mxu0 0.0
    %4686 = vmatpush1.msra.mxu0 0.0
    %4687 = vmatprep.subr.mxu0 0.0
    %4688 = vmatpush1.msra.mxu0 0.0
    %4689 = vmatprep.subr.mxu0 0.0
    %4690 = vmatpush1.msra.mxu0 0.0
    %4691 = vmatprep.subr.mxu0 0.0
    %4692 = vmatpush1.msra.mxu0 0.0
    %4693 = vmatprep.subr.mxu0 0.0
    %4694 = vmatpush1.msra.mxu0 0.0
    %4695 = vmatprep.subr.mxu0 0.0
    %4696 = vmatpush1.msra.mxu0 0.0
    %4697 = vmatprep.subr.mxu0 0.0
    %4698 = vmatpush1.msra.mxu0 0.0
    %4699 = vmatprep.subr.mxu0 0.0
    %4700 = vmatpush1.msra.mxu0 %v644
    %4701 = vmatprep.subr.mxu0 0.0
    %4702 = vmatpush1.msra.mxu0 %v482
    %4703 = vmatprep.subr.mxu0 0.0
    %4704 = vmatpush1.msra.mxu0 %v481
    %4705 = vmatprep.subr.mxu0 0.0
    %4706 = vmatpush1.msra.mxu0 %v480
    %4707 = vmatprep.subr.mxu0 0.0
    %4708 = vmatpush2.msra.mxu0 0.0
    %4709 = vmatprep.subr.mxu0 0.0
    %4710 = vmatpush2.msra.mxu0 0.0
    %4711 = vmatprep.subr.mxu0 0.0
    %4712 = vmatpush2.msra.mxu0 0.0
    %4713 = vmatprep.subr.mxu0 0.0
    %4714 = vmatpush2.msra.mxu0 0.0
    %4715 = vmatprep.subr.mxu0 0.0
    %4716 = vmatpush2.msra.mxu0 0.0
    %4717 = vmatprep.subr.mxu0 0.0
    %4718 = vmatpush2.msra.mxu0 0.0
    %4719 = vmatprep.subr.mxu0 0.0
    %4720 = vmatpush2.msra.mxu0 0.0
    %4721 = vmatprep.subr.mxu0 0.0
    %4722 = vmatpush2.msra.mxu0 0.0
    %4723 = vmatprep.subr.mxu0 0.0
    %4724 = vmatpush2.msra.mxu0 0.0
    %4725 = vmatprep.subr.mxu0 0.0
    %4726 = vmatpush2.msra.mxu0 0.0
    %4727 = vmatprep.subr.mxu0 0.0
    %4728 = vmatpush2.msra.mxu0 0.0
    %4729 = vmatprep.subr.mxu0 0.0
    %4730 = vmatpush2.msra.mxu0 0.0
    %4731 = vmatprep.subr.mxu0 0.0
    %4732 = vmatpush2.msra.mxu0 0.0
    %4733 = vmatprep.subr.mxu0 0.0
    %4734 = vmatpush2.msra.mxu0 0.0
    %4735 = vmatprep.subr.mxu0 0.0
    %4736 = vmatpush2.msra.mxu0 0.0
    %4737 = vmatprep.subr.mxu0 0.0
    %4738 = vmatpush2.msra.mxu0 0.0
    %4739 = vmatprep.mubr.f32.mxu0 0.0
    %4740 = vmatmul.mubr.f32.gmra.mxu0 %v4533
    %v4741 = vpop.f32.mrf.mxu0
    %v4742 = vadd.f32 %v489, %v4741
    %v4743 = vpop.f32.mrf.mxu0
    %4744 = vdwg.mxu0
    %v4745 = vadd.f32 %v4529, %v4602
    %v4746 = vxor.u32 %v4745, 2147483648
    %v4747 = vmul.f32 %v4746, 1.442695
    %v4748 = vpow.pop %v4747
    %v4749 = vadd.f32 %v4748, 1.0
    %v4750 = vrcp.pop %v4749
    %v4751 = vmul.f32 1.0, %v4750
    %v4752 = vadd.f32 %v4530, %v4672
    %v4753 = vxor.u32 %v4752, 2147483648
    %v4754 = vmul.f32 %v4753, 1.442695
    %v4755 = vpow.pop %v4754
    %v4756 = vadd.f32 %v4755, 1.0
    %v4757 = vrcp.pop %v4756
    %v4758 = vmul.f32 1.0, %v4757
    %v4759 = vmul.f32 %v4751, %v4742
    %v4760 = vadd.f32 %v4531, %v4759
    %v4761 = vtanh.pop %v4760
    %v4762 = vsub.f32 1.0, %v4758
    %v4763 = vmul.f32 %v4762, %v4761
    %v4764 = vmul.f32 %v4758, %v4528
    %v4765 = vadd.f32 %v4763, %v4764
    %v4766 = vld [vmem:[#allocation2 + $0x24] sm:$0x3]
    %v4767 = vld [vmem:[%s324 + $0x24] sm:$0x3]
    %v4768 = vld [vmem:[%s460 + $0x24] sm:$0x3]
    %v4770 = vsel %vm47, %v4765, 0
    %4772 = vmatprep.subr.mxu0 0.0
    %4773 = vmatpush1.msra.mxu0 0.0
    %4774 = vmatprep.subr.mxu0 0.0
    %4775 = vmatpush1.msra.mxu0 0.0
    %4776 = vmatprep.subr.mxu0 0.0
    %4777 = vmatpush1.msra.mxu0 0.0
    %4778 = vmatprep.subr.mxu0 0.0
    %4779 = vmatpush1.msra.mxu0 0.0
    %4780 = vmatprep.subr.mxu0 0.0
    %4781 = vmatpush1.msra.mxu0 0.0
    %4782 = vmatprep.subr.mxu0 0.0
    %4783 = vmatpush1.msra.mxu0 0.0
    %4784 = vmatprep.subr.mxu0 0.0
    %4785 = vmatpush1.msra.mxu0 0.0
    %4786 = vmatprep.subr.mxu0 0.0
    %4787 = vmatpush1.msra.mxu0 0.0
    %4788 = vmatprep.subr.mxu0 0.0
    %4789 = vmatpush1.msra.mxu0 0.0
    %4790 = vmatprep.subr.mxu0 0.0
    %4791 = vmatpush1.msra.mxu0 0.0
    %4792 = vmatprep.subr.mxu0 0.0
    %4793 = vmatpush1.msra.mxu0 0.0
    %4794 = vmatprep.subr.mxu0 0.0
    %4795 = vmatpush1.msra.mxu0 0.0
    %4796 = vmatprep.subr.mxu0 0.0
    %4797 = vmatpush1.msra.mxu0 %v498
    %4798 = vmatprep.subr.mxu0 0.0
    %4799 = vmatpush1.msra.mxu0 %v472
    %4800 = vmatprep.subr.mxu0 0.0
    %4801 = vmatpush1.msra.mxu0 %v471
    %4802 = vmatprep.subr.mxu0 0.0
    %4803 = vmatpush1.msra.mxu0 %v470
    %4804 = vmatprep.subr.mxu0 0.0
    %4805 = vmatpush2.msra.mxu0 0.0
    %4806 = vmatprep.subr.mxu0 0.0
    %4807 = vmatpush2.msra.mxu0 0.0
    %4808 = vmatprep.subr.mxu0 0.0
    %4809 = vmatpush2.msra.mxu0 0.0
    %4810 = vmatprep.subr.mxu0 0.0
    %4811 = vmatpush2.msra.mxu0 0.0
    %4812 = vmatprep.subr.mxu0 0.0
    %4813 = vmatpush2.msra.mxu0 0.0
    %4814 = vmatprep.subr.mxu0 0.0
    %4815 = vmatpush2.msra.mxu0 0.0
    %4816 = vmatprep.subr.mxu0 0.0
    %4817 = vmatpush2.msra.mxu0 0.0
    %4818 = vmatprep.subr.mxu0 0.0
    %4819 = vmatpush2.msra.mxu0 0.0
    %4820 = vmatprep.subr.mxu0 0.0
    %4821 = vmatpush2.msra.mxu0 0.0
    %4822 = vmatprep.subr.mxu0 0.0
    %4823 = vmatpush2.msra.mxu0 0.0
    %4824 = vmatprep.subr.mxu0 0.0
    %4825 = vmatpush2.msra.mxu0 0.0
    %4826 = vmatprep.subr.mxu0 0.0
    %4827 = vmatpush2.msra.mxu0 0.0
    %4828 = vmatprep.subr.mxu0 0.0
    %4829 = vmatpush2.msra.mxu0 0.0
    %4830 = vmatprep.subr.mxu0 0.0
    %4831 = vmatpush2.msra.mxu0 0.0
    %4832 = vmatprep.subr.mxu0 0.0
    %4833 = vmatpush2.msra.mxu0 0.0
    %4834 = vmatprep.subr.mxu0 0.0
    %4835 = vmatpush2.msra.mxu0 0.0
    %4836 = vmatprep.mubr.f32.mxu0 0.0
    %4837 = vmatmul.mubr.f32.gmra.mxu0 %v4770
    %v4838 = vpop.f32.mrf.mxu0
    %v4839 = vadd.f32 0.0, %v4838
    %v4840 = vpop.f32.mrf.mxu0
    %4841 = vdwg.mxu0
    %4842 = vmatprep.subr.mxu0 0.0
    %4843 = vmatpush1.msra.mxu0 0.0
    %4844 = vmatprep.subr.mxu0 0.0
    %4845 = vmatpush1.msra.mxu0 0.0
    %4846 = vmatprep.subr.mxu0 0.0
    %4847 = vmatpush1.msra.mxu0 0.0
    %4848 = vmatprep.subr.mxu0 0.0
    %4849 = vmatpush1.msra.mxu0 0.0
    %4850 = vmatprep.subr.mxu0 0.0
    %4851 = vmatpush1.msra.mxu0 0.0
    %4852 = vmatprep.subr.mxu0 0.0
    %4853 = vmatpush1.msra.mxu0 0.0
    %4854 = vmatprep.subr.mxu0 0.0
    %4855 = vmatpush1.msra.mxu0 0.0
    %4856 = vmatprep.subr.mxu0 0.0
    %4857 = vmatpush1.msra.mxu0 0.0
    %4858 = vmatprep.subr.mxu0 0.0
    %4859 = vmatpush1.msra.mxu0 0.0
    %4860 = vmatprep.subr.mxu0 0.0
    %4861 = vmatpush1.msra.mxu0 0.0
    %4862 = vmatprep.subr.mxu0 0.0
    %4863 = vmatpush1.msra.mxu0 0.0
    %4864 = vmatprep.subr.mxu0 0.0
    %4865 = vmatpush1.msra.mxu0 0.0
    %4866 = vmatprep.subr.mxu0 0.0
    %4867 = vmatpush1.msra.mxu0 %v571
    %4868 = vmatprep.subr.mxu0 0.0
    %4869 = vmatpush1.msra.mxu0 %v477
    %4870 = vmatprep.subr.mxu0 0.0
    %4871 = vmatpush1.msra.mxu0 %v476
    %4872 = vmatprep.subr.mxu0 0.0
    %4873 = vmatpush1.msra.mxu0 %v475
    %4874 = vmatprep.subr.mxu0 0.0
    %4875 = vmatpush2.msra.mxu0 0.0
    %4876 = vmatprep.subr.mxu0 0.0
    %4877 = vmatpush2.msra.mxu0 0.0
    %4878 = vmatprep.subr.mxu0 0.0
    %4879 = vmatpush2.msra.mxu0 0.0
    %4880 = vmatprep.subr.mxu0 0.0
    %4881 = vmatpush2.msra.mxu0 0.0
    %4882 = vmatprep.subr.mxu0 0.0
    %4883 = vmatpush2.msra.mxu0 0.0
    %4884 = vmatprep.subr.mxu0 0.0
    %4885 = vmatpush2.msra.mxu0 0.0
    %4886 = vmatprep.subr.mxu0 0.0
    %4887 = vmatpush2.msra.mxu0 0.0
    %4888 = vmatprep.subr.mxu0 0.0
    %4889 = vmatpush2.msra.mxu0 0.0
    %4890 = vmatprep.subr.mxu0 0.0
    %4891 = vmatpush2.msra.mxu0 0.0
    %4892 = vmatprep.subr.mxu0 0.0
    %4893 = vmatpush2.msra.mxu0 0.0
    %4894 = vmatprep.subr.mxu0 0.0
    %4895 = vmatpush2.msra.mxu0 0.0
    %4896 = vmatprep.subr.mxu0 0.0
    %4897 = vmatpush2.msra.mxu0 0.0
    %4898 = vmatprep.subr.mxu0 0.0
    %4899 = vmatpush2.msra.mxu0 0.0
    %4900 = vmatprep.subr.mxu0 0.0
    %4901 = vmatpush2.msra.mxu0 0.0
    %4902 = vmatprep.subr.mxu0 0.0
    %4903 = vmatpush2.msra.mxu0 0.0
    %4904 = vmatprep.subr.mxu0 0.0
    %4905 = vmatpush2.msra.mxu0 0.0
    %4906 = vmatprep.mubr.f32.mxu0 0.0
    %4907 = vmatmul.mubr.f32.gmra.mxu0 %v4770
    %v4908 = vpop.f32.mrf.mxu0
    %v4909 = vadd.f32 0.0, %v4908
    %v4910 = vpop.f32.mrf.mxu0
    %4911 = vdwg.mxu0
    %4912 = vmatprep.subr.mxu0 0.0
    %4913 = vmatpush1.msra.mxu0 0.0
    %4914 = vmatprep.subr.mxu0 0.0
    %4915 = vmatpush1.msra.mxu0 0.0
    %4916 = vmatprep.subr.mxu0 0.0
    %4917 = vmatpush1.msra.mxu0 0.0
    %4918 = vmatprep.subr.mxu0 0.0
    %4919 = vmatpush1.msra.mxu0 0.0
    %4920 = vmatprep.subr.mxu0 0.0
    %4921 = vmatpush1.msra.mxu0 0.0
    %4922 = vmatprep.subr.mxu0 0.0
    %4923 = vmatpush1.msra.mxu0 0.0
    %4924 = vmatprep.subr.mxu0 0.0
    %4925 = vmatpush1.msra.mxu0 0.0
    %4926 = vmatprep.subr.mxu0 0.0
    %4927 = vmatpush1.msra.mxu0 0.0
    %4928 = vmatprep.subr.mxu0 0.0
    %4929 = vmatpush1.msra.mxu0 0.0
    %4930 = vmatprep.subr.mxu0 0.0
    %4931 = vmatpush1.msra.mxu0 0.0
    %4932 = vmatprep.subr.mxu0 0.0
    %4933 = vmatpush1.msra.mxu0 0.0
    %4934 = vmatprep.subr.mxu0 0.0
    %4935 = vmatpush1.msra.mxu0 0.0
    %4936 = vmatprep.subr.mxu0 0.0
    %4937 = vmatpush1.msra.mxu0 %v644
    %4938 = vmatprep.subr.mxu0 0.0
    %4939 = vmatpush1.msra.mxu0 %v482
    %4940 = vmatprep.subr.mxu0 0.0
    %4941 = vmatpush1.msra.mxu0 %v481
    %4942 = vmatprep.subr.mxu0 0.0
    %4943 = vmatpush1.msra.mxu0 %v480
    %4944 = vmatprep.subr.mxu0 0.0
    %4945 = vmatpush2.msra.mxu0 0.0
    %4946 = vmatprep.subr.mxu0 0.0
    %4947 = vmatpush2.msra.mxu0 0.0
    %4948 = vmatprep.subr.mxu0 0.0
    %4949 = vmatpush2.msra.mxu0 0.0
    %4950 = vmatprep.subr.mxu0 0.0
    %4951 = vmatpush2.msra.mxu0 0.0
    %4952 = vmatprep.subr.mxu0 0.0
    %4953 = vmatpush2.msra.mxu0 0.0
    %4954 = vmatprep.subr.mxu0 0.0
    %4955 = vmatpush2.msra.mxu0 0.0
    %4956 = vmatprep.subr.mxu0 0.0
    %4957 = vmatpush2.msra.mxu0 0.0
    %4958 = vmatprep.subr.mxu0 0.0
    %4959 = vmatpush2.msra.mxu0 0.0
    %4960 = vmatprep.subr.mxu0 0.0
    %4961 = vmatpush2.msra.mxu0 0.0
    %4962 = vmatprep.subr.mxu0 0.0
    %4963 = vmatpush2.msra.mxu0 0.0
    %4964 = vmatprep.subr.mxu0 0.0
    %4965 = vmatpush2.msra.mxu0 0.0
    %4966 = vmatprep.subr.mxu0 0.0
    %4967 = vmatpush2.msra.mxu0 0.0
    %4968 = vmatprep.subr.mxu0 0.0
    %4969 = vmatpush2.msra.mxu0 0.0
    %4970 = vmatprep.subr.mxu0 0.0
    %4971 = vmatpush2.msra.mxu0 0.0
    %4972 = vmatprep.subr.mxu0 0.0
    %4973 = vmatpush2.msra.mxu0 0.0
    %4974 = vmatprep.subr.mxu0 0.0
    %4975 = vmatpush2.msra.mxu0 0.0
    %4976 = vmatprep.mubr.f32.mxu0 0.0
    %4977 = vmatmul.mubr.f32.gmra.mxu0 %v4770
    %v4978 = vpop.f32.mrf.mxu0
    %v4979 = vadd.f32 %v489, %v4978
    %v4980 = vpop.f32.mrf.mxu0
    %4981 = vdwg.mxu0
    %v4982 = vadd.f32 %v4766, %v4839
    %v4983 = vxor.u32 %v4982, 2147483648
    %v4984 = vmul.f32 %v4983, 1.442695
    %v4985 = vpow.pop %v4984
    %v4986 = vadd.f32 %v4985, 1.0
    %v4987 = vrcp.pop %v4986
    %v4988 = vmul.f32 1.0, %v4987
    %v4989 = vadd.f32 %v4767, %v4909
    %v4990 = vxor.u32 %v4989, 2147483648
    %v4991 = vmul.f32 %v4990, 1.442695
    %v4992 = vpow.pop %v4991
    %v4993 = vadd.f32 %v4992, 1.0
    %v4994 = vrcp.pop %v4993
    %v4995 = vmul.f32 1.0, %v4994
    %v4996 = vmul.f32 %v4988, %v4979
    %v4997 = vadd.f32 %v4768, %v4996
    %v4998 = vtanh.pop %v4997
    %v4999 = vsub.f32 1.0, %v4995
    %v5000 = vmul.f32 %v4999, %v4998
    %v5001 = vmul.f32 %v4995, %v4765
    %v5002 = vadd.f32 %v5000, %v5001
    %v5003 = vld [vmem:[#allocation2 + $0x26] sm:$0x3]
    %v5004 = vld [vmem:[%s324 + $0x26] sm:$0x3]
    %v5005 = vld [vmem:[%s460 + $0x26] sm:$0x3]
    %v5007 = vsel %vm47, %v5002, 0
    %5009 = vmatprep.subr.mxu0 0.0
    %5010 = vmatpush1.msra.mxu0 0.0
    %5011 = vmatprep.subr.mxu0 0.0
    %5012 = vmatpush1.msra.mxu0 0.0
    %5013 = vmatprep.subr.mxu0 0.0
    %5014 = vmatpush1.msra.mxu0 0.0
    %5015 = vmatprep.subr.mxu0 0.0
    %5016 = vmatpush1.msra.mxu0 0.0
    %5017 = vmatprep.subr.mxu0 0.0
    %5018 = vmatpush1.msra.mxu0 0.0
    %5019 = vmatprep.subr.mxu0 0.0
    %5020 = vmatpush1.msra.mxu0 0.0
    %5021 = vmatprep.subr.mxu0 0.0
    %5022 = vmatpush1.msra.mxu0 0.0
    %5023 = vmatprep.subr.mxu0 0.0
    %5024 = vmatpush1.msra.mxu0 0.0
    %5025 = vmatprep.subr.mxu0 0.0
    %5026 = vmatpush1.msra.mxu0 0.0
    %5027 = vmatprep.subr.mxu0 0.0
    %5028 = vmatpush1.msra.mxu0 0.0
    %5029 = vmatprep.subr.mxu0 0.0
    %5030 = vmatpush1.msra.mxu0 0.0
    %5031 = vmatprep.subr.mxu0 0.0
    %5032 = vmatpush1.msra.mxu0 0.0
    %5033 = vmatprep.subr.mxu0 0.0
    %5034 = vmatpush1.msra.mxu0 %v498
    %5035 = vmatprep.subr.mxu0 0.0
    %5036 = vmatpush1.msra.mxu0 %v472
    %5037 = vmatprep.subr.mxu0 0.0
    %5038 = vmatpush1.msra.mxu0 %v471
    %5039 = vmatprep.subr.mxu0 0.0
    %5040 = vmatpush1.msra.mxu0 %v470
    %5041 = vmatprep.subr.mxu0 0.0
    %5042 = vmatpush2.msra.mxu0 0.0
    %5043 = vmatprep.subr.mxu0 0.0
    %5044 = vmatpush2.msra.mxu0 0.0
    %5045 = vmatprep.subr.mxu0 0.0
    %5046 = vmatpush2.msra.mxu0 0.0
    %5047 = vmatprep.subr.mxu0 0.0
    %5048 = vmatpush2.msra.mxu0 0.0
    %5049 = vmatprep.subr.mxu0 0.0
    %5050 = vmatpush2.msra.mxu0 0.0
    %5051 = vmatprep.subr.mxu0 0.0
    %5052 = vmatpush2.msra.mxu0 0.0
    %5053 = vmatprep.subr.mxu0 0.0
    %5054 = vmatpush2.msra.mxu0 0.0
    %5055 = vmatprep.subr.mxu0 0.0
    %5056 = vmatpush2.msra.mxu0 0.0
    %5057 = vmatprep.subr.mxu0 0.0
    %5058 = vmatpush2.msra.mxu0 0.0
    %5059 = vmatprep.subr.mxu0 0.0
    %5060 = vmatpush2.msra.mxu0 0.0
    %5061 = vmatprep.subr.mxu0 0.0
    %5062 = vmatpush2.msra.mxu0 0.0
    %5063 = vmatprep.subr.mxu0 0.0
    %5064 = vmatpush2.msra.mxu0 0.0
    %5065 = vmatprep.subr.mxu0 0.0
    %5066 = vmatpush2.msra.mxu0 0.0
    %5067 = vmatprep.subr.mxu0 0.0
    %5068 = vmatpush2.msra.mxu0 0.0
    %5069 = vmatprep.subr.mxu0 0.0
    %5070 = vmatpush2.msra.mxu0 0.0
    %5071 = vmatprep.subr.mxu0 0.0
    %5072 = vmatpush2.msra.mxu0 0.0
    %5073 = vmatprep.mubr.f32.mxu0 0.0
    %5074 = vmatmul.mubr.f32.gmra.mxu0 %v5007
    %v5075 = vpop.f32.mrf.mxu0
    %v5076 = vadd.f32 0.0, %v5075
    %v5077 = vpop.f32.mrf.mxu0
    %5078 = vdwg.mxu0
    %5079 = vmatprep.subr.mxu0 0.0
    %5080 = vmatpush1.msra.mxu0 0.0
    %5081 = vmatprep.subr.mxu0 0.0
    %5082 = vmatpush1.msra.mxu0 0.0
    %5083 = vmatprep.subr.mxu0 0.0
    %5084 = vmatpush1.msra.mxu0 0.0
    %5085 = vmatprep.subr.mxu0 0.0
    %5086 = vmatpush1.msra.mxu0 0.0
    %5087 = vmatprep.subr.mxu0 0.0
    %5088 = vmatpush1.msra.mxu0 0.0
    %5089 = vmatprep.subr.mxu0 0.0
    %5090 = vmatpush1.msra.mxu0 0.0
    %5091 = vmatprep.subr.mxu0 0.0
    %5092 = vmatpush1.msra.mxu0 0.0
    %5093 = vmatprep.subr.mxu0 0.0
    %5094 = vmatpush1.msra.mxu0 0.0
    %5095 = vmatprep.subr.mxu0 0.0
    %5096 = vmatpush1.msra.mxu0 0.0
    %5097 = vmatprep.subr.mxu0 0.0
    %5098 = vmatpush1.msra.mxu0 0.0
    %5099 = vmatprep.subr.mxu0 0.0
    %5100 = vmatpush1.msra.mxu0 0.0
    %5101 = vmatprep.subr.mxu0 0.0
    %5102 = vmatpush1.msra.mxu0 0.0
    %5103 = vmatprep.subr.mxu0 0.0
    %5104 = vmatpush1.msra.mxu0 %v571
    %5105 = vmatprep.subr.mxu0 0.0
    %5106 = vmatpush1.msra.mxu0 %v477
    %5107 = vmatprep.subr.mxu0 0.0
    %5108 = vmatpush1.msra.mxu0 %v476
    %5109 = vmatprep.subr.mxu0 0.0
    %5110 = vmatpush1.msra.mxu0 %v475
    %5111 = vmatprep.subr.mxu0 0.0
    %5112 = vmatpush2.msra.mxu0 0.0
    %5113 = vmatprep.subr.mxu0 0.0
    %5114 = vmatpush2.msra.mxu0 0.0
    %5115 = vmatprep.subr.mxu0 0.0
    %5116 = vmatpush2.msra.mxu0 0.0
    %5117 = vmatprep.subr.mxu0 0.0
    %5118 = vmatpush2.msra.mxu0 0.0
    %5119 = vmatprep.subr.mxu0 0.0
    %5120 = vmatpush2.msra.mxu0 0.0
    %5121 = vmatprep.subr.mxu0 0.0
    %5122 = vmatpush2.msra.mxu0 0.0
    %5123 = vmatprep.subr.mxu0 0.0
    %5124 = vmatpush2.msra.mxu0 0.0
    %5125 = vmatprep.subr.mxu0 0.0
    %5126 = vmatpush2.msra.mxu0 0.0
    %5127 = vmatprep.subr.mxu0 0.0
    %5128 = vmatpush2.msra.mxu0 0.0
    %5129 = vmatprep.subr.mxu0 0.0
    %5130 = vmatpush2.msra.mxu0 0.0
    %5131 = vmatprep.subr.mxu0 0.0
    %5132 = vmatpush2.msra.mxu0 0.0
    %5133 = vmatprep.subr.mxu0 0.0
    %5134 = vmatpush2.msra.mxu0 0.0
    %5135 = vmatprep.subr.mxu0 0.0
    %5136 = vmatpush2.msra.mxu0 0.0
    %5137 = vmatprep.subr.mxu0 0.0
    %5138 = vmatpush2.msra.mxu0 0.0
    %5139 = vmatprep.subr.mxu0 0.0
    %5140 = vmatpush2.msra.mxu0 0.0
    %5141 = vmatprep.subr.mxu0 0.0
    %5142 = vmatpush2.msra.mxu0 0.0
    %5143 = vmatprep.mubr.f32.mxu0 0.0
    %5144 = vmatmul.mubr.f32.gmra.mxu0 %v5007
    %v5145 = vpop.f32.mrf.mxu0
    %v5146 = vadd.f32 0.0, %v5145
    %v5147 = vpop.f32.mrf.mxu0
    %5148 = vdwg.mxu0
    %5149 = vmatprep.subr.mxu0 0.0
    %5150 = vmatpush1.msra.mxu0 0.0
    %5151 = vmatprep.subr.mxu0 0.0
    %5152 = vmatpush1.msra.mxu0 0.0
    %5153 = vmatprep.subr.mxu0 0.0
    %5154 = vmatpush1.msra.mxu0 0.0
    %5155 = vmatprep.subr.mxu0 0.0
    %5156 = vmatpush1.msra.mxu0 0.0
    %5157 = vmatprep.subr.mxu0 0.0
    %5158 = vmatpush1.msra.mxu0 0.0
    %5159 = vmatprep.subr.mxu0 0.0
    %5160 = vmatpush1.msra.mxu0 0.0
    %5161 = vmatprep.subr.mxu0 0.0
    %5162 = vmatpush1.msra.mxu0 0.0
    %5163 = vmatprep.subr.mxu0 0.0
    %5164 = vmatpush1.msra.mxu0 0.0
    %5165 = vmatprep.subr.mxu0 0.0
    %5166 = vmatpush1.msra.mxu0 0.0
    %5167 = vmatprep.subr.mxu0 0.0
    %5168 = vmatpush1.msra.mxu0 0.0
    %5169 = vmatprep.subr.mxu0 0.0
    %5170 = vmatpush1.msra.mxu0 0.0
    %5171 = vmatprep.subr.mxu0 0.0
    %5172 = vmatpush1.msra.mxu0 0.0
    %5173 = vmatprep.subr.mxu0 0.0
    %5174 = vmatpush1.msra.mxu0 %v644
    %5175 = vmatprep.subr.mxu0 0.0
    %5176 = vmatpush1.msra.mxu0 %v482
    %5177 = vmatprep.subr.mxu0 0.0
    %5178 = vmatpush1.msra.mxu0 %v481
    %5179 = vmatprep.subr.mxu0 0.0
    %5180 = vmatpush1.msra.mxu0 %v480
    %5181 = vmatprep.subr.mxu0 0.0
    %5182 = vmatpush2.msra.mxu0 0.0
    %5183 = vmatprep.subr.mxu0 0.0
    %5184 = vmatpush2.msra.mxu0 0.0
    %5185 = vmatprep.subr.mxu0 0.0
    %5186 = vmatpush2.msra.mxu0 0.0
    %5187 = vmatprep.subr.mxu0 0.0
    %5188 = vmatpush2.msra.mxu0 0.0
    %5189 = vmatprep.subr.mxu0 0.0
    %5190 = vmatpush2.msra.mxu0 0.0
    %5191 = vmatprep.subr.mxu0 0.0
    %5192 = vmatpush2.msra.mxu0 0.0
    %5193 = vmatprep.subr.mxu0 0.0
    %5194 = vmatpush2.msra.mxu0 0.0
    %5195 = vmatprep.subr.mxu0 0.0
    %5196 = vmatpush2.msra.mxu0 0.0
    %5197 = vmatprep.subr.mxu0 0.0
    %5198 = vmatpush2.msra.mxu0 0.0
    %5199 = vmatprep.subr.mxu0 0.0
    %5200 = vmatpush2.msra.mxu0 0.0
    %5201 = vmatprep.subr.mxu0 0.0
    %5202 = vmatpush2.msra.mxu0 0.0
    %5203 = vmatprep.subr.mxu0 0.0
    %5204 = vmatpush2.msra.mxu0 0.0
    %5205 = vmatprep.subr.mxu0 0.0
    %5206 = vmatpush2.msra.mxu0 0.0
    %5207 = vmatprep.subr.mxu0 0.0
    %5208 = vmatpush2.msra.mxu0 0.0
    %5209 = vmatprep.subr.mxu0 0.0
    %5210 = vmatpush2.msra.mxu0 0.0
    %5211 = vmatprep.subr.mxu0 0.0
    %5212 = vmatpush2.msra.mxu0 0.0
    %5213 = vmatprep.mubr.f32.mxu0 0.0
    %5214 = vmatmul.mubr.f32.gmra.mxu0 %v5007
    %v5215 = vpop.f32.mrf.mxu0
    %v5216 = vadd.f32 %v489, %v5215
    %v5217 = vpop.f32.mrf.mxu0
    %5218 = vdwg.mxu0
    %v5219 = vadd.f32 %v5003, %v5076
    %v5220 = vxor.u32 %v5219, 2147483648
    %v5221 = vmul.f32 %v5220, 1.442695
    %v5222 = vpow.pop %v5221
    %v5223 = vadd.f32 %v5222, 1.0
    %v5224 = vrcp.pop %v5223
    %v5225 = vmul.f32 1.0, %v5224
    %v5226 = vadd.f32 %v5004, %v5146
    %v5227 = vxor.u32 %v5226, 2147483648
    %v5228 = vmul.f32 %v5227, 1.442695
    %v5229 = vpow.pop %v5228
    %v5230 = vadd.f32 %v5229, 1.0
    %v5231 = vrcp.pop %v5230
    %v5232 = vmul.f32 1.0, %v5231
    %v5233 = vmul.f32 %v5225, %v5216
    %v5234 = vadd.f32 %v5005, %v5233
    %v5235 = vtanh.pop %v5234
    %v5236 = vsub.f32 1.0, %v5232
    %v5237 = vmul.f32 %v5236, %v5235
    %v5238 = vmul.f32 %v5232, %v5002
    %v5239 = vadd.f32 %v5237, %v5238
    %v5240 = vld [vmem:[#allocation2 + $0x28] sm:$0x3]
    %v5241 = vld [vmem:[%s324 + $0x28] sm:$0x3]
    %v5242 = vld [vmem:[%s460 + $0x28] sm:$0x3]
    %v5244 = vsel %vm47, %v5239, 0
    %5246 = vmatprep.subr.mxu0 0.0
    %5247 = vmatpush1.msra.mxu0 0.0
    %5248 = vmatprep.subr.mxu0 0.0
    %5249 = vmatpush1.msra.mxu0 0.0
    %5250 = vmatprep.subr.mxu0 0.0
    %5251 = vmatpush1.msra.mxu0 0.0
    %5252 = vmatprep.subr.mxu0 0.0
    %5253 = vmatpush1.msra.mxu0 0.0
    %5254 = vmatprep.subr.mxu0 0.0
    %5255 = vmatpush1.msra.mxu0 0.0
    %5256 = vmatprep.subr.mxu0 0.0
    %5257 = vmatpush1.msra.mxu0 0.0
    %5258 = vmatprep.subr.mxu0 0.0
    %5259 = vmatpush1.msra.mxu0 0.0
    %5260 = vmatprep.subr.mxu0 0.0
    %5261 = vmatpush1.msra.mxu0 0.0
    %5262 = vmatprep.subr.mxu0 0.0
    %5263 = vmatpush1.msra.mxu0 0.0
    %5264 = vmatprep.subr.mxu0 0.0
    %5265 = vmatpush1.msra.mxu0 0.0
    %5266 = vmatprep.subr.mxu0 0.0
    %5267 = vmatpush1.msra.mxu0 0.0
    %5268 = vmatprep.subr.mxu0 0.0
    %5269 = vmatpush1.msra.mxu0 0.0
    %5270 = vmatprep.subr.mxu0 0.0
    %5271 = vmatpush1.msra.mxu0 %v498
    %5272 = vmatprep.subr.mxu0 0.0
    %5273 = vmatpush1.msra.mxu0 %v472
    %5274 = vmatprep.subr.mxu0 0.0
    %5275 = vmatpush1.msra.mxu0 %v471
    %5276 = vmatprep.subr.mxu0 0.0
    %5277 = vmatpush1.msra.mxu0 %v470
    %5278 = vmatprep.subr.mxu0 0.0
    %5279 = vmatpush2.msra.mxu0 0.0
    %5280 = vmatprep.subr.mxu0 0.0
    %5281 = vmatpush2.msra.mxu0 0.0
    %5282 = vmatprep.subr.mxu0 0.0
    %5283 = vmatpush2.msra.mxu0 0.0
    %5284 = vmatprep.subr.mxu0 0.0
    %5285 = vmatpush2.msra.mxu0 0.0
    %5286 = vmatprep.subr.mxu0 0.0
    %5287 = vmatpush2.msra.mxu0 0.0
    %5288 = vmatprep.subr.mxu0 0.0
    %5289 = vmatpush2.msra.mxu0 0.0
    %5290 = vmatprep.subr.mxu0 0.0
    %5291 = vmatpush2.msra.mxu0 0.0
    %5292 = vmatprep.subr.mxu0 0.0
    %5293 = vmatpush2.msra.mxu0 0.0
    %5294 = vmatprep.subr.mxu0 0.0
    %5295 = vmatpush2.msra.mxu0 0.0
    %5296 = vmatprep.subr.mxu0 0.0
    %5297 = vmatpush2.msra.mxu0 0.0
    %5298 = vmatprep.subr.mxu0 0.0
    %5299 = vmatpush2.msra.mxu0 0.0
    %5300 = vmatprep.subr.mxu0 0.0
    %5301 = vmatpush2.msra.mxu0 0.0
    %5302 = vmatprep.subr.mxu0 0.0
    %5303 = vmatpush2.msra.mxu0 0.0
    %5304 = vmatprep.subr.mxu0 0.0
    %5305 = vmatpush2.msra.mxu0 0.0
    %5306 = vmatprep.subr.mxu0 0.0
    %5307 = vmatpush2.msra.mxu0 0.0
    %5308 = vmatprep.subr.mxu0 0.0
    %5309 = vmatpush2.msra.mxu0 0.0
    %5310 = vmatprep.mubr.f32.mxu0 0.0
    %5311 = vmatmul.mubr.f32.gmra.mxu0 %v5244
    %v5312 = vpop.f32.mrf.mxu0
    %v5313 = vadd.f32 0.0, %v5312
    %v5314 = vpop.f32.mrf.mxu0
    %5315 = vdwg.mxu0
    %5316 = vmatprep.subr.mxu0 0.0
    %5317 = vmatpush1.msra.mxu0 0.0
    %5318 = vmatprep.subr.mxu0 0.0
    %5319 = vmatpush1.msra.mxu0 0.0
    %5320 = vmatprep.subr.mxu0 0.0
    %5321 = vmatpush1.msra.mxu0 0.0
    %5322 = vmatprep.subr.mxu0 0.0
    %5323 = vmatpush1.msra.mxu0 0.0
    %5324 = vmatprep.subr.mxu0 0.0
    %5325 = vmatpush1.msra.mxu0 0.0
    %5326 = vmatprep.subr.mxu0 0.0
    %5327 = vmatpush1.msra.mxu0 0.0
    %5328 = vmatprep.subr.mxu0 0.0
    %5329 = vmatpush1.msra.mxu0 0.0
    %5330 = vmatprep.subr.mxu0 0.0
    %5331 = vmatpush1.msra.mxu0 0.0
    %5332 = vmatprep.subr.mxu0 0.0
    %5333 = vmatpush1.msra.mxu0 0.0
    %5334 = vmatprep.subr.mxu0 0.0
    %5335 = vmatpush1.msra.mxu0 0.0
    %5336 = vmatprep.subr.mxu0 0.0
    %5337 = vmatpush1.msra.mxu0 0.0
    %5338 = vmatprep.subr.mxu0 0.0
    %5339 = vmatpush1.msra.mxu0 0.0
    %5340 = vmatprep.subr.mxu0 0.0
    %5341 = vmatpush1.msra.mxu0 %v571
    %5342 = vmatprep.subr.mxu0 0.0
    %5343 = vmatpush1.msra.mxu0 %v477
    %5344 = vmatprep.subr.mxu0 0.0
    %5345 = vmatpush1.msra.mxu0 %v476
    %5346 = vmatprep.subr.mxu0 0.0
    %5347 = vmatpush1.msra.mxu0 %v475
    %5348 = vmatprep.subr.mxu0 0.0
    %5349 = vmatpush2.msra.mxu0 0.0
    %5350 = vmatprep.subr.mxu0 0.0
    %5351 = vmatpush2.msra.mxu0 0.0
    %5352 = vmatprep.subr.mxu0 0.0
    %5353 = vmatpush2.msra.mxu0 0.0
    %5354 = vmatprep.subr.mxu0 0.0
    %5355 = vmatpush2.msra.mxu0 0.0
    %5356 = vmatprep.subr.mxu0 0.0
    %5357 = vmatpush2.msra.mxu0 0.0
    %5358 = vmatprep.subr.mxu0 0.0
    %5359 = vmatpush2.msra.mxu0 0.0
    %5360 = vmatprep.subr.mxu0 0.0
    %5361 = vmatpush2.msra.mxu0 0.0
    %5362 = vmatprep.subr.mxu0 0.0
    %5363 = vmatpush2.msra.mxu0 0.0
    %5364 = vmatprep.subr.mxu0 0.0
    %5365 = vmatpush2.msra.mxu0 0.0
    %5366 = vmatprep.subr.mxu0 0.0
    %5367 = vmatpush2.msra.mxu0 0.0
    %5368 = vmatprep.subr.mxu0 0.0
    %5369 = vmatpush2.msra.mxu0 0.0
    %5370 = vmatprep.subr.mxu0 0.0
    %5371 = vmatpush2.msra.mxu0 0.0
    %5372 = vmatprep.subr.mxu0 0.0
    %5373 = vmatpush2.msra.mxu0 0.0
    %5374 = vmatprep.subr.mxu0 0.0
    %5375 = vmatpush2.msra.mxu0 0.0
    %5376 = vmatprep.subr.mxu0 0.0
    %5377 = vmatpush2.msra.mxu0 0.0
    %5378 = vmatprep.subr.mxu0 0.0
    %5379 = vmatpush2.msra.mxu0 0.0
    %5380 = vmatprep.mubr.f32.mxu0 0.0
    %5381 = vmatmul.mubr.f32.gmra.mxu0 %v5244
    %v5382 = vpop.f32.mrf.mxu0
    %v5383 = vadd.f32 0.0, %v5382
    %v5384 = vpop.f32.mrf.mxu0
    %5385 = vdwg.mxu0
    %5386 = vmatprep.subr.mxu0 0.0
    %5387 = vmatpush1.msra.mxu0 0.0
    %5388 = vmatprep.subr.mxu0 0.0
    %5389 = vmatpush1.msra.mxu0 0.0
    %5390 = vmatprep.subr.mxu0 0.0
    %5391 = vmatpush1.msra.mxu0 0.0
    %5392 = vmatprep.subr.mxu0 0.0
    %5393 = vmatpush1.msra.mxu0 0.0
    %5394 = vmatprep.subr.mxu0 0.0
    %5395 = vmatpush1.msra.mxu0 0.0
    %5396 = vmatprep.subr.mxu0 0.0
    %5397 = vmatpush1.msra.mxu0 0.0
    %5398 = vmatprep.subr.mxu0 0.0
    %5399 = vmatpush1.msra.mxu0 0.0
    %5400 = vmatprep.subr.mxu0 0.0
    %5401 = vmatpush1.msra.mxu0 0.0
    %5402 = vmatprep.subr.mxu0 0.0
    %5403 = vmatpush1.msra.mxu0 0.0
    %5404 = vmatprep.subr.mxu0 0.0
    %5405 = vmatpush1.msra.mxu0 0.0
    %5406 = vmatprep.subr.mxu0 0.0
    %5407 = vmatpush1.msra.mxu0 0.0
    %5408 = vmatprep.subr.mxu0 0.0
    %5409 = vmatpush1.msra.mxu0 0.0
    %5410 = vmatprep.subr.mxu0 0.0
    %5411 = vmatpush1.msra.mxu0 %v644
    %5412 = vmatprep.subr.mxu0 0.0
    %5413 = vmatpush1.msra.mxu0 %v482
    %5414 = vmatprep.subr.mxu0 0.0
    %5415 = vmatpush1.msra.mxu0 %v481
    %5416 = vmatprep.subr.mxu0 0.0
    %5417 = vmatpush1.msra.mxu0 %v480
    %5418 = vmatprep.subr.mxu0 0.0
    %5419 = vmatpush2.msra.mxu0 0.0
    %5420 = vmatprep.subr.mxu0 0.0
    %5421 = vmatpush2.msra.mxu0 0.0
    %5422 = vmatprep.subr.mxu0 0.0
    %5423 = vmatpush2.msra.mxu0 0.0
    %5424 = vmatprep.subr.mxu0 0.0
    %5425 = vmatpush2.msra.mxu0 0.0
    %5426 = vmatprep.subr.mxu0 0.0
    %5427 = vmatpush2.msra.mxu0 0.0
    %5428 = vmatprep.subr.mxu0 0.0
    %5429 = vmatpush2.msra.mxu0 0.0
    %5430 = vmatprep.subr.mxu0 0.0
    %5431 = vmatpush2.msra.mxu0 0.0
    %5432 = vmatprep.subr.mxu0 0.0
    %5433 = vmatpush2.msra.mxu0 0.0
    %5434 = vmatprep.subr.mxu0 0.0
    %5435 = vmatpush2.msra.mxu0 0.0
    %5436 = vmatprep.subr.mxu0 0.0
    %5437 = vmatpush2.msra.mxu0 0.0
    %5438 = vmatprep.subr.mxu0 0.0
    %5439 = vmatpush2.msra.mxu0 0.0
    %5440 = vmatprep.subr.mxu0 0.0
    %5441 = vmatpush2.msra.mxu0 0.0
    %5442 = vmatprep.subr.mxu0 0.0
    %5443 = vmatpush2.msra.mxu0 0.0
    %5444 = vmatprep.subr.mxu0 0.0
    %5445 = vmatpush2.msra.mxu0 0.0
    %5446 = vmatprep.subr.mxu0 0.0
    %5447 = vmatpush2.msra.mxu0 0.0
    %5448 = vmatprep.subr.mxu0 0.0
    %5449 = vmatpush2.msra.mxu0 0.0
    %5450 = vmatprep.mubr.f32.mxu0 0.0
    %5451 = vmatmul.mubr.f32.gmra.mxu0 %v5244
    %v5452 = vpop.f32.mrf.mxu0
    %v5453 = vadd.f32 %v489, %v5452
    %v5454 = vpop.f32.mrf.mxu0
    %5455 = vdwg.mxu0
    %v5456 = vadd.f32 %v5240, %v5313
    %v5457 = vxor.u32 %v5456, 2147483648
    %v5458 = vmul.f32 %v5457, 1.442695
    %v5459 = vpow.pop %v5458
    %v5460 = vadd.f32 %v5459, 1.0
    %v5461 = vrcp.pop %v5460
    %v5462 = vmul.f32 1.0, %v5461
    %v5463 = vadd.f32 %v5241, %v5383
    %v5464 = vxor.u32 %v5463, 2147483648
    %v5465 = vmul.f32 %v5464, 1.442695
    %v5466 = vpow.pop %v5465
    %v5467 = vadd.f32 %v5466, 1.0
    %v5468 = vrcp.pop %v5467
    %v5469 = vmul.f32 1.0, %v5468
    %v5470 = vmul.f32 %v5462, %v5453
    %v5471 = vadd.f32 %v5242, %v5470
    %v5472 = vtanh.pop %v5471
    %v5473 = vsub.f32 1.0, %v5469
    %v5474 = vmul.f32 %v5473, %v5472
    %v5475 = vmul.f32 %v5469, %v5239
    %v5476 = vadd.f32 %v5474, %v5475
    %v5477 = vld [vmem:[#allocation2 + $0x2a] sm:$0x3]
    %v5478 = vld [vmem:[%s324 + $0x2a] sm:$0x3]
    %v5479 = vld [vmem:[%s460 + $0x2a] sm:$0x3]
    %v5481 = vsel %vm47, %v5476, 0
    %5483 = vmatprep.subr.mxu0 0.0
    %5484 = vmatpush1.msra.mxu0 0.0
    %5485 = vmatprep.subr.mxu0 0.0
    %5486 = vmatpush1.msra.mxu0 0.0
    %5487 = vmatprep.subr.mxu0 0.0
    %5488 = vmatpush1.msra.mxu0 0.0
    %5489 = vmatprep.subr.mxu0 0.0
    %5490 = vmatpush1.msra.mxu0 0.0
    %5491 = vmatprep.subr.mxu0 0.0
    %5492 = vmatpush1.msra.mxu0 0.0
    %5493 = vmatprep.subr.mxu0 0.0
    %5494 = vmatpush1.msra.mxu0 0.0
    %5495 = vmatprep.subr.mxu0 0.0
    %5496 = vmatpush1.msra.mxu0 0.0
    %5497 = vmatprep.subr.mxu0 0.0
    %5498 = vmatpush1.msra.mxu0 0.0
    %5499 = vmatprep.subr.mxu0 0.0
    %5500 = vmatpush1.msra.mxu0 0.0
    %5501 = vmatprep.subr.mxu0 0.0
    %5502 = vmatpush1.msra.mxu0 0.0
    %5503 = vmatprep.subr.mxu0 0.0
    %5504 = vmatpush1.msra.mxu0 0.0
    %5505 = vmatprep.subr.mxu0 0.0
    %5506 = vmatpush1.msra.mxu0 0.0
    %5507 = vmatprep.subr.mxu0 0.0
    %5508 = vmatpush1.msra.mxu0 %v498
    %5509 = vmatprep.subr.mxu0 0.0
    %5510 = vmatpush1.msra.mxu0 %v472
    %5511 = vmatprep.subr.mxu0 0.0
    %5512 = vmatpush1.msra.mxu0 %v471
    %5513 = vmatprep.subr.mxu0 0.0
    %5514 = vmatpush1.msra.mxu0 %v470
    %5515 = vmatprep.subr.mxu0 0.0
    %5516 = vmatpush2.msra.mxu0 0.0
    %5517 = vmatprep.subr.mxu0 0.0
    %5518 = vmatpush2.msra.mxu0 0.0
    %5519 = vmatprep.subr.mxu0 0.0
    %5520 = vmatpush2.msra.mxu0 0.0
    %5521 = vmatprep.subr.mxu0 0.0
    %5522 = vmatpush2.msra.mxu0 0.0
    %5523 = vmatprep.subr.mxu0 0.0
    %5524 = vmatpush2.msra.mxu0 0.0
    %5525 = vmatprep.subr.mxu0 0.0
    %5526 = vmatpush2.msra.mxu0 0.0
    %5527 = vmatprep.subr.mxu0 0.0
    %5528 = vmatpush2.msra.mxu0 0.0
    %5529 = vmatprep.subr.mxu0 0.0
    %5530 = vmatpush2.msra.mxu0 0.0
    %5531 = vmatprep.subr.mxu0 0.0
    %5532 = vmatpush2.msra.mxu0 0.0
    %5533 = vmatprep.subr.mxu0 0.0
    %5534 = vmatpush2.msra.mxu0 0.0
    %5535 = vmatprep.subr.mxu0 0.0
    %5536 = vmatpush2.msra.mxu0 0.0
    %5537 = vmatprep.subr.mxu0 0.0
    %5538 = vmatpush2.msra.mxu0 0.0
    %5539 = vmatprep.subr.mxu0 0.0
    %5540 = vmatpush2.msra.mxu0 0.0
    %5541 = vmatprep.subr.mxu0 0.0
    %5542 = vmatpush2.msra.mxu0 0.0
    %5543 = vmatprep.subr.mxu0 0.0
    %5544 = vmatpush2.msra.mxu0 0.0
    %5545 = vmatprep.subr.mxu0 0.0
    %5546 = vmatpush2.msra.mxu0 0.0
    %5547 = vmatprep.mubr.f32.mxu0 0.0
    %5548 = vmatmul.mubr.f32.gmra.mxu0 %v5481
    %v5549 = vpop.f32.mrf.mxu0
    %v5550 = vadd.f32 0.0, %v5549
    %v5551 = vpop.f32.mrf.mxu0
    %5552 = vdwg.mxu0
    %5553 = vmatprep.subr.mxu0 0.0
    %5554 = vmatpush1.msra.mxu0 0.0
    %5555 = vmatprep.subr.mxu0 0.0
    %5556 = vmatpush1.msra.mxu0 0.0
    %5557 = vmatprep.subr.mxu0 0.0
    %5558 = vmatpush1.msra.mxu0 0.0
    %5559 = vmatprep.subr.mxu0 0.0
    %5560 = vmatpush1.msra.mxu0 0.0
    %5561 = vmatprep.subr.mxu0 0.0
    %5562 = vmatpush1.msra.mxu0 0.0
    %5563 = vmatprep.subr.mxu0 0.0
    %5564 = vmatpush1.msra.mxu0 0.0
    %5565 = vmatprep.subr.mxu0 0.0
    %5566 = vmatpush1.msra.mxu0 0.0
    %5567 = vmatprep.subr.mxu0 0.0
    %5568 = vmatpush1.msra.mxu0 0.0
    %5569 = vmatprep.subr.mxu0 0.0
    %5570 = vmatpush1.msra.mxu0 0.0
    %5571 = vmatprep.subr.mxu0 0.0
    %5572 = vmatpush1.msra.mxu0 0.0
    %5573 = vmatprep.subr.mxu0 0.0
    %5574 = vmatpush1.msra.mxu0 0.0
    %5575 = vmatprep.subr.mxu0 0.0
    %5576 = vmatpush1.msra.mxu0 0.0
    %5577 = vmatprep.subr.mxu0 0.0
    %5578 = vmatpush1.msra.mxu0 %v571
    %5579 = vmatprep.subr.mxu0 0.0
    %5580 = vmatpush1.msra.mxu0 %v477
    %5581 = vmatprep.subr.mxu0 0.0
    %5582 = vmatpush1.msra.mxu0 %v476
    %5583 = vmatprep.subr.mxu0 0.0
    %5584 = vmatpush1.msra.mxu0 %v475
    %5585 = vmatprep.subr.mxu0 0.0
    %5586 = vmatpush2.msra.mxu0 0.0
    %5587 = vmatprep.subr.mxu0 0.0
    %5588 = vmatpush2.msra.mxu0 0.0
    %5589 = vmatprep.subr.mxu0 0.0
    %5590 = vmatpush2.msra.mxu0 0.0
    %5591 = vmatprep.subr.mxu0 0.0
    %5592 = vmatpush2.msra.mxu0 0.0
    %5593 = vmatprep.subr.mxu0 0.0
    %5594 = vmatpush2.msra.mxu0 0.0
    %5595 = vmatprep.subr.mxu0 0.0
    %5596 = vmatpush2.msra.mxu0 0.0
    %5597 = vmatprep.subr.mxu0 0.0
    %5598 = vmatpush2.msra.mxu0 0.0
    %5599 = vmatprep.subr.mxu0 0.0
    %5600 = vmatpush2.msra.mxu0 0.0
    %5601 = vmatprep.subr.mxu0 0.0
    %5602 = vmatpush2.msra.mxu0 0.0
    %5603 = vmatprep.subr.mxu0 0.0
    %5604 = vmatpush2.msra.mxu0 0.0
    %5605 = vmatprep.subr.mxu0 0.0
    %5606 = vmatpush2.msra.mxu0 0.0
    %5607 = vmatprep.subr.mxu0 0.0
    %5608 = vmatpush2.msra.mxu0 0.0
    %5609 = vmatprep.subr.mxu0 0.0
    %5610 = vmatpush2.msra.mxu0 0.0
    %5611 = vmatprep.subr.mxu0 0.0
    %5612 = vmatpush2.msra.mxu0 0.0
    %5613 = vmatprep.subr.mxu0 0.0
    %5614 = vmatpush2.msra.mxu0 0.0
    %5615 = vmatprep.subr.mxu0 0.0
    %5616 = vmatpush2.msra.mxu0 0.0
    %5617 = vmatprep.mubr.f32.mxu0 0.0
    %5618 = vmatmul.mubr.f32.gmra.mxu0 %v5481
    %v5619 = vpop.f32.mrf.mxu0
    %v5620 = vadd.f32 0.0, %v5619
    %v5621 = vpop.f32.mrf.mxu0
    %5622 = vdwg.mxu0
    %5623 = vmatprep.subr.mxu0 0.0
    %5624 = vmatpush1.msra.mxu0 0.0
    %5625 = vmatprep.subr.mxu0 0.0
    %5626 = vmatpush1.msra.mxu0 0.0
    %5627 = vmatprep.subr.mxu0 0.0
    %5628 = vmatpush1.msra.mxu0 0.0
    %5629 = vmatprep.subr.mxu0 0.0
    %5630 = vmatpush1.msra.mxu0 0.0
    %5631 = vmatprep.subr.mxu0 0.0
    %5632 = vmatpush1.msra.mxu0 0.0
    %5633 = vmatprep.subr.mxu0 0.0
    %5634 = vmatpush1.msra.mxu0 0.0
    %5635 = vmatprep.subr.mxu0 0.0
    %5636 = vmatpush1.msra.mxu0 0.0
    %5637 = vmatprep.subr.mxu0 0.0
    %5638 = vmatpush1.msra.mxu0 0.0
    %5639 = vmatprep.subr.mxu0 0.0
    %5640 = vmatpush1.msra.mxu0 0.0
    %5641 = vmatprep.subr.mxu0 0.0
    %5642 = vmatpush1.msra.mxu0 0.0
    %5643 = vmatprep.subr.mxu0 0.0
    %5644 = vmatpush1.msra.mxu0 0.0
    %5645 = vmatprep.subr.mxu0 0.0
    %5646 = vmatpush1.msra.mxu0 0.0
    %5647 = vmatprep.subr.mxu0 0.0
    %5648 = vmatpush1.msra.mxu0 %v644
    %5649 = vmatprep.subr.mxu0 0.0
    %5650 = vmatpush1.msra.mxu0 %v482
    %5651 = vmatprep.subr.mxu0 0.0
    %5652 = vmatpush1.msra.mxu0 %v481
    %5653 = vmatprep.subr.mxu0 0.0
    %5654 = vmatpush1.msra.mxu0 %v480
    %5655 = vmatprep.subr.mxu0 0.0
    %5656 = vmatpush2.msra.mxu0 0.0
    %5657 = vmatprep.subr.mxu0 0.0
    %5658 = vmatpush2.msra.mxu0 0.0
    %5659 = vmatprep.subr.mxu0 0.0
    %5660 = vmatpush2.msra.mxu0 0.0
    %5661 = vmatprep.subr.mxu0 0.0
    %5662 = vmatpush2.msra.mxu0 0.0
    %5663 = vmatprep.subr.mxu0 0.0
    %5664 = vmatpush2.msra.mxu0 0.0
    %5665 = vmatprep.subr.mxu0 0.0
    %5666 = vmatpush2.msra.mxu0 0.0
    %5667 = vmatprep.subr.mxu0 0.0
    %5668 = vmatpush2.msra.mxu0 0.0
    %5669 = vmatprep.subr.mxu0 0.0
    %5670 = vmatpush2.msra.mxu0 0.0
    %5671 = vmatprep.subr.mxu0 0.0
    %5672 = vmatpush2.msra.mxu0 0.0
    %5673 = vmatprep.subr.mxu0 0.0
    %5674 = vmatpush2.msra.mxu0 0.0
    %5675 = vmatprep.subr.mxu0 0.0
    %5676 = vmatpush2.msra.mxu0 0.0
    %5677 = vmatprep.subr.mxu0 0.0
    %5678 = vmatpush2.msra.mxu0 0.0
    %5679 = vmatprep.subr.mxu0 0.0
    %5680 = vmatpush2.msra.mxu0 0.0
    %5681 = vmatprep.subr.mxu0 0.0
    %5682 = vmatpush2.msra.mxu0 0.0
    %5683 = vmatprep.subr.mxu0 0.0
    %5684 = vmatpush2.msra.mxu0 0.0
    %5685 = vmatprep.subr.mxu0 0.0
    %5686 = vmatpush2.msra.mxu0 0.0
    %5687 = vmatprep.mubr.f32.mxu0 0.0
    %5688 = vmatmul.mubr.f32.gmra.mxu0 %v5481
    %v5689 = vpop.f32.mrf.mxu0
    %v5690 = vadd.f32 %v489, %v5689
    %v5691 = vpop.f32.mrf.mxu0
    %5692 = vdwg.mxu0
    %v5693 = vadd.f32 %v5477, %v5550
    %v5694 = vxor.u32 %v5693, 2147483648
    %v5695 = vmul.f32 %v5694, 1.442695
    %v5696 = vpow.pop %v5695
    %v5697 = vadd.f32 %v5696, 1.0
    %v5698 = vrcp.pop %v5697
    %v5699 = vmul.f32 1.0, %v5698
    %v5700 = vadd.f32 %v5478, %v5620
    %v5701 = vxor.u32 %v5700, 2147483648
    %v5702 = vmul.f32 %v5701, 1.442695
    %v5703 = vpow.pop %v5702
    %v5704 = vadd.f32 %v5703, 1.0
    %v5705 = vrcp.pop %v5704
    %v5706 = vmul.f32 1.0, %v5705
    %v5707 = vmul.f32 %v5699, %v5690
    %v5708 = vadd.f32 %v5479, %v5707
    %v5709 = vtanh.pop %v5708
    %v5710 = vsub.f32 1.0, %v5706
    %v5711 = vmul.f32 %v5710, %v5709
    %v5712 = vmul.f32 %v5706, %v5476
    %v5713 = vadd.f32 %v5711, %v5712
    %v5714 = vld [vmem:[#allocation2 + $0x2c] sm:$0x3]
    %v5715 = vld [vmem:[%s324 + $0x2c] sm:$0x3]
    %v5716 = vld [vmem:[%s460 + $0x2c] sm:$0x3]
    %v5718 = vsel %vm47, %v5713, 0
    %5720 = vmatprep.subr.mxu0 0.0
    %5721 = vmatpush1.msra.mxu0 0.0
    %5722 = vmatprep.subr.mxu0 0.0
    %5723 = vmatpush1.msra.mxu0 0.0
    %5724 = vmatprep.subr.mxu0 0.0
    %5725 = vmatpush1.msra.mxu0 0.0
    %5726 = vmatprep.subr.mxu0 0.0
    %5727 = vmatpush1.msra.mxu0 0.0
    %5728 = vmatprep.subr.mxu0 0.0
    %5729 = vmatpush1.msra.mxu0 0.0
    %5730 = vmatprep.subr.mxu0 0.0
    %5731 = vmatpush1.msra.mxu0 0.0
    %5732 = vmatprep.subr.mxu0 0.0
    %5733 = vmatpush1.msra.mxu0 0.0
    %5734 = vmatprep.subr.mxu0 0.0
    %5735 = vmatpush1.msra.mxu0 0.0
    %5736 = vmatprep.subr.mxu0 0.0
    %5737 = vmatpush1.msra.mxu0 0.0
    %5738 = vmatprep.subr.mxu0 0.0
    %5739 = vmatpush1.msra.mxu0 0.0
    %5740 = vmatprep.subr.mxu0 0.0
    %5741 = vmatpush1.msra.mxu0 0.0
    %5742 = vmatprep.subr.mxu0 0.0
    %5743 = vmatpush1.msra.mxu0 0.0
    %5744 = vmatprep.subr.mxu0 0.0
    %5745 = vmatpush1.msra.mxu0 %v498
    %5746 = vmatprep.subr.mxu0 0.0
    %5747 = vmatpush1.msra.mxu0 %v472
    %5748 = vmatprep.subr.mxu0 0.0
    %5749 = vmatpush1.msra.mxu0 %v471
    %5750 = vmatprep.subr.mxu0 0.0
    %5751 = vmatpush1.msra.mxu0 %v470
    %5752 = vmatprep.subr.mxu0 0.0
    %5753 = vmatpush2.msra.mxu0 0.0
    %5754 = vmatprep.subr.mxu0 0.0
    %5755 = vmatpush2.msra.mxu0 0.0
    %5756 = vmatprep.subr.mxu0 0.0
    %5757 = vmatpush2.msra.mxu0 0.0
    %5758 = vmatprep.subr.mxu0 0.0
    %5759 = vmatpush2.msra.mxu0 0.0
    %5760 = vmatprep.subr.mxu0 0.0
    %5761 = vmatpush2.msra.mxu0 0.0
    %5762 = vmatprep.subr.mxu0 0.0
    %5763 = vmatpush2.msra.mxu0 0.0
    %5764 = vmatprep.subr.mxu0 0.0
    %5765 = vmatpush2.msra.mxu0 0.0
    %5766 = vmatprep.subr.mxu0 0.0
    %5767 = vmatpush2.msra.mxu0 0.0
    %5768 = vmatprep.subr.mxu0 0.0
    %5769 = vmatpush2.msra.mxu0 0.0
    %5770 = vmatprep.subr.mxu0 0.0
    %5771 = vmatpush2.msra.mxu0 0.0
    %5772 = vmatprep.subr.mxu0 0.0
    %5773 = vmatpush2.msra.mxu0 0.0
    %5774 = vmatprep.subr.mxu0 0.0
    %5775 = vmatpush2.msra.mxu0 0.0
    %5776 = vmatprep.subr.mxu0 0.0
    %5777 = vmatpush2.msra.mxu0 0.0
    %5778 = vmatprep.subr.mxu0 0.0
    %5779 = vmatpush2.msra.mxu0 0.0
    %5780 = vmatprep.subr.mxu0 0.0
    %5781 = vmatpush2.msra.mxu0 0.0
    %5782 = vmatprep.subr.mxu0 0.0
    %5783 = vmatpush2.msra.mxu0 0.0
    %5784 = vmatprep.mubr.f32.mxu0 0.0
    %5785 = vmatmul.mubr.f32.gmra.mxu0 %v5718
    %v5786 = vpop.f32.mrf.mxu0
    %v5787 = vadd.f32 0.0, %v5786
    %v5788 = vpop.f32.mrf.mxu0
    %5789 = vdwg.mxu0
    %5790 = vmatprep.subr.mxu0 0.0
    %5791 = vmatpush1.msra.mxu0 0.0
    %5792 = vmatprep.subr.mxu0 0.0
    %5793 = vmatpush1.msra.mxu0 0.0
    %5794 = vmatprep.subr.mxu0 0.0
    %5795 = vmatpush1.msra.mxu0 0.0
    %5796 = vmatprep.subr.mxu0 0.0
    %5797 = vmatpush1.msra.mxu0 0.0
    %5798 = vmatprep.subr.mxu0 0.0
    %5799 = vmatpush1.msra.mxu0 0.0
    %5800 = vmatprep.subr.mxu0 0.0
    %5801 = vmatpush1.msra.mxu0 0.0
    %5802 = vmatprep.subr.mxu0 0.0
    %5803 = vmatpush1.msra.mxu0 0.0
    %5804 = vmatprep.subr.mxu0 0.0
    %5805 = vmatpush1.msra.mxu0 0.0
    %5806 = vmatprep.subr.mxu0 0.0
    %5807 = vmatpush1.msra.mxu0 0.0
    %5808 = vmatprep.subr.mxu0 0.0
    %5809 = vmatpush1.msra.mxu0 0.0
    %5810 = vmatprep.subr.mxu0 0.0
    %5811 = vmatpush1.msra.mxu0 0.0
    %5812 = vmatprep.subr.mxu0 0.0
    %5813 = vmatpush1.msra.mxu0 0.0
    %5814 = vmatprep.subr.mxu0 0.0
    %5815 = vmatpush1.msra.mxu0 %v571
    %5816 = vmatprep.subr.mxu0 0.0
    %5817 = vmatpush1.msra.mxu0 %v477
    %5818 = vmatprep.subr.mxu0 0.0
    %5819 = vmatpush1.msra.mxu0 %v476
    %5820 = vmatprep.subr.mxu0 0.0
    %5821 = vmatpush1.msra.mxu0 %v475
    %5822 = vmatprep.subr.mxu0 0.0
    %5823 = vmatpush2.msra.mxu0 0.0
    %5824 = vmatprep.subr.mxu0 0.0
    %5825 = vmatpush2.msra.mxu0 0.0
    %5826 = vmatprep.subr.mxu0 0.0
    %5827 = vmatpush2.msra.mxu0 0.0
    %5828 = vmatprep.subr.mxu0 0.0
    %5829 = vmatpush2.msra.mxu0 0.0
    %5830 = vmatprep.subr.mxu0 0.0
    %5831 = vmatpush2.msra.mxu0 0.0
    %5832 = vmatprep.subr.mxu0 0.0
    %5833 = vmatpush2.msra.mxu0 0.0
    %5834 = vmatprep.subr.mxu0 0.0
    %5835 = vmatpush2.msra.mxu0 0.0
    %5836 = vmatprep.subr.mxu0 0.0
    %5837 = vmatpush2.msra.mxu0 0.0
    %5838 = vmatprep.subr.mxu0 0.0
    %5839 = vmatpush2.msra.mxu0 0.0
    %5840 = vmatprep.subr.mxu0 0.0
    %5841 = vmatpush2.msra.mxu0 0.0
    %5842 = vmatprep.subr.mxu0 0.0
    %5843 = vmatpush2.msra.mxu0 0.0
    %5844 = vmatprep.subr.mxu0 0.0
    %5845 = vmatpush2.msra.mxu0 0.0
    %5846 = vmatprep.subr.mxu0 0.0
    %5847 = vmatpush2.msra.mxu0 0.0
    %5848 = vmatprep.subr.mxu0 0.0
    %5849 = vmatpush2.msra.mxu0 0.0
    %5850 = vmatprep.subr.mxu0 0.0
    %5851 = vmatpush2.msra.mxu0 0.0
    %5852 = vmatprep.subr.mxu0 0.0
    %5853 = vmatpush2.msra.mxu0 0.0
    %5854 = vmatprep.mubr.f32.mxu0 0.0
    %5855 = vmatmul.mubr.f32.gmra.mxu0 %v5718
    %v5856 = vpop.f32.mrf.mxu0
    %v5857 = vadd.f32 0.0, %v5856
    %v5858 = vpop.f32.mrf.mxu0
    %5859 = vdwg.mxu0
    %5860 = vmatprep.subr.mxu0 0.0
    %5861 = vmatpush1.msra.mxu0 0.0
    %5862 = vmatprep.subr.mxu0 0.0
    %5863 = vmatpush1.msra.mxu0 0.0
    %5864 = vmatprep.subr.mxu0 0.0
    %5865 = vmatpush1.msra.mxu0 0.0
    %5866 = vmatprep.subr.mxu0 0.0
    %5867 = vmatpush1.msra.mxu0 0.0
    %5868 = vmatprep.subr.mxu0 0.0
    %5869 = vmatpush1.msra.mxu0 0.0
    %5870 = vmatprep.subr.mxu0 0.0
    %5871 = vmatpush1.msra.mxu0 0.0
    %5872 = vmatprep.subr.mxu0 0.0
    %5873 = vmatpush1.msra.mxu0 0.0
    %5874 = vmatprep.subr.mxu0 0.0
    %5875 = vmatpush1.msra.mxu0 0.0
    %5876 = vmatprep.subr.mxu0 0.0
    %5877 = vmatpush1.msra.mxu0 0.0
    %5878 = vmatprep.subr.mxu0 0.0
    %5879 = vmatpush1.msra.mxu0 0.0
    %5880 = vmatprep.subr.mxu0 0.0
    %5881 = vmatpush1.msra.mxu0 0.0
    %5882 = vmatprep.subr.mxu0 0.0
    %5883 = vmatpush1.msra.mxu0 0.0
    %5884 = vmatprep.subr.mxu0 0.0
    %5885 = vmatpush1.msra.mxu0 %v644
    %5886 = vmatprep.subr.mxu0 0.0
    %5887 = vmatpush1.msra.mxu0 %v482
    %5888 = vmatprep.subr.mxu0 0.0
    %5889 = vmatpush1.msra.mxu0 %v481
    %5890 = vmatprep.subr.mxu0 0.0
    %5891 = vmatpush1.msra.mxu0 %v480
    %5892 = vmatprep.subr.mxu0 0.0
    %5893 = vmatpush2.msra.mxu0 0.0
    %5894 = vmatprep.subr.mxu0 0.0
    %5895 = vmatpush2.msra.mxu0 0.0
    %5896 = vmatprep.subr.mxu0 0.0
    %5897 = vmatpush2.msra.mxu0 0.0
    %5898 = vmatprep.subr.mxu0 0.0
    %5899 = vmatpush2.msra.mxu0 0.0
    %5900 = vmatprep.subr.mxu0 0.0
    %5901 = vmatpush2.msra.mxu0 0.0
    %5902 = vmatprep.subr.mxu0 0.0
    %5903 = vmatpush2.msra.mxu0 0.0
    %5904 = vmatprep.subr.mxu0 0.0
    %5905 = vmatpush2.msra.mxu0 0.0
    %5906 = vmatprep.subr.mxu0 0.0
    %5907 = vmatpush2.msra.mxu0 0.0
    %5908 = vmatprep.subr.mxu0 0.0
    %5909 = vmatpush2.msra.mxu0 0.0
    %5910 = vmatprep.subr.mxu0 0.0
    %5911 = vmatpush2.msra.mxu0 0.0
    %5912 = vmatprep.subr.mxu0 0.0
    %5913 = vmatpush2.msra.mxu0 0.0
    %5914 = vmatprep.subr.mxu0 0.0
    %5915 = vmatpush2.msra.mxu0 0.0
    %5916 = vmatprep.subr.mxu0 0.0
    %5917 = vmatpush2.msra.mxu0 0.0
    %5918 = vmatprep.subr.mxu0 0.0
    %5919 = vmatpush2.msra.mxu0 0.0
    %5920 = vmatprep.subr.mxu0 0.0
    %5921 = vmatpush2.msra.mxu0 0.0
    %5922 = vmatprep.subr.mxu0 0.0
    %5923 = vmatpush2.msra.mxu0 0.0
    %5924 = vmatprep.mubr.f32.mxu0 0.0
    %5925 = vmatmul.mubr.f32.gmra.mxu0 %v5718
    %v5926 = vpop.f32.mrf.mxu0
    %v5927 = vadd.f32 %v489, %v5926
    %v5928 = vpop.f32.mrf.mxu0
    %5929 = vdwg.mxu0
    %v5930 = vadd.f32 %v5714, %v5787
    %v5931 = vxor.u32 %v5930, 2147483648
    %v5932 = vmul.f32 %v5931, 1.442695
    %v5933 = vpow.pop %v5932
    %v5934 = vadd.f32 %v5933, 1.0
    %v5935 = vrcp.pop %v5934
    %v5936 = vmul.f32 1.0, %v5935
    %v5937 = vadd.f32 %v5715, %v5857
    %v5938 = vxor.u32 %v5937, 2147483648
    %v5939 = vmul.f32 %v5938, 1.442695
    %v5940 = vpow.pop %v5939
    %v5941 = vadd.f32 %v5940, 1.0
    %v5942 = vrcp.pop %v5941
    %v5943 = vmul.f32 1.0, %v5942
    %v5944 = vmul.f32 %v5936, %v5927
    %v5945 = vadd.f32 %v5716, %v5944
    %v5946 = vtanh.pop %v5945
    %v5947 = vsub.f32 1.0, %v5943
    %v5948 = vmul.f32 %v5947, %v5946
    %v5949 = vmul.f32 %v5943, %v5713
    %v5950 = vadd.f32 %v5948, %v5949
    %v5951 = vld [vmem:[#allocation2 + $0x2e] sm:$0x3]
    %v5952 = vld [vmem:[%s324 + $0x2e] sm:$0x3]
    %v5953 = vld [vmem:[%s460 + $0x2e] sm:$0x3]
    %v5955 = vsel %vm47, %v5950, 0
    %5957 = vmatprep.subr.mxu0 0.0
    %5958 = vmatpush1.msra.mxu0 0.0
    %5959 = vmatprep.subr.mxu0 0.0
    %5960 = vmatpush1.msra.mxu0 0.0
    %5961 = vmatprep.subr.mxu0 0.0
    %5962 = vmatpush1.msra.mxu0 0.0
    %5963 = vmatprep.subr.mxu0 0.0
    %5964 = vmatpush1.msra.mxu0 0.0
    %5965 = vmatprep.subr.mxu0 0.0
    %5966 = vmatpush1.msra.mxu0 0.0
    %5967 = vmatprep.subr.mxu0 0.0
    %5968 = vmatpush1.msra.mxu0 0.0
    %5969 = vmatprep.subr.mxu0 0.0
    %5970 = vmatpush1.msra.mxu0 0.0
    %5971 = vmatprep.subr.mxu0 0.0
    %5972 = vmatpush1.msra.mxu0 0.0
    %5973 = vmatprep.subr.mxu0 0.0
    %5974 = vmatpush1.msra.mxu0 0.0
    %5975 = vmatprep.subr.mxu0 0.0
    %5976 = vmatpush1.msra.mxu0 0.0
    %5977 = vmatprep.subr.mxu0 0.0
    %5978 = vmatpush1.msra.mxu0 0.0
    %5979 = vmatprep.subr.mxu0 0.0
    %5980 = vmatpush1.msra.mxu0 0.0
    %5981 = vmatprep.subr.mxu0 0.0
    %5982 = vmatpush1.msra.mxu0 %v498
    %5983 = vmatprep.subr.mxu0 0.0
    %5984 = vmatpush1.msra.mxu0 %v472
    %5985 = vmatprep.subr.mxu0 0.0
    %5986 = vmatpush1.msra.mxu0 %v471
    %5987 = vmatprep.subr.mxu0 0.0
    %5988 = vmatpush1.msra.mxu0 %v470
    %5989 = vmatprep.subr.mxu0 0.0
    %5990 = vmatpush2.msra.mxu0 0.0
    %5991 = vmatprep.subr.mxu0 0.0
    %5992 = vmatpush2.msra.mxu0 0.0
    %5993 = vmatprep.subr.mxu0 0.0
    %5994 = vmatpush2.msra.mxu0 0.0
    %5995 = vmatprep.subr.mxu0 0.0
    %5996 = vmatpush2.msra.mxu0 0.0
    %5997 = vmatprep.subr.mxu0 0.0
    %5998 = vmatpush2.msra.mxu0 0.0
    %5999 = vmatprep.subr.mxu0 0.0
    %6000 = vmatpush2.msra.mxu0 0.0
    %6001 = vmatprep.subr.mxu0 0.0
    %6002 = vmatpush2.msra.mxu0 0.0
    %6003 = vmatprep.subr.mxu0 0.0
    %6004 = vmatpush2.msra.mxu0 0.0
    %6005 = vmatprep.subr.mxu0 0.0
    %6006 = vmatpush2.msra.mxu0 0.0
    %6007 = vmatprep.subr.mxu0 0.0
    %6008 = vmatpush2.msra.mxu0 0.0
    %6009 = vmatprep.subr.mxu0 0.0
    %6010 = vmatpush2.msra.mxu0 0.0
    %6011 = vmatprep.subr.mxu0 0.0
    %6012 = vmatpush2.msra.mxu0 0.0
    %6013 = vmatprep.subr.mxu0 0.0
    %6014 = vmatpush2.msra.mxu0 0.0
    %6015 = vmatprep.subr.mxu0 0.0
    %6016 = vmatpush2.msra.mxu0 0.0
    %6017 = vmatprep.subr.mxu0 0.0
    %6018 = vmatpush2.msra.mxu0 0.0
    %6019 = vmatprep.subr.mxu0 0.0
    %6020 = vmatpush2.msra.mxu0 0.0
    %6021 = vmatprep.mubr.f32.mxu0 0.0
    %6022 = vmatmul.mubr.f32.gmra.mxu0 %v5955
    %v6023 = vpop.f32.mrf.mxu0
    %v6024 = vadd.f32 0.0, %v6023
    %v6025 = vpop.f32.mrf.mxu0
    %6026 = vdwg.mxu0
    %6027 = vmatprep.subr.mxu0 0.0
    %6028 = vmatpush1.msra.mxu0 0.0
    %6029 = vmatprep.subr.mxu0 0.0
    %6030 = vmatpush1.msra.mxu0 0.0
    %6031 = vmatprep.subr.mxu0 0.0
    %6032 = vmatpush1.msra.mxu0 0.0
    %6033 = vmatprep.subr.mxu0 0.0
    %6034 = vmatpush1.msra.mxu0 0.0
    %6035 = vmatprep.subr.mxu0 0.0
    %6036 = vmatpush1.msra.mxu0 0.0
    %6037 = vmatprep.subr.mxu0 0.0
    %6038 = vmatpush1.msra.mxu0 0.0
    %6039 = vmatprep.subr.mxu0 0.0
    %6040 = vmatpush1.msra.mxu0 0.0
    %6041 = vmatprep.subr.mxu0 0.0
    %6042 = vmatpush1.msra.mxu0 0.0
    %6043 = vmatprep.subr.mxu0 0.0
    %6044 = vmatpush1.msra.mxu0 0.0
    %6045 = vmatprep.subr.mxu0 0.0
    %6046 = vmatpush1.msra.mxu0 0.0
    %6047 = vmatprep.subr.mxu0 0.0
    %6048 = vmatpush1.msra.mxu0 0.0
    %6049 = vmatprep.subr.mxu0 0.0
    %6050 = vmatpush1.msra.mxu0 0.0
    %6051 = vmatprep.subr.mxu0 0.0
    %6052 = vmatpush1.msra.mxu0 %v571
    %6053 = vmatprep.subr.mxu0 0.0
    %6054 = vmatpush1.msra.mxu0 %v477
    %6055 = vmatprep.subr.mxu0 0.0
    %6056 = vmatpush1.msra.mxu0 %v476
    %6057 = vmatprep.subr.mxu0 0.0
    %6058 = vmatpush1.msra.mxu0 %v475
    %6059 = vmatprep.subr.mxu0 0.0
    %6060 = vmatpush2.msra.mxu0 0.0
    %6061 = vmatprep.subr.mxu0 0.0
    %6062 = vmatpush2.msra.mxu0 0.0
    %6063 = vmatprep.subr.mxu0 0.0
    %6064 = vmatpush2.msra.mxu0 0.0
    %6065 = vmatprep.subr.mxu0 0.0
    %6066 = vmatpush2.msra.mxu0 0.0
    %6067 = vmatprep.subr.mxu0 0.0
    %6068 = vmatpush2.msra.mxu0 0.0
    %6069 = vmatprep.subr.mxu0 0.0
    %6070 = vmatpush2.msra.mxu0 0.0
    %6071 = vmatprep.subr.mxu0 0.0
    %6072 = vmatpush2.msra.mxu0 0.0
    %6073 = vmatprep.subr.mxu0 0.0
    %6074 = vmatpush2.msra.mxu0 0.0
    %6075 = vmatprep.subr.mxu0 0.0
    %6076 = vmatpush2.msra.mxu0 0.0
    %6077 = vmatprep.subr.mxu0 0.0
    %6078 = vmatpush2.msra.mxu0 0.0
    %6079 = vmatprep.subr.mxu0 0.0
    %6080 = vmatpush2.msra.mxu0 0.0
    %6081 = vmatprep.subr.mxu0 0.0
    %6082 = vmatpush2.msra.mxu0 0.0
    %6083 = vmatprep.subr.mxu0 0.0
    %6084 = vmatpush2.msra.mxu0 0.0
    %6085 = vmatprep.subr.mxu0 0.0
    %6086 = vmatpush2.msra.mxu0 0.0
    %6087 = vmatprep.subr.mxu0 0.0
    %6088 = vmatpush2.msra.mxu0 0.0
    %6089 = vmatprep.subr.mxu0 0.0
    %6090 = vmatpush2.msra.mxu0 0.0
    %6091 = vmatprep.mubr.f32.mxu0 0.0
    %6092 = vmatmul.mubr.f32.gmra.mxu0 %v5955
    %v6093 = vpop.f32.mrf.mxu0
    %v6094 = vadd.f32 0.0, %v6093
    %v6095 = vpop.f32.mrf.mxu0
    %6096 = vdwg.mxu0
    %6097 = vmatprep.subr.mxu0 0.0
    %6098 = vmatpush1.msra.mxu0 0.0
    %6099 = vmatprep.subr.mxu0 0.0
    %6100 = vmatpush1.msra.mxu0 0.0
    %6101 = vmatprep.subr.mxu0 0.0
    %6102 = vmatpush1.msra.mxu0 0.0
    %6103 = vmatprep.subr.mxu0 0.0
    %6104 = vmatpush1.msra.mxu0 0.0
    %6105 = vmatprep.subr.mxu0 0.0
    %6106 = vmatpush1.msra.mxu0 0.0
    %6107 = vmatprep.subr.mxu0 0.0
    %6108 = vmatpush1.msra.mxu0 0.0
    %6109 = vmatprep.subr.mxu0 0.0
    %6110 = vmatpush1.msra.mxu0 0.0
    %6111 = vmatprep.subr.mxu0 0.0
    %6112 = vmatpush1.msra.mxu0 0.0
    %6113 = vmatprep.subr.mxu0 0.0
    %6114 = vmatpush1.msra.mxu0 0.0
    %6115 = vmatprep.subr.mxu0 0.0
    %6116 = vmatpush1.msra.mxu0 0.0
    %6117 = vmatprep.subr.mxu0 0.0
    %6118 = vmatpush1.msra.mxu0 0.0
    %6119 = vmatprep.subr.mxu0 0.0
    %6120 = vmatpush1.msra.mxu0 0.0
    %6121 = vmatprep.subr.mxu0 0.0
    %6122 = vmatpush1.msra.mxu0 %v644
    %6123 = vmatprep.subr.mxu0 0.0
    %6124 = vmatpush1.msra.mxu0 %v482
    %6125 = vmatprep.subr.mxu0 0.0
    %6126 = vmatpush1.msra.mxu0 %v481
    %6127 = vmatprep.subr.mxu0 0.0
    %6128 = vmatpush1.msra.mxu0 %v480
    %6129 = vmatprep.subr.mxu0 0.0
    %6130 = vmatpush2.msra.mxu0 0.0
    %6131 = vmatprep.subr.mxu0 0.0
    %6132 = vmatpush2.msra.mxu0 0.0
    %6133 = vmatprep.subr.mxu0 0.0
    %6134 = vmatpush2.msra.mxu0 0.0
    %6135 = vmatprep.subr.mxu0 0.0
    %6136 = vmatpush2.msra.mxu0 0.0
    %6137 = vmatprep.subr.mxu0 0.0
    %6138 = vmatpush2.msra.mxu0 0.0
    %6139 = vmatprep.subr.mxu0 0.0
    %6140 = vmatpush2.msra.mxu0 0.0
    %6141 = vmatprep.subr.mxu0 0.0
    %6142 = vmatpush2.msra.mxu0 0.0
    %6143 = vmatprep.subr.mxu0 0.0
    %6144 = vmatpush2.msra.mxu0 0.0
    %6145 = vmatprep.subr.mxu0 0.0
    %6146 = vmatpush2.msra.mxu0 0.0
    %6147 = vmatprep.subr.mxu0 0.0
    %6148 = vmatpush2.msra.mxu0 0.0
    %6149 = vmatprep.subr.mxu0 0.0
    %6150 = vmatpush2.msra.mxu0 0.0
    %6151 = vmatprep.subr.mxu0 0.0
    %6152 = vmatpush2.msra.mxu0 0.0
    %6153 = vmatprep.subr.mxu0 0.0
    %6154 = vmatpush2.msra.mxu0 0.0
    %6155 = vmatprep.subr.mxu0 0.0
    %6156 = vmatpush2.msra.mxu0 0.0
    %6157 = vmatprep.subr.mxu0 0.0
    %6158 = vmatpush2.msra.mxu0 0.0
    %6159 = vmatprep.subr.mxu0 0.0
    %6160 = vmatpush2.msra.mxu0 0.0
    %6161 = vmatprep.mubr.f32.mxu0 0.0
    %6162 = vmatmul.mubr.f32.gmra.mxu0 %v5955
    %v6163 = vpop.f32.mrf.mxu0
    %v6164 = vadd.f32 %v489, %v6163
    %v6165 = vpop.f32.mrf.mxu0
    %6166 = vdwg.mxu0
    %v6167 = vadd.f32 %v5951, %v6024
    %v6168 = vxor.u32 %v6167, 2147483648
    %v6169 = vmul.f32 %v6168, 1.442695
    %v6170 = vpow.pop %v6169
    %v6171 = vadd.f32 %v6170, 1.0
    %v6172 = vrcp.pop %v6171
    %v6173 = vmul.f32 1.0, %v6172
    %v6174 = vadd.f32 %v5952, %v6094
    %v6175 = vxor.u32 %v6174, 2147483648
    %v6176 = vmul.f32 %v6175, 1.442695
    %v6177 = vpow.pop %v6176
    %v6178 = vadd.f32 %v6177, 1.0
    %v6179 = vrcp.pop %v6178
    %v6180 = vmul.f32 1.0, %v6179
    %v6181 = vmul.f32 %v6173, %v6164
    %v6182 = vadd.f32 %v5953, %v6181
    %v6183 = vtanh.pop %v6182
    %v6184 = vsub.f32 1.0, %v6180
    %v6185 = vmul.f32 %v6184, %v6183
    %v6186 = vmul.f32 %v6180, %v5950
    %v6187 = vadd.f32 %v6185, %v6186
    %v6188 = vld [vmem:[#allocation2 + $0x30] sm:$0x3]
    %v6189 = vld [vmem:[%s324 + $0x30] sm:$0x3]
    %v6190 = vld [vmem:[%s460 + $0x30] sm:$0x3]
    %v6192 = vsel %vm47, %v6187, 0
    %6194 = vmatprep.subr.mxu0 0.0
    %6195 = vmatpush1.msra.mxu0 0.0
    %6196 = vmatprep.subr.mxu0 0.0
    %6197 = vmatpush1.msra.mxu0 0.0
    %6198 = vmatprep.subr.mxu0 0.0
    %6199 = vmatpush1.msra.mxu0 0.0
    %6200 = vmatprep.subr.mxu0 0.0
    %6201 = vmatpush1.msra.mxu0 0.0
    %6202 = vmatprep.subr.mxu0 0.0
    %6203 = vmatpush1.msra.mxu0 0.0
    %6204 = vmatprep.subr.mxu0 0.0
    %6205 = vmatpush1.msra.mxu0 0.0
    %6206 = vmatprep.subr.mxu0 0.0
    %6207 = vmatpush1.msra.mxu0 0.0
    %6208 = vmatprep.subr.mxu0 0.0
    %6209 = vmatpush1.msra.mxu0 0.0
    %6210 = vmatprep.subr.mxu0 0.0
    %6211 = vmatpush1.msra.mxu0 0.0
    %6212 = vmatprep.subr.mxu0 0.0
    %6213 = vmatpush1.msra.mxu0 0.0
    %6214 = vmatprep.subr.mxu0 0.0
    %6215 = vmatpush1.msra.mxu0 0.0
    %6216 = vmatprep.subr.mxu0 0.0
    %6217 = vmatpush1.msra.mxu0 0.0
    %6218 = vmatprep.subr.mxu0 0.0
    %6219 = vmatpush1.msra.mxu0 %v498
    %6220 = vmatprep.subr.mxu0 0.0
    %6221 = vmatpush1.msra.mxu0 %v472
    %6222 = vmatprep.subr.mxu0 0.0
    %6223 = vmatpush1.msra.mxu0 %v471
    %6224 = vmatprep.subr.mxu0 0.0
    %6225 = vmatpush1.msra.mxu0 %v470
    %6226 = vmatprep.subr.mxu0 0.0
    %6227 = vmatpush2.msra.mxu0 0.0
    %6228 = vmatprep.subr.mxu0 0.0
    %6229 = vmatpush2.msra.mxu0 0.0
    %6230 = vmatprep.subr.mxu0 0.0
    %6231 = vmatpush2.msra.mxu0 0.0
    %6232 = vmatprep.subr.mxu0 0.0
    %6233 = vmatpush2.msra.mxu0 0.0
    %6234 = vmatprep.subr.mxu0 0.0
    %6235 = vmatpush2.msra.mxu0 0.0
    %6236 = vmatprep.subr.mxu0 0.0
    %6237 = vmatpush2.msra.mxu0 0.0
    %6238 = vmatprep.subr.mxu0 0.0
    %6239 = vmatpush2.msra.mxu0 0.0
    %6240 = vmatprep.subr.mxu0 0.0
    %6241 = vmatpush2.msra.mxu0 0.0
    %6242 = vmatprep.subr.mxu0 0.0
    %6243 = vmatpush2.msra.mxu0 0.0
    %6244 = vmatprep.subr.mxu0 0.0
    %6245 = vmatpush2.msra.mxu0 0.0
    %6246 = vmatprep.subr.mxu0 0.0
    %6247 = vmatpush2.msra.mxu0 0.0
    %6248 = vmatprep.subr.mxu0 0.0
    %6249 = vmatpush2.msra.mxu0 0.0
    %6250 = vmatprep.subr.mxu0 0.0
    %6251 = vmatpush2.msra.mxu0 0.0
    %6252 = vmatprep.subr.mxu0 0.0
    %6253 = vmatpush2.msra.mxu0 0.0
    %6254 = vmatprep.subr.mxu0 0.0
    %6255 = vmatpush2.msra.mxu0 0.0
    %6256 = vmatprep.subr.mxu0 0.0
    %6257 = vmatpush2.msra.mxu0 0.0
    %6258 = vmatprep.mubr.f32.mxu0 0.0
    %6259 = vmatmul.mubr.f32.gmra.mxu0 %v6192
    %v6260 = vpop.f32.mrf.mxu0
    %v6261 = vadd.f32 0.0, %v6260
    %v6262 = vpop.f32.mrf.mxu0
    %6263 = vdwg.mxu0
    %6264 = vmatprep.subr.mxu0 0.0
    %6265 = vmatpush1.msra.mxu0 0.0
    %6266 = vmatprep.subr.mxu0 0.0
    %6267 = vmatpush1.msra.mxu0 0.0
    %6268 = vmatprep.subr.mxu0 0.0
    %6269 = vmatpush1.msra.mxu0 0.0
    %6270 = vmatprep.subr.mxu0 0.0
    %6271 = vmatpush1.msra.mxu0 0.0
    %6272 = vmatprep.subr.mxu0 0.0
    %6273 = vmatpush1.msra.mxu0 0.0
    %6274 = vmatprep.subr.mxu0 0.0
    %6275 = vmatpush1.msra.mxu0 0.0
    %6276 = vmatprep.subr.mxu0 0.0
    %6277 = vmatpush1.msra.mxu0 0.0
    %6278 = vmatprep.subr.mxu0 0.0
    %6279 = vmatpush1.msra.mxu0 0.0
    %6280 = vmatprep.subr.mxu0 0.0
    %6281 = vmatpush1.msra.mxu0 0.0
    %6282 = vmatprep.subr.mxu0 0.0
    %6283 = vmatpush1.msra.mxu0 0.0
    %6284 = vmatprep.subr.mxu0 0.0
    %6285 = vmatpush1.msra.mxu0 0.0
    %6286 = vmatprep.subr.mxu0 0.0
    %6287 = vmatpush1.msra.mxu0 0.0
    %6288 = vmatprep.subr.mxu0 0.0
    %6289 = vmatpush1.msra.mxu0 %v571
    %6290 = vmatprep.subr.mxu0 0.0
    %6291 = vmatpush1.msra.mxu0 %v477
    %6292 = vmatprep.subr.mxu0 0.0
    %6293 = vmatpush1.msra.mxu0 %v476
    %6294 = vmatprep.subr.mxu0 0.0
    %6295 = vmatpush1.msra.mxu0 %v475
    %6296 = vmatprep.subr.mxu0 0.0
    %6297 = vmatpush2.msra.mxu0 0.0
    %6298 = vmatprep.subr.mxu0 0.0
    %6299 = vmatpush2.msra.mxu0 0.0
    %6300 = vmatprep.subr.mxu0 0.0
    %6301 = vmatpush2.msra.mxu0 0.0
    %6302 = vmatprep.subr.mxu0 0.0
    %6303 = vmatpush2.msra.mxu0 0.0
    %6304 = vmatprep.subr.mxu0 0.0
    %6305 = vmatpush2.msra.mxu0 0.0
    %6306 = vmatprep.subr.mxu0 0.0
    %6307 = vmatpush2.msra.mxu0 0.0
    %6308 = vmatprep.subr.mxu0 0.0
    %6309 = vmatpush2.msra.mxu0 0.0
    %6310 = vmatprep.subr.mxu0 0.0
    %6311 = vmatpush2.msra.mxu0 0.0
    %6312 = vmatprep.subr.mxu0 0.0
    %6313 = vmatpush2.msra.mxu0 0.0
    %6314 = vmatprep.subr.mxu0 0.0
    %6315 = vmatpush2.msra.mxu0 0.0
    %6316 = vmatprep.subr.mxu0 0.0
    %6317 = vmatpush2.msra.mxu0 0.0
    %6318 = vmatprep.subr.mxu0 0.0
    %6319 = vmatpush2.msra.mxu0 0.0
    %6320 = vmatprep.subr.mxu0 0.0
    %6321 = vmatpush2.msra.mxu0 0.0
    %6322 = vmatprep.subr.mxu0 0.0
    %6323 = vmatpush2.msra.mxu0 0.0
    %6324 = vmatprep.subr.mxu0 0.0
    %6325 = vmatpush2.msra.mxu0 0.0
    %6326 = vmatprep.subr.mxu0 0.0
    %6327 = vmatpush2.msra.mxu0 0.0
    %6328 = vmatprep.mubr.f32.mxu0 0.0
    %6329 = vmatmul.mubr.f32.gmra.mxu0 %v6192
    %v6330 = vpop.f32.mrf.mxu0
    %v6331 = vadd.f32 0.0, %v6330
    %v6332 = vpop.f32.mrf.mxu0
    %6333 = vdwg.mxu0
    %6334 = vmatprep.subr.mxu0 0.0
    %6335 = vmatpush1.msra.mxu0 0.0
    %6336 = vmatprep.subr.mxu0 0.0
    %6337 = vmatpush1.msra.mxu0 0.0
    %6338 = vmatprep.subr.mxu0 0.0
    %6339 = vmatpush1.msra.mxu0 0.0
    %6340 = vmatprep.subr.mxu0 0.0
    %6341 = vmatpush1.msra.mxu0 0.0
    %6342 = vmatprep.subr.mxu0 0.0
    %6343 = vmatpush1.msra.mxu0 0.0
    %6344 = vmatprep.subr.mxu0 0.0
    %6345 = vmatpush1.msra.mxu0 0.0
    %6346 = vmatprep.subr.mxu0 0.0
    %6347 = vmatpush1.msra.mxu0 0.0
    %6348 = vmatprep.subr.mxu0 0.0
    %6349 = vmatpush1.msra.mxu0 0.0
    %6350 = vmatprep.subr.mxu0 0.0
    %6351 = vmatpush1.msra.mxu0 0.0
    %6352 = vmatprep.subr.mxu0 0.0
    %6353 = vmatpush1.msra.mxu0 0.0
    %6354 = vmatprep.subr.mxu0 0.0
    %6355 = vmatpush1.msra.mxu0 0.0
    %6356 = vmatprep.subr.mxu0 0.0
    %6357 = vmatpush1.msra.mxu0 0.0
    %6358 = vmatprep.subr.mxu0 0.0
    %6359 = vmatpush1.msra.mxu0 %v644
    %6360 = vmatprep.subr.mxu0 0.0
    %6361 = vmatpush1.msra.mxu0 %v482
    %6362 = vmatprep.subr.mxu0 0.0
    %6363 = vmatpush1.msra.mxu0 %v481
    %6364 = vmatprep.subr.mxu0 0.0
    %6365 = vmatpush1.msra.mxu0 %v480
    %6366 = vmatprep.subr.mxu0 0.0
    %6367 = vmatpush2.msra.mxu0 0.0
    %6368 = vmatprep.subr.mxu0 0.0
    %6369 = vmatpush2.msra.mxu0 0.0
    %6370 = vmatprep.subr.mxu0 0.0
    %6371 = vmatpush2.msra.mxu0 0.0
    %6372 = vmatprep.subr.mxu0 0.0
    %6373 = vmatpush2.msra.mxu0 0.0
    %6374 = vmatprep.subr.mxu0 0.0
    %6375 = vmatpush2.msra.mxu0 0.0
    %6376 = vmatprep.subr.mxu0 0.0
    %6377 = vmatpush2.msra.mxu0 0.0
    %6378 = vmatprep.subr.mxu0 0.0
    %6379 = vmatpush2.msra.mxu0 0.0
    %6380 = vmatprep.subr.mxu0 0.0
    %6381 = vmatpush2.msra.mxu0 0.0
    %6382 = vmatprep.subr.mxu0 0.0
    %6383 = vmatpush2.msra.mxu0 0.0
    %6384 = vmatprep.subr.mxu0 0.0
    %6385 = vmatpush2.msra.mxu0 0.0
    %6386 = vmatprep.subr.mxu0 0.0
    %6387 = vmatpush2.msra.mxu0 0.0
    %6388 = vmatprep.subr.mxu0 0.0
    %6389 = vmatpush2.msra.mxu0 0.0
    %6390 = vmatprep.subr.mxu0 0.0
    %6391 = vmatpush2.msra.mxu0 0.0
    %6392 = vmatprep.subr.mxu0 0.0
    %6393 = vmatpush2.msra.mxu0 0.0
    %6394 = vmatprep.subr.mxu0 0.0
    %6395 = vmatpush2.msra.mxu0 0.0
    %6396 = vmatprep.subr.mxu0 0.0
    %6397 = vmatpush2.msra.mxu0 0.0
    %6398 = vmatprep.mubr.f32.mxu0 0.0
    %6399 = vmatmul.mubr.f32.gmra.mxu0 %v6192
    %v6400 = vpop.f32.mrf.mxu0
    %v6401 = vadd.f32 %v489, %v6400
    %v6402 = vpop.f32.mrf.mxu0
    %6403 = vdwg.mxu0
    %v6404 = vadd.f32 %v6188, %v6261
    %v6405 = vxor.u32 %v6404, 2147483648
    %v6406 = vmul.f32 %v6405, 1.442695
    %v6407 = vpow.pop %v6406
    %v6408 = vadd.f32 %v6407, 1.0
    %v6409 = vrcp.pop %v6408
    %v6410 = vmul.f32 1.0, %v6409
    %v6411 = vadd.f32 %v6189, %v6331
    %v6412 = vxor.u32 %v6411, 2147483648
    %v6413 = vmul.f32 %v6412, 1.442695
    %v6414 = vpow.pop %v6413
    %v6415 = vadd.f32 %v6414, 1.0
    %v6416 = vrcp.pop %v6415
    %v6417 = vmul.f32 1.0, %v6416
    %v6418 = vmul.f32 %v6410, %v6401
    %v6419 = vadd.f32 %v6190, %v6418
    %v6420 = vtanh.pop %v6419
    %v6421 = vsub.f32 1.0, %v6417
    %v6422 = vmul.f32 %v6421, %v6420
    %v6423 = vmul.f32 %v6417, %v6187
    %v6424 = vadd.f32 %v6422, %v6423
    %v6425 = vld [vmem:[#allocation2 + $0x32] sm:$0x3]
    %v6426 = vld [vmem:[%s324 + $0x32] sm:$0x3]
    %v6427 = vld [vmem:[%s460 + $0x32] sm:$0x3]
    %v6429 = vsel %vm47, %v6424, 0
    %6431 = vmatprep.subr.mxu0 0.0
    %6432 = vmatpush1.msra.mxu0 0.0
    %6433 = vmatprep.subr.mxu0 0.0
    %6434 = vmatpush1.msra.mxu0 0.0
    %6435 = vmatprep.subr.mxu0 0.0
    %6436 = vmatpush1.msra.mxu0 0.0
    %6437 = vmatprep.subr.mxu0 0.0
    %6438 = vmatpush1.msra.mxu0 0.0
    %6439 = vmatprep.subr.mxu0 0.0
    %6440 = vmatpush1.msra.mxu0 0.0
    %6441 = vmatprep.subr.mxu0 0.0
    %6442 = vmatpush1.msra.mxu0 0.0
    %6443 = vmatprep.subr.mxu0 0.0
    %6444 = vmatpush1.msra.mxu0 0.0
    %6445 = vmatprep.subr.mxu0 0.0
    %6446 = vmatpush1.msra.mxu0 0.0
    %6447 = vmatprep.subr.mxu0 0.0
    %6448 = vmatpush1.msra.mxu0 0.0
    %6449 = vmatprep.subr.mxu0 0.0
    %6450 = vmatpush1.msra.mxu0 0.0
    %6451 = vmatprep.subr.mxu0 0.0
    %6452 = vmatpush1.msra.mxu0 0.0
    %6453 = vmatprep.subr.mxu0 0.0
    %6454 = vmatpush1.msra.mxu0 0.0
    %6455 = vmatprep.subr.mxu0 0.0
    %6456 = vmatpush1.msra.mxu0 %v498
    %6457 = vmatprep.subr.mxu0 0.0
    %6458 = vmatpush1.msra.mxu0 %v472
    %6459 = vmatprep.subr.mxu0 0.0
    %6460 = vmatpush1.msra.mxu0 %v471
    %6461 = vmatprep.subr.mxu0 0.0
    %6462 = vmatpush1.msra.mxu0 %v470
    %6463 = vmatprep.subr.mxu0 0.0
    %6464 = vmatpush2.msra.mxu0 0.0
    %6465 = vmatprep.subr.mxu0 0.0
    %6466 = vmatpush2.msra.mxu0 0.0
    %6467 = vmatprep.subr.mxu0 0.0
    %6468 = vmatpush2.msra.mxu0 0.0
    %6469 = vmatprep.subr.mxu0 0.0
    %6470 = vmatpush2.msra.mxu0 0.0
    %6471 = vmatprep.subr.mxu0 0.0
    %6472 = vmatpush2.msra.mxu0 0.0
    %6473 = vmatprep.subr.mxu0 0.0
    %6474 = vmatpush2.msra.mxu0 0.0
    %6475 = vmatprep.subr.mxu0 0.0
    %6476 = vmatpush2.msra.mxu0 0.0
    %6477 = vmatprep.subr.mxu0 0.0
    %6478 = vmatpush2.msra.mxu0 0.0
    %6479 = vmatprep.subr.mxu0 0.0
    %6480 = vmatpush2.msra.mxu0 0.0
    %6481 = vmatprep.subr.mxu0 0.0
    %6482 = vmatpush2.msra.mxu0 0.0
    %6483 = vmatprep.subr.mxu0 0.0
    %6484 = vmatpush2.msra.mxu0 0.0
    %6485 = vmatprep.subr.mxu0 0.0
    %6486 = vmatpush2.msra.mxu0 0.0
    %6487 = vmatprep.subr.mxu0 0.0
    %6488 = vmatpush2.msra.mxu0 0.0
    %6489 = vmatprep.subr.mxu0 0.0
    %6490 = vmatpush2.msra.mxu0 0.0
    %6491 = vmatprep.subr.mxu0 0.0
    %6492 = vmatpush2.msra.mxu0 0.0
    %6493 = vmatprep.subr.mxu0 0.0
    %6494 = vmatpush2.msra.mxu0 0.0
    %6495 = vmatprep.mubr.f32.mxu0 0.0
    %6496 = vmatmul.mubr.f32.gmra.mxu0 %v6429
    %v6497 = vpop.f32.mrf.mxu0
    %v6498 = vadd.f32 0.0, %v6497
    %v6499 = vpop.f32.mrf.mxu0
    %6500 = vdwg.mxu0
    %6501 = vmatprep.subr.mxu0 0.0
    %6502 = vmatpush1.msra.mxu0 0.0
    %6503 = vmatprep.subr.mxu0 0.0
    %6504 = vmatpush1.msra.mxu0 0.0
    %6505 = vmatprep.subr.mxu0 0.0
    %6506 = vmatpush1.msra.mxu0 0.0
    %6507 = vmatprep.subr.mxu0 0.0
    %6508 = vmatpush1.msra.mxu0 0.0
    %6509 = vmatprep.subr.mxu0 0.0
    %6510 = vmatpush1.msra.mxu0 0.0
    %6511 = vmatprep.subr.mxu0 0.0
    %6512 = vmatpush1.msra.mxu0 0.0
    %6513 = vmatprep.subr.mxu0 0.0
    %6514 = vmatpush1.msra.mxu0 0.0
    %6515 = vmatprep.subr.mxu0 0.0
    %6516 = vmatpush1.msra.mxu0 0.0
    %6517 = vmatprep.subr.mxu0 0.0
    %6518 = vmatpush1.msra.mxu0 0.0
    %6519 = vmatprep.subr.mxu0 0.0
    %6520 = vmatpush1.msra.mxu0 0.0
    %6521 = vmatprep.subr.mxu0 0.0
    %6522 = vmatpush1.msra.mxu0 0.0
    %6523 = vmatprep.subr.mxu0 0.0
    %6524 = vmatpush1.msra.mxu0 0.0
    %6525 = vmatprep.subr.mxu0 0.0
    %6526 = vmatpush1.msra.mxu0 %v571
    %6527 = vmatprep.subr.mxu0 0.0
    %6528 = vmatpush1.msra.mxu0 %v477
    %6529 = vmatprep.subr.mxu0 0.0
    %6530 = vmatpush1.msra.mxu0 %v476
    %6531 = vmatprep.subr.mxu0 0.0
    %6532 = vmatpush1.msra.mxu0 %v475
    %6533 = vmatprep.subr.mxu0 0.0
    %6534 = vmatpush2.msra.mxu0 0.0
    %6535 = vmatprep.subr.mxu0 0.0
    %6536 = vmatpush2.msra.mxu0 0.0
    %6537 = vmatprep.subr.mxu0 0.0
    %6538 = vmatpush2.msra.mxu0 0.0
    %6539 = vmatprep.subr.mxu0 0.0
    %6540 = vmatpush2.msra.mxu0 0.0
    %6541 = vmatprep.subr.mxu0 0.0
    %6542 = vmatpush2.msra.mxu0 0.0
    %6543 = vmatprep.subr.mxu0 0.0
    %6544 = vmatpush2.msra.mxu0 0.0
    %6545 = vmatprep.subr.mxu0 0.0
    %6546 = vmatpush2.msra.mxu0 0.0
    %6547 = vmatprep.subr.mxu0 0.0
    %6548 = vmatpush2.msra.mxu0 0.0
    %6549 = vmatprep.subr.mxu0 0.0
    %6550 = vmatpush2.msra.mxu0 0.0
    %6551 = vmatprep.subr.mxu0 0.0
    %6552 = vmatpush2.msra.mxu0 0.0
    %6553 = vmatprep.subr.mxu0 0.0
    %6554 = vmatpush2.msra.mxu0 0.0
    %6555 = vmatprep.subr.mxu0 0.0
    %6556 = vmatpush2.msra.mxu0 0.0
    %6557 = vmatprep.subr.mxu0 0.0
    %6558 = vmatpush2.msra.mxu0 0.0
    %6559 = vmatprep.subr.mxu0 0.0
    %6560 = vmatpush2.msra.mxu0 0.0
    %6561 = vmatprep.subr.mxu0 0.0
    %6562 = vmatpush2.msra.mxu0 0.0
    %6563 = vmatprep.subr.mxu0 0.0
    %6564 = vmatpush2.msra.mxu0 0.0
    %6565 = vmatprep.mubr.f32.mxu0 0.0
    %6566 = vmatmul.mubr.f32.gmra.mxu0 %v6429
    %v6567 = vpop.f32.mrf.mxu0
    %v6568 = vadd.f32 0.0, %v6567
    %v6569 = vpop.f32.mrf.mxu0
    %6570 = vdwg.mxu0
    %6571 = vmatprep.subr.mxu0 0.0
    %6572 = vmatpush1.msra.mxu0 0.0
    %6573 = vmatprep.subr.mxu0 0.0
    %6574 = vmatpush1.msra.mxu0 0.0
    %6575 = vmatprep.subr.mxu0 0.0
    %6576 = vmatpush1.msra.mxu0 0.0
    %6577 = vmatprep.subr.mxu0 0.0
    %6578 = vmatpush1.msra.mxu0 0.0
    %6579 = vmatprep.subr.mxu0 0.0
    %6580 = vmatpush1.msra.mxu0 0.0
    %6581 = vmatprep.subr.mxu0 0.0
    %6582 = vmatpush1.msra.mxu0 0.0
    %6583 = vmatprep.subr.mxu0 0.0
    %6584 = vmatpush1.msra.mxu0 0.0
    %6585 = vmatprep.subr.mxu0 0.0
    %6586 = vmatpush1.msra.mxu0 0.0
    %6587 = vmatprep.subr.mxu0 0.0
    %6588 = vmatpush1.msra.mxu0 0.0
    %6589 = vmatprep.subr.mxu0 0.0
    %6590 = vmatpush1.msra.mxu0 0.0
    %6591 = vmatprep.subr.mxu0 0.0
    %6592 = vmatpush1.msra.mxu0 0.0
    %6593 = vmatprep.subr.mxu0 0.0
    %6594 = vmatpush1.msra.mxu0 0.0
    %6595 = vmatprep.subr.mxu0 0.0
    %6596 = vmatpush1.msra.mxu0 %v644
    %6597 = vmatprep.subr.mxu0 0.0
    %6598 = vmatpush1.msra.mxu0 %v482
    %6599 = vmatprep.subr.mxu0 0.0
    %6600 = vmatpush1.msra.mxu0 %v481
    %6601 = vmatprep.subr.mxu0 0.0
    %6602 = vmatpush1.msra.mxu0 %v480
    %6603 = vmatprep.subr.mxu0 0.0
    %6604 = vmatpush2.msra.mxu0 0.0
    %6605 = vmatprep.subr.mxu0 0.0
    %6606 = vmatpush2.msra.mxu0 0.0
    %6607 = vmatprep.subr.mxu0 0.0
    %6608 = vmatpush2.msra.mxu0 0.0
    %6609 = vmatprep.subr.mxu0 0.0
    %6610 = vmatpush2.msra.mxu0 0.0
    %6611 = vmatprep.subr.mxu0 0.0
    %6612 = vmatpush2.msra.mxu0 0.0
    %6613 = vmatprep.subr.mxu0 0.0
    %6614 = vmatpush2.msra.mxu0 0.0
    %6615 = vmatprep.subr.mxu0 0.0
    %6616 = vmatpush2.msra.mxu0 0.0
    %6617 = vmatprep.subr.mxu0 0.0
    %6618 = vmatpush2.msra.mxu0 0.0
    %6619 = vmatprep.subr.mxu0 0.0
    %6620 = vmatpush2.msra.mxu0 0.0
    %6621 = vmatprep.subr.mxu0 0.0
    %6622 = vmatpush2.msra.mxu0 0.0
    %6623 = vmatprep.subr.mxu0 0.0
    %6624 = vmatpush2.msra.mxu0 0.0
    %6625 = vmatprep.subr.mxu0 0.0
    %6626 = vmatpush2.msra.mxu0 0.0
    %6627 = vmatprep.subr.mxu0 0.0
    %6628 = vmatpush2.msra.mxu0 0.0
    %6629 = vmatprep.subr.mxu0 0.0
    %6630 = vmatpush2.msra.mxu0 0.0
    %6631 = vmatprep.subr.mxu0 0.0
    %6632 = vmatpush2.msra.mxu0 0.0
    %6633 = vmatprep.subr.mxu0 0.0
    %6634 = vmatpush2.msra.mxu0 0.0
    %6635 = vmatprep.mubr.f32.mxu0 0.0
    %6636 = vmatmul.mubr.f32.gmra.mxu0 %v6429
    %v6637 = vpop.f32.mrf.mxu0
    %v6638 = vadd.f32 %v489, %v6637
    %v6639 = vpop.f32.mrf.mxu0
    %6640 = vdwg.mxu0
    %v6641 = vadd.f32 %v6425, %v6498
    %v6642 = vxor.u32 %v6641, 2147483648
    %v6643 = vmul.f32 %v6642, 1.442695
    %v6644 = vpow.pop %v6643
    %v6645 = vadd.f32 %v6644, 1.0
    %v6646 = vrcp.pop %v6645
    %v6647 = vmul.f32 1.0, %v6646
    %v6648 = vadd.f32 %v6426, %v6568
    %v6649 = vxor.u32 %v6648, 2147483648
    %v6650 = vmul.f32 %v6649, 1.442695
    %v6651 = vpow.pop %v6650
    %v6652 = vadd.f32 %v6651, 1.0
    %v6653 = vrcp.pop %v6652
    %v6654 = vmul.f32 1.0, %v6653
    %v6655 = vmul.f32 %v6647, %v6638
    %v6656 = vadd.f32 %v6427, %v6655
    %v6657 = vtanh.pop %v6656
    %v6658 = vsub.f32 1.0, %v6654
    %v6659 = vmul.f32 %v6658, %v6657
    %v6660 = vmul.f32 %v6654, %v6424
    %v6661 = vadd.f32 %v6659, %v6660
    %v6662 = vld [vmem:[#allocation2 + $0x34] sm:$0x3]
    %v6663 = vld [vmem:[%s324 + $0x34] sm:$0x3]
    %v6664 = vld [vmem:[%s460 + $0x34] sm:$0x3]
    %v6666 = vsel %vm47, %v6661, 0
    %6668 = vmatprep.subr.mxu0 0.0
    %6669 = vmatpush1.msra.mxu0 0.0
    %6670 = vmatprep.subr.mxu0 0.0
    %6671 = vmatpush1.msra.mxu0 0.0
    %6672 = vmatprep.subr.mxu0 0.0
    %6673 = vmatpush1.msra.mxu0 0.0
    %6674 = vmatprep.subr.mxu0 0.0
    %6675 = vmatpush1.msra.mxu0 0.0
    %6676 = vmatprep.subr.mxu0 0.0
    %6677 = vmatpush1.msra.mxu0 0.0
    %6678 = vmatprep.subr.mxu0 0.0
    %6679 = vmatpush1.msra.mxu0 0.0
    %6680 = vmatprep.subr.mxu0 0.0
    %6681 = vmatpush1.msra.mxu0 0.0
    %6682 = vmatprep.subr.mxu0 0.0
    %6683 = vmatpush1.msra.mxu0 0.0
    %6684 = vmatprep.subr.mxu0 0.0
    %6685 = vmatpush1.msra.mxu0 0.0
    %6686 = vmatprep.subr.mxu0 0.0
    %6687 = vmatpush1.msra.mxu0 0.0
    %6688 = vmatprep.subr.mxu0 0.0
    %6689 = vmatpush1.msra.mxu0 0.0
    %6690 = vmatprep.subr.mxu0 0.0
    %6691 = vmatpush1.msra.mxu0 0.0
    %6692 = vmatprep.subr.mxu0 0.0
    %6693 = vmatpush1.msra.mxu0 %v498
    %6694 = vmatprep.subr.mxu0 0.0
    %6695 = vmatpush1.msra.mxu0 %v472
    %6696 = vmatprep.subr.mxu0 0.0
    %6697 = vmatpush1.msra.mxu0 %v471
    %6698 = vmatprep.subr.mxu0 0.0
    %6699 = vmatpush1.msra.mxu0 %v470
    %6700 = vmatprep.subr.mxu0 0.0
    %6701 = vmatpush2.msra.mxu0 0.0
    %6702 = vmatprep.subr.mxu0 0.0
    %6703 = vmatpush2.msra.mxu0 0.0
    %6704 = vmatprep.subr.mxu0 0.0
    %6705 = vmatpush2.msra.mxu0 0.0
    %6706 = vmatprep.subr.mxu0 0.0
    %6707 = vmatpush2.msra.mxu0 0.0
    %6708 = vmatprep.subr.mxu0 0.0
    %6709 = vmatpush2.msra.mxu0 0.0
    %6710 = vmatprep.subr.mxu0 0.0
    %6711 = vmatpush2.msra.mxu0 0.0
    %6712 = vmatprep.subr.mxu0 0.0
    %6713 = vmatpush2.msra.mxu0 0.0
    %6714 = vmatprep.subr.mxu0 0.0
    %6715 = vmatpush2.msra.mxu0 0.0
    %6716 = vmatprep.subr.mxu0 0.0
    %6717 = vmatpush2.msra.mxu0 0.0
    %6718 = vmatprep.subr.mxu0 0.0
    %6719 = vmatpush2.msra.mxu0 0.0
    %6720 = vmatprep.subr.mxu0 0.0
    %6721 = vmatpush2.msra.mxu0 0.0
    %6722 = vmatprep.subr.mxu0 0.0
    %6723 = vmatpush2.msra.mxu0 0.0
    %6724 = vmatprep.subr.mxu0 0.0
    %6725 = vmatpush2.msra.mxu0 0.0
    %6726 = vmatprep.subr.mxu0 0.0
    %6727 = vmatpush2.msra.mxu0 0.0
    %6728 = vmatprep.subr.mxu0 0.0
    %6729 = vmatpush2.msra.mxu0 0.0
    %6730 = vmatprep.subr.mxu0 0.0
    %6731 = vmatpush2.msra.mxu0 0.0
    %6732 = vmatprep.mubr.f32.mxu0 0.0
    %6733 = vmatmul.mubr.f32.gmra.mxu0 %v6666
    %v6734 = vpop.f32.mrf.mxu0
    %v6735 = vadd.f32 0.0, %v6734
    %v6736 = vpop.f32.mrf.mxu0
    %6737 = vdwg.mxu0
    %6738 = vmatprep.subr.mxu0 0.0
    %6739 = vmatpush1.msra.mxu0 0.0
    %6740 = vmatprep.subr.mxu0 0.0
    %6741 = vmatpush1.msra.mxu0 0.0
    %6742 = vmatprep.subr.mxu0 0.0
    %6743 = vmatpush1.msra.mxu0 0.0
    %6744 = vmatprep.subr.mxu0 0.0
    %6745 = vmatpush1.msra.mxu0 0.0
    %6746 = vmatprep.subr.mxu0 0.0
    %6747 = vmatpush1.msra.mxu0 0.0
    %6748 = vmatprep.subr.mxu0 0.0
    %6749 = vmatpush1.msra.mxu0 0.0
    %6750 = vmatprep.subr.mxu0 0.0
    %6751 = vmatpush1.msra.mxu0 0.0
    %6752 = vmatprep.subr.mxu0 0.0
    %6753 = vmatpush1.msra.mxu0 0.0
    %6754 = vmatprep.subr.mxu0 0.0
    %6755 = vmatpush1.msra.mxu0 0.0
    %6756 = vmatprep.subr.mxu0 0.0
    %6757 = vmatpush1.msra.mxu0 0.0
    %6758 = vmatprep.subr.mxu0 0.0
    %6759 = vmatpush1.msra.mxu0 0.0
    %6760 = vmatprep.subr.mxu0 0.0
    %6761 = vmatpush1.msra.mxu0 0.0
    %6762 = vmatprep.subr.mxu0 0.0
    %6763 = vmatpush1.msra.mxu0 %v571
    %6764 = vmatprep.subr.mxu0 0.0
    %6765 = vmatpush1.msra.mxu0 %v477
    %6766 = vmatprep.subr.mxu0 0.0
    %6767 = vmatpush1.msra.mxu0 %v476
    %6768 = vmatprep.subr.mxu0 0.0
    %6769 = vmatpush1.msra.mxu0 %v475
    %6770 = vmatprep.subr.mxu0 0.0
    %6771 = vmatpush2.msra.mxu0 0.0
    %6772 = vmatprep.subr.mxu0 0.0
    %6773 = vmatpush2.msra.mxu0 0.0
    %6774 = vmatprep.subr.mxu0 0.0
    %6775 = vmatpush2.msra.mxu0 0.0
    %6776 = vmatprep.subr.mxu0 0.0
    %6777 = vmatpush2.msra.mxu0 0.0
    %6778 = vmatprep.subr.mxu0 0.0
    %6779 = vmatpush2.msra.mxu0 0.0
    %6780 = vmatprep.subr.mxu0 0.0
    %6781 = vmatpush2.msra.mxu0 0.0
    %6782 = vmatprep.subr.mxu0 0.0
    %6783 = vmatpush2.msra.mxu0 0.0
    %6784 = vmatprep.subr.mxu0 0.0
    %6785 = vmatpush2.msra.mxu0 0.0
    %6786 = vmatprep.subr.mxu0 0.0
    %6787 = vmatpush2.msra.mxu0 0.0
    %6788 = vmatprep.subr.mxu0 0.0
    %6789 = vmatpush2.msra.mxu0 0.0
    %6790 = vmatprep.subr.mxu0 0.0
    %6791 = vmatpush2.msra.mxu0 0.0
    %6792 = vmatprep.subr.mxu0 0.0
    %6793 = vmatpush2.msra.mxu0 0.0
    %6794 = vmatprep.subr.mxu0 0.0
    %6795 = vmatpush2.msra.mxu0 0.0
    %6796 = vmatprep.subr.mxu0 0.0
    %6797 = vmatpush2.msra.mxu0 0.0
    %6798 = vmatprep.subr.mxu0 0.0
    %6799 = vmatpush2.msra.mxu0 0.0
    %6800 = vmatprep.subr.mxu0 0.0
    %6801 = vmatpush2.msra.mxu0 0.0
    %6802 = vmatprep.mubr.f32.mxu0 0.0
    %6803 = vmatmul.mubr.f32.gmra.mxu0 %v6666
    %v6804 = vpop.f32.mrf.mxu0
    %v6805 = vadd.f32 0.0, %v6804
    %v6806 = vpop.f32.mrf.mxu0
    %6807 = vdwg.mxu0
    %6808 = vmatprep.subr.mxu0 0.0
    %6809 = vmatpush1.msra.mxu0 0.0
    %6810 = vmatprep.subr.mxu0 0.0
    %6811 = vmatpush1.msra.mxu0 0.0
    %6812 = vmatprep.subr.mxu0 0.0
    %6813 = vmatpush1.msra.mxu0 0.0
    %6814 = vmatprep.subr.mxu0 0.0
    %6815 = vmatpush1.msra.mxu0 0.0
    %6816 = vmatprep.subr.mxu0 0.0
    %6817 = vmatpush1.msra.mxu0 0.0
    %6818 = vmatprep.subr.mxu0 0.0
    %6819 = vmatpush1.msra.mxu0 0.0
    %6820 = vmatprep.subr.mxu0 0.0
    %6821 = vmatpush1.msra.mxu0 0.0
    %6822 = vmatprep.subr.mxu0 0.0
    %6823 = vmatpush1.msra.mxu0 0.0
    %6824 = vmatprep.subr.mxu0 0.0
    %6825 = vmatpush1.msra.mxu0 0.0
    %6826 = vmatprep.subr.mxu0 0.0
    %6827 = vmatpush1.msra.mxu0 0.0
    %6828 = vmatprep.subr.mxu0 0.0
    %6829 = vmatpush1.msra.mxu0 0.0
    %6830 = vmatprep.subr.mxu0 0.0
    %6831 = vmatpush1.msra.mxu0 0.0
    %6832 = vmatprep.subr.mxu0 0.0
    %6833 = vmatpush1.msra.mxu0 %v644
    %6834 = vmatprep.subr.mxu0 0.0
    %6835 = vmatpush1.msra.mxu0 %v482
    %6836 = vmatprep.subr.mxu0 0.0
    %6837 = vmatpush1.msra.mxu0 %v481
    %6838 = vmatprep.subr.mxu0 0.0
    %6839 = vmatpush1.msra.mxu0 %v480
    %6840 = vmatprep.subr.mxu0 0.0
    %6841 = vmatpush2.msra.mxu0 0.0
    %6842 = vmatprep.subr.mxu0 0.0
    %6843 = vmatpush2.msra.mxu0 0.0
    %6844 = vmatprep.subr.mxu0 0.0
    %6845 = vmatpush2.msra.mxu0 0.0
    %6846 = vmatprep.subr.mxu0 0.0
    %6847 = vmatpush2.msra.mxu0 0.0
    %6848 = vmatprep.subr.mxu0 0.0
    %6849 = vmatpush2.msra.mxu0 0.0
    %6850 = vmatprep.subr.mxu0 0.0
    %6851 = vmatpush2.msra.mxu0 0.0
    %6852 = vmatprep.subr.mxu0 0.0
    %6853 = vmatpush2.msra.mxu0 0.0
    %6854 = vmatprep.subr.mxu0 0.0
    %6855 = vmatpush2.msra.mxu0 0.0
    %6856 = vmatprep.subr.mxu0 0.0
    %6857 = vmatpush2.msra.mxu0 0.0
    %6858 = vmatprep.subr.mxu0 0.0
    %6859 = vmatpush2.msra.mxu0 0.0
    %6860 = vmatprep.subr.mxu0 0.0
    %6861 = vmatpush2.msra.mxu0 0.0
    %6862 = vmatprep.subr.mxu0 0.0
    %6863 = vmatpush2.msra.mxu0 0.0
    %6864 = vmatprep.subr.mxu0 0.0
    %6865 = vmatpush2.msra.mxu0 0.0
    %6866 = vmatprep.subr.mxu0 0.0
    %6867 = vmatpush2.msra.mxu0 0.0
    %6868 = vmatprep.subr.mxu0 0.0
    %6869 = vmatpush2.msra.mxu0 0.0
    %6870 = vmatprep.subr.mxu0 0.0
    %6871 = vmatpush2.msra.mxu0 0.0
    %6872 = vmatprep.mubr.f32.mxu0 0.0
    %6873 = vmatmul.mubr.f32.gmra.mxu0 %v6666
    %v6874 = vpop.f32.mrf.mxu0
    %v6875 = vadd.f32 %v489, %v6874
    %v6876 = vpop.f32.mrf.mxu0
    %6877 = vdwg.mxu0
    %v6878 = vadd.f32 %v6662, %v6735
    %v6879 = vxor.u32 %v6878, 2147483648
    %v6880 = vmul.f32 %v6879, 1.442695
    %v6881 = vpow.pop %v6880
    %v6882 = vadd.f32 %v6881, 1.0
    %v6883 = vrcp.pop %v6882
    %v6884 = vmul.f32 1.0, %v6883
    %v6885 = vadd.f32 %v6663, %v6805
    %v6886 = vxor.u32 %v6885, 2147483648
    %v6887 = vmul.f32 %v6886, 1.442695
    %v6888 = vpow.pop %v6887
    %v6889 = vadd.f32 %v6888, 1.0
    %v6890 = vrcp.pop %v6889
    %v6891 = vmul.f32 1.0, %v6890
    %v6892 = vmul.f32 %v6884, %v6875
    %v6893 = vadd.f32 %v6664, %v6892
    %v6894 = vtanh.pop %v6893
    %v6895 = vsub.f32 1.0, %v6891
    %v6896 = vmul.f32 %v6895, %v6894
    %v6897 = vmul.f32 %v6891, %v6661
    %v6898 = vadd.f32 %v6896, %v6897
    %v6899 = vld [vmem:[#allocation2 + $0x36] sm:$0x3]
    %v6900 = vld [vmem:[%s324 + $0x36] sm:$0x3]
    %v6901 = vld [vmem:[%s460 + $0x36] sm:$0x3]
    %v6903 = vsel %vm47, %v6898, 0
    %6905 = vmatprep.subr.mxu0 0.0
    %6906 = vmatpush1.msra.mxu0 0.0
    %6907 = vmatprep.subr.mxu0 0.0
    %6908 = vmatpush1.msra.mxu0 0.0
    %6909 = vmatprep.subr.mxu0 0.0
    %6910 = vmatpush1.msra.mxu0 0.0
    %6911 = vmatprep.subr.mxu0 0.0
    %6912 = vmatpush1.msra.mxu0 0.0
    %6913 = vmatprep.subr.mxu0 0.0
    %6914 = vmatpush1.msra.mxu0 0.0
    %6915 = vmatprep.subr.mxu0 0.0
    %6916 = vmatpush1.msra.mxu0 0.0
    %6917 = vmatprep.subr.mxu0 0.0
    %6918 = vmatpush1.msra.mxu0 0.0
    %6919 = vmatprep.subr.mxu0 0.0
    %6920 = vmatpush1.msra.mxu0 0.0
    %6921 = vmatprep.subr.mxu0 0.0
    %6922 = vmatpush1.msra.mxu0 0.0
    %6923 = vmatprep.subr.mxu0 0.0
    %6924 = vmatpush1.msra.mxu0 0.0
    %6925 = vmatprep.subr.mxu0 0.0
    %6926 = vmatpush1.msra.mxu0 0.0
    %6927 = vmatprep.subr.mxu0 0.0
    %6928 = vmatpush1.msra.mxu0 0.0
    %6929 = vmatprep.subr.mxu0 0.0
    %6930 = vmatpush1.msra.mxu0 %v498
    %6931 = vmatprep.subr.mxu0 0.0
    %6932 = vmatpush1.msra.mxu0 %v472
    %6933 = vmatprep.subr.mxu0 0.0
    %6934 = vmatpush1.msra.mxu0 %v471
    %6935 = vmatprep.subr.mxu0 0.0
    %6936 = vmatpush1.msra.mxu0 %v470
    %6937 = vmatprep.subr.mxu0 0.0
    %6938 = vmatpush2.msra.mxu0 0.0
    %6939 = vmatprep.subr.mxu0 0.0
    %6940 = vmatpush2.msra.mxu0 0.0
    %6941 = vmatprep.subr.mxu0 0.0
    %6942 = vmatpush2.msra.mxu0 0.0
    %6943 = vmatprep.subr.mxu0 0.0
    %6944 = vmatpush2.msra.mxu0 0.0
    %6945 = vmatprep.subr.mxu0 0.0
    %6946 = vmatpush2.msra.mxu0 0.0
    %6947 = vmatprep.subr.mxu0 0.0
    %6948 = vmatpush2.msra.mxu0 0.0
    %6949 = vmatprep.subr.mxu0 0.0
    %6950 = vmatpush2.msra.mxu0 0.0
    %6951 = vmatprep.subr.mxu0 0.0
    %6952 = vmatpush2.msra.mxu0 0.0
    %6953 = vmatprep.subr.mxu0 0.0
    %6954 = vmatpush2.msra.mxu0 0.0
    %6955 = vmatprep.subr.mxu0 0.0
    %6956 = vmatpush2.msra.mxu0 0.0
    %6957 = vmatprep.subr.mxu0 0.0
    %6958 = vmatpush2.msra.mxu0 0.0
    %6959 = vmatprep.subr.mxu0 0.0
    %6960 = vmatpush2.msra.mxu0 0.0
    %6961 = vmatprep.subr.mxu0 0.0
    %6962 = vmatpush2.msra.mxu0 0.0
    %6963 = vmatprep.subr.mxu0 0.0
    %6964 = vmatpush2.msra.mxu0 0.0
    %6965 = vmatprep.subr.mxu0 0.0
    %6966 = vmatpush2.msra.mxu0 0.0
    %6967 = vmatprep.subr.mxu0 0.0
    %6968 = vmatpush2.msra.mxu0 0.0
    %6969 = vmatprep.mubr.f32.mxu0 0.0
    %6970 = vmatmul.mubr.f32.gmra.mxu0 %v6903
    %v6971 = vpop.f32.mrf.mxu0
    %v6972 = vadd.f32 0.0, %v6971
    %v6973 = vpop.f32.mrf.mxu0
    %6974 = vdwg.mxu0
    %6975 = vmatprep.subr.mxu0 0.0
    %6976 = vmatpush1.msra.mxu0 0.0
    %6977 = vmatprep.subr.mxu0 0.0
    %6978 = vmatpush1.msra.mxu0 0.0
    %6979 = vmatprep.subr.mxu0 0.0
    %6980 = vmatpush1.msra.mxu0 0.0
    %6981 = vmatprep.subr.mxu0 0.0
    %6982 = vmatpush1.msra.mxu0 0.0
    %6983 = vmatprep.subr.mxu0 0.0
    %6984 = vmatpush1.msra.mxu0 0.0
    %6985 = vmatprep.subr.mxu0 0.0
    %6986 = vmatpush1.msra.mxu0 0.0
    %6987 = vmatprep.subr.mxu0 0.0
    %6988 = vmatpush1.msra.mxu0 0.0
    %6989 = vmatprep.subr.mxu0 0.0
    %6990 = vmatpush1.msra.mxu0 0.0
    %6991 = vmatprep.subr.mxu0 0.0
    %6992 = vmatpush1.msra.mxu0 0.0
    %6993 = vmatprep.subr.mxu0 0.0
    %6994 = vmatpush1.msra.mxu0 0.0
    %6995 = vmatprep.subr.mxu0 0.0
    %6996 = vmatpush1.msra.mxu0 0.0
    %6997 = vmatprep.subr.mxu0 0.0
    %6998 = vmatpush1.msra.mxu0 0.0
    %6999 = vmatprep.subr.mxu0 0.0
    %7000 = vmatpush1.msra.mxu0 %v571
    %7001 = vmatprep.subr.mxu0 0.0
    %7002 = vmatpush1.msra.mxu0 %v477
    %7003 = vmatprep.subr.mxu0 0.0
    %7004 = vmatpush1.msra.mxu0 %v476
    %7005 = vmatprep.subr.mxu0 0.0
    %7006 = vmatpush1.msra.mxu0 %v475
    %7007 = vmatprep.subr.mxu0 0.0
    %7008 = vmatpush2.msra.mxu0 0.0
    %7009 = vmatprep.subr.mxu0 0.0
    %7010 = vmatpush2.msra.mxu0 0.0
    %7011 = vmatprep.subr.mxu0 0.0
    %7012 = vmatpush2.msra.mxu0 0.0
    %7013 = vmatprep.subr.mxu0 0.0
    %7014 = vmatpush2.msra.mxu0 0.0
    %7015 = vmatprep.subr.mxu0 0.0
    %7016 = vmatpush2.msra.mxu0 0.0
    %7017 = vmatprep.subr.mxu0 0.0
    %7018 = vmatpush2.msra.mxu0 0.0
    %7019 = vmatprep.subr.mxu0 0.0
    %7020 = vmatpush2.msra.mxu0 0.0
    %7021 = vmatprep.subr.mxu0 0.0
    %7022 = vmatpush2.msra.mxu0 0.0
    %7023 = vmatprep.subr.mxu0 0.0
    %7024 = vmatpush2.msra.mxu0 0.0
    %7025 = vmatprep.subr.mxu0 0.0
    %7026 = vmatpush2.msra.mxu0 0.0
    %7027 = vmatprep.subr.mxu0 0.0
    %7028 = vmatpush2.msra.mxu0 0.0
    %7029 = vmatprep.subr.mxu0 0.0
    %7030 = vmatpush2.msra.mxu0 0.0
    %7031 = vmatprep.subr.mxu0 0.0
    %7032 = vmatpush2.msra.mxu0 0.0
    %7033 = vmatprep.subr.mxu0 0.0
    %7034 = vmatpush2.msra.mxu0 0.0
    %7035 = vmatprep.subr.mxu0 0.0
    %7036 = vmatpush2.msra.mxu0 0.0
    %7037 = vmatprep.subr.mxu0 0.0
    %7038 = vmatpush2.msra.mxu0 0.0
    %7039 = vmatprep.mubr.f32.mxu0 0.0
    %7040 = vmatmul.mubr.f32.gmra.mxu0 %v6903
    %v7041 = vpop.f32.mrf.mxu0
    %v7042 = vadd.f32 0.0, %v7041
    %v7043 = vpop.f32.mrf.mxu0
    %7044 = vdwg.mxu0
    %7045 = vmatprep.subr.mxu0 0.0
    %7046 = vmatpush1.msra.mxu0 0.0
    %7047 = vmatprep.subr.mxu0 0.0
    %7048 = vmatpush1.msra.mxu0 0.0
    %7049 = vmatprep.subr.mxu0 0.0
    %7050 = vmatpush1.msra.mxu0 0.0
    %7051 = vmatprep.subr.mxu0 0.0
    %7052 = vmatpush1.msra.mxu0 0.0
    %7053 = vmatprep.subr.mxu0 0.0
    %7054 = vmatpush1.msra.mxu0 0.0
    %7055 = vmatprep.subr.mxu0 0.0
    %7056 = vmatpush1.msra.mxu0 0.0
    %7057 = vmatprep.subr.mxu0 0.0
    %7058 = vmatpush1.msra.mxu0 0.0
    %7059 = vmatprep.subr.mxu0 0.0
    %7060 = vmatpush1.msra.mxu0 0.0
    %7061 = vmatprep.subr.mxu0 0.0
    %7062 = vmatpush1.msra.mxu0 0.0
    %7063 = vmatprep.subr.mxu0 0.0
    %7064 = vmatpush1.msra.mxu0 0.0
    %7065 = vmatprep.subr.mxu0 0.0
    %7066 = vmatpush1.msra.mxu0 0.0
    %7067 = vmatprep.subr.mxu0 0.0
    %7068 = vmatpush1.msra.mxu0 0.0
    %7069 = vmatprep.subr.mxu0 0.0
    %7070 = vmatpush1.msra.mxu0 %v644
    %7071 = vmatprep.subr.mxu0 0.0
    %7072 = vmatpush1.msra.mxu0 %v482
    %7073 = vmatprep.subr.mxu0 0.0
    %7074 = vmatpush1.msra.mxu0 %v481
    %7075 = vmatprep.subr.mxu0 0.0
    %7076 = vmatpush1.msra.mxu0 %v480
    %7077 = vmatprep.subr.mxu0 0.0
    %7078 = vmatpush2.msra.mxu0 0.0
    %7079 = vmatprep.subr.mxu0 0.0
    %7080 = vmatpush2.msra.mxu0 0.0
    %7081 = vmatprep.subr.mxu0 0.0
    %7082 = vmatpush2.msra.mxu0 0.0
    %7083 = vmatprep.subr.mxu0 0.0
    %7084 = vmatpush2.msra.mxu0 0.0
    %7085 = vmatprep.subr.mxu0 0.0
    %7086 = vmatpush2.msra.mxu0 0.0
    %7087 = vmatprep.subr.mxu0 0.0
    %7088 = vmatpush2.msra.mxu0 0.0
    %7089 = vmatprep.subr.mxu0 0.0
    %7090 = vmatpush2.msra.mxu0 0.0
    %7091 = vmatprep.subr.mxu0 0.0
    %7092 = vmatpush2.msra.mxu0 0.0
    %7093 = vmatprep.subr.mxu0 0.0
    %7094 = vmatpush2.msra.mxu0 0.0
    %7095 = vmatprep.subr.mxu0 0.0
    %7096 = vmatpush2.msra.mxu0 0.0
    %7097 = vmatprep.subr.mxu0 0.0
    %7098 = vmatpush2.msra.mxu0 0.0
    %7099 = vmatprep.subr.mxu0 0.0
    %7100 = vmatpush2.msra.mxu0 0.0
    %7101 = vmatprep.subr.mxu0 0.0
    %7102 = vmatpush2.msra.mxu0 0.0
    %7103 = vmatprep.subr.mxu0 0.0
    %7104 = vmatpush2.msra.mxu0 0.0
    %7105 = vmatprep.subr.mxu0 0.0
    %7106 = vmatpush2.msra.mxu0 0.0
    %7107 = vmatprep.subr.mxu0 0.0
    %7108 = vmatpush2.msra.mxu0 0.0
    %7109 = vmatprep.mubr.f32.mxu0 0.0
    %7110 = vmatmul.mubr.f32.gmra.mxu0 %v6903
    %v7111 = vpop.f32.mrf.mxu0
    %v7112 = vadd.f32 %v489, %v7111
    %v7113 = vpop.f32.mrf.mxu0
    %7114 = vdwg.mxu0
    %v7115 = vadd.f32 %v6899, %v6972
    %v7116 = vxor.u32 %v7115, 2147483648
    %v7117 = vmul.f32 %v7116, 1.442695
    %v7118 = vpow.pop %v7117
    %v7119 = vadd.f32 %v7118, 1.0
    %v7120 = vrcp.pop %v7119
    %v7121 = vmul.f32 1.0, %v7120
    %v7122 = vadd.f32 %v6900, %v7042
    %v7123 = vxor.u32 %v7122, 2147483648
    %v7124 = vmul.f32 %v7123, 1.442695
    %v7125 = vpow.pop %v7124
    %v7126 = vadd.f32 %v7125, 1.0
    %v7127 = vrcp.pop %v7126
    %v7128 = vmul.f32 1.0, %v7127
    %v7129 = vmul.f32 %v7121, %v7112
    %v7130 = vadd.f32 %v6901, %v7129
    %v7131 = vtanh.pop %v7130
    %v7132 = vsub.f32 1.0, %v7128
    %v7133 = vmul.f32 %v7132, %v7131
    %v7134 = vmul.f32 %v7128, %v6898
    %v7135 = vadd.f32 %v7133, %v7134
    %v7136 = vld [vmem:[#allocation2 + $0x38] sm:$0x3]
    %v7137 = vld [vmem:[%s324 + $0x38] sm:$0x3]
    %v7138 = vld [vmem:[%s460 + $0x38] sm:$0x3]
    %v7140 = vsel %vm47, %v7135, 0
    %7142 = vmatprep.subr.mxu0 0.0
    %7143 = vmatpush1.msra.mxu0 0.0
    %7144 = vmatprep.subr.mxu0 0.0
    %7145 = vmatpush1.msra.mxu0 0.0
    %7146 = vmatprep.subr.mxu0 0.0
    %7147 = vmatpush1.msra.mxu0 0.0
    %7148 = vmatprep.subr.mxu0 0.0
    %7149 = vmatpush1.msra.mxu0 0.0
    %7150 = vmatprep.subr.mxu0 0.0
    %7151 = vmatpush1.msra.mxu0 0.0
    %7152 = vmatprep.subr.mxu0 0.0
    %7153 = vmatpush1.msra.mxu0 0.0
    %7154 = vmatprep.subr.mxu0 0.0
    %7155 = vmatpush1.msra.mxu0 0.0
    %7156 = vmatprep.subr.mxu0 0.0
    %7157 = vmatpush1.msra.mxu0 0.0
    %7158 = vmatprep.subr.mxu0 0.0
    %7159 = vmatpush1.msra.mxu0 0.0
    %7160 = vmatprep.subr.mxu0 0.0
    %7161 = vmatpush1.msra.mxu0 0.0
    %7162 = vmatprep.subr.mxu0 0.0
    %7163 = vmatpush1.msra.mxu0 0.0
    %7164 = vmatprep.subr.mxu0 0.0
    %7165 = vmatpush1.msra.mxu0 0.0
    %7166 = vmatprep.subr.mxu0 0.0
    %7167 = vmatpush1.msra.mxu0 %v498
    %7168 = vmatprep.subr.mxu0 0.0
    %7169 = vmatpush1.msra.mxu0 %v472
    %7170 = vmatprep.subr.mxu0 0.0
    %7171 = vmatpush1.msra.mxu0 %v471
    %7172 = vmatprep.subr.mxu0 0.0
    %7173 = vmatpush1.msra.mxu0 %v470
    %7174 = vmatprep.subr.mxu0 0.0
    %7175 = vmatpush2.msra.mxu0 0.0
    %7176 = vmatprep.subr.mxu0 0.0
    %7177 = vmatpush2.msra.mxu0 0.0
    %7178 = vmatprep.subr.mxu0 0.0
    %7179 = vmatpush2.msra.mxu0 0.0
    %7180 = vmatprep.subr.mxu0 0.0
    %7181 = vmatpush2.msra.mxu0 0.0
    %7182 = vmatprep.subr.mxu0 0.0
    %7183 = vmatpush2.msra.mxu0 0.0
    %7184 = vmatprep.subr.mxu0 0.0
    %7185 = vmatpush2.msra.mxu0 0.0
    %7186 = vmatprep.subr.mxu0 0.0
    %7187 = vmatpush2.msra.mxu0 0.0
    %7188 = vmatprep.subr.mxu0 0.0
    %7189 = vmatpush2.msra.mxu0 0.0
    %7190 = vmatprep.subr.mxu0 0.0
    %7191 = vmatpush2.msra.mxu0 0.0
    %7192 = vmatprep.subr.mxu0 0.0
    %7193 = vmatpush2.msra.mxu0 0.0
    %7194 = vmatprep.subr.mxu0 0.0
    %7195 = vmatpush2.msra.mxu0 0.0
    %7196 = vmatprep.subr.mxu0 0.0
    %7197 = vmatpush2.msra.mxu0 0.0
    %7198 = vmatprep.subr.mxu0 0.0
    %7199 = vmatpush2.msra.mxu0 0.0
    %7200 = vmatprep.subr.mxu0 0.0
    %7201 = vmatpush2.msra.mxu0 0.0
    %7202 = vmatprep.subr.mxu0 0.0
    %7203 = vmatpush2.msra.mxu0 0.0
    %7204 = vmatprep.subr.mxu0 0.0
    %7205 = vmatpush2.msra.mxu0 0.0
    %7206 = vmatprep.mubr.f32.mxu0 0.0
    %7207 = vmatmul.mubr.f32.gmra.mxu0 %v7140
    %v7208 = vpop.f32.mrf.mxu0
    %v7209 = vadd.f32 0.0, %v7208
    %v7210 = vpop.f32.mrf.mxu0
    %7211 = vdwg.mxu0
    %7212 = vmatprep.subr.mxu0 0.0
    %7213 = vmatpush1.msra.mxu0 0.0
    %7214 = vmatprep.subr.mxu0 0.0
    %7215 = vmatpush1.msra.mxu0 0.0
    %7216 = vmatprep.subr.mxu0 0.0
    %7217 = vmatpush1.msra.mxu0 0.0
    %7218 = vmatprep.subr.mxu0 0.0
    %7219 = vmatpush1.msra.mxu0 0.0
    %7220 = vmatprep.subr.mxu0 0.0
    %7221 = vmatpush1.msra.mxu0 0.0
    %7222 = vmatprep.subr.mxu0 0.0
    %7223 = vmatpush1.msra.mxu0 0.0
    %7224 = vmatprep.subr.mxu0 0.0
    %7225 = vmatpush1.msra.mxu0 0.0
    %7226 = vmatprep.subr.mxu0 0.0
    %7227 = vmatpush1.msra.mxu0 0.0
    %7228 = vmatprep.subr.mxu0 0.0
    %7229 = vmatpush1.msra.mxu0 0.0
    %7230 = vmatprep.subr.mxu0 0.0
    %7231 = vmatpush1.msra.mxu0 0.0
    %7232 = vmatprep.subr.mxu0 0.0
    %7233 = vmatpush1.msra.mxu0 0.0
    %7234 = vmatprep.subr.mxu0 0.0
    %7235 = vmatpush1.msra.mxu0 0.0
    %7236 = vmatprep.subr.mxu0 0.0
    %7237 = vmatpush1.msra.mxu0 %v571
    %7238 = vmatprep.subr.mxu0 0.0
    %7239 = vmatpush1.msra.mxu0 %v477
    %7240 = vmatprep.subr.mxu0 0.0
    %7241 = vmatpush1.msra.mxu0 %v476
    %7242 = vmatprep.subr.mxu0 0.0
    %7243 = vmatpush1.msra.mxu0 %v475
    %7244 = vmatprep.subr.mxu0 0.0
    %7245 = vmatpush2.msra.mxu0 0.0
    %7246 = vmatprep.subr.mxu0 0.0
    %7247 = vmatpush2.msra.mxu0 0.0
    %7248 = vmatprep.subr.mxu0 0.0
    %7249 = vmatpush2.msra.mxu0 0.0
    %7250 = vmatprep.subr.mxu0 0.0
    %7251 = vmatpush2.msra.mxu0 0.0
    %7252 = vmatprep.subr.mxu0 0.0
    %7253 = vmatpush2.msra.mxu0 0.0
    %7254 = vmatprep.subr.mxu0 0.0
    %7255 = vmatpush2.msra.mxu0 0.0
    %7256 = vmatprep.subr.mxu0 0.0
    %7257 = vmatpush2.msra.mxu0 0.0
    %7258 = vmatprep.subr.mxu0 0.0
    %7259 = vmatpush2.msra.mxu0 0.0
    %7260 = vmatprep.subr.mxu0 0.0
    %7261 = vmatpush2.msra.mxu0 0.0
    %7262 = vmatprep.subr.mxu0 0.0
    %7263 = vmatpush2.msra.mxu0 0.0
    %7264 = vmatprep.subr.mxu0 0.0
    %7265 = vmatpush2.msra.mxu0 0.0
    %7266 = vmatprep.subr.mxu0 0.0
    %7267 = vmatpush2.msra.mxu0 0.0
    %7268 = vmatprep.subr.mxu0 0.0
    %7269 = vmatpush2.msra.mxu0 0.0
    %7270 = vmatprep.subr.mxu0 0.0
    %7271 = vmatpush2.msra.mxu0 0.0
    %7272 = vmatprep.subr.mxu0 0.0
    %7273 = vmatpush2.msra.mxu0 0.0
    %7274 = vmatprep.subr.mxu0 0.0
    %7275 = vmatpush2.msra.mxu0 0.0
    %7276 = vmatprep.mubr.f32.mxu0 0.0
    %7277 = vmatmul.mubr.f32.gmra.mxu0 %v7140
    %v7278 = vpop.f32.mrf.mxu0
    %v7279 = vadd.f32 0.0, %v7278
    %v7280 = vpop.f32.mrf.mxu0
    %7281 = vdwg.mxu0
    %7282 = vmatprep.subr.mxu0 0.0
    %7283 = vmatpush1.msra.mxu0 0.0
    %7284 = vmatprep.subr.mxu0 0.0
    %7285 = vmatpush1.msra.mxu0 0.0
    %7286 = vmatprep.subr.mxu0 0.0
    %7287 = vmatpush1.msra.mxu0 0.0
    %7288 = vmatprep.subr.mxu0 0.0
    %7289 = vmatpush1.msra.mxu0 0.0
    %7290 = vmatprep.subr.mxu0 0.0
    %7291 = vmatpush1.msra.mxu0 0.0
    %7292 = vmatprep.subr.mxu0 0.0
    %7293 = vmatpush1.msra.mxu0 0.0
    %7294 = vmatprep.subr.mxu0 0.0
    %7295 = vmatpush1.msra.mxu0 0.0
    %7296 = vmatprep.subr.mxu0 0.0
    %7297 = vmatpush1.msra.mxu0 0.0
    %7298 = vmatprep.subr.mxu0 0.0
    %7299 = vmatpush1.msra.mxu0 0.0
    %7300 = vmatprep.subr.mxu0 0.0
    %7301 = vmatpush1.msra.mxu0 0.0
    %7302 = vmatprep.subr.mxu0 0.0
    %7303 = vmatpush1.msra.mxu0 0.0
    %7304 = vmatprep.subr.mxu0 0.0
    %7305 = vmatpush1.msra.mxu0 0.0
    %7306 = vmatprep.subr.mxu0 0.0
    %7307 = vmatpush1.msra.mxu0 %v644
    %7308 = vmatprep.subr.mxu0 0.0
    %7309 = vmatpush1.msra.mxu0 %v482
    %7310 = vmatprep.subr.mxu0 0.0
    %7311 = vmatpush1.msra.mxu0 %v481
    %7312 = vmatprep.subr.mxu0 0.0
    %7313 = vmatpush1.msra.mxu0 %v480
    %7314 = vmatprep.subr.mxu0 0.0
    %7315 = vmatpush2.msra.mxu0 0.0
    %7316 = vmatprep.subr.mxu0 0.0
    %7317 = vmatpush2.msra.mxu0 0.0
    %7318 = vmatprep.subr.mxu0 0.0
    %7319 = vmatpush2.msra.mxu0 0.0
    %7320 = vmatprep.subr.mxu0 0.0
    %7321 = vmatpush2.msra.mxu0 0.0
    %7322 = vmatprep.subr.mxu0 0.0
    %7323 = vmatpush2.msra.mxu0 0.0
    %7324 = vmatprep.subr.mxu0 0.0
    %7325 = vmatpush2.msra.mxu0 0.0
    %7326 = vmatprep.subr.mxu0 0.0
    %7327 = vmatpush2.msra.mxu0 0.0
    %7328 = vmatprep.subr.mxu0 0.0
    %7329 = vmatpush2.msra.mxu0 0.0
    %7330 = vmatprep.subr.mxu0 0.0
    %7331 = vmatpush2.msra.mxu0 0.0
    %7332 = vmatprep.subr.mxu0 0.0
    %7333 = vmatpush2.msra.mxu0 0.0
    %7334 = vmatprep.subr.mxu0 0.0
    %7335 = vmatpush2.msra.mxu0 0.0
    %7336 = vmatprep.subr.mxu0 0.0
    %7337 = vmatpush2.msra.mxu0 0.0
    %7338 = vmatprep.subr.mxu0 0.0
    %7339 = vmatpush2.msra.mxu0 0.0
    %7340 = vmatprep.subr.mxu0 0.0
    %7341 = vmatpush2.msra.mxu0 0.0
    %7342 = vmatprep.subr.mxu0 0.0
    %7343 = vmatpush2.msra.mxu0 0.0
    %7344 = vmatprep.subr.mxu0 0.0
    %7345 = vmatpush2.msra.mxu0 0.0
    %7346 = vmatprep.mubr.f32.mxu0 0.0
    %7347 = vmatmul.mubr.f32.gmra.mxu0 %v7140
    %v7348 = vpop.f32.mrf.mxu0
    %v7349 = vadd.f32 %v489, %v7348
    %v7350 = vpop.f32.mrf.mxu0
    %7351 = vdwg.mxu0
    %v7352 = vadd.f32 %v7136, %v7209
    %v7353 = vxor.u32 %v7352, 2147483648
    %v7354 = vmul.f32 %v7353, 1.442695
    %v7355 = vpow.pop %v7354
    %v7356 = vadd.f32 %v7355, 1.0
    %v7357 = vrcp.pop %v7356
    %v7358 = vmul.f32 1.0, %v7357
    %v7359 = vadd.f32 %v7137, %v7279
    %v7360 = vxor.u32 %v7359, 2147483648
    %v7361 = vmul.f32 %v7360, 1.442695
    %v7362 = vpow.pop %v7361
    %v7363 = vadd.f32 %v7362, 1.0
    %v7364 = vrcp.pop %v7363
    %v7365 = vmul.f32 1.0, %v7364
    %v7366 = vmul.f32 %v7358, %v7349
    %v7367 = vadd.f32 %v7138, %v7366
    %v7368 = vtanh.pop %v7367
    %v7369 = vsub.f32 1.0, %v7365
    %v7370 = vmul.f32 %v7369, %v7368
    %v7371 = vmul.f32 %v7365, %v7135
    %v7372 = vadd.f32 %v7370, %v7371
    %v7373 = vld [vmem:[#allocation2 + $0x3a] sm:$0x3]
    %v7374 = vld [vmem:[%s324 + $0x3a] sm:$0x3]
    %v7375 = vld [vmem:[%s460 + $0x3a] sm:$0x3]
    %v7377 = vsel %vm47, %v7372, 0
    %7379 = vmatprep.subr.mxu0 0.0
    %7380 = vmatpush1.msra.mxu0 0.0
    %7381 = vmatprep.subr.mxu0 0.0
    %7382 = vmatpush1.msra.mxu0 0.0
    %7383 = vmatprep.subr.mxu0 0.0
    %7384 = vmatpush1.msra.mxu0 0.0
    %7385 = vmatprep.subr.mxu0 0.0
    %7386 = vmatpush1.msra.mxu0 0.0
    %7387 = vmatprep.subr.mxu0 0.0
    %7388 = vmatpush1.msra.mxu0 0.0
    %7389 = vmatprep.subr.mxu0 0.0
    %7390 = vmatpush1.msra.mxu0 0.0
    %7391 = vmatprep.subr.mxu0 0.0
    %7392 = vmatpush1.msra.mxu0 0.0
    %7393 = vmatprep.subr.mxu0 0.0
    %7394 = vmatpush1.msra.mxu0 0.0
    %7395 = vmatprep.subr.mxu0 0.0
    %7396 = vmatpush1.msra.mxu0 0.0
    %7397 = vmatprep.subr.mxu0 0.0
    %7398 = vmatpush1.msra.mxu0 0.0
    %7399 = vmatprep.subr.mxu0 0.0
    %7400 = vmatpush1.msra.mxu0 0.0
    %7401 = vmatprep.subr.mxu0 0.0
    %7402 = vmatpush1.msra.mxu0 0.0
    %7403 = vmatprep.subr.mxu0 0.0
    %7404 = vmatpush1.msra.mxu0 %v498
    %7405 = vmatprep.subr.mxu0 0.0
    %7406 = vmatpush1.msra.mxu0 %v472
    %7407 = vmatprep.subr.mxu0 0.0
    %7408 = vmatpush1.msra.mxu0 %v471
    %7409 = vmatprep.subr.mxu0 0.0
    %7410 = vmatpush1.msra.mxu0 %v470
    %7411 = vmatprep.subr.mxu0 0.0
    %7412 = vmatpush2.msra.mxu0 0.0
    %7413 = vmatprep.subr.mxu0 0.0
    %7414 = vmatpush2.msra.mxu0 0.0
    %7415 = vmatprep.subr.mxu0 0.0
    %7416 = vmatpush2.msra.mxu0 0.0
    %7417 = vmatprep.subr.mxu0 0.0
    %7418 = vmatpush2.msra.mxu0 0.0
    %7419 = vmatprep.subr.mxu0 0.0
    %7420 = vmatpush2.msra.mxu0 0.0
    %7421 = vmatprep.subr.mxu0 0.0
    %7422 = vmatpush2.msra.mxu0 0.0
    %7423 = vmatprep.subr.mxu0 0.0
    %7424 = vmatpush2.msra.mxu0 0.0
    %7425 = vmatprep.subr.mxu0 0.0
    %7426 = vmatpush2.msra.mxu0 0.0
    %7427 = vmatprep.subr.mxu0 0.0
    %7428 = vmatpush2.msra.mxu0 0.0
    %7429 = vmatprep.subr.mxu0 0.0
    %7430 = vmatpush2.msra.mxu0 0.0
    %7431 = vmatprep.subr.mxu0 0.0
    %7432 = vmatpush2.msra.mxu0 0.0
    %7433 = vmatprep.subr.mxu0 0.0
    %7434 = vmatpush2.msra.mxu0 0.0
    %7435 = vmatprep.subr.mxu0 0.0
    %7436 = vmatpush2.msra.mxu0 0.0
    %7437 = vmatprep.subr.mxu0 0.0
    %7438 = vmatpush2.msra.mxu0 0.0
    %7439 = vmatprep.subr.mxu0 0.0
    %7440 = vmatpush2.msra.mxu0 0.0
    %7441 = vmatprep.subr.mxu0 0.0
    %7442 = vmatpush2.msra.mxu0 0.0
    %7443 = vmatprep.mubr.f32.mxu0 0.0
    %7444 = vmatmul.mubr.f32.gmra.mxu0 %v7377
    %v7445 = vpop.f32.mrf.mxu0
    %v7446 = vadd.f32 0.0, %v7445
    %v7447 = vpop.f32.mrf.mxu0
    %7448 = vdwg.mxu0
    %7449 = vmatprep.subr.mxu0 0.0
    %7450 = vmatpush1.msra.mxu0 0.0
    %7451 = vmatprep.subr.mxu0 0.0
    %7452 = vmatpush1.msra.mxu0 0.0
    %7453 = vmatprep.subr.mxu0 0.0
    %7454 = vmatpush1.msra.mxu0 0.0
    %7455 = vmatprep.subr.mxu0 0.0
    %7456 = vmatpush1.msra.mxu0 0.0
    %7457 = vmatprep.subr.mxu0 0.0
    %7458 = vmatpush1.msra.mxu0 0.0
    %7459 = vmatprep.subr.mxu0 0.0
    %7460 = vmatpush1.msra.mxu0 0.0
    %7461 = vmatprep.subr.mxu0 0.0
    %7462 = vmatpush1.msra.mxu0 0.0
    %7463 = vmatprep.subr.mxu0 0.0
    %7464 = vmatpush1.msra.mxu0 0.0
    %7465 = vmatprep.subr.mxu0 0.0
    %7466 = vmatpush1.msra.mxu0 0.0
    %7467 = vmatprep.subr.mxu0 0.0
    %7468 = vmatpush1.msra.mxu0 0.0
    %7469 = vmatprep.subr.mxu0 0.0
    %7470 = vmatpush1.msra.mxu0 0.0
    %7471 = vmatprep.subr.mxu0 0.0
    %7472 = vmatpush1.msra.mxu0 0.0
    %7473 = vmatprep.subr.mxu0 0.0
    %7474 = vmatpush1.msra.mxu0 %v571
    %7475 = vmatprep.subr.mxu0 0.0
    %7476 = vmatpush1.msra.mxu0 %v477
    %7477 = vmatprep.subr.mxu0 0.0
    %7478 = vmatpush1.msra.mxu0 %v476
    %7479 = vmatprep.subr.mxu0 0.0
    %7480 = vmatpush1.msra.mxu0 %v475
    %7481 = vmatprep.subr.mxu0 0.0
    %7482 = vmatpush2.msra.mxu0 0.0
    %7483 = vmatprep.subr.mxu0 0.0
    %7484 = vmatpush2.msra.mxu0 0.0
    %7485 = vmatprep.subr.mxu0 0.0
    %7486 = vmatpush2.msra.mxu0 0.0
    %7487 = vmatprep.subr.mxu0 0.0
    %7488 = vmatpush2.msra.mxu0 0.0
    %7489 = vmatprep.subr.mxu0 0.0
    %7490 = vmatpush2.msra.mxu0 0.0
    %7491 = vmatprep.subr.mxu0 0.0
    %7492 = vmatpush2.msra.mxu0 0.0
    %7493 = vmatprep.subr.mxu0 0.0
    %7494 = vmatpush2.msra.mxu0 0.0
    %7495 = vmatprep.subr.mxu0 0.0
    %7496 = vmatpush2.msra.mxu0 0.0
    %7497 = vmatprep.subr.mxu0 0.0
    %7498 = vmatpush2.msra.mxu0 0.0
    %7499 = vmatprep.subr.mxu0 0.0
    %7500 = vmatpush2.msra.mxu0 0.0
    %7501 = vmatprep.subr.mxu0 0.0
    %7502 = vmatpush2.msra.mxu0 0.0
    %7503 = vmatprep.subr.mxu0 0.0
    %7504 = vmatpush2.msra.mxu0 0.0
    %7505 = vmatprep.subr.mxu0 0.0
    %7506 = vmatpush2.msra.mxu0 0.0
    %7507 = vmatprep.subr.mxu0 0.0
    %7508 = vmatpush2.msra.mxu0 0.0
    %7509 = vmatprep.subr.mxu0 0.0
    %7510 = vmatpush2.msra.mxu0 0.0
    %7511 = vmatprep.subr.mxu0 0.0
    %7512 = vmatpush2.msra.mxu0 0.0
    %7513 = vmatprep.mubr.f32.mxu0 0.0
    %7514 = vmatmul.mubr.f32.gmra.mxu0 %v7377
    %v7515 = vpop.f32.mrf.mxu0
    %v7516 = vadd.f32 0.0, %v7515
    %v7517 = vpop.f32.mrf.mxu0
    %7518 = vdwg.mxu0
    %7519 = vmatprep.subr.mxu0 0.0
    %7520 = vmatpush1.msra.mxu0 0.0
    %7521 = vmatprep.subr.mxu0 0.0
    %7522 = vmatpush1.msra.mxu0 0.0
    %7523 = vmatprep.subr.mxu0 0.0
    %7524 = vmatpush1.msra.mxu0 0.0
    %7525 = vmatprep.subr.mxu0 0.0
    %7526 = vmatpush1.msra.mxu0 0.0
    %7527 = vmatprep.subr.mxu0 0.0
    %7528 = vmatpush1.msra.mxu0 0.0
    %7529 = vmatprep.subr.mxu0 0.0
    %7530 = vmatpush1.msra.mxu0 0.0
    %7531 = vmatprep.subr.mxu0 0.0
    %7532 = vmatpush1.msra.mxu0 0.0
    %7533 = vmatprep.subr.mxu0 0.0
    %7534 = vmatpush1.msra.mxu0 0.0
    %7535 = vmatprep.subr.mxu0 0.0
    %7536 = vmatpush1.msra.mxu0 0.0
    %7537 = vmatprep.subr.mxu0 0.0
    %7538 = vmatpush1.msra.mxu0 0.0
    %7539 = vmatprep.subr.mxu0 0.0
    %7540 = vmatpush1.msra.mxu0 0.0
    %7541 = vmatprep.subr.mxu0 0.0
    %7542 = vmatpush1.msra.mxu0 0.0
    %7543 = vmatprep.subr.mxu0 0.0
    %7544 = vmatpush1.msra.mxu0 %v644
    %7545 = vmatprep.subr.mxu0 0.0
    %7546 = vmatpush1.msra.mxu0 %v482
    %7547 = vmatprep.subr.mxu0 0.0
    %7548 = vmatpush1.msra.mxu0 %v481
    %7549 = vmatprep.subr.mxu0 0.0
    %7550 = vmatpush1.msra.mxu0 %v480
    %7551 = vmatprep.subr.mxu0 0.0
    %7552 = vmatpush2.msra.mxu0 0.0
    %7553 = vmatprep.subr.mxu0 0.0
    %7554 = vmatpush2.msra.mxu0 0.0
    %7555 = vmatprep.subr.mxu0 0.0
    %7556 = vmatpush2.msra.mxu0 0.0
    %7557 = vmatprep.subr.mxu0 0.0
    %7558 = vmatpush2.msra.mxu0 0.0
    %7559 = vmatprep.subr.mxu0 0.0
    %7560 = vmatpush2.msra.mxu0 0.0
    %7561 = vmatprep.subr.mxu0 0.0
    %7562 = vmatpush2.msra.mxu0 0.0
    %7563 = vmatprep.subr.mxu0 0.0
    %7564 = vmatpush2.msra.mxu0 0.0
    %7565 = vmatprep.subr.mxu0 0.0
    %7566 = vmatpush2.msra.mxu0 0.0
    %7567 = vmatprep.subr.mxu0 0.0
    %7568 = vmatpush2.msra.mxu0 0.0
    %7569 = vmatprep.subr.mxu0 0.0
    %7570 = vmatpush2.msra.mxu0 0.0
    %7571 = vmatprep.subr.mxu0 0.0
    %7572 = vmatpush2.msra.mxu0 0.0
    %7573 = vmatprep.subr.mxu0 0.0
    %7574 = vmatpush2.msra.mxu0 0.0
    %7575 = vmatprep.subr.mxu0 0.0
    %7576 = vmatpush2.msra.mxu0 0.0
    %7577 = vmatprep.subr.mxu0 0.0
    %7578 = vmatpush2.msra.mxu0 0.0
    %7579 = vmatprep.subr.mxu0 0.0
    %7580 = vmatpush2.msra.mxu0 0.0
    %7581 = vmatprep.subr.mxu0 0.0
    %7582 = vmatpush2.msra.mxu0 0.0
    %7583 = vmatprep.mubr.f32.mxu0 0.0
    %7584 = vmatmul.mubr.f32.gmra.mxu0 %v7377
    %v7585 = vpop.f32.mrf.mxu0
    %v7586 = vadd.f32 %v489, %v7585
    %v7587 = vpop.f32.mrf.mxu0
    %7588 = vdwg.mxu0
    %v7589 = vadd.f32 %v7373, %v7446
    %v7590 = vxor.u32 %v7589, 2147483648
    %v7591 = vmul.f32 %v7590, 1.442695
    %v7592 = vpow.pop %v7591
    %v7593 = vadd.f32 %v7592, 1.0
    %v7594 = vrcp.pop %v7593
    %v7595 = vmul.f32 1.0, %v7594
    %v7596 = vadd.f32 %v7374, %v7516
    %v7597 = vxor.u32 %v7596, 2147483648
    %v7598 = vmul.f32 %v7597, 1.442695
    %v7599 = vpow.pop %v7598
    %v7600 = vadd.f32 %v7599, 1.0
    %v7601 = vrcp.pop %v7600
    %v7602 = vmul.f32 1.0, %v7601
    %v7603 = vmul.f32 %v7595, %v7586
    %v7604 = vadd.f32 %v7375, %v7603
    %v7605 = vtanh.pop %v7604
    %v7606 = vsub.f32 1.0, %v7602
    %v7607 = vmul.f32 %v7606, %v7605
    %v7608 = vmul.f32 %v7602, %v7372
    %v7609 = vadd.f32 %v7607, %v7608
    %v7610 = vld [vmem:[#allocation2 + $0x3c] sm:$0x3]
    %v7611 = vld [vmem:[%s324 + $0x3c] sm:$0x3]
    %v7612 = vld [vmem:[%s460 + $0x3c] sm:$0x3]
    %v7614 = vsel %vm47, %v7609, 0
    %7616 = vmatprep.subr.mxu0 0.0
    %7617 = vmatpush1.msra.mxu0 0.0
    %7618 = vmatprep.subr.mxu0 0.0
    %7619 = vmatpush1.msra.mxu0 0.0
    %7620 = vmatprep.subr.mxu0 0.0
    %7621 = vmatpush1.msra.mxu0 0.0
    %7622 = vmatprep.subr.mxu0 0.0
    %7623 = vmatpush1.msra.mxu0 0.0
    %7624 = vmatprep.subr.mxu0 0.0
    %7625 = vmatpush1.msra.mxu0 0.0
    %7626 = vmatprep.subr.mxu0 0.0
    %7627 = vmatpush1.msra.mxu0 0.0
    %7628 = vmatprep.subr.mxu0 0.0
    %7629 = vmatpush1.msra.mxu0 0.0
    %7630 = vmatprep.subr.mxu0 0.0
    %7631 = vmatpush1.msra.mxu0 0.0
    %7632 = vmatprep.subr.mxu0 0.0
    %7633 = vmatpush1.msra.mxu0 0.0
    %7634 = vmatprep.subr.mxu0 0.0
    %7635 = vmatpush1.msra.mxu0 0.0
    %7636 = vmatprep.subr.mxu0 0.0
    %7637 = vmatpush1.msra.mxu0 0.0
    %7638 = vmatprep.subr.mxu0 0.0
    %7639 = vmatpush1.msra.mxu0 0.0
    %7640 = vmatprep.subr.mxu0 0.0
    %7641 = vmatpush1.msra.mxu0 %v498
    %7642 = vmatprep.subr.mxu0 0.0
    %7643 = vmatpush1.msra.mxu0 %v472
    %7644 = vmatprep.subr.mxu0 0.0
    %7645 = vmatpush1.msra.mxu0 %v471
    %7646 = vmatprep.subr.mxu0 0.0
    %7647 = vmatpush1.msra.mxu0 %v470
    %7648 = vmatprep.subr.mxu0 0.0
    %7649 = vmatpush2.msra.mxu0 0.0
    %7650 = vmatprep.subr.mxu0 0.0
    %7651 = vmatpush2.msra.mxu0 0.0
    %7652 = vmatprep.subr.mxu0 0.0
    %7653 = vmatpush2.msra.mxu0 0.0
    %7654 = vmatprep.subr.mxu0 0.0
    %7655 = vmatpush2.msra.mxu0 0.0
    %7656 = vmatprep.subr.mxu0 0.0
    %7657 = vmatpush2.msra.mxu0 0.0
    %7658 = vmatprep.subr.mxu0 0.0
    %7659 = vmatpush2.msra.mxu0 0.0
    %7660 = vmatprep.subr.mxu0 0.0
    %7661 = vmatpush2.msra.mxu0 0.0
    %7662 = vmatprep.subr.mxu0 0.0
    %7663 = vmatpush2.msra.mxu0 0.0
    %7664 = vmatprep.subr.mxu0 0.0
    %7665 = vmatpush2.msra.mxu0 0.0
    %7666 = vmatprep.subr.mxu0 0.0
    %7667 = vmatpush2.msra.mxu0 0.0
    %7668 = vmatprep.subr.mxu0 0.0
    %7669 = vmatpush2.msra.mxu0 0.0
    %7670 = vmatprep.subr.mxu0 0.0
    %7671 = vmatpush2.msra.mxu0 0.0
    %7672 = vmatprep.subr.mxu0 0.0
    %7673 = vmatpush2.msra.mxu0 0.0
    %7674 = vmatprep.subr.mxu0 0.0
    %7675 = vmatpush2.msra.mxu0 0.0
    %7676 = vmatprep.subr.mxu0 0.0
    %7677 = vmatpush2.msra.mxu0 0.0
    %7678 = vmatprep.subr.mxu0 0.0
    %7679 = vmatpush2.msra.mxu0 0.0
    %7680 = vmatprep.mubr.f32.mxu0 0.0
    %7681 = vmatmul.mubr.f32.gmra.mxu0 %v7614
    %v7682 = vpop.f32.mrf.mxu0
    %v7683 = vadd.f32 0.0, %v7682
    %v7684 = vpop.f32.mrf.mxu0
    %7685 = vdwg.mxu0
    %7686 = vmatprep.subr.mxu0 0.0
    %7687 = vmatpush1.msra.mxu0 0.0
    %7688 = vmatprep.subr.mxu0 0.0
    %7689 = vmatpush1.msra.mxu0 0.0
    %7690 = vmatprep.subr.mxu0 0.0
    %7691 = vmatpush1.msra.mxu0 0.0
    %7692 = vmatprep.subr.mxu0 0.0
    %7693 = vmatpush1.msra.mxu0 0.0
    %7694 = vmatprep.subr.mxu0 0.0
    %7695 = vmatpush1.msra.mxu0 0.0
    %7696 = vmatprep.subr.mxu0 0.0
    %7697 = vmatpush1.msra.mxu0 0.0
    %7698 = vmatprep.subr.mxu0 0.0
    %7699 = vmatpush1.msra.mxu0 0.0
    %7700 = vmatprep.subr.mxu0 0.0
    %7701 = vmatpush1.msra.mxu0 0.0
    %7702 = vmatprep.subr.mxu0 0.0
    %7703 = vmatpush1.msra.mxu0 0.0
    %7704 = vmatprep.subr.mxu0 0.0
    %7705 = vmatpush1.msra.mxu0 0.0
    %7706 = vmatprep.subr.mxu0 0.0
    %7707 = vmatpush1.msra.mxu0 0.0
    %7708 = vmatprep.subr.mxu0 0.0
    %7709 = vmatpush1.msra.mxu0 0.0
    %7710 = vmatprep.subr.mxu0 0.0
    %7711 = vmatpush1.msra.mxu0 %v571
    %7712 = vmatprep.subr.mxu0 0.0
    %7713 = vmatpush1.msra.mxu0 %v477
    %7714 = vmatprep.subr.mxu0 0.0
    %7715 = vmatpush1.msra.mxu0 %v476
    %7716 = vmatprep.subr.mxu0 0.0
    %7717 = vmatpush1.msra.mxu0 %v475
    %7718 = vmatprep.subr.mxu0 0.0
    %7719 = vmatpush2.msra.mxu0 0.0
    %7720 = vmatprep.subr.mxu0 0.0
    %7721 = vmatpush2.msra.mxu0 0.0
    %7722 = vmatprep.subr.mxu0 0.0
    %7723 = vmatpush2.msra.mxu0 0.0
    %7724 = vmatprep.subr.mxu0 0.0
    %7725 = vmatpush2.msra.mxu0 0.0
    %7726 = vmatprep.subr.mxu0 0.0
    %7727 = vmatpush2.msra.mxu0 0.0
    %7728 = vmatprep.subr.mxu0 0.0
    %7729 = vmatpush2.msra.mxu0 0.0
    %7730 = vmatprep.subr.mxu0 0.0
    %7731 = vmatpush2.msra.mxu0 0.0
    %7732 = vmatprep.subr.mxu0 0.0
    %7733 = vmatpush2.msra.mxu0 0.0
    %7734 = vmatprep.subr.mxu0 0.0
    %7735 = vmatpush2.msra.mxu0 0.0
    %7736 = vmatprep.subr.mxu0 0.0
    %7737 = vmatpush2.msra.mxu0 0.0
    %7738 = vmatprep.subr.mxu0 0.0
    %7739 = vmatpush2.msra.mxu0 0.0
    %7740 = vmatprep.subr.mxu0 0.0
    %7741 = vmatpush2.msra.mxu0 0.0
    %7742 = vmatprep.subr.mxu0 0.0
    %7743 = vmatpush2.msra.mxu0 0.0
    %7744 = vmatprep.subr.mxu0 0.0
    %7745 = vmatpush2.msra.mxu0 0.0
    %7746 = vmatprep.subr.mxu0 0.0
    %7747 = vmatpush2.msra.mxu0 0.0
    %7748 = vmatprep.subr.mxu0 0.0
    %7749 = vmatpush2.msra.mxu0 0.0
    %7750 = vmatprep.mubr.f32.mxu0 0.0
    %7751 = vmatmul.mubr.f32.gmra.mxu0 %v7614
    %v7752 = vpop.f32.mrf.mxu0
    %v7753 = vadd.f32 0.0, %v7752
    %v7754 = vpop.f32.mrf.mxu0
    %7755 = vdwg.mxu0
    %7756 = vmatprep.subr.mxu0 0.0
    %7757 = vmatpush1.msra.mxu0 0.0
    %7758 = vmatprep.subr.mxu0 0.0
    %7759 = vmatpush1.msra.mxu0 0.0
    %7760 = vmatprep.subr.mxu0 0.0
    %7761 = vmatpush1.msra.mxu0 0.0
    %7762 = vmatprep.subr.mxu0 0.0
    %7763 = vmatpush1.msra.mxu0 0.0
    %7764 = vmatprep.subr.mxu0 0.0
    %7765 = vmatpush1.msra.mxu0 0.0
    %7766 = vmatprep.subr.mxu0 0.0
    %7767 = vmatpush1.msra.mxu0 0.0
    %7768 = vmatprep.subr.mxu0 0.0
    %7769 = vmatpush1.msra.mxu0 0.0
    %7770 = vmatprep.subr.mxu0 0.0
    %7771 = vmatpush1.msra.mxu0 0.0
    %7772 = vmatprep.subr.mxu0 0.0
    %7773 = vmatpush1.msra.mxu0 0.0
    %7774 = vmatprep.subr.mxu0 0.0
    %7775 = vmatpush1.msra.mxu0 0.0
    %7776 = vmatprep.subr.mxu0 0.0
    %7777 = vmatpush1.msra.mxu0 0.0
    %7778 = vmatprep.subr.mxu0 0.0
    %7779 = vmatpush1.msra.mxu0 0.0
    %7780 = vmatprep.subr.mxu0 0.0
    %7781 = vmatpush1.msra.mxu0 %v644
    %7782 = vmatprep.subr.mxu0 0.0
    %7783 = vmatpush1.msra.mxu0 %v482
    %7784 = vmatprep.subr.mxu0 0.0
    %7785 = vmatpush1.msra.mxu0 %v481
    %7786 = vmatprep.subr.mxu0 0.0
    %7787 = vmatpush1.msra.mxu0 %v480
    %7788 = vmatprep.subr.mxu0 0.0
    %7789 = vmatpush2.msra.mxu0 0.0
    %7790 = vmatprep.subr.mxu0 0.0
    %7791 = vmatpush2.msra.mxu0 0.0
    %7792 = vmatprep.subr.mxu0 0.0
    %7793 = vmatpush2.msra.mxu0 0.0
    %7794 = vmatprep.subr.mxu0 0.0
    %7795 = vmatpush2.msra.mxu0 0.0
    %7796 = vmatprep.subr.mxu0 0.0
    %7797 = vmatpush2.msra.mxu0 0.0
    %7798 = vmatprep.subr.mxu0 0.0
    %7799 = vmatpush2.msra.mxu0 0.0
    %7800 = vmatprep.subr.mxu0 0.0
    %7801 = vmatpush2.msra.mxu0 0.0
    %7802 = vmatprep.subr.mxu0 0.0
    %7803 = vmatpush2.msra.mxu0 0.0
    %7804 = vmatprep.subr.mxu0 0.0
    %7805 = vmatpush2.msra.mxu0 0.0
    %7806 = vmatprep.subr.mxu0 0.0
    %7807 = vmatpush2.msra.mxu0 0.0
    %7808 = vmatprep.subr.mxu0 0.0
    %7809 = vmatpush2.msra.mxu0 0.0
    %7810 = vmatprep.subr.mxu0 0.0
    %7811 = vmatpush2.msra.mxu0 0.0
    %7812 = vmatprep.subr.mxu0 0.0
    %7813 = vmatpush2.msra.mxu0 0.0
    %7814 = vmatprep.subr.mxu0 0.0
    %7815 = vmatpush2.msra.mxu0 0.0
    %7816 = vmatprep.subr.mxu0 0.0
    %7817 = vmatpush2.msra.mxu0 0.0
    %7818 = vmatprep.subr.mxu0 0.0
    %7819 = vmatpush2.msra.mxu0 0.0
    %7820 = vmatprep.mubr.f32.mxu0 0.0
    %7821 = vmatmul.mubr.f32.gmra.mxu0 %v7614
    %v7822 = vpop.f32.mrf.mxu0
    %v7823 = vadd.f32 %v489, %v7822
    %v7824 = vpop.f32.mrf.mxu0
    %7825 = vdwg.mxu0
    %v7826 = vadd.f32 %v7610, %v7683
    %v7827 = vxor.u32 %v7826, 2147483648
    %v7828 = vmul.f32 %v7827, 1.442695
    %v7829 = vpow.pop %v7828
    %v7830 = vadd.f32 %v7829, 1.0
    %v7831 = vrcp.pop %v7830
    %v7832 = vmul.f32 1.0, %v7831
    %v7833 = vadd.f32 %v7611, %v7753
    %v7834 = vxor.u32 %v7833, 2147483648
    %v7835 = vmul.f32 %v7834, 1.442695
    %v7836 = vpow.pop %v7835
    %v7837 = vadd.f32 %v7836, 1.0
    %v7838 = vrcp.pop %v7837
    %v7839 = vmul.f32 1.0, %v7838
    %v7840 = vmul.f32 %v7832, %v7823
    %v7841 = vadd.f32 %v7612, %v7840
    %v7842 = vtanh.pop %v7841
    %v7843 = vsub.f32 1.0, %v7839
    %v7844 = vmul.f32 %v7843, %v7842
    %v7845 = vmul.f32 %v7839, %v7609
    %v7846 = vadd.f32 %v7844, %v7845
    %v7847 = vld [vmem:[#allocation2 + $0x3e] sm:$0x3]
    %v7848 = vld [vmem:[%s324 + $0x3e] sm:$0x3]
    %v7849 = vld [vmem:[%s460 + $0x3e] sm:$0x3]
    %v7851 = vsel %vm47, %v7846, 0
    %7853 = vmatprep.subr.mxu0 0.0
    %7854 = vmatpush1.msra.mxu0 0.0
    %7855 = vmatprep.subr.mxu0 0.0
    %7856 = vmatpush1.msra.mxu0 0.0
    %7857 = vmatprep.subr.mxu0 0.0
    %7858 = vmatpush1.msra.mxu0 0.0
    %7859 = vmatprep.subr.mxu0 0.0
    %7860 = vmatpush1.msra.mxu0 0.0
    %7861 = vmatprep.subr.mxu0 0.0
    %7862 = vmatpush1.msra.mxu0 0.0
    %7863 = vmatprep.subr.mxu0 0.0
    %7864 = vmatpush1.msra.mxu0 0.0
    %7865 = vmatprep.subr.mxu0 0.0
    %7866 = vmatpush1.msra.mxu0 0.0
    %7867 = vmatprep.subr.mxu0 0.0
    %7868 = vmatpush1.msra.mxu0 0.0
    %7869 = vmatprep.subr.mxu0 0.0
    %7870 = vmatpush1.msra.mxu0 0.0
    %7871 = vmatprep.subr.mxu0 0.0
    %7872 = vmatpush1.msra.mxu0 0.0
    %7873 = vmatprep.subr.mxu0 0.0
    %7874 = vmatpush1.msra.mxu0 0.0
    %7875 = vmatprep.subr.mxu0 0.0
    %7876 = vmatpush1.msra.mxu0 0.0
    %7877 = vmatprep.subr.mxu0 0.0
    %7878 = vmatpush1.msra.mxu0 %v498
    %7879 = vmatprep.subr.mxu0 0.0
    %7880 = vmatpush1.msra.mxu0 %v472
    %7881 = vmatprep.subr.mxu0 0.0
    %7882 = vmatpush1.msra.mxu0 %v471
    %7883 = vmatprep.subr.mxu0 0.0
    %7884 = vmatpush1.msra.mxu0 %v470
    %7885 = vmatprep.subr.mxu0 0.0
    %7886 = vmatpush2.msra.mxu0 0.0
    %7887 = vmatprep.subr.mxu0 0.0
    %7888 = vmatpush2.msra.mxu0 0.0
    %7889 = vmatprep.subr.mxu0 0.0
    %7890 = vmatpush2.msra.mxu0 0.0
    %7891 = vmatprep.subr.mxu0 0.0
    %7892 = vmatpush2.msra.mxu0 0.0
    %7893 = vmatprep.subr.mxu0 0.0
    %7894 = vmatpush2.msra.mxu0 0.0
    %7895 = vmatprep.subr.mxu0 0.0
    %7896 = vmatpush2.msra.mxu0 0.0
    %7897 = vmatprep.subr.mxu0 0.0
    %7898 = vmatpush2.msra.mxu0 0.0
    %7899 = vmatprep.subr.mxu0 0.0
    %7900 = vmatpush2.msra.mxu0 0.0
    %7901 = vmatprep.subr.mxu0 0.0
    %7902 = vmatpush2.msra.mxu0 0.0
    %7903 = vmatprep.subr.mxu0 0.0
    %7904 = vmatpush2.msra.mxu0 0.0
    %7905 = vmatprep.subr.mxu0 0.0
    %7906 = vmatpush2.msra.mxu0 0.0
    %7907 = vmatprep.subr.mxu0 0.0
    %7908 = vmatpush2.msra.mxu0 0.0
    %7909 = vmatprep.subr.mxu0 0.0
    %7910 = vmatpush2.msra.mxu0 0.0
    %7911 = vmatprep.subr.mxu0 0.0
    %7912 = vmatpush2.msra.mxu0 0.0
    %7913 = vmatprep.subr.mxu0 0.0
    %7914 = vmatpush2.msra.mxu0 0.0
    %7915 = vmatprep.subr.mxu0 0.0
    %7916 = vmatpush2.msra.mxu0 0.0
    %7917 = vmatprep.mubr.f32.mxu0 0.0
    %7918 = vmatmul.mubr.f32.gmra.mxu0 %v7851
    %v7919 = vpop.f32.mrf.mxu0
    %v7920 = vadd.f32 0.0, %v7919
    %v7921 = vpop.f32.mrf.mxu0
    %7922 = vdwg.mxu0
    %7923 = vmatprep.subr.mxu0 0.0
    %7924 = vmatpush1.msra.mxu0 0.0
    %7925 = vmatprep.subr.mxu0 0.0
    %7926 = vmatpush1.msra.mxu0 0.0
    %7927 = vmatprep.subr.mxu0 0.0
    %7928 = vmatpush1.msra.mxu0 0.0
    %7929 = vmatprep.subr.mxu0 0.0
    %7930 = vmatpush1.msra.mxu0 0.0
    %7931 = vmatprep.subr.mxu0 0.0
    %7932 = vmatpush1.msra.mxu0 0.0
    %7933 = vmatprep.subr.mxu0 0.0
    %7934 = vmatpush1.msra.mxu0 0.0
    %7935 = vmatprep.subr.mxu0 0.0
    %7936 = vmatpush1.msra.mxu0 0.0
    %7937 = vmatprep.subr.mxu0 0.0
    %7938 = vmatpush1.msra.mxu0 0.0
    %7939 = vmatprep.subr.mxu0 0.0
    %7940 = vmatpush1.msra.mxu0 0.0
    %7941 = vmatprep.subr.mxu0 0.0
    %7942 = vmatpush1.msra.mxu0 0.0
    %7943 = vmatprep.subr.mxu0 0.0
    %7944 = vmatpush1.msra.mxu0 0.0
    %7945 = vmatprep.subr.mxu0 0.0
    %7946 = vmatpush1.msra.mxu0 0.0
    %7947 = vmatprep.subr.mxu0 0.0
    %7948 = vmatpush1.msra.mxu0 %v571
    %7949 = vmatprep.subr.mxu0 0.0
    %7950 = vmatpush1.msra.mxu0 %v477
    %7951 = vmatprep.subr.mxu0 0.0
    %7952 = vmatpush1.msra.mxu0 %v476
    %7953 = vmatprep.subr.mxu0 0.0
    %7954 = vmatpush1.msra.mxu0 %v475
    %7955 = vmatprep.subr.mxu0 0.0
    %7956 = vmatpush2.msra.mxu0 0.0
    %7957 = vmatprep.subr.mxu0 0.0
    %7958 = vmatpush2.msra.mxu0 0.0
    %7959 = vmatprep.subr.mxu0 0.0
    %7960 = vmatpush2.msra.mxu0 0.0
    %7961 = vmatprep.subr.mxu0 0.0
    %7962 = vmatpush2.msra.mxu0 0.0
    %7963 = vmatprep.subr.mxu0 0.0
    %7964 = vmatpush2.msra.mxu0 0.0
    %7965 = vmatprep.subr.mxu0 0.0
    %7966 = vmatpush2.msra.mxu0 0.0
    %7967 = vmatprep.subr.mxu0 0.0
    %7968 = vmatpush2.msra.mxu0 0.0
    %7969 = vmatprep.subr.mxu0 0.0
    %7970 = vmatpush2.msra.mxu0 0.0
    %7971 = vmatprep.subr.mxu0 0.0
    %7972 = vmatpush2.msra.mxu0 0.0
    %7973 = vmatprep.subr.mxu0 0.0
    %7974 = vmatpush2.msra.mxu0 0.0
    %7975 = vmatprep.subr.mxu0 0.0
    %7976 = vmatpush2.msra.mxu0 0.0
    %7977 = vmatprep.subr.mxu0 0.0
    %7978 = vmatpush2.msra.mxu0 0.0
    %7979 = vmatprep.subr.mxu0 0.0
    %7980 = vmatpush2.msra.mxu0 0.0
    %7981 = vmatprep.subr.mxu0 0.0
    %7982 = vmatpush2.msra.mxu0 0.0
    %7983 = vmatprep.subr.mxu0 0.0
    %7984 = vmatpush2.msra.mxu0 0.0
    %7985 = vmatprep.subr.mxu0 0.0
    %7986 = vmatpush2.msra.mxu0 0.0
    %7987 = vmatprep.mubr.f32.mxu0 0.0
    %7988 = vmatmul.mubr.f32.gmra.mxu0 %v7851
    %v7989 = vpop.f32.mrf.mxu0
    %v7990 = vadd.f32 0.0, %v7989
    %v7991 = vpop.f32.mrf.mxu0
    %7992 = vdwg.mxu0
    %7993 = vmatprep.subr.mxu0 0.0
    %7994 = vmatpush1.msra.mxu0 0.0
    %7995 = vmatprep.subr.mxu0 0.0
    %7996 = vmatpush1.msra.mxu0 0.0
    %7997 = vmatprep.subr.mxu0 0.0
    %7998 = vmatpush1.msra.mxu0 0.0
    %7999 = vmatprep.subr.mxu0 0.0
    %8000 = vmatpush1.msra.mxu0 0.0
    %8001 = vmatprep.subr.mxu0 0.0
    %8002 = vmatpush1.msra.mxu0 0.0
    %8003 = vmatprep.subr.mxu0 0.0
    %8004 = vmatpush1.msra.mxu0 0.0
    %8005 = vmatprep.subr.mxu0 0.0
    %8006 = vmatpush1.msra.mxu0 0.0
    %8007 = vmatprep.subr.mxu0 0.0
    %8008 = vmatpush1.msra.mxu0 0.0
    %8009 = vmatprep.subr.mxu0 0.0
    %8010 = vmatpush1.msra.mxu0 0.0
    %8011 = vmatprep.subr.mxu0 0.0
    %8012 = vmatpush1.msra.mxu0 0.0
    %8013 = vmatprep.subr.mxu0 0.0
    %8014 = vmatpush1.msra.mxu0 0.0
    %8015 = vmatprep.subr.mxu0 0.0
    %8016 = vmatpush1.msra.mxu0 0.0
    %8017 = vmatprep.subr.mxu0 0.0
    %8018 = vmatpush1.msra.mxu0 %v644
    %8019 = vmatprep.subr.mxu0 0.0
    %8020 = vmatpush1.msra.mxu0 %v482
    %8021 = vmatprep.subr.mxu0 0.0
    %8022 = vmatpush1.msra.mxu0 %v481
    %8023 = vmatprep.subr.mxu0 0.0
    %8024 = vmatpush1.msra.mxu0 %v480
    %8025 = vmatprep.subr.mxu0 0.0
    %8026 = vmatpush2.msra.mxu0 0.0
    %8027 = vmatprep.subr.mxu0 0.0
    %8028 = vmatpush2.msra.mxu0 0.0
    %8029 = vmatprep.subr.mxu0 0.0
    %8030 = vmatpush2.msra.mxu0 0.0
    %8031 = vmatprep.subr.mxu0 0.0
    %8032 = vmatpush2.msra.mxu0 0.0
    %8033 = vmatprep.subr.mxu0 0.0
    %8034 = vmatpush2.msra.mxu0 0.0
    %8035 = vmatprep.subr.mxu0 0.0
    %8036 = vmatpush2.msra.mxu0 0.0
    %8037 = vmatprep.subr.mxu0 0.0
    %8038 = vmatpush2.msra.mxu0 0.0
    %8039 = vmatprep.subr.mxu0 0.0
    %8040 = vmatpush2.msra.mxu0 0.0
    %8041 = vmatprep.subr.mxu0 0.0
    %8042 = vmatpush2.msra.mxu0 0.0
    %8043 = vmatprep.subr.mxu0 0.0
    %8044 = vmatpush2.msra.mxu0 0.0
    %8045 = vmatprep.subr.mxu0 0.0
    %8046 = vmatpush2.msra.mxu0 0.0
    %8047 = vmatprep.subr.mxu0 0.0
    %8048 = vmatpush2.msra.mxu0 0.0
    %8049 = vmatprep.subr.mxu0 0.0
    %8050 = vmatpush2.msra.mxu0 0.0
    %8051 = vmatprep.subr.mxu0 0.0
    %8052 = vmatpush2.msra.mxu0 0.0
    %8053 = vmatprep.subr.mxu0 0.0
    %8054 = vmatpush2.msra.mxu0 0.0
    %8055 = vmatprep.subr.mxu0 0.0
    %8056 = vmatpush2.msra.mxu0 0.0
    %8057 = vmatprep.mubr.f32.mxu0 0.0
    %8058 = vmatmul.mubr.f32.gmra.mxu0 %v7851
    %v8059 = vpop.f32.mrf.mxu0
    %v8060 = vadd.f32 %v489, %v8059
    %v8061 = vpop.f32.mrf.mxu0
    %8062 = vdwg.mxu0
    %v8063 = vadd.f32 %v7847, %v7920
    %v8064 = vxor.u32 %v8063, 2147483648
    %v8065 = vmul.f32 %v8064, 1.442695
    %v8066 = vpow.pop %v8065
    %v8067 = vadd.f32 %v8066, 1.0
    %v8068 = vrcp.pop %v8067
    %v8069 = vmul.f32 1.0, %v8068
    %v8070 = vadd.f32 %v7848, %v7990
    %v8071 = vxor.u32 %v8070, 2147483648
    %v8072 = vmul.f32 %v8071, 1.442695
    %v8073 = vpow.pop %v8072
    %v8074 = vadd.f32 %v8073, 1.0
    %v8075 = vrcp.pop %v8074
    %v8076 = vmul.f32 1.0, %v8075
    %v8077 = vmul.f32 %v8069, %v8060
    %v8078 = vadd.f32 %v7849, %v8077
    %v8079 = vtanh.pop %v8078
    %v8080 = vsub.f32 1.0, %v8076
    %v8081 = vmul.f32 %v8080, %v8079
    %v8082 = vmul.f32 %v8076, %v7846
    %v8083 = vadd.f32 %v8081, %v8082
    %v8084 = vld [vmem:[#allocation2 + $0x40] sm:$0x3]
    %v8085 = vld [vmem:[%s324 + $0x40] sm:$0x3]
    %v8086 = vld [vmem:[%s460 + $0x40] sm:$0x3]
    %v8088 = vsel %vm47, %v8083, 0
    %8090 = vmatprep.subr.mxu0 0.0
    %8091 = vmatpush1.msra.mxu0 0.0
    %8092 = vmatprep.subr.mxu0 0.0
    %8093 = vmatpush1.msra.mxu0 0.0
    %8094 = vmatprep.subr.mxu0 0.0
    %8095 = vmatpush1.msra.mxu0 0.0
    %8096 = vmatprep.subr.mxu0 0.0
    %8097 = vmatpush1.msra.mxu0 0.0
    %8098 = vmatprep.subr.mxu0 0.0
    %8099 = vmatpush1.msra.mxu0 0.0
    %8100 = vmatprep.subr.mxu0 0.0
    %8101 = vmatpush1.msra.mxu0 0.0
    %8102 = vmatprep.subr.mxu0 0.0
    %8103 = vmatpush1.msra.mxu0 0.0
    %8104 = vmatprep.subr.mxu0 0.0
    %8105 = vmatpush1.msra.mxu0 0.0
    %8106 = vmatprep.subr.mxu0 0.0
    %8107 = vmatpush1.msra.mxu0 0.0
    %8108 = vmatprep.subr.mxu0 0.0
    %8109 = vmatpush1.msra.mxu0 0.0
    %8110 = vmatprep.subr.mxu0 0.0
    %8111 = vmatpush1.msra.mxu0 0.0
    %8112 = vmatprep.subr.mxu0 0.0
    %8113 = vmatpush1.msra.mxu0 0.0
    %8114 = vmatprep.subr.mxu0 0.0
    %8115 = vmatpush1.msra.mxu0 %v498
    %8116 = vmatprep.subr.mxu0 0.0
    %8117 = vmatpush1.msra.mxu0 %v472
    %8118 = vmatprep.subr.mxu0 0.0
    %8119 = vmatpush1.msra.mxu0 %v471
    %8120 = vmatprep.subr.mxu0 0.0
    %8121 = vmatpush1.msra.mxu0 %v470
    %8122 = vmatprep.subr.mxu0 0.0
    %8123 = vmatpush2.msra.mxu0 0.0
    %8124 = vmatprep.subr.mxu0 0.0
    %8125 = vmatpush2.msra.mxu0 0.0
    %8126 = vmatprep.subr.mxu0 0.0
    %8127 = vmatpush2.msra.mxu0 0.0
    %8128 = vmatprep.subr.mxu0 0.0
    %8129 = vmatpush2.msra.mxu0 0.0
    %8130 = vmatprep.subr.mxu0 0.0
    %8131 = vmatpush2.msra.mxu0 0.0
    %8132 = vmatprep.subr.mxu0 0.0
    %8133 = vmatpush2.msra.mxu0 0.0
    %8134 = vmatprep.subr.mxu0 0.0
    %8135 = vmatpush2.msra.mxu0 0.0
    %8136 = vmatprep.subr.mxu0 0.0
    %8137 = vmatpush2.msra.mxu0 0.0
    %8138 = vmatprep.subr.mxu0 0.0
    %8139 = vmatpush2.msra.mxu0 0.0
    %8140 = vmatprep.subr.mxu0 0.0
    %8141 = vmatpush2.msra.mxu0 0.0
    %8142 = vmatprep.subr.mxu0 0.0
    %8143 = vmatpush2.msra.mxu0 0.0
    %8144 = vmatprep.subr.mxu0 0.0
    %8145 = vmatpush2.msra.mxu0 0.0
    %8146 = vmatprep.subr.mxu0 0.0
    %8147 = vmatpush2.msra.mxu0 0.0
    %8148 = vmatprep.subr.mxu0 0.0
    %8149 = vmatpush2.msra.mxu0 0.0
    %8150 = vmatprep.subr.mxu0 0.0
    %8151 = vmatpush2.msra.mxu0 0.0
    %8152 = vmatprep.subr.mxu0 0.0
    %8153 = vmatpush2.msra.mxu0 0.0
    %8154 = vmatprep.mubr.f32.mxu0 0.0
    %8155 = vmatmul.mubr.f32.gmra.mxu0 %v8088
    %v8156 = vpop.f32.mrf.mxu0
    %v8157 = vadd.f32 0.0, %v8156
    %v8158 = vpop.f32.mrf.mxu0
    %8159 = vdwg.mxu0
    %8160 = vmatprep.subr.mxu0 0.0
    %8161 = vmatpush1.msra.mxu0 0.0
    %8162 = vmatprep.subr.mxu0 0.0
    %8163 = vmatpush1.msra.mxu0 0.0
    %8164 = vmatprep.subr.mxu0 0.0
    %8165 = vmatpush1.msra.mxu0 0.0
    %8166 = vmatprep.subr.mxu0 0.0
    %8167 = vmatpush1.msra.mxu0 0.0
    %8168 = vmatprep.subr.mxu0 0.0
    %8169 = vmatpush1.msra.mxu0 0.0
    %8170 = vmatprep.subr.mxu0 0.0
    %8171 = vmatpush1.msra.mxu0 0.0
    %8172 = vmatprep.subr.mxu0 0.0
    %8173 = vmatpush1.msra.mxu0 0.0
    %8174 = vmatprep.subr.mxu0 0.0
    %8175 = vmatpush1.msra.mxu0 0.0
    %8176 = vmatprep.subr.mxu0 0.0
    %8177 = vmatpush1.msra.mxu0 0.0
    %8178 = vmatprep.subr.mxu0 0.0
    %8179 = vmatpush1.msra.mxu0 0.0
    %8180 = vmatprep.subr.mxu0 0.0
    %8181 = vmatpush1.msra.mxu0 0.0
    %8182 = vmatprep.subr.mxu0 0.0
    %8183 = vmatpush1.msra.mxu0 0.0
    %8184 = vmatprep.subr.mxu0 0.0
    %8185 = vmatpush1.msra.mxu0 %v571
    %8186 = vmatprep.subr.mxu0 0.0
    %8187 = vmatpush1.msra.mxu0 %v477
    %8188 = vmatprep.subr.mxu0 0.0
    %8189 = vmatpush1.msra.mxu0 %v476
    %8190 = vmatprep.subr.mxu0 0.0
    %8191 = vmatpush1.msra.mxu0 %v475
    %8192 = vmatprep.subr.mxu0 0.0
    %8193 = vmatpush2.msra.mxu0 0.0
    %8194 = vmatprep.subr.mxu0 0.0
    %8195 = vmatpush2.msra.mxu0 0.0
    %8196 = vmatprep.subr.mxu0 0.0
    %8197 = vmatpush2.msra.mxu0 0.0
    %8198 = vmatprep.subr.mxu0 0.0
    %8199 = vmatpush2.msra.mxu0 0.0
    %8200 = vmatprep.subr.mxu0 0.0
    %8201 = vmatpush2.msra.mxu0 0.0
    %8202 = vmatprep.subr.mxu0 0.0
    %8203 = vmatpush2.msra.mxu0 0.0
    %8204 = vmatprep.subr.mxu0 0.0
    %8205 = vmatpush2.msra.mxu0 0.0
    %8206 = vmatprep.subr.mxu0 0.0
    %8207 = vmatpush2.msra.mxu0 0.0
    %8208 = vmatprep.subr.mxu0 0.0
    %8209 = vmatpush2.msra.mxu0 0.0
    %8210 = vmatprep.subr.mxu0 0.0
    %8211 = vmatpush2.msra.mxu0 0.0
    %8212 = vmatprep.subr.mxu0 0.0
    %8213 = vmatpush2.msra.mxu0 0.0
    %8214 = vmatprep.subr.mxu0 0.0
    %8215 = vmatpush2.msra.mxu0 0.0
    %8216 = vmatprep.subr.mxu0 0.0
    %8217 = vmatpush2.msra.mxu0 0.0
    %8218 = vmatprep.subr.mxu0 0.0
    %8219 = vmatpush2.msra.mxu0 0.0
    %8220 = vmatprep.subr.mxu0 0.0
    %8221 = vmatpush2.msra.mxu0 0.0
    %8222 = vmatprep.subr.mxu0 0.0
    %8223 = vmatpush2.msra.mxu0 0.0
    %8224 = vmatprep.mubr.f32.mxu0 0.0
    %8225 = vmatmul.mubr.f32.gmra.mxu0 %v8088
    %v8226 = vpop.f32.mrf.mxu0
    %v8227 = vadd.f32 0.0, %v8226
    %v8228 = vpop.f32.mrf.mxu0
    %8229 = vdwg.mxu0
    %8230 = vmatprep.subr.mxu0 0.0
    %8231 = vmatpush1.msra.mxu0 0.0
    %8232 = vmatprep.subr.mxu0 0.0
    %8233 = vmatpush1.msra.mxu0 0.0
    %8234 = vmatprep.subr.mxu0 0.0
    %8235 = vmatpush1.msra.mxu0 0.0
    %8236 = vmatprep.subr.mxu0 0.0
    %8237 = vmatpush1.msra.mxu0 0.0
    %8238 = vmatprep.subr.mxu0 0.0
    %8239 = vmatpush1.msra.mxu0 0.0
    %8240 = vmatprep.subr.mxu0 0.0
    %8241 = vmatpush1.msra.mxu0 0.0
    %8242 = vmatprep.subr.mxu0 0.0
    %8243 = vmatpush1.msra.mxu0 0.0
    %8244 = vmatprep.subr.mxu0 0.0
    %8245 = vmatpush1.msra.mxu0 0.0
    %8246 = vmatprep.subr.mxu0 0.0
    %8247 = vmatpush1.msra.mxu0 0.0
    %8248 = vmatprep.subr.mxu0 0.0
    %8249 = vmatpush1.msra.mxu0 0.0
    %8250 = vmatprep.subr.mxu0 0.0
    %8251 = vmatpush1.msra.mxu0 0.0
    %8252 = vmatprep.subr.mxu0 0.0
    %8253 = vmatpush1.msra.mxu0 0.0
    %8254 = vmatprep.subr.mxu0 0.0
    %8255 = vmatpush1.msra.mxu0 %v644
    %8256 = vmatprep.subr.mxu0 0.0
    %8257 = vmatpush1.msra.mxu0 %v482
    %8258 = vmatprep.subr.mxu0 0.0
    %8259 = vmatpush1.msra.mxu0 %v481
    %8260 = vmatprep.subr.mxu0 0.0
    %8261 = vmatpush1.msra.mxu0 %v480
    %8262 = vmatprep.subr.mxu0 0.0
    %8263 = vmatpush2.msra.mxu0 0.0
    %8264 = vmatprep.subr.mxu0 0.0
    %8265 = vmatpush2.msra.mxu0 0.0
    %8266 = vmatprep.subr.mxu0 0.0
    %8267 = vmatpush2.msra.mxu0 0.0
    %8268 = vmatprep.subr.mxu0 0.0
    %8269 = vmatpush2.msra.mxu0 0.0
    %8270 = vmatprep.subr.mxu0 0.0
    %8271 = vmatpush2.msra.mxu0 0.0
    %8272 = vmatprep.subr.mxu0 0.0
    %8273 = vmatpush2.msra.mxu0 0.0
    %8274 = vmatprep.subr.mxu0 0.0
    %8275 = vmatpush2.msra.mxu0 0.0
    %8276 = vmatprep.subr.mxu0 0.0
    %8277 = vmatpush2.msra.mxu0 0.0
    %8278 = vmatprep.subr.mxu0 0.0
    %8279 = vmatpush2.msra.mxu0 0.0
    %8280 = vmatprep.subr.mxu0 0.0
    %8281 = vmatpush2.msra.mxu0 0.0
    %8282 = vmatprep.subr.mxu0 0.0
    %8283 = vmatpush2.msra.mxu0 0.0
    %8284 = vmatprep.subr.mxu0 0.0
    %8285 = vmatpush2.msra.mxu0 0.0
    %8286 = vmatprep.subr.mxu0 0.0
    %8287 = vmatpush2.msra.mxu0 0.0
    %8288 = vmatprep.subr.mxu0 0.0
    %8289 = vmatpush2.msra.mxu0 0.0
    %8290 = vmatprep.subr.mxu0 0.0
    %8291 = vmatpush2.msra.mxu0 0.0
    %8292 = vmatprep.subr.mxu0 0.0
    %8293 = vmatpush2.msra.mxu0 0.0
    %8294 = vmatprep.mubr.f32.mxu0 0.0
    %8295 = vmatmul.mubr.f32.gmra.mxu0 %v8088
    %v8296 = vpop.f32.mrf.mxu0
    %v8297 = vadd.f32 %v489, %v8296
    %v8298 = vpop.f32.mrf.mxu0
    %8299 = vdwg.mxu0
    %v8300 = vadd.f32 %v8084, %v8157
    %v8301 = vxor.u32 %v8300, 2147483648
    %v8302 = vmul.f32 %v8301, 1.442695
    %v8303 = vpow.pop %v8302
    %v8304 = vadd.f32 %v8303, 1.0
    %v8305 = vrcp.pop %v8304
    %v8306 = vmul.f32 1.0, %v8305
    %v8307 = vadd.f32 %v8085, %v8227
    %v8308 = vxor.u32 %v8307, 2147483648
    %v8309 = vmul.f32 %v8308, 1.442695
    %v8310 = vpow.pop %v8309
    %v8311 = vadd.f32 %v8310, 1.0
    %v8312 = vrcp.pop %v8311
    %v8313 = vmul.f32 1.0, %v8312
    %v8314 = vmul.f32 %v8306, %v8297
    %v8315 = vadd.f32 %v8086, %v8314
    %v8316 = vtanh.pop %v8315
    %v8317 = vsub.f32 1.0, %v8313
    %v8318 = vmul.f32 %v8317, %v8316
    %v8319 = vmul.f32 %v8313, %v8083
    %v8320 = vadd.f32 %v8318, %v8319
    %v8321 = vld [vmem:[#allocation2 + $0x42] sm:$0x3]
    %v8322 = vld [vmem:[%s324 + $0x42] sm:$0x3]
    %v8323 = vld [vmem:[%s460 + $0x42] sm:$0x3]
    %v8325 = vsel %vm47, %v8320, 0
    %8327 = vmatprep.subr.mxu0 0.0
    %8328 = vmatpush1.msra.mxu0 0.0
    %8329 = vmatprep.subr.mxu0 0.0
    %8330 = vmatpush1.msra.mxu0 0.0
    %8331 = vmatprep.subr.mxu0 0.0
    %8332 = vmatpush1.msra.mxu0 0.0
    %8333 = vmatprep.subr.mxu0 0.0
    %8334 = vmatpush1.msra.mxu0 0.0
    %8335 = vmatprep.subr.mxu0 0.0
    %8336 = vmatpush1.msra.mxu0 0.0
    %8337 = vmatprep.subr.mxu0 0.0
    %8338 = vmatpush1.msra.mxu0 0.0
    %8339 = vmatprep.subr.mxu0 0.0
    %8340 = vmatpush1.msra.mxu0 0.0
    %8341 = vmatprep.subr.mxu0 0.0
    %8342 = vmatpush1.msra.mxu0 0.0
    %8343 = vmatprep.subr.mxu0 0.0
    %8344 = vmatpush1.msra.mxu0 0.0
    %8345 = vmatprep.subr.mxu0 0.0
    %8346 = vmatpush1.msra.mxu0 0.0
    %8347 = vmatprep.subr.mxu0 0.0
    %8348 = vmatpush1.msra.mxu0 0.0
    %8349 = vmatprep.subr.mxu0 0.0
    %8350 = vmatpush1.msra.mxu0 0.0
    %8351 = vmatprep.subr.mxu0 0.0
    %8352 = vmatpush1.msra.mxu0 %v498
    %8353 = vmatprep.subr.mxu0 0.0
    %8354 = vmatpush1.msra.mxu0 %v472
    %8355 = vmatprep.subr.mxu0 0.0
    %8356 = vmatpush1.msra.mxu0 %v471
    %8357 = vmatprep.subr.mxu0 0.0
    %8358 = vmatpush1.msra.mxu0 %v470
    %8359 = vmatprep.subr.mxu0 0.0
    %8360 = vmatpush2.msra.mxu0 0.0
    %8361 = vmatprep.subr.mxu0 0.0
    %8362 = vmatpush2.msra.mxu0 0.0
    %8363 = vmatprep.subr.mxu0 0.0
    %8364 = vmatpush2.msra.mxu0 0.0
    %8365 = vmatprep.subr.mxu0 0.0
    %8366 = vmatpush2.msra.mxu0 0.0
    %8367 = vmatprep.subr.mxu0 0.0
    %8368 = vmatpush2.msra.mxu0 0.0
    %8369 = vmatprep.subr.mxu0 0.0
    %8370 = vmatpush2.msra.mxu0 0.0
    %8371 = vmatprep.subr.mxu0 0.0
    %8372 = vmatpush2.msra.mxu0 0.0
    %8373 = vmatprep.subr.mxu0 0.0
    %8374 = vmatpush2.msra.mxu0 0.0
    %8375 = vmatprep.subr.mxu0 0.0
    %8376 = vmatpush2.msra.mxu0 0.0
    %8377 = vmatprep.subr.mxu0 0.0
    %8378 = vmatpush2.msra.mxu0 0.0
    %8379 = vmatprep.subr.mxu0 0.0
    %8380 = vmatpush2.msra.mxu0 0.0
    %8381 = vmatprep.subr.mxu0 0.0
    %8382 = vmatpush2.msra.mxu0 0.0
    %8383 = vmatprep.subr.mxu0 0.0
    %8384 = vmatpush2.msra.mxu0 0.0
    %8385 = vmatprep.subr.mxu0 0.0
    %8386 = vmatpush2.msra.mxu0 0.0
    %8387 = vmatprep.subr.mxu0 0.0
    %8388 = vmatpush2.msra.mxu0 0.0
    %8389 = vmatprep.subr.mxu0 0.0
    %8390 = vmatpush2.msra.mxu0 0.0
    %8391 = vmatprep.mubr.f32.mxu0 0.0
    %8392 = vmatmul.mubr.f32.gmra.mxu0 %v8325
    %v8393 = vpop.f32.mrf.mxu0
    %v8394 = vadd.f32 0.0, %v8393
    %v8395 = vpop.f32.mrf.mxu0
    %8396 = vdwg.mxu0
    %8397 = vmatprep.subr.mxu0 0.0
    %8398 = vmatpush1.msra.mxu0 0.0
    %8399 = vmatprep.subr.mxu0 0.0
    %8400 = vmatpush1.msra.mxu0 0.0
    %8401 = vmatprep.subr.mxu0 0.0
    %8402 = vmatpush1.msra.mxu0 0.0
    %8403 = vmatprep.subr.mxu0 0.0
    %8404 = vmatpush1.msra.mxu0 0.0
    %8405 = vmatprep.subr.mxu0 0.0
    %8406 = vmatpush1.msra.mxu0 0.0
    %8407 = vmatprep.subr.mxu0 0.0
    %8408 = vmatpush1.msra.mxu0 0.0
    %8409 = vmatprep.subr.mxu0 0.0
    %8410 = vmatpush1.msra.mxu0 0.0
    %8411 = vmatprep.subr.mxu0 0.0
    %8412 = vmatpush1.msra.mxu0 0.0
    %8413 = vmatprep.subr.mxu0 0.0
    %8414 = vmatpush1.msra.mxu0 0.0
    %8415 = vmatprep.subr.mxu0 0.0
    %8416 = vmatpush1.msra.mxu0 0.0
    %8417 = vmatprep.subr.mxu0 0.0
    %8418 = vmatpush1.msra.mxu0 0.0
    %8419 = vmatprep.subr.mxu0 0.0
    %8420 = vmatpush1.msra.mxu0 0.0
    %8421 = vmatprep.subr.mxu0 0.0
    %8422 = vmatpush1.msra.mxu0 %v571
    %8423 = vmatprep.subr.mxu0 0.0
    %8424 = vmatpush1.msra.mxu0 %v477
    %8425 = vmatprep.subr.mxu0 0.0
    %8426 = vmatpush1.msra.mxu0 %v476
    %8427 = vmatprep.subr.mxu0 0.0
    %8428 = vmatpush1.msra.mxu0 %v475
    %8429 = vmatprep.subr.mxu0 0.0
    %8430 = vmatpush2.msra.mxu0 0.0
    %8431 = vmatprep.subr.mxu0 0.0
    %8432 = vmatpush2.msra.mxu0 0.0
    %8433 = vmatprep.subr.mxu0 0.0
    %8434 = vmatpush2.msra.mxu0 0.0
    %8435 = vmatprep.subr.mxu0 0.0
    %8436 = vmatpush2.msra.mxu0 0.0
    %8437 = vmatprep.subr.mxu0 0.0
    %8438 = vmatpush2.msra.mxu0 0.0
    %8439 = vmatprep.subr.mxu0 0.0
    %8440 = vmatpush2.msra.mxu0 0.0
    %8441 = vmatprep.subr.mxu0 0.0
    %8442 = vmatpush2.msra.mxu0 0.0
    %8443 = vmatprep.subr.mxu0 0.0
    %8444 = vmatpush2.msra.mxu0 0.0
    %8445 = vmatprep.subr.mxu0 0.0
    %8446 = vmatpush2.msra.mxu0 0.0
    %8447 = vmatprep.subr.mxu0 0.0
    %8448 = vmatpush2.msra.mxu0 0.0
    %8449 = vmatprep.subr.mxu0 0.0
    %8450 = vmatpush2.msra.mxu0 0.0
    %8451 = vmatprep.subr.mxu0 0.0
    %8452 = vmatpush2.msra.mxu0 0.0
    %8453 = vmatprep.subr.mxu0 0.0
    %8454 = vmatpush2.msra.mxu0 0.0
    %8455 = vmatprep.subr.mxu0 0.0
    %8456 = vmatpush2.msra.mxu0 0.0
    %8457 = vmatprep.subr.mxu0 0.0
    %8458 = vmatpush2.msra.mxu0 0.0
    %8459 = vmatprep.subr.mxu0 0.0
    %8460 = vmatpush2.msra.mxu0 0.0
    %8461 = vmatprep.mubr.f32.mxu0 0.0
    %8462 = vmatmul.mubr.f32.gmra.mxu0 %v8325
    %v8463 = vpop.f32.mrf.mxu0
    %v8464 = vadd.f32 0.0, %v8463
    %v8465 = vpop.f32.mrf.mxu0
    %8466 = vdwg.mxu0
    %8467 = vmatprep.subr.mxu0 0.0
    %8468 = vmatpush1.msra.mxu0 0.0
    %8469 = vmatprep.subr.mxu0 0.0
    %8470 = vmatpush1.msra.mxu0 0.0
    %8471 = vmatprep.subr.mxu0 0.0
    %8472 = vmatpush1.msra.mxu0 0.0
    %8473 = vmatprep.subr.mxu0 0.0
    %8474 = vmatpush1.msra.mxu0 0.0
    %8475 = vmatprep.subr.mxu0 0.0
    %8476 = vmatpush1.msra.mxu0 0.0
    %8477 = vmatprep.subr.mxu0 0.0
    %8478 = vmatpush1.msra.mxu0 0.0
    %8479 = vmatprep.subr.mxu0 0.0
    %8480 = vmatpush1.msra.mxu0 0.0
    %8481 = vmatprep.subr.mxu0 0.0
    %8482 = vmatpush1.msra.mxu0 0.0
    %8483 = vmatprep.subr.mxu0 0.0
    %8484 = vmatpush1.msra.mxu0 0.0
    %8485 = vmatprep.subr.mxu0 0.0
    %8486 = vmatpush1.msra.mxu0 0.0
    %8487 = vmatprep.subr.mxu0 0.0
    %8488 = vmatpush1.msra.mxu0 0.0
    %8489 = vmatprep.subr.mxu0 0.0
    %8490 = vmatpush1.msra.mxu0 0.0
    %8491 = vmatprep.subr.mxu0 0.0
    %8492 = vmatpush1.msra.mxu0 %v644
    %8493 = vmatprep.subr.mxu0 0.0
    %8494 = vmatpush1.msra.mxu0 %v482
    %8495 = vmatprep.subr.mxu0 0.0
    %8496 = vmatpush1.msra.mxu0 %v481
    %8497 = vmatprep.subr.mxu0 0.0
    %8498 = vmatpush1.msra.mxu0 %v480
    %8499 = vmatprep.subr.mxu0 0.0
    %8500 = vmatpush2.msra.mxu0 0.0
    %8501 = vmatprep.subr.mxu0 0.0
    %8502 = vmatpush2.msra.mxu0 0.0
    %8503 = vmatprep.subr.mxu0 0.0
    %8504 = vmatpush2.msra.mxu0 0.0
    %8505 = vmatprep.subr.mxu0 0.0
    %8506 = vmatpush2.msra.mxu0 0.0
    %8507 = vmatprep.subr.mxu0 0.0
    %8508 = vmatpush2.msra.mxu0 0.0
    %8509 = vmatprep.subr.mxu0 0.0
    %8510 = vmatpush2.msra.mxu0 0.0
    %8511 = vmatprep.subr.mxu0 0.0
    %8512 = vmatpush2.msra.mxu0 0.0
    %8513 = vmatprep.subr.mxu0 0.0
    %8514 = vmatpush2.msra.mxu0 0.0
    %8515 = vmatprep.subr.mxu0 0.0
    %8516 = vmatpush2.msra.mxu0 0.0
    %8517 = vmatprep.subr.mxu0 0.0
    %8518 = vmatpush2.msra.mxu0 0.0
    %8519 = vmatprep.subr.mxu0 0.0
    %8520 = vmatpush2.msra.mxu0 0.0
    %8521 = vmatprep.subr.mxu0 0.0
    %8522 = vmatpush2.msra.mxu0 0.0
    %8523 = vmatprep.subr.mxu0 0.0
    %8524 = vmatpush2.msra.mxu0 0.0
    %8525 = vmatprep.subr.mxu0 0.0
    %8526 = vmatpush2.msra.mxu0 0.0
    %8527 = vmatprep.subr.mxu0 0.0
    %8528 = vmatpush2.msra.mxu0 0.0
    %8529 = vmatprep.subr.mxu0 0.0
    %8530 = vmatpush2.msra.mxu0 0.0
    %8531 = vmatprep.mubr.f32.mxu0 0.0
    %8532 = vmatmul.mubr.f32.gmra.mxu0 %v8325
    %v8533 = vpop.f32.mrf.mxu0
    %v8534 = vadd.f32 %v489, %v8533
    %v8535 = vpop.f32.mrf.mxu0
    %8536 = vdwg.mxu0
    %v8537 = vadd.f32 %v8321, %v8394
    %v8538 = vxor.u32 %v8537, 2147483648
    %v8539 = vmul.f32 %v8538, 1.442695
    %v8540 = vpow.pop %v8539
    %v8541 = vadd.f32 %v8540, 1.0
    %v8542 = vrcp.pop %v8541
    %v8543 = vmul.f32 1.0, %v8542
    %v8544 = vadd.f32 %v8322, %v8464
    %v8545 = vxor.u32 %v8544, 2147483648
    %v8546 = vmul.f32 %v8545, 1.442695
    %v8547 = vpow.pop %v8546
    %v8548 = vadd.f32 %v8547, 1.0
    %v8549 = vrcp.pop %v8548
    %v8550 = vmul.f32 1.0, %v8549
    %v8551 = vmul.f32 %v8543, %v8534
    %v8552 = vadd.f32 %v8323, %v8551
    %v8553 = vtanh.pop %v8552
    %v8554 = vsub.f32 1.0, %v8550
    %v8555 = vmul.f32 %v8554, %v8553
    %v8556 = vmul.f32 %v8550, %v8320
    %v8557 = vadd.f32 %v8555, %v8556
    %v8558 = vld [vmem:[#allocation2 + $0x44] sm:$0x3]
    %v8559 = vld [vmem:[%s324 + $0x44] sm:$0x3]
    %v8560 = vld [vmem:[%s460 + $0x44] sm:$0x3]
    %v8562 = vsel %vm47, %v8557, 0
    %8564 = vmatprep.subr.mxu0 0.0
    %8565 = vmatpush1.msra.mxu0 0.0
    %8566 = vmatprep.subr.mxu0 0.0
    %8567 = vmatpush1.msra.mxu0 0.0
    %8568 = vmatprep.subr.mxu0 0.0
    %8569 = vmatpush1.msra.mxu0 0.0
    %8570 = vmatprep.subr.mxu0 0.0
    %8571 = vmatpush1.msra.mxu0 0.0
    %8572 = vmatprep.subr.mxu0 0.0
    %8573 = vmatpush1.msra.mxu0 0.0
    %8574 = vmatprep.subr.mxu0 0.0
    %8575 = vmatpush1.msra.mxu0 0.0
    %8576 = vmatprep.subr.mxu0 0.0
    %8577 = vmatpush1.msra.mxu0 0.0
    %8578 = vmatprep.subr.mxu0 0.0
    %8579 = vmatpush1.msra.mxu0 0.0
    %8580 = vmatprep.subr.mxu0 0.0
    %8581 = vmatpush1.msra.mxu0 0.0
    %8582 = vmatprep.subr.mxu0 0.0
    %8583 = vmatpush1.msra.mxu0 0.0
    %8584 = vmatprep.subr.mxu0 0.0
    %8585 = vmatpush1.msra.mxu0 0.0
    %8586 = vmatprep.subr.mxu0 0.0
    %8587 = vmatpush1.msra.mxu0 0.0
    %8588 = vmatprep.subr.mxu0 0.0
    %8589 = vmatpush1.msra.mxu0 %v498
    %8590 = vmatprep.subr.mxu0 0.0
    %8591 = vmatpush1.msra.mxu0 %v472
    %8592 = vmatprep.subr.mxu0 0.0
    %8593 = vmatpush1.msra.mxu0 %v471
    %8594 = vmatprep.subr.mxu0 0.0
    %8595 = vmatpush1.msra.mxu0 %v470
    %8596 = vmatprep.subr.mxu0 0.0
    %8597 = vmatpush2.msra.mxu0 0.0
    %8598 = vmatprep.subr.mxu0 0.0
    %8599 = vmatpush2.msra.mxu0 0.0
    %8600 = vmatprep.subr.mxu0 0.0
    %8601 = vmatpush2.msra.mxu0 0.0
    %8602 = vmatprep.subr.mxu0 0.0
    %8603 = vmatpush2.msra.mxu0 0.0
    %8604 = vmatprep.subr.mxu0 0.0
    %8605 = vmatpush2.msra.mxu0 0.0
    %8606 = vmatprep.subr.mxu0 0.0
    %8607 = vmatpush2.msra.mxu0 0.0
    %8608 = vmatprep.subr.mxu0 0.0
    %8609 = vmatpush2.msra.mxu0 0.0
    %8610 = vmatprep.subr.mxu0 0.0
    %8611 = vmatpush2.msra.mxu0 0.0
    %8612 = vmatprep.subr.mxu0 0.0
    %8613 = vmatpush2.msra.mxu0 0.0
    %8614 = vmatprep.subr.mxu0 0.0
    %8615 = vmatpush2.msra.mxu0 0.0
    %8616 = vmatprep.subr.mxu0 0.0
    %8617 = vmatpush2.msra.mxu0 0.0
    %8618 = vmatprep.subr.mxu0 0.0
    %8619 = vmatpush2.msra.mxu0 0.0
    %8620 = vmatprep.subr.mxu0 0.0
    %8621 = vmatpush2.msra.mxu0 0.0
    %8622 = vmatprep.subr.mxu0 0.0
    %8623 = vmatpush2.msra.mxu0 0.0
    %8624 = vmatprep.subr.mxu0 0.0
    %8625 = vmatpush2.msra.mxu0 0.0
    %8626 = vmatprep.subr.mxu0 0.0
    %8627 = vmatpush2.msra.mxu0 0.0
    %8628 = vmatprep.mubr.f32.mxu0 0.0
    %8629 = vmatmul.mubr.f32.gmra.mxu0 %v8562
    %v8630 = vpop.f32.mrf.mxu0
    %v8631 = vadd.f32 0.0, %v8630
    %v8632 = vpop.f32.mrf.mxu0
    %8633 = vdwg.mxu0
    %8634 = vmatprep.subr.mxu0 0.0
    %8635 = vmatpush1.msra.mxu0 0.0
    %8636 = vmatprep.subr.mxu0 0.0
    %8637 = vmatpush1.msra.mxu0 0.0
    %8638 = vmatprep.subr.mxu0 0.0
    %8639 = vmatpush1.msra.mxu0 0.0
    %8640 = vmatprep.subr.mxu0 0.0
    %8641 = vmatpush1.msra.mxu0 0.0
    %8642 = vmatprep.subr.mxu0 0.0
    %8643 = vmatpush1.msra.mxu0 0.0
    %8644 = vmatprep.subr.mxu0 0.0
    %8645 = vmatpush1.msra.mxu0 0.0
    %8646 = vmatprep.subr.mxu0 0.0
    %8647 = vmatpush1.msra.mxu0 0.0
    %8648 = vmatprep.subr.mxu0 0.0
    %8649 = vmatpush1.msra.mxu0 0.0
    %8650 = vmatprep.subr.mxu0 0.0
    %8651 = vmatpush1.msra.mxu0 0.0
    %8652 = vmatprep.subr.mxu0 0.0
    %8653 = vmatpush1.msra.mxu0 0.0
    %8654 = vmatprep.subr.mxu0 0.0
    %8655 = vmatpush1.msra.mxu0 0.0
    %8656 = vmatprep.subr.mxu0 0.0
    %8657 = vmatpush1.msra.mxu0 0.0
    %8658 = vmatprep.subr.mxu0 0.0
    %8659 = vmatpush1.msra.mxu0 %v571
    %8660 = vmatprep.subr.mxu0 0.0
    %8661 = vmatpush1.msra.mxu0 %v477
    %8662 = vmatprep.subr.mxu0 0.0
    %8663 = vmatpush1.msra.mxu0 %v476
    %8664 = vmatprep.subr.mxu0 0.0
    %8665 = vmatpush1.msra.mxu0 %v475
    %8666 = vmatprep.subr.mxu0 0.0
    %8667 = vmatpush2.msra.mxu0 0.0
    %8668 = vmatprep.subr.mxu0 0.0
    %8669 = vmatpush2.msra.mxu0 0.0
    %8670 = vmatprep.subr.mxu0 0.0
    %8671 = vmatpush2.msra.mxu0 0.0
    %8672 = vmatprep.subr.mxu0 0.0
    %8673 = vmatpush2.msra.mxu0 0.0
    %8674 = vmatprep.subr.mxu0 0.0
    %8675 = vmatpush2.msra.mxu0 0.0
    %8676 = vmatprep.subr.mxu0 0.0
    %8677 = vmatpush2.msra.mxu0 0.0
    %8678 = vmatprep.subr.mxu0 0.0
    %8679 = vmatpush2.msra.mxu0 0.0
    %8680 = vmatprep.subr.mxu0 0.0
    %8681 = vmatpush2.msra.mxu0 0.0
    %8682 = vmatprep.subr.mxu0 0.0
    %8683 = vmatpush2.msra.mxu0 0.0
    %8684 = vmatprep.subr.mxu0 0.0
    %8685 = vmatpush2.msra.mxu0 0.0
    %8686 = vmatprep.subr.mxu0 0.0
    %8687 = vmatpush2.msra.mxu0 0.0
    %8688 = vmatprep.subr.mxu0 0.0
    %8689 = vmatpush2.msra.mxu0 0.0
    %8690 = vmatprep.subr.mxu0 0.0
    %8691 = vmatpush2.msra.mxu0 0.0
    %8692 = vmatprep.subr.mxu0 0.0
    %8693 = vmatpush2.msra.mxu0 0.0
    %8694 = vmatprep.subr.mxu0 0.0
    %8695 = vmatpush2.msra.mxu0 0.0
    %8696 = vmatprep.subr.mxu0 0.0
    %8697 = vmatpush2.msra.mxu0 0.0
    %8698 = vmatprep.mubr.f32.mxu0 0.0
    %8699 = vmatmul.mubr.f32.gmra.mxu0 %v8562
    %v8700 = vpop.f32.mrf.mxu0
    %v8701 = vadd.f32 0.0, %v8700
    %v8702 = vpop.f32.mrf.mxu0
    %8703 = vdwg.mxu0
    %8704 = vmatprep.subr.mxu0 0.0
    %8705 = vmatpush1.msra.mxu0 0.0
    %8706 = vmatprep.subr.mxu0 0.0
    %8707 = vmatpush1.msra.mxu0 0.0
    %8708 = vmatprep.subr.mxu0 0.0
    %8709 = vmatpush1.msra.mxu0 0.0
    %8710 = vmatprep.subr.mxu0 0.0
    %8711 = vmatpush1.msra.mxu0 0.0
    %8712 = vmatprep.subr.mxu0 0.0
    %8713 = vmatpush1.msra.mxu0 0.0
    %8714 = vmatprep.subr.mxu0 0.0
    %8715 = vmatpush1.msra.mxu0 0.0
    %8716 = vmatprep.subr.mxu0 0.0
    %8717 = vmatpush1.msra.mxu0 0.0
    %8718 = vmatprep.subr.mxu0 0.0
    %8719 = vmatpush1.msra.mxu0 0.0
    %8720 = vmatprep.subr.mxu0 0.0
    %8721 = vmatpush1.msra.mxu0 0.0
    %8722 = vmatprep.subr.mxu0 0.0
    %8723 = vmatpush1.msra.mxu0 0.0
    %8724 = vmatprep.subr.mxu0 0.0
    %8725 = vmatpush1.msra.mxu0 0.0
    %8726 = vmatprep.subr.mxu0 0.0
    %8727 = vmatpush1.msra.mxu0 0.0
    %8728 = vmatprep.subr.mxu0 0.0
    %8729 = vmatpush1.msra.mxu0 %v644
    %8730 = vmatprep.subr.mxu0 0.0
    %8731 = vmatpush1.msra.mxu0 %v482
    %8732 = vmatprep.subr.mxu0 0.0
    %8733 = vmatpush1.msra.mxu0 %v481
    %8734 = vmatprep.subr.mxu0 0.0
    %8735 = vmatpush1.msra.mxu0 %v480
    %8736 = vmatprep.subr.mxu0 0.0
    %8737 = vmatpush2.msra.mxu0 0.0
    %8738 = vmatprep.subr.mxu0 0.0
    %8739 = vmatpush2.msra.mxu0 0.0
    %8740 = vmatprep.subr.mxu0 0.0
    %8741 = vmatpush2.msra.mxu0 0.0
    %8742 = vmatprep.subr.mxu0 0.0
    %8743 = vmatpush2.msra.mxu0 0.0
    %8744 = vmatprep.subr.mxu0 0.0
    %8745 = vmatpush2.msra.mxu0 0.0
    %8746 = vmatprep.subr.mxu0 0.0
    %8747 = vmatpush2.msra.mxu0 0.0
    %8748 = vmatprep.subr.mxu0 0.0
    %8749 = vmatpush2.msra.mxu0 0.0
    %8750 = vmatprep.subr.mxu0 0.0
    %8751 = vmatpush2.msra.mxu0 0.0
    %8752 = vmatprep.subr.mxu0 0.0
    %8753 = vmatpush2.msra.mxu0 0.0
    %8754 = vmatprep.subr.mxu0 0.0
    %8755 = vmatpush2.msra.mxu0 0.0
    %8756 = vmatprep.subr.mxu0 0.0
    %8757 = vmatpush2.msra.mxu0 0.0
    %8758 = vmatprep.subr.mxu0 0.0
    %8759 = vmatpush2.msra.mxu0 0.0
    %8760 = vmatprep.subr.mxu0 0.0
    %8761 = vmatpush2.msra.mxu0 0.0
    %8762 = vmatprep.subr.mxu0 0.0
    %8763 = vmatpush2.msra.mxu0 0.0
    %8764 = vmatprep.subr.mxu0 0.0
    %8765 = vmatpush2.msra.mxu0 0.0
    %8766 = vmatprep.subr.mxu0 0.0
    %8767 = vmatpush2.msra.mxu0 0.0
    %8768 = vmatprep.mubr.f32.mxu0 0.0
    %8769 = vmatmul.mubr.f32.gmra.mxu0 %v8562
    %v8770 = vpop.f32.mrf.mxu0
    %v8771 = vadd.f32 %v489, %v8770
    %v8772 = vpop.f32.mrf.mxu0
    %8773 = vdwg.mxu0
    %v8774 = vadd.f32 %v8558, %v8631
    %v8775 = vxor.u32 %v8774, 2147483648
    %v8776 = vmul.f32 %v8775, 1.442695
    %v8777 = vpow.pop %v8776
    %v8778 = vadd.f32 %v8777, 1.0
    %v8779 = vrcp.pop %v8778
    %v8780 = vmul.f32 1.0, %v8779
    %v8781 = vadd.f32 %v8559, %v8701
    %v8782 = vxor.u32 %v8781, 2147483648
    %v8783 = vmul.f32 %v8782, 1.442695
    %v8784 = vpow.pop %v8783
    %v8785 = vadd.f32 %v8784, 1.0
    %v8786 = vrcp.pop %v8785
    %v8787 = vmul.f32 1.0, %v8786
    %v8788 = vmul.f32 %v8780, %v8771
    %v8789 = vadd.f32 %v8560, %v8788
    %v8790 = vtanh.pop %v8789
    %v8791 = vsub.f32 1.0, %v8787
    %v8792 = vmul.f32 %v8791, %v8790
    %v8793 = vmul.f32 %v8787, %v8557
    %v8794 = vadd.f32 %v8792, %v8793
    %v8795 = vld [vmem:[#allocation2 + $0x46] sm:$0x3]
    %v8796 = vld [vmem:[%s324 + $0x46] sm:$0x3]
    %v8797 = vld [vmem:[%s460 + $0x46] sm:$0x3]
    %v8799 = vsel %vm47, %v8794, 0
    %8801 = vmatprep.subr.mxu0 0.0
    %8802 = vmatpush1.msra.mxu0 0.0
    %8803 = vmatprep.subr.mxu0 0.0
    %8804 = vmatpush1.msra.mxu0 0.0
    %8805 = vmatprep.subr.mxu0 0.0
    %8806 = vmatpush1.msra.mxu0 0.0
    %8807 = vmatprep.subr.mxu0 0.0
    %8808 = vmatpush1.msra.mxu0 0.0
    %8809 = vmatprep.subr.mxu0 0.0
    %8810 = vmatpush1.msra.mxu0 0.0
    %8811 = vmatprep.subr.mxu0 0.0
    %8812 = vmatpush1.msra.mxu0 0.0
    %8813 = vmatprep.subr.mxu0 0.0
    %8814 = vmatpush1.msra.mxu0 0.0
    %8815 = vmatprep.subr.mxu0 0.0
    %8816 = vmatpush1.msra.mxu0 0.0
    %8817 = vmatprep.subr.mxu0 0.0
    %8818 = vmatpush1.msra.mxu0 0.0
    %8819 = vmatprep.subr.mxu0 0.0
    %8820 = vmatpush1.msra.mxu0 0.0
    %8821 = vmatprep.subr.mxu0 0.0
    %8822 = vmatpush1.msra.mxu0 0.0
    %8823 = vmatprep.subr.mxu0 0.0
    %8824 = vmatpush1.msra.mxu0 0.0
    %8825 = vmatprep.subr.mxu0 0.0
    %8826 = vmatpush1.msra.mxu0 %v498
    %8827 = vmatprep.subr.mxu0 0.0
    %8828 = vmatpush1.msra.mxu0 %v472
    %8829 = vmatprep.subr.mxu0 0.0
    %8830 = vmatpush1.msra.mxu0 %v471
    %8831 = vmatprep.subr.mxu0 0.0
    %8832 = vmatpush1.msra.mxu0 %v470
    %8833 = vmatprep.subr.mxu0 0.0
    %8834 = vmatpush2.msra.mxu0 0.0
    %8835 = vmatprep.subr.mxu0 0.0
    %8836 = vmatpush2.msra.mxu0 0.0
    %8837 = vmatprep.subr.mxu0 0.0
    %8838 = vmatpush2.msra.mxu0 0.0
    %8839 = vmatprep.subr.mxu0 0.0
    %8840 = vmatpush2.msra.mxu0 0.0
    %8841 = vmatprep.subr.mxu0 0.0
    %8842 = vmatpush2.msra.mxu0 0.0
    %8843 = vmatprep.subr.mxu0 0.0
    %8844 = vmatpush2.msra.mxu0 0.0
    %8845 = vmatprep.subr.mxu0 0.0
    %8846 = vmatpush2.msra.mxu0 0.0
    %8847 = vmatprep.subr.mxu0 0.0
    %8848 = vmatpush2.msra.mxu0 0.0
    %8849 = vmatprep.subr.mxu0 0.0
    %8850 = vmatpush2.msra.mxu0 0.0
    %8851 = vmatprep.subr.mxu0 0.0
    %8852 = vmatpush2.msra.mxu0 0.0
    %8853 = vmatprep.subr.mxu0 0.0
    %8854 = vmatpush2.msra.mxu0 0.0
    %8855 = vmatprep.subr.mxu0 0.0
    %8856 = vmatpush2.msra.mxu0 0.0
    %8857 = vmatprep.subr.mxu0 0.0
    %8858 = vmatpush2.msra.mxu0 0.0
    %8859 = vmatprep.subr.mxu0 0.0
    %8860 = vmatpush2.msra.mxu0 0.0
    %8861 = vmatprep.subr.mxu0 0.0
    %8862 = vmatpush2.msra.mxu0 0.0
    %8863 = vmatprep.subr.mxu0 0.0
    %8864 = vmatpush2.msra.mxu0 0.0
    %8865 = vmatprep.mubr.f32.mxu0 0.0
    %8866 = vmatmul.mubr.f32.gmra.mxu0 %v8799
    %v8867 = vpop.f32.mrf.mxu0
    %v8868 = vadd.f32 0.0, %v8867
    %v8869 = vpop.f32.mrf.mxu0
    %8870 = vdwg.mxu0
    %8871 = vmatprep.subr.mxu0 0.0
    %8872 = vmatpush1.msra.mxu0 0.0
    %8873 = vmatprep.subr.mxu0 0.0
    %8874 = vmatpush1.msra.mxu0 0.0
    %8875 = vmatprep.subr.mxu0 0.0
    %8876 = vmatpush1.msra.mxu0 0.0
    %8877 = vmatprep.subr.mxu0 0.0
    %8878 = vmatpush1.msra.mxu0 0.0
    %8879 = vmatprep.subr.mxu0 0.0
    %8880 = vmatpush1.msra.mxu0 0.0
    %8881 = vmatprep.subr.mxu0 0.0
    %8882 = vmatpush1.msra.mxu0 0.0
    %8883 = vmatprep.subr.mxu0 0.0
    %8884 = vmatpush1.msra.mxu0 0.0
    %8885 = vmatprep.subr.mxu0 0.0
    %8886 = vmatpush1.msra.mxu0 0.0
    %8887 = vmatprep.subr.mxu0 0.0
    %8888 = vmatpush1.msra.mxu0 0.0
    %8889 = vmatprep.subr.mxu0 0.0
    %8890 = vmatpush1.msra.mxu0 0.0
    %8891 = vmatprep.subr.mxu0 0.0
    %8892 = vmatpush1.msra.mxu0 0.0
    %8893 = vmatprep.subr.mxu0 0.0
    %8894 = vmatpush1.msra.mxu0 0.0
    %8895 = vmatprep.subr.mxu0 0.0
    %8896 = vmatpush1.msra.mxu0 %v571
    %8897 = vmatprep.subr.mxu0 0.0
    %8898 = vmatpush1.msra.mxu0 %v477
    %8899 = vmatprep.subr.mxu0 0.0
    %8900 = vmatpush1.msra.mxu0 %v476
    %8901 = vmatprep.subr.mxu0 0.0
    %8902 = vmatpush1.msra.mxu0 %v475
    %8903 = vmatprep.subr.mxu0 0.0
    %8904 = vmatpush2.msra.mxu0 0.0
    %8905 = vmatprep.subr.mxu0 0.0
    %8906 = vmatpush2.msra.mxu0 0.0
    %8907 = vmatprep.subr.mxu0 0.0
    %8908 = vmatpush2.msra.mxu0 0.0
    %8909 = vmatprep.subr.mxu0 0.0
    %8910 = vmatpush2.msra.mxu0 0.0
    %8911 = vmatprep.subr.mxu0 0.0
    %8912 = vmatpush2.msra.mxu0 0.0
    %8913 = vmatprep.subr.mxu0 0.0
    %8914 = vmatpush2.msra.mxu0 0.0
    %8915 = vmatprep.subr.mxu0 0.0
    %8916 = vmatpush2.msra.mxu0 0.0
    %8917 = vmatprep.subr.mxu0 0.0
    %8918 = vmatpush2.msra.mxu0 0.0
    %8919 = vmatprep.subr.mxu0 0.0
    %8920 = vmatpush2.msra.mxu0 0.0
    %8921 = vmatprep.subr.mxu0 0.0
    %8922 = vmatpush2.msra.mxu0 0.0
    %8923 = vmatprep.subr.mxu0 0.0
    %8924 = vmatpush2.msra.mxu0 0.0
    %8925 = vmatprep.subr.mxu0 0.0
    %8926 = vmatpush2.msra.mxu0 0.0
    %8927 = vmatprep.subr.mxu0 0.0
    %8928 = vmatpush2.msra.mxu0 0.0
    %8929 = vmatprep.subr.mxu0 0.0
    %8930 = vmatpush2.msra.mxu0 0.0
    %8931 = vmatprep.subr.mxu0 0.0
    %8932 = vmatpush2.msra.mxu0 0.0
    %8933 = vmatprep.subr.mxu0 0.0
    %8934 = vmatpush2.msra.mxu0 0.0
    %8935 = vmatprep.mubr.f32.mxu0 0.0
    %8936 = vmatmul.mubr.f32.gmra.mxu0 %v8799
    %v8937 = vpop.f32.mrf.mxu0
    %v8938 = vadd.f32 0.0, %v8937
    %v8939 = vpop.f32.mrf.mxu0
    %8940 = vdwg.mxu0
    %8941 = vmatprep.subr.mxu0 0.0
    %8942 = vmatpush1.msra.mxu0 0.0
    %8943 = vmatprep.subr.mxu0 0.0
    %8944 = vmatpush1.msra.mxu0 0.0
    %8945 = vmatprep.subr.mxu0 0.0
    %8946 = vmatpush1.msra.mxu0 0.0
    %8947 = vmatprep.subr.mxu0 0.0
    %8948 = vmatpush1.msra.mxu0 0.0
    %8949 = vmatprep.subr.mxu0 0.0
    %8950 = vmatpush1.msra.mxu0 0.0
    %8951 = vmatprep.subr.mxu0 0.0
    %8952 = vmatpush1.msra.mxu0 0.0
    %8953 = vmatprep.subr.mxu0 0.0
    %8954 = vmatpush1.msra.mxu0 0.0
    %8955 = vmatprep.subr.mxu0 0.0
    %8956 = vmatpush1.msra.mxu0 0.0
    %8957 = vmatprep.subr.mxu0 0.0
    %8958 = vmatpush1.msra.mxu0 0.0
    %8959 = vmatprep.subr.mxu0 0.0
    %8960 = vmatpush1.msra.mxu0 0.0
    %8961 = vmatprep.subr.mxu0 0.0
    %8962 = vmatpush1.msra.mxu0 0.0
    %8963 = vmatprep.subr.mxu0 0.0
    %8964 = vmatpush1.msra.mxu0 0.0
    %8965 = vmatprep.subr.mxu0 0.0
    %8966 = vmatpush1.msra.mxu0 %v644
    %8967 = vmatprep.subr.mxu0 0.0
    %8968 = vmatpush1.msra.mxu0 %v482
    %8969 = vmatprep.subr.mxu0 0.0
    %8970 = vmatpush1.msra.mxu0 %v481
    %8971 = vmatprep.subr.mxu0 0.0
    %8972 = vmatpush1.msra.mxu0 %v480
    %8973 = vmatprep.subr.mxu0 0.0
    %8974 = vmatpush2.msra.mxu0 0.0
    %8975 = vmatprep.subr.mxu0 0.0
    %8976 = vmatpush2.msra.mxu0 0.0
    %8977 = vmatprep.subr.mxu0 0.0
    %8978 = vmatpush2.msra.mxu0 0.0
    %8979 = vmatprep.subr.mxu0 0.0
    %8980 = vmatpush2.msra.mxu0 0.0
    %8981 = vmatprep.subr.mxu0 0.0
    %8982 = vmatpush2.msra.mxu0 0.0
    %8983 = vmatprep.subr.mxu0 0.0
    %8984 = vmatpush2.msra.mxu0 0.0
    %8985 = vmatprep.subr.mxu0 0.0
    %8986 = vmatpush2.msra.mxu0 0.0
    %8987 = vmatprep.subr.mxu0 0.0
    %8988 = vmatpush2.msra.mxu0 0.0
    %8989 = vmatprep.subr.mxu0 0.0
    %8990 = vmatpush2.msra.mxu0 0.0
    %8991 = vmatprep.subr.mxu0 0.0
    %8992 = vmatpush2.msra.mxu0 0.0
    %8993 = vmatprep.subr.mxu0 0.0
    %8994 = vmatpush2.msra.mxu0 0.0
    %8995 = vmatprep.subr.mxu0 0.0
    %8996 = vmatpush2.msra.mxu0 0.0
    %8997 = vmatprep.subr.mxu0 0.0
    %8998 = vmatpush2.msra.mxu0 0.0
    %8999 = vmatprep.subr.mxu0 0.0
    %9000 = vmatpush2.msra.mxu0 0.0
    %9001 = vmatprep.subr.mxu0 0.0
    %9002 = vmatpush2.msra.mxu0 0.0
    %9003 = vmatprep.subr.mxu0 0.0
    %9004 = vmatpush2.msra.mxu0 0.0
    %9005 = vmatprep.mubr.f32.mxu0 0.0
    %9006 = vmatmul.mubr.f32.gmra.mxu0 %v8799
    %v9007 = vpop.f32.mrf.mxu0
    %v9008 = vadd.f32 %v489, %v9007
    %v9009 = vpop.f32.mrf.mxu0
    %9010 = vdwg.mxu0
    %v9011 = vadd.f32 %v8795, %v8868
    %v9012 = vxor.u32 %v9011, 2147483648
    %v9013 = vmul.f32 %v9012, 1.442695
    %v9014 = vpow.pop %v9013
    %v9015 = vadd.f32 %v9014, 1.0
    %v9016 = vrcp.pop %v9015
    %v9017 = vmul.f32 1.0, %v9016
    %v9018 = vadd.f32 %v8796, %v8938
    %v9019 = vxor.u32 %v9018, 2147483648
    %v9020 = vmul.f32 %v9019, 1.442695
    %v9021 = vpow.pop %v9020
    %v9022 = vadd.f32 %v9021, 1.0
    %v9023 = vrcp.pop %v9022
    %v9024 = vmul.f32 1.0, %v9023
    %v9025 = vmul.f32 %v9017, %v9008
    %v9026 = vadd.f32 %v8797, %v9025
    %v9027 = vtanh.pop %v9026
    %v9028 = vsub.f32 1.0, %v9024
    %v9029 = vmul.f32 %v9028, %v9027
    %v9030 = vmul.f32 %v9024, %v8794
    %v9031 = vadd.f32 %v9029, %v9030
    %v9032 = vld [vmem:[%s5] sm:$0xff]
    %v9033 = vld [vmem:[%s5 + $0x8] sm:$0xff]
    %v9034 = vld [vmem:[%s5 + $0x10] sm:$0xff]
    %v9035 = vld [vmem:[%s5 + $0x18] sm:$0xf]
    %v9036 = vld [vmem:[%s6] sm:$0x1]
    %v9038 = vlaneseq
    %v9039 = vshrl.u32 %v9038, 7
    %v9040 = vsub.s32 0, %v9039
    %v9041 = vrot.slane %v9036, %v9040
    %v9044 = vsel %vm47, %v9031, 0
    %v9047 = vsel %vm75, %v9035, 0
    %9049 = vmatprep.subr.mxu0 0.0
    %9050 = vmatpush1.msra.mxu0 0.0
    %9051 = vmatprep.subr.mxu0 0.0
    %9052 = vmatpush1.msra.mxu0 0.0
    %9053 = vmatprep.subr.mxu0 0.0
    %9054 = vmatpush1.msra.mxu0 0.0
    %9055 = vmatprep.subr.mxu0 0.0
    %9056 = vmatpush1.msra.mxu0 0.0
    %9057 = vmatprep.subr.mxu0 0.0
    %9058 = vmatpush1.msra.mxu0 0.0
    %9059 = vmatprep.subr.mxu0 0.0
    %9060 = vmatpush1.msra.mxu0 0.0
    %9061 = vmatprep.subr.mxu0 0.0
    %9062 = vmatpush1.msra.mxu0 0.0
    %9063 = vmatprep.subr.mxu0 0.0
    %9064 = vmatpush1.msra.mxu0 0.0
    %9065 = vmatprep.subr.mxu0 0.0
    %9066 = vmatpush1.msra.mxu0 0.0
    %9067 = vmatprep.subr.mxu0 0.0
    %9068 = vmatpush1.msra.mxu0 0.0
    %9069 = vmatprep.subr.mxu0 0.0
    %9070 = vmatpush1.msra.mxu0 0.0
    %9071 = vmatprep.subr.mxu0 0.0
    %9072 = vmatpush1.msra.mxu0 0.0
    %9073 = vmatprep.subr.mxu0 0.0
    %9074 = vmatpush1.msra.mxu0 %v9047
    %9075 = vmatprep.subr.mxu0 0.0
    %9076 = vmatpush1.msra.mxu0 %v9034
    %9077 = vmatprep.subr.mxu0 0.0
    %9078 = vmatpush1.msra.mxu0 %v9033
    %9079 = vmatprep.subr.mxu0 0.0
    %9080 = vmatpush1.msra.mxu0 %v9032
    %9081 = vmatprep.subr.mxu0 0.0
    %9082 = vmatpush2.msra.mxu0 0.0
    %9083 = vmatprep.subr.mxu0 0.0
    %9084 = vmatpush2.msra.mxu0 0.0
    %9085 = vmatprep.subr.mxu0 0.0
    %9086 = vmatpush2.msra.mxu0 0.0
    %9087 = vmatprep.subr.mxu0 0.0
    %9088 = vmatpush2.msra.mxu0 0.0
    %9089 = vmatprep.subr.mxu0 0.0
    %9090 = vmatpush2.msra.mxu0 0.0
    %9091 = vmatprep.subr.mxu0 0.0
    %9092 = vmatpush2.msra.mxu0 0.0
    %9093 = vmatprep.subr.mxu0 0.0
    %9094 = vmatpush2.msra.mxu0 0.0
    %9095 = vmatprep.subr.mxu0 0.0
    %9096 = vmatpush2.msra.mxu0 0.0
    %9097 = vmatprep.subr.mxu0 0.0
    %9098 = vmatpush2.msra.mxu0 0.0
    %9099 = vmatprep.subr.mxu0 0.0
    %9100 = vmatpush2.msra.mxu0 0.0
    %9101 = vmatprep.subr.mxu0 0.0
    %9102 = vmatpush2.msra.mxu0 0.0
    %9103 = vmatprep.subr.mxu0 0.0
    %9104 = vmatpush2.msra.mxu0 0.0
    %9105 = vmatprep.subr.mxu0 0.0
    %9106 = vmatpush2.msra.mxu0 0.0
    %9107 = vmatprep.subr.mxu0 0.0
    %9108 = vmatpush2.msra.mxu0 0.0
    %9109 = vmatprep.subr.mxu0 0.0
    %9110 = vmatpush2.msra.mxu0 0.0
    %9111 = vmatprep.subr.mxu0 0.0
    %9112 = vmatpush2.msra.mxu0 0.0
    %9113 = vmatprep.mubr.f32.mxu0 0.0
    %9114 = vmatmul.mubr.f32.gmra.mxu0 %v9044
    %v9115 = vpop.f32.mrf.mxu0
    %v9116 = vadd.f32 %v9041, %v9115
    %v9117 = vpop.f32.mrf.mxu0
    %9118 = vdwg.mxu0
    %vm9119 = vcmask 33792
    %9120 = vst.msk [vmem:[#allocation3] sm:$0x3] %vm9119, %v9116
    // Predicated region
    $region30: #{my_gru_net.1} parent=1 // pred_check
      _
    $region31: #{my_gru_net.1} parent=1 // pred_check_branch
      %9122 = sbr.rel (0) target = $region33
    $region32: #{my_gru_net.1} parent=1 // pred_region
      %s9124 = ssub.s32 32, 32
      %9125 = vsyncadd [#allocation4], %s9124
      %s9127 = sshll.u32 [#allocation3], 4
      %s9128 = int_to_ptr.vmem [resolvable:$true] %s9127
      %9130 = dma.vmem_to_hbm [thread:$0]  %s9128, 32, %s7, [#allocation4]
    $region33: #{my_gru_net.1} parent=1 // pred_fallthru
      _
    // Predicated region
    $region34: #{my_gru_net.1} parent=1 // pred_check
      _
    $region35: #{my_gru_net.1} parent=1 // pred_check_branch
      %9132 = sbr.rel (0) target = $region37
    $region36: #{my_gru_net.1} parent=1 // pred_region
      %9133 = dma.done [#allocation4], 32
    $region37: #{my_gru_net.1} parent=1 // pred_fallthru
      _
    %9134 = vsyncpa [#allocation4], 1

</llo_original>
